<compile_context>
chip_gen: v5e
topology: v5e:2x2
jax: 0.10.0
libtpu: 0.0.40
codegen_flags: <defaults>
</compile_context>

<pallas_src>
from functools import partial

import numpy as np
import jax
import jax.numpy as jnp
from jax.experimental import pallas as pl
from jax.experimental.pallas import tpu as pltpu

K = 7            # kernel_size of every Conv1dtranspose block
POOL_OUT = 19    # nn.AdaptiveAvgPool1d(19)
N_CLASSES = 100  # Linout(out_size=100)
N_OUT_PAD = 128  # lane-dense padded output width


# ----------------------------------------------------------------------------
# Fused kernel: one batch tile (TB samples).  Activations live in VMEM in an
# l-major / batch-minor 2-D layout (row = l*TB + b); every conv tap, pool
# bucket and the flatten are static, sublane-aligned row slices.
# ----------------------------------------------------------------------------
def _adapt_rm_kernel(x_ref, wc1_ref, bc1_ref, wc2_ref, bc2_ref,
                     wc3_ref, bc3_ref, wc4_ref, bc4_ref,
                     w1_ref, b1_ref, w2_ref, b2_ref, o_ref, *,
                     tb, pool_bounds):
    def im2col(h, taps, rows_out):
        # `taps` contiguous, sublane-aligned row slices (stride tb, tb % 8 == 0)
        # concatenated along lanes -> one wide-K matmul operand.
        return jnp.concatenate(
            [h[k * tb:k * tb + rows_out, :] for k in range(taps)], axis=-1)

    def conv_relu(h, w_ref, b_ref):
        # h: (L_in*tb, C_in) value; w_ref: (K*C_in, C_out); b_ref: (1, C_out)
        taps = w_ref.shape[0] // h.shape[1]
        rows_out = h.shape[0] - (taps - 1) * tb
        slab = im2col(h, taps, rows_out)                     # (rows_out, K*C_in)
        y = jnp.dot(slab, w_ref[...], preferred_element_type=jnp.float32)
        return jnp.maximum(y + b_ref[...], 0.0)              # Dropout = id (eval)

    h = x_ref[0]                                             # (L*tb, C_in)

    h = conv_relu(h, wc1_ref, bc1_ref)                       # (L1*tb, 32)
    h = conv_relu(h, wc2_ref, bc2_ref)                       # (L2*tb, 64)

    # AdaptiveAvgPool1d(19): static row-slice averaging (VPU adds only).
    pooled = []
    for s, e in pool_bounds:                                 # static unroll
        acc = h[s * tb:(s + 1) * tb, :]
        for l in range(s + 1, e):
            acc = acc + h[l * tb:(l + 1) * tb, :]
        pooled.append(acc * (1.0 / (e - s)))
    h = jnp.concatenate(pooled, axis=0)                      # (19*tb, 64)

    h = conv_relu(h, wc3_ref, bc3_ref)                       # (13*tb, 32)
    h = conv_relu(h, wc4_ref, bc4_ref)                       # (7*tb, 64)

    # Flatten (torch's NCL flatten folded into w1's row order) -> (tb, 448).
    n_pos = w1_ref.shape[0] // h.shape[1]
    slab = im2col(h, n_pos, tb)

    # Linear(448, 2048) + ReLU.  bf16 weights / bf16 LHS, f32 accumulation.
    z = jnp.dot(slab.astype(w1_ref.dtype), w1_ref[...],
                preferred_element_type=jnp.float32)
    z = jnp.maximum(z + b1_ref[...], 0.0)                    # Dropout = id (eval)

    # Linear(2048, 128-padded) + Sigmoid; lane-dense output store.
    z = jnp.dot(z.astype(w2_ref.dtype), w2_ref[...],
                preferred_element_type=jnp.float32) + b2_ref[...]
    o_ref[...] = jax.nn.sigmoid(z)


# ----------------------------------------------------------------------------
# Wrapper
# ----------------------------------------------------------------------------
def adapt_rm_forward(x, params, *, block_b=128):
    """x: (B, L, 4) — the first Conv1dtranspose has in_transpose=True."""
    B, L, c_in = x.shape
    L1 = L - (K - 1)
    L2 = L1 - (K - 1)
    L3 = POOL_OUT - (K - 1)
    L4 = L3 - (K - 1)
    c4_out = params["wc4"].shape[1]
    assert params["w1"].shape[0] == L4 * c4_out, "architecture expects 7*64 features"

    # Static AdaptiveAvgPool1d bucket boundaries (L2 -> 19).
    bounds = tuple((o * L2 // POOL_OUT, -(-((o + 1) * L2) // POOL_OUT))
                   for o in range(POOL_OUT))

    # Batch tile: multiple of 8 (sublane-aligned tap slices); pad B to n_t*TB.
    TB = min(-(-B // 8) * 8, max(8, (block_b // 8) * 8))
    n_t = -(-B // TB)
    Bp = n_t * TB

    # Per-tile l-major / batch-minor layout: x_lb[t, l*TB + b, c] = x[t*TB+b, l, c]
    x_pad = jnp.pad(x, ((0, Bp - B), (0, 0), (0, 0)))
    x_lb = jnp.transpose(x_pad.reshape(n_t, TB, L, c_in), (0, 2, 1, 3))
    x_lb = x_lb.reshape(n_t, L * TB, c_in)

    p = params
    weights = (p["wc1"], p["bc1"], p["wc2"], p["bc2"],
               p["wc3"], p["bc3"], p["wc4"], p["bc4"],
               p["w1"], p["b1"], p["w2"], p["b2"])

    def resident(a):          # whole array resident in VMEM across the batch grid
        zeros = (0,) * a.ndim
        return pl.BlockSpec(a.shape, lambda i: zeros)

    flops = 2 * Bp * (L1 * p["wc1"].shape[0] * p["wc1"].shape[1]
                      + L2 * p["wc2"].shape[0] * p["wc2"].shape[1]
                      + L3 * p["wc3"].shape[0] * p["wc3"].shape[1]
                      + L4 * p["wc4"].shape[0] * p["wc4"].shape[1]
                      + p["w1"].shape[0] * p["w1"].shape[1]
                      + p["w2"].shape[0] * p["w2"].shape[1])
    bytes_accessed = (int(np.prod(x_lb.shape)) * x_lb.dtype.itemsize
                      + sum(int(np.prod(w.shape)) * w.dtype.itemsize for w in weights)
                      + Bp * N_OUT_PAD * 4)
    vmem_limit = (12 if TB <= 32 else 32) * 1024 * 1024

    out = pl.pallas_call(
        partial(_adapt_rm_kernel, tb=TB, pool_bounds=bounds),
        out_shape=jax.ShapeDtypeStruct((Bp, N_OUT_PAD), jnp.float32),
        grid=(n_t,),
        in_specs=[pl.BlockSpec((1, L * TB, c_in), lambda i: (i, 0, 0))]
                 + [resident(w) for w in weights],
        out_specs=pl.BlockSpec((TB, N_OUT_PAD), lambda i: (i, 0)),
        compiler_params=pltpu.CompilerParams(
            dimension_semantics=("parallel",),
            vmem_limit_bytes=vmem_limit),
        cost_estimate=pl.CostEstimate(flops=int(flops),
                                      transcendentals=int(Bp * N_OUT_PAD),
                                      bytes_accessed=int(bytes_accessed)),
    )(x_lb, *weights)
    return out[:B, :N_CLASSES]


# ----------------------------------------------------------------------------
# Parameter preparation: torch-layout params -> kernel-layout params (one-time)
# ----------------------------------------------------------------------------
def prepare_params(tp):
    def conv_w2d(w):   # torch (C_out, C_in, K) -> (K*C_in, C_out); row = k*C_in + c_in
        c_out, c_in, k = w.shape
        return jnp.transpose(w, (2, 1, 0)).reshape(k * c_in, c_out)

    # Fold torch's NCL flatten (feature index = c*L4 + l) into w1's row order;
    # the kernel's flatten slab uses column index = l*C4 + c.
    hidden, in_feats = tp["lin1_w"].shape
    c4 = tp["conv4_w"].shape[0]
    l4 = in_feats // c4
    w1 = jnp.transpose(tp["lin1_w"])                                   # (448, H)
    w1 = jnp.transpose(w1.reshape(c4, l4, hidden), (1, 0, 2)).reshape(in_feats, hidden)
    w1 = w1.astype(jnp.bfloat16)                                       # halve weight DMA

    # Pad the head to 128 output lanes (sliced back to 100 in the wrapper).
    w2 = jnp.transpose(tp["lin2_w"])                                   # (H, 100)
    w2 = jnp.pad(w2, ((0, 0), (0, N_OUT_PAD - w2.shape[1]))).astype(jnp.bfloat16)
    b2 = jnp.pad(tp["lin2_b"], (0, N_OUT_PAD - tp["lin2_b"].shape[0]))

    return {
        "wc1": conv_w2d(tp["conv1_w"]), "bc1": tp["conv1_b"].reshape(1, -1),
        "wc2": conv_w2d(tp["conv2_w"]), "bc2": tp["conv2_b"].reshape(1, -1),
        "wc3": conv_w2d(tp["conv3_w"]), "bc3": tp["conv3_b"].reshape(1, -1),
        "wc4": conv_w2d(tp["conv4_w"]), "bc4": tp["conv4_b"].reshape(1, -1),
        "w1": w1, "b1": tp["lin1_b"].reshape(1, -1),
        "w2": w2, "b2": b2.reshape(1, -1),
    }


def init_torch_params(key):
    """Deterministic torch-layout params (Conv1d: (C_out,C_in,K); Linear: (out,in))."""
    ks = jax.random.split(key, 12)

    def u(k, shape, fan_in):
        b = 1.0 / np.sqrt(fan_in)
        return jax.random.uniform(k, shape, jnp.float32, -b, b)

    return {
        "conv1_w": u(ks[0], (32, 4, K), 4 * K),    "conv1_b": u(ks[1], (32,), 4 * K),
        "conv2_w": u(ks[2], (64, 32, K), 32 * K),  "conv2_b": u(ks[3], (64,), 32 * K),
        "conv3_w": u(ks[4], (32, 64, K), 64 * K),  "conv3_b": u(ks[5], (32,), 64 * K),
        "conv4_w": u(ks[6], (64, 32, K), 32 * K),  "conv4_b": u(ks[7], (64,), 32 * K),
        "lin1_w": u(ks[8], (2048, 7 * 64), 7 * 64), "lin1_b": u(ks[9], (2048,), 7 * 64),
        "lin2_w": u(ks[10], (N_CLASSES, 2048), 2048),
        "lin2_b": u(ks[11], (N_CLASSES,), 2048),
    }


# ----------------------------------------------------------------------------
# Pure-JAX reference (mirrors the torch module directly) for validation.
# ----------------------------------------------------------------------------
def adapt_rm_reference(x, tp):
    def conv1d_relu(h_ncl, w, b):  # h: (B, C_in, L), w: (C_out, C_in, K)
        out = jax.lax.conv_general_dilated(
            h_ncl, w, window_strides=(1,), padding="VALID",
            dimension_numbers=("NCH", "OIH", "NCH"))
        return jax.nn.relu(out + b[None, :, None])

    h = jnp.transpose(x, (0, 2, 1))                       # in_transpose
    h = conv1d_relu(h, tp["conv1_w"], tp["conv1_b"])
    h = conv1d_relu(h, tp["conv2_w"], tp["conv2_b"])
    B, _, L2 = h.shape
    P = np.zeros((POOL_OUT, L2), np.float32)
    for o in range(POOL_OUT):
        s = (o * L2) // POOL_OUT
        e = -(-((o + 1) * L2) // POOL_OUT)
        P[o, s:e] = 1.0 / (e - s)
    h = jnp.einsum("bcl,ol->bco", h, jnp.asarray(P))      # AdaptiveAvgPool1d(19)
    h = conv1d_relu(h, tp["conv3_w"], tp["conv3_b"])
    h = conv1d_relu(h, tp["conv4_w"], tp["conv4_b"])
    h = h.reshape(B, -1)                                  # nn.Flatten on NCL tensor
    h = jax.nn.relu(h @ tp["lin1_w"].T + tp["lin1_b"])
    return jax.nn.sigmoid(h @ tp["lin2_w"].T + tp["lin2_b"])


if __name__ == "__main__":
    key = jax.random.PRNGKey(0)
    k_param, k_x = jax.random.split(key)

    B, L = 2, 50  # L=50 -> 44 -> 38 -> pool 19 -> 13 -> 7 (matches in_size=7*64)
    torch_params = init_torch_params(k_param)
    params = prepare_params(torch_params)
    x = jax.random.normal(k_x, (B, L, 4), jnp.float32)

    out = jax.jit(adapt_rm_forward)(x, params)
    out = jax.block_until_ready(out)
    assert out.shape == (B, N_CLASSES)
    assert bool(jnp.all((out > 0.0) & (out < 1.0)))       # sigmoid range

    with jax.default_matmul_precision("highest"):
        ref = adapt_rm_reference(x, torch_params)
    assert float(jnp.max(jnp.abs(out - ref))) < 5e-3

    print("KERNEL_OK")
</pallas_src>

<mosaic_0001>
module attributes {stable_mosaic.version = 11 : i64} {
  func.func @_adapt_rm_kernel(%arg0: i32, %arg1: memref<1x400x4xf32, #tpu.memory_space<vmem>>, %arg2: memref<28x32xf32, #tpu.memory_space<vmem>>, %arg3: memref<1x32xf32, #tpu.memory_space<vmem>>, %arg4: memref<224x64xf32, #tpu.memory_space<vmem>>, %arg5: memref<1x64xf32, #tpu.memory_space<vmem>>, %arg6: memref<448x32xf32, #tpu.memory_space<vmem>>, %arg7: memref<1x32xf32, #tpu.memory_space<vmem>>, %arg8: memref<224x64xf32, #tpu.memory_space<vmem>>, %arg9: memref<1x64xf32, #tpu.memory_space<vmem>>, %arg10: memref<448x2048xbf16, #tpu.memory_space<vmem>>, %arg11: memref<1x2048xf32, #tpu.memory_space<vmem>>, %arg12: memref<2048x128xbf16, #tpu.memory_space<vmem>>, %arg13: memref<1x128xf32, #tpu.memory_space<vmem>>, %arg14: memref<8x128xf32, #tpu.memory_space<vmem>>) attributes {dimension_semantics = [#tpu.dimension_semantics<parallel>], iteration_bounds = array<i64: 1>, scalar_prefetch = 0 : i64, scratch_operands = 0 : i64, tpu.core_type = #tpu.core_type<tc>, window_params = [{transform_indices = @transform_0, window_bounds = array<i64: 1, 400, 4>}, {pipeline_mode = #tpu.pipeline_mode<synchronous>, transform_indices = @transform_1, window_bounds = array<i64: 28, 32>}, {pipeline_mode = #tpu.pipeline_mode<synchronous>, transform_indices = @transform_2, window_bounds = array<i64: 1, 32>}, {pipeline_mode = #tpu.pipeline_mode<synchronous>, transform_indices = @transform_3, window_bounds = array<i64: 224, 64>}, {pipeline_mode = #tpu.pipeline_mode<synchronous>, transform_indices = @transform_4, window_bounds = array<i64: 1, 64>}, {pipeline_mode = #tpu.pipeline_mode<synchronous>, transform_indices = @transform_5, window_bounds = array<i64: 448, 32>}, {pipeline_mode = #tpu.pipeline_mode<synchronous>, transform_indices = @transform_6, window_bounds = array<i64: 1, 32>}, {pipeline_mode = #tpu.pipeline_mode<synchronous>, transform_indices = @transform_7, window_bounds = array<i64: 224, 64>}, {pipeline_mode = #tpu.pipeline_mode<synchronous>, transform_indices = @transform_8, window_bounds = array<i64: 1, 64>}, {pipeline_mode = #tpu.pipeline_mode<synchronous>, transform_indices = @transform_9, window_bounds = array<i64: 448, 2048>}, {pipeline_mode = #tpu.pipeline_mode<synchronous>, transform_indices = @transform_10, window_bounds = array<i64: 1, 2048>}, {pipeline_mode = #tpu.pipeline_mode<synchronous>, transform_indices = @transform_11, window_bounds = array<i64: 2048, 128>}, {pipeline_mode = #tpu.pipeline_mode<synchronous>, transform_indices = @transform_12, window_bounds = array<i64: 1, 128>}, {transform_indices = @transform_13, window_bounds = array<i64: 8, 128>}]} {
    %c0 = arith.constant 0 : index
    %c0_0 = arith.constant 0 : index
    %c0_1 = arith.constant 0 : index
    %0 = vector.load %arg1[%c0, %c0_0, %c0_1] : memref<1x400x4xf32, #tpu.memory_space<vmem>>, vector<1x400x4xf32>
    %1 = vector.shape_cast %0 : vector<1x400x4xf32> to vector<400x4xf32>
    %2 = vector.extract_strided_slice %1 {offsets = [0, 0], sizes = [352, 4], strides = [1, 1]} : vector<400x4xf32> to vector<352x4xf32>
    %3 = vector.extract_strided_slice %1 {offsets = [8, 0], sizes = [352, 4], strides = [1, 1]} : vector<400x4xf32> to vector<352x4xf32>
    %4 = vector.extract_strided_slice %1 {offsets = [16, 0], sizes = [352, 4], strides = [1, 1]} : vector<400x4xf32> to vector<352x4xf32>
    %5 = vector.extract_strided_slice %1 {offsets = [24, 0], sizes = [352, 4], strides = [1, 1]} : vector<400x4xf32> to vector<352x4xf32>
    %6 = vector.extract_strided_slice %1 {offsets = [32, 0], sizes = [352, 4], strides = [1, 1]} : vector<400x4xf32> to vector<352x4xf32>
    %7 = vector.extract_strided_slice %1 {offsets = [40, 0], sizes = [352, 4], strides = [1, 1]} : vector<400x4xf32> to vector<352x4xf32>
    %8 = vector.extract_strided_slice %1 {offsets = [48, 0], sizes = [352, 4], strides = [1, 1]} : vector<400x4xf32> to vector<352x4xf32>
    %9 = tpu.concatenate %2, %3, %4, %5, %6, %7, %8 in 1 : vector<352x4xf32>, vector<352x4xf32>, vector<352x4xf32>, vector<352x4xf32>, vector<352x4xf32>, vector<352x4xf32>, vector<352x4xf32> -> vector<352x28xf32>
    %c0_2 = arith.constant 0 : index
    %c0_3 = arith.constant 0 : index
    %10 = vector.load %arg2[%c0_2, %c0_3] : memref<28x32xf32, #tpu.memory_space<vmem>>, vector<28x32xf32>
    %cst = arith.constant dense<0.000000e+00> : vector<352x32xf32>
    %11 = tpu.matmul %9, %10, %cst {dimension_numbers = #tpu.dot_dimension_numbers<[1], [0], [0], [1], [0, 0, 1, 1], [], []>} : vector<352x28xf32>, vector<28x32xf32>, vector<352x32xf32> -> vector<352x32xf32>
    %c0_4 = arith.constant 0 : index
    %c0_5 = arith.constant 0 : index
    %12 = vector.load %arg3[%c0_4, %c0_5] : memref<1x32xf32, #tpu.memory_space<vmem>>, vector<1x32xf32>
    %13 = vector.broadcast %12 : vector<1x32xf32> to vector<352x32xf32>
    %14 = arith.addf %11, %13 : vector<352x32xf32>
    %cst_6 = arith.constant 0.000000e+00 : f32
    %15 = vector.broadcast %cst_6 : f32 to vector<352x32xf32>
    %16 = arith.maximumf %14, %15 : vector<352x32xf32>
    %17 = vector.extract_strided_slice %16 {offsets = [0, 0], sizes = [304, 32], strides = [1, 1]} : vector<352x32xf32> to vector<304x32xf32>
    %18 = vector.extract_strided_slice %16 {offsets = [8, 0], sizes = [304, 32], strides = [1, 1]} : vector<352x32xf32> to vector<304x32xf32>
    %19 = vector.extract_strided_slice %16 {offsets = [16, 0], sizes = [304, 32], strides = [1, 1]} : vector<352x32xf32> to vector<304x32xf32>
    %20 = vector.extract_strided_slice %16 {offsets = [24, 0], sizes = [304, 32], strides = [1, 1]} : vector<352x32xf32> to vector<304x32xf32>
    %21 = vector.extract_strided_slice %16 {offsets = [32, 0], sizes = [304, 32], strides = [1, 1]} : vector<352x32xf32> to vector<304x32xf32>
    %22 = vector.extract_strided_slice %16 {offsets = [40, 0], sizes = [304, 32], strides = [1, 1]} : vector<352x32xf32> to vector<304x32xf32>
    %23 = vector.extract_strided_slice %16 {offsets = [48, 0], sizes = [304, 32], strides = [1, 1]} : vector<352x32xf32> to vector<304x32xf32>
    %24 = tpu.concatenate %17, %18, %19, %20, %21, %22, %23 in 1 : vector<304x32xf32>, vector<304x32xf32>, vector<304x32xf32>, vector<304x32xf32>, vector<304x32xf32>, vector<304x32xf32>, vector<304x32xf32> -> vector<304x224xf32>
    %c0_7 = arith.constant 0 : index
    %c0_8 = arith.constant 0 : index
    %25 = vector.load %arg4[%c0_7, %c0_8] : memref<224x64xf32, #tpu.memory_space<vmem>>, vector<224x64xf32>
    %cst_9 = arith.constant dense<0.000000e+00> : vector<304x64xf32>
    %26 = tpu.matmul %24, %25, %cst_9 {dimension_numbers = #tpu.dot_dimension_numbers<[1], [0], [0], [1], [0, 0, 1, 1], [], []>} : vector<304x224xf32>, vector<224x64xf32>, vector<304x64xf32> -> vector<304x64xf32>
    %c0_10 = arith.constant 0 : index
    %c0_11 = arith.constant 0 : index
    %27 = vector.load %arg5[%c0_10, %c0_11] : memref<1x64xf32, #tpu.memory_space<vmem>>, vector<1x64xf32>
    %28 = vector.broadcast %27 : vector<1x64xf32> to vector<304x64xf32>
    %29 = arith.addf %26, %28 : vector<304x64xf32>
    %cst_12 = arith.constant 0.000000e+00 : f32
    %30 = vector.broadcast %cst_12 : f32 to vector<304x64xf32>
    %31 = arith.maximumf %29, %30 : vector<304x64xf32>
    %32 = vector.extract_strided_slice %31 {offsets = [0, 0], sizes = [8, 64], strides = [1, 1]} : vector<304x64xf32> to vector<8x64xf32>
    %33 = vector.extract_strided_slice %31 {offsets = [8, 0], sizes = [8, 64], strides = [1, 1]} : vector<304x64xf32> to vector<8x64xf32>
    %34 = arith.addf %32, %33 : vector<8x64xf32>
    %cst_13 = arith.constant 5.000000e-01 : f32
    %35 = vector.broadcast %cst_13 : f32 to vector<8x64xf32>
    %36 = arith.mulf %34, %35 : vector<8x64xf32>
    %37 = vector.extract_strided_slice %31 {offsets = [16, 0], sizes = [8, 64], strides = [1, 1]} : vector<304x64xf32> to vector<8x64xf32>
    %38 = vector.extract_strided_slice %31 {offsets = [24, 0], sizes = [8, 64], strides = [1, 1]} : vector<304x64xf32> to vector<8x64xf32>
    %39 = arith.addf %37, %38 : vector<8x64xf32>
    %cst_14 = arith.constant 5.000000e-01 : f32
    %40 = vector.broadcast %cst_14 : f32 to vector<8x64xf32>
    %41 = arith.mulf %39, %40 : vector<8x64xf32>
    %42 = vector.extract_strided_slice %31 {offsets = [32, 0], sizes = [8, 64], strides = [1, 1]} : vector<304x64xf32> to vector<8x64xf32>
    %43 = vector.extract_strided_slice %31 {offsets = [40, 0], sizes = [8, 64], strides = [1, 1]} : vector<304x64xf32> to vector<8x64xf32>
    %44 = arith.addf %42, %43 : vector<8x64xf32>
    %cst_15 = arith.constant 5.000000e-01 : f32
    %45 = vector.broadcast %cst_15 : f32 to vector<8x64xf32>
    %46 = arith.mulf %44, %45 : vector<8x64xf32>
    %47 = vector.extract_strided_slice %31 {offsets = [48, 0], sizes = [8, 64], strides = [1, 1]} : vector<304x64xf32> to vector<8x64xf32>
    %48 = vector.extract_strided_slice %31 {offsets = [56, 0], sizes = [8, 64], strides = [1, 1]} : vector<304x64xf32> to vector<8x64xf32>
    %49 = arith.addf %47, %48 : vector<8x64xf32>
    %cst_16 = arith.constant 5.000000e-01 : f32
    %50 = vector.broadcast %cst_16 : f32 to vector<8x64xf32>
    %51 = arith.mulf %49, %50 : vector<8x64xf32>
    %52 = vector.extract_strided_slice %31 {offsets = [64, 0], sizes = [8, 64], strides = [1, 1]} : vector<304x64xf32> to vector<8x64xf32>
    %53 = vector.extract_strided_slice %31 {offsets = [72, 0], sizes = [8, 64], strides = [1, 1]} : vector<304x64xf32> to vector<8x64xf32>
    %54 = arith.addf %52, %53 : vector<8x64xf32>
    %cst_17 = arith.constant 5.000000e-01 : f32
    %55 = vector.broadcast %cst_17 : f32 to vector<8x64xf32>
    %56 = arith.mulf %54, %55 : vector<8x64xf32>
    %57 = vector.extract_strided_slice %31 {offsets = [80, 0], sizes = [8, 64], strides = [1, 1]} : vector<304x64xf32> to vector<8x64xf32>
    %58 = vector.extract_strided_slice %31 {offsets = [88, 0], sizes = [8, 64], strides = [1, 1]} : vector<304x64xf32> to vector<8x64xf32>
    %59 = arith.addf %57, %58 : vector<8x64xf32>
    %cst_18 = arith.constant 5.000000e-01 : f32
    %60 = vector.broadcast %cst_18 : f32 to vector<8x64xf32>
    %61 = arith.mulf %59, %60 : vector<8x64xf32>
    %62 = vector.extract_strided_slice %31 {offsets = [96, 0], sizes = [8, 64], strides = [1, 1]} : vector<304x64xf32> to vector<8x64xf32>
    %63 = vector.extract_strided_slice %31 {offsets = [104, 0], sizes = [8, 64], strides = [1, 1]} : vector<304x64xf32> to vector<8x64xf32>
    %64 = arith.addf %62, %63 : vector<8x64xf32>
    %cst_19 = arith.constant 5.000000e-01 : f32
    %65 = vector.broadcast %cst_19 : f32 to vector<8x64xf32>
    %66 = arith.mulf %64, %65 : vector<8x64xf32>
    %67 = vector.extract_strided_slice %31 {offsets = [112, 0], sizes = [8, 64], strides = [1, 1]} : vector<304x64xf32> to vector<8x64xf32>
    %68 = vector.extract_strided_slice %31 {offsets = [120, 0], sizes = [8, 64], strides = [1, 1]} : vector<304x64xf32> to vector<8x64xf32>
    %69 = arith.addf %67, %68 : vector<8x64xf32>
    %cst_20 = arith.constant 5.000000e-01 : f32
    %70 = vector.broadcast %cst_20 : f32 to vector<8x64xf32>
    %71 = arith.mulf %69, %70 : vector<8x64xf32>
    %72 = vector.extract_strided_slice %31 {offsets = [128, 0], sizes = [8, 64], strides = [1, 1]} : vector<304x64xf32> to vector<8x64xf32>
    %73 = vector.extract_strided_slice %31 {offsets = [136, 0], sizes = [8, 64], strides = [1, 1]} : vector<304x64xf32> to vector<8x64xf32>
    %74 = arith.addf %72, %73 : vector<8x64xf32>
    %cst_21 = arith.constant 5.000000e-01 : f32
    %75 = vector.broadcast %cst_21 : f32 to vector<8x64xf32>
    %76 = arith.mulf %74, %75 : vector<8x64xf32>
    %77 = vector.extract_strided_slice %31 {offsets = [144, 0], sizes = [8, 64], strides = [1, 1]} : vector<304x64xf32> to vector<8x64xf32>
    %78 = vector.extract_strided_slice %31 {offsets = [152, 0], sizes = [8, 64], strides = [1, 1]} : vector<304x64xf32> to vector<8x64xf32>
    %79 = arith.addf %77, %78 : vector<8x64xf32>
    %cst_22 = arith.constant 5.000000e-01 : f32
    %80 = vector.broadcast %cst_22 : f32 to vector<8x64xf32>
    %81 = arith.mulf %79, %80 : vector<8x64xf32>
    %82 = vector.extract_strided_slice %31 {offsets = [160, 0], sizes = [8, 64], strides = [1, 1]} : vector<304x64xf32> to vector<8x64xf32>
    %83 = vector.extract_strided_slice %31 {offsets = [168, 0], sizes = [8, 64], strides = [1, 1]} : vector<304x64xf32> to vector<8x64xf32>
    %84 = arith.addf %82, %83 : vector<8x64xf32>
    %cst_23 = arith.constant 5.000000e-01 : f32
    %85 = vector.broadcast %cst_23 : f32 to vector<8x64xf32>
    %86 = arith.mulf %84, %85 : vector<8x64xf32>
    %87 = vector.extract_strided_slice %31 {offsets = [176, 0], sizes = [8, 64], strides = [1, 1]} : vector<304x64xf32> to vector<8x64xf32>
    %88 = vector.extract_strided_slice %31 {offsets = [184, 0], sizes = [8, 64], strides = [1, 1]} : vector<304x64xf32> to vector<8x64xf32>
    %89 = arith.addf %87, %88 : vector<8x64xf32>
    %cst_24 = arith.constant 5.000000e-01 : f32
    %90 = vector.broadcast %cst_24 : f32 to vector<8x64xf32>
    %91 = arith.mulf %89, %90 : vector<8x64xf32>
    %92 = vector.extract_strided_slice %31 {offsets = [192, 0], sizes = [8, 64], strides = [1, 1]} : vector<304x64xf32> to vector<8x64xf32>
    %93 = vector.extract_strided_slice %31 {offsets = [200, 0], sizes = [8, 64], strides = [1, 1]} : vector<304x64xf32> to vector<8x64xf32>
    %94 = arith.addf %92, %93 : vector<8x64xf32>
    %cst_25 = arith.constant 5.000000e-01 : f32
    %95 = vector.broadcast %cst_25 : f32 to vector<8x64xf32>
    %96 = arith.mulf %94, %95 : vector<8x64xf32>
    %97 = vector.extract_strided_slice %31 {offsets = [208, 0], sizes = [8, 64], strides = [1, 1]} : vector<304x64xf32> to vector<8x64xf32>
    %98 = vector.extract_strided_slice %31 {offsets = [216, 0], sizes = [8, 64], strides = [1, 1]} : vector<304x64xf32> to vector<8x64xf32>
    %99 = arith.addf %97, %98 : vector<8x64xf32>
    %cst_26 = arith.constant 5.000000e-01 : f32
    %100 = vector.broadcast %cst_26 : f32 to vector<8x64xf32>
    %101 = arith.mulf %99, %100 : vector<8x64xf32>
    %102 = vector.extract_strided_slice %31 {offsets = [224, 0], sizes = [8, 64], strides = [1, 1]} : vector<304x64xf32> to vector<8x64xf32>
    %103 = vector.extract_strided_slice %31 {offsets = [232, 0], sizes = [8, 64], strides = [1, 1]} : vector<304x64xf32> to vector<8x64xf32>
    %104 = arith.addf %102, %103 : vector<8x64xf32>
    %cst_27 = arith.constant 5.000000e-01 : f32
    %105 = vector.broadcast %cst_27 : f32 to vector<8x64xf32>
    %106 = arith.mulf %104, %105 : vector<8x64xf32>
    %107 = vector.extract_strided_slice %31 {offsets = [240, 0], sizes = [8, 64], strides = [1, 1]} : vector<304x64xf32> to vector<8x64xf32>
    %108 = vector.extract_strided_slice %31 {offsets = [248, 0], sizes = [8, 64], strides = [1, 1]} : vector<304x64xf32> to vector<8x64xf32>
    %109 = arith.addf %107, %108 : vector<8x64xf32>
    %cst_28 = arith.constant 5.000000e-01 : f32
    %110 = vector.broadcast %cst_28 : f32 to vector<8x64xf32>
    %111 = arith.mulf %109, %110 : vector<8x64xf32>
    %112 = vector.extract_strided_slice %31 {offsets = [256, 0], sizes = [8, 64], strides = [1, 1]} : vector<304x64xf32> to vector<8x64xf32>
    %113 = vector.extract_strided_slice %31 {offsets = [264, 0], sizes = [8, 64], strides = [1, 1]} : vector<304x64xf32> to vector<8x64xf32>
    %114 = arith.addf %112, %113 : vector<8x64xf32>
    %cst_29 = arith.constant 5.000000e-01 : f32
    %115 = vector.broadcast %cst_29 : f32 to vector<8x64xf32>
    %116 = arith.mulf %114, %115 : vector<8x64xf32>
    %117 = vector.extract_strided_slice %31 {offsets = [272, 0], sizes = [8, 64], strides = [1, 1]} : vector<304x64xf32> to vector<8x64xf32>
    %118 = vector.extract_strided_slice %31 {offsets = [280, 0], sizes = [8, 64], strides = [1, 1]} : vector<304x64xf32> to vector<8x64xf32>
    %119 = arith.addf %117, %118 : vector<8x64xf32>
    %cst_30 = arith.constant 5.000000e-01 : f32
    %120 = vector.broadcast %cst_30 : f32 to vector<8x64xf32>
    %121 = arith.mulf %119, %120 : vector<8x64xf32>
    %122 = vector.extract_strided_slice %31 {offsets = [288, 0], sizes = [8, 64], strides = [1, 1]} : vector<304x64xf32> to vector<8x64xf32>
    %123 = vector.extract_strided_slice %31 {offsets = [296, 0], sizes = [8, 64], strides = [1, 1]} : vector<304x64xf32> to vector<8x64xf32>
    %124 = arith.addf %122, %123 : vector<8x64xf32>
    %cst_31 = arith.constant 5.000000e-01 : f32
    %125 = vector.broadcast %cst_31 : f32 to vector<8x64xf32>
    %126 = arith.mulf %124, %125 : vector<8x64xf32>
    %127 = tpu.concatenate %36, %41, %46, %51, %56, %61, %66, %71, %76, %81, %86, %91, %96, %101, %106, %111 in 0 : vector<8x64xf32>, vector<8x64xf32>, vector<8x64xf32>, vector<8x64xf32>, vector<8x64xf32>, vector<8x64xf32>, vector<8x64xf32>, vector<8x64xf32>, vector<8x64xf32>, vector<8x64xf32>, vector<8x64xf32>, vector<8x64xf32>, vector<8x64xf32>, vector<8x64xf32>, vector<8x64xf32>, vector<8x64xf32> -> vector<128x64xf32>
    %128 = tpu.concatenate %116, %121, %126 in 0 : vector<8x64xf32>, vector<8x64xf32>, vector<8x64xf32> -> vector<24x64xf32>
    %129 = tpu.concatenate %127, %128 in 0 : vector<128x64xf32>, vector<24x64xf32> -> vector<152x64xf32>
    %130 = vector.extract_strided_slice %129 {offsets = [0, 0], sizes = [104, 64], strides = [1, 1]} : vector<152x64xf32> to vector<104x64xf32>
    %131 = vector.extract_strided_slice %129 {offsets = [8, 0], sizes = [104, 64], strides = [1, 1]} : vector<152x64xf32> to vector<104x64xf32>
    %132 = vector.extract_strided_slice %129 {offsets = [16, 0], sizes = [104, 64], strides = [1, 1]} : vector<152x64xf32> to vector<104x64xf32>
    %133 = vector.extract_strided_slice %129 {offsets = [24, 0], sizes = [104, 64], strides = [1, 1]} : vector<152x64xf32> to vector<104x64xf32>
    %134 = vector.extract_strided_slice %129 {offsets = [32, 0], sizes = [104, 64], strides = [1, 1]} : vector<152x64xf32> to vector<104x64xf32>
    %135 = vector.extract_strided_slice %129 {offsets = [40, 0], sizes = [104, 64], strides = [1, 1]} : vector<152x64xf32> to vector<104x64xf32>
    %136 = vector.extract_strided_slice %129 {offsets = [48, 0], sizes = [104, 64], strides = [1, 1]} : vector<152x64xf32> to vector<104x64xf32>
    %137 = tpu.concatenate %130, %131, %132, %133, %134, %135, %136 in 1 : vector<104x64xf32>, vector<104x64xf32>, vector<104x64xf32>, vector<104x64xf32>, vector<104x64xf32>, vector<104x64xf32>, vector<104x64xf32> -> vector<104x448xf32>
    %c0_32 = arith.constant 0 : index
    %c0_33 = arith.constant 0 : index
    %138 = vector.load %arg6[%c0_32, %c0_33] : memref<448x32xf32, #tpu.memory_space<vmem>>, vector<448x32xf32>
    %cst_34 = arith.constant dense<0.000000e+00> : vector<104x32xf32>
    %139 = tpu.matmul %137, %138, %cst_34 {dimension_numbers = #tpu.dot_dimension_numbers<[1], [0], [0], [1], [0, 0, 1, 1], [], []>} : vector<104x448xf32>, vector<448x32xf32>, vector<104x32xf32> -> vector<104x32xf32>
    %c0_35 = arith.constant 0 : index
    %c0_36 = arith.constant 0 : index
    %140 = vector.load %arg7[%c0_35, %c0_36] : memref<1x32xf32, #tpu.memory_space<vmem>>, vector<1x32xf32>
    %141 = vector.broadcast %140 : vector<1x32xf32> to vector<104x32xf32>
    %142 = arith.addf %139, %141 : vector<104x32xf32>
    %cst_37 = arith.constant 0.000000e+00 : f32
    %143 = vector.broadcast %cst_37 : f32 to vector<104x32xf32>
    %144 = arith.maximumf %142, %143 : vector<104x32xf32>
    %145 = vector.extract_strided_slice %144 {offsets = [0, 0], sizes = [56, 32], strides = [1, 1]} : vector<104x32xf32> to vector<56x32xf32>
    %146 = vector.extract_strided_slice %144 {offsets = [8, 0], sizes = [56, 32], strides = [1, 1]} : vector<104x32xf32> to vector<56x32xf32>
    %147 = vector.extract_strided_slice %144 {offsets = [16, 0], sizes = [56, 32], strides = [1, 1]} : vector<104x32xf32> to vector<56x32xf32>
    %148 = vector.extract_strided_slice %144 {offsets = [24, 0], sizes = [56, 32], strides = [1, 1]} : vector<104x32xf32> to vector<56x32xf32>
    %149 = vector.extract_strided_slice %144 {offsets = [32, 0], sizes = [56, 32], strides = [1, 1]} : vector<104x32xf32> to vector<56x32xf32>
    %150 = vector.extract_strided_slice %144 {offsets = [40, 0], sizes = [56, 32], strides = [1, 1]} : vector<104x32xf32> to vector<56x32xf32>
    %151 = vector.extract_strided_slice %144 {offsets = [48, 0], sizes = [56, 32], strides = [1, 1]} : vector<104x32xf32> to vector<56x32xf32>
    %152 = tpu.concatenate %145, %146, %147, %148, %149, %150, %151 in 1 : vector<56x32xf32>, vector<56x32xf32>, vector<56x32xf32>, vector<56x32xf32>, vector<56x32xf32>, vector<56x32xf32>, vector<56x32xf32> -> vector<56x224xf32>
    %c0_38 = arith.constant 0 : index
    %c0_39 = arith.constant 0 : index
    %153 = vector.load %arg8[%c0_38, %c0_39] : memref<224x64xf32, #tpu.memory_space<vmem>>, vector<224x64xf32>
    %cst_40 = arith.constant dense<0.000000e+00> : vector<56x64xf32>
    %154 = tpu.matmul %152, %153, %cst_40 {dimension_numbers = #tpu.dot_dimension_numbers<[1], [0], [0], [1], [0, 0, 1, 1], [], []>} : vector<56x224xf32>, vector<224x64xf32>, vector<56x64xf32> -> vector<56x64xf32>
    %c0_41 = arith.constant 0 : index
    %c0_42 = arith.constant 0 : index
    %155 = vector.load %arg9[%c0_41, %c0_42] : memref<1x64xf32, #tpu.memory_space<vmem>>, vector<1x64xf32>
    %156 = vector.broadcast %155 : vector<1x64xf32> to vector<56x64xf32>
    %157 = arith.addf %154, %156 : vector<56x64xf32>
    %cst_43 = arith.constant 0.000000e+00 : f32
    %158 = vector.broadcast %cst_43 : f32 to vector<56x64xf32>
    %159 = arith.maximumf %157, %158 : vector<56x64xf32>
    %160 = vector.extract_strided_slice %159 {offsets = [0, 0], sizes = [8, 64], strides = [1, 1]} : vector<56x64xf32> to vector<8x64xf32>
    %161 = vector.extract_strided_slice %159 {offsets = [8, 0], sizes = [8, 64], strides = [1, 1]} : vector<56x64xf32> to vector<8x64xf32>
    %162 = vector.extract_strided_slice %159 {offsets = [16, 0], sizes = [8, 64], strides = [1, 1]} : vector<56x64xf32> to vector<8x64xf32>
    %163 = vector.extract_strided_slice %159 {offsets = [24, 0], sizes = [8, 64], strides = [1, 1]} : vector<56x64xf32> to vector<8x64xf32>
    %164 = vector.extract_strided_slice %159 {offsets = [32, 0], sizes = [8, 64], strides = [1, 1]} : vector<56x64xf32> to vector<8x64xf32>
    %165 = vector.extract_strided_slice %159 {offsets = [40, 0], sizes = [8, 64], strides = [1, 1]} : vector<56x64xf32> to vector<8x64xf32>
    %166 = vector.extract_strided_slice %159 {offsets = [48, 0], sizes = [8, 64], strides = [1, 1]} : vector<56x64xf32> to vector<8x64xf32>
    %167 = tpu.concatenate %160, %161, %162, %163, %164, %165, %166 in 1 : vector<8x64xf32>, vector<8x64xf32>, vector<8x64xf32>, vector<8x64xf32>, vector<8x64xf32>, vector<8x64xf32>, vector<8x64xf32> -> vector<8x448xf32>
    %168 = arith.truncf %167 : vector<8x448xf32> to vector<8x448xbf16>
    %c0_44 = arith.constant 0 : index
    %c0_45 = arith.constant 0 : index
    %169 = vector.load %arg10[%c0_44, %c0_45] : memref<448x2048xbf16, #tpu.memory_space<vmem>>, vector<448x2048xbf16>
    %cst_46 = arith.constant dense<0.000000e+00> : vector<8x2048xf32>
    %170 = tpu.matmul %168, %169, %cst_46 {dimension_numbers = #tpu.dot_dimension_numbers<[1], [0], [0], [1], [0, 0, 1, 1], [], []>} : vector<8x448xbf16>, vector<448x2048xbf16>, vector<8x2048xf32> -> vector<8x2048xf32>
    %c0_47 = arith.constant 0 : index
    %c0_48 = arith.constant 0 : index
    %171 = vector.load %arg11[%c0_47, %c0_48] : memref<1x2048xf32, #tpu.memory_space<vmem>>, vector<1x2048xf32>
    %172 = vector.broadcast %171 : vector<1x2048xf32> to vector<8x2048xf32>
    %173 = arith.addf %170, %172 : vector<8x2048xf32>
    %cst_49 = arith.constant 0.000000e+00 : f32
    %174 = vector.broadcast %cst_49 : f32 to vector<8x2048xf32>
    %175 = arith.maximumf %173, %174 : vector<8x2048xf32>
    %176 = arith.truncf %175 : vector<8x2048xf32> to vector<8x2048xbf16>
    %c0_50 = arith.constant 0 : index
    %c0_51 = arith.constant 0 : index
    %177 = vector.load %arg12[%c0_50, %c0_51] : memref<2048x128xbf16, #tpu.memory_space<vmem>>, vector<2048x128xbf16>
    %cst_52 = arith.constant dense<0.000000e+00> : vector<8x128xf32>
    %178 = tpu.matmul %176, %177, %cst_52 {dimension_numbers = #tpu.dot_dimension_numbers<[1], [0], [0], [1], [0, 0, 1, 1], [], []>} : vector<8x2048xbf16>, vector<2048x128xbf16>, vector<8x128xf32> -> vector<8x128xf32>
    %c0_53 = arith.constant 0 : index
    %c0_54 = arith.constant 0 : index
    %179 = vector.load %arg13[%c0_53, %c0_54] : memref<1x128xf32, #tpu.memory_space<vmem>>, vector<1x128xf32>
    %180 = vector.broadcast %179 : vector<1x128xf32> to vector<8x128xf32>
    %181 = arith.addf %178, %180 : vector<8x128xf32>
    %182 = arith.negf %181 : vector<8x128xf32>
    %183 = math.exp %182 : vector<8x128xf32>
    %cst_55 = arith.constant 1.000000e+00 : f32
    %184 = vector.broadcast %cst_55 : f32 to vector<8x128xf32>
    %185 = arith.addf %184, %183 : vector<8x128xf32>
    %186 = arith.divf %184, %185 : vector<8x128xf32>
    %c0_56 = arith.constant 0 : index
    %c0_57 = arith.constant 0 : index
    %187 = vector.load %arg14[%c0_56, %c0_57] : memref<8x128xf32, #tpu.memory_space<vmem>>, vector<8x128xf32>
    tpu.vector_store %arg14[%c0_56, %c0_57], %186 {strides = array<i32>} : memref<8x128xf32, #tpu.memory_space<vmem>>, vector<8x128xf32>,
    return
  }
  func.func @transform_0(%arg0: i32) -> (i32, i32, i32) {
    %c0_i32 = arith.constant 0 : i32
    %c0_i32_0 = arith.constant 0 : i32
    %c0_i32_1 = arith.constant 0 : i32
    return %arg0, %c0_i32, %c0_i32_0 : i32, i32, i32
  }
  func.func @transform_1(%arg0: i32) -> (i32, i32) {
    %c0_i32 = arith.constant 0 : i32
    %c0_i32_0 = arith.constant 0 : i32
    %c0_i32_1 = arith.constant 0 : i32
    return %c0_i32, %c0_i32_0 : i32, i32
  }
  func.func @transform_2(%arg0: i32) -> (i32, i32) {
    %c0_i32 = arith.constant 0 : i32
    %c0_i32_0 = arith.constant 0 : i32
    %c0_i32_1 = arith.constant 0 : i32
    return %c0_i32, %c0_i32_0 : i32, i32
  }
  func.func @transform_3(%arg0: i32) -> (i32, i32) {
    %c0_i32 = arith.constant 0 : i32
    %c0_i32_0 = arith.constant 0 : i32
    %c0_i32_1 = arith.constant 0 : i32
    return %c0_i32, %c0_i32_0 : i32, i32
  }
  func.func @transform_4(%arg0: i32) -> (i32, i32) {
    %c0_i32 = arith.constant 0 : i32
    %c0_i32_0 = arith.constant 0 : i32
    %c0_i32_1 = arith.constant 0 : i32
    return %c0_i32, %c0_i32_0 : i32, i32
  }
  func.func @transform_5(%arg0: i32) -> (i32, i32) {
    %c0_i32 = arith.constant 0 : i32
    %c0_i32_0 = arith.constant 0 : i32
    %c0_i32_1 = arith.constant 0 : i32
    return %c0_i32, %c0_i32_0 : i32, i32
  }
  func.func @transform_6(%arg0: i32) -> (i32, i32) {
    %c0_i32 = arith.constant 0 : i32
    %c0_i32_0 = arith.constant 0 : i32
    %c0_i32_1 = arith.constant 0 : i32
    return %c0_i32, %c0_i32_0 : i32, i32
  }
  func.func @transform_7(%arg0: i32) -> (i32, i32) {
    %c0_i32 = arith.constant 0 : i32
    %c0_i32_0 = arith.constant 0 : i32
    %c0_i32_1 = arith.constant 0 : i32
    return %c0_i32, %c0_i32_0 : i32, i32
  }
  func.func @transform_8(%arg0: i32) -> (i32, i32) {
    %c0_i32 = arith.constant 0 : i32
    %c0_i32_0 = arith.constant 0 : i32
    %c0_i32_1 = arith.constant 0 : i32
    return %c0_i32, %c0_i32_0 : i32, i32
  }
  func.func @transform_9(%arg0: i32) -> (i32, i32) {
    %c0_i32 = arith.constant 0 : i32
    %c0_i32_0 = arith.constant 0 : i32
    %c0_i32_1 = arith.constant 0 : i32
    return %c0_i32, %c0_i32_0 : i32, i32
  }
  func.func @transform_10(%arg0: i32) -> (i32, i32) {
    %c0_i32 = arith.constant 0 : i32
    %c0_i32_0 = arith.constant 0 : i32
    %c0_i32_1 = arith.constant 0 : i32
    return %c0_i32, %c0_i32_0 : i32, i32
  }
  func.func @transform_11(%arg0: i32) -> (i32, i32) {
    %c0_i32 = arith.constant 0 : i32
    %c0_i32_0 = arith.constant 0 : i32
    %c0_i32_1 = arith.constant 0 : i32
    return %c0_i32, %c0_i32_0 : i32, i32
  }
  func.func @transform_12(%arg0: i32) -> (i32, i32) {
    %c0_i32 = arith.constant 0 : i32
    %c0_i32_0 = arith.constant 0 : i32
    %c0_i32_1 = arith.constant 0 : i32
    return %c0_i32, %c0_i32_0 : i32, i32
  }
  func.func @transform_13(%arg0: i32) -> (i32, i32) {
    %c0_i32 = arith.constant 0 : i32
    %c0_i32_0 = arith.constant 0 : i32
    return %arg0, %c0_i32 : i32, i32
  }
}

</mosaic_0001>

<llo_original>
// kernel: adapt_rm_forward.1
$region0: #{adapt_rm_forward.1}
  #allocation0 [shape = 'u32[]', space=smem, size = 0x4, offset = 0x4, fixed_abs, tag = 'smem constant byte address 0x4 - core index']
  #allocation1 [shape = 'u32[72,128]{1,0:T(1,128)}', space=vmem, size = 0x9000, scoped, tag = 'internal scratch']
  %s0 = inlined_call_operand.vmem [shape: f32[1,400,4], index: 0, kind: input, shape index: {}]
  %s1 = inlined_call_operand.hbm [shape: f32[28,32], index: 1, kind: input, shape index: {}]
  %s2 = inlined_call_operand.hbm [shape: f32[1,32], index: 2, kind: input, shape index: {}]
  %s3 = inlined_call_operand.vmem [shape: f32[224,64], index: 3, kind: input, shape index: {}]
  %s4 = inlined_call_operand.hbm [shape: f32[1,64], index: 4, kind: input, shape index: {}]
  %s5 = inlined_call_operand.vmem [shape: f32[448,32], index: 5, kind: input, shape index: {}]
  %s6 = inlined_call_operand.hbm [shape: f32[1,32], index: 6, kind: input, shape index: {}]
  %s7 = inlined_call_operand.vmem [shape: f32[224,64], index: 7, kind: input, shape index: {}]
  %s8 = inlined_call_operand.hbm [shape: f32[1,64], index: 8, kind: input, shape index: {}]
  %s9 = inlined_call_operand.hbm [shape: bf16[448,2048], index: 9, kind: input, shape index: {}]
  %s10 = inlined_call_operand.hbm [shape: f32[1,2048], index: 10, kind: input, shape index: {}]
  %s11 = inlined_call_operand.hbm [shape: bf16[2048,128], index: 11, kind: input, shape index: {}]
  %s12 = inlined_call_operand.hbm [shape: f32[1,128], index: 12, kind: input, shape index: {}]
  %s13 = inlined_call_operand.vmem [shape: f32[8,128], index: 13, kind: output, shape index: {}]
  %s14 = sld [smem:[#allocation0]]
  $region98: #{adapt_rm_forward.1} parent=0
    _
  %s16 = ssub.s32 1, %s14
  %s17 = scalar_select 0, %s16, %s14
  $region1: #{adapt_rm_forward.1} parent=0
    #allocation2 [shape = 'u8[16384]{0}', space=vmem, size = 0x4000, scoped, tag = 'input window, operand 1, single buffered']
    #allocation3 [shape = 's32[1]{0}', space=sflag, size = 0x4, scoped, tag = 'scoped memory for adapt_rm_forward.1']
    #allocation4 [shape = 'u8[512]{0}', space=vmem, size = 0x400, scoped, tag = 'input window, operand 2, single buffered']
    #allocation5 [shape = 's32[1]{0}', space=sflag, size = 0x4, scoped, tag = 'scoped memory for adapt_rm_forward.1']
    #allocation6 [shape = 'u8[512]{0}', space=vmem, size = 0x400, scoped, tag = 'input window, operand 4, single buffered']
    #allocation7 [shape = 'u8[512]{0}', space=vmem, size = 0x400, scoped, tag = 'input window, operand 6, single buffered']
    #allocation8 [shape = 's32[1]{0}', space=sflag, size = 0x4, scoped, tag = 'scoped memory for adapt_rm_forward.1']
    #allocation9 [shape = 'u8[512]{0}', space=vmem, size = 0x400, scoped, tag = 'input window, operand 8, single buffered']
    #allocation10 [shape = 'u8[1835008]{0}', space=vmem, size = 0x1c0000, scoped, tag = 'input window, operand 9, single buffered']
    #allocation11 [shape = 's32[1]{0}', space=sflag, size = 0x4, scoped, tag = 'scoped memory for adapt_rm_forward.1']
    #allocation12 [shape = 'u8[8192]{0}', space=vmem, size = 0x2000, scoped, tag = 'input window, operand 10, single buffered']
    #allocation13 [shape = 'u8[524288]{0}', space=vmem, size = 0x80000, scoped, tag = 'input window, operand 11, single buffered']
    #allocation14 [shape = 's32[1]{0}', space=sflag, size = 0x4, scoped, tag = 'scoped memory for adapt_rm_forward.1']
    #allocation15 [shape = 'u8[512]{0}', space=vmem, size = 0x400, scoped, tag = 'input window, operand 12, single buffered']
    %18 = vsyncpa [#allocation3], 0
    %19 = vsyncpa [#allocation5], 0
    %20 = vsyncpa [#allocation8], 0
    %21 = vsyncpa [#allocation11], 0
    %22 = vsyncpa [#allocation14], 0
    // Predicated region
    $region2: #{adapt_rm_forward.1} parent=1 // pred_check
      _
    $region3: #{adapt_rm_forward.1} parent=1 // pred_check_branch
      %24 = sbr.rel (0) target = $region5
    $region4: #{adapt_rm_forward.1} parent=1 // pred_region
      _
    $region5: #{adapt_rm_forward.1} parent=1 // pred_fallthru
      _
    // Predicated region
    $region6: #{adapt_rm_forward.1} parent=1 // pred_check
      _
    $region7: #{adapt_rm_forward.1} parent=1 // pred_check_branch
      %26 = sbr.rel (0) target = $region9
    $region8: #{adapt_rm_forward.1} parent=1 // pred_region
      %28 = vsyncadd [#allocation3], 0
      %s29 = sshll.u32 %s1, 4
      %s30 = int_to_ptr.hbm [resolvable:$true] %s29
      %s31 = sshll.u32 [#allocation2], 4
      %s32 = int_to_ptr.vmem [resolvable:$true] %s31
      %37 = dma.hbm_to_vmem [thread:$0]  %s30, 512, %s32, [#allocation3], 128, 128, 8
    $region9: #{adapt_rm_forward.1} parent=1 // pred_fallthru
      _
    // Predicated region
    $region10: #{adapt_rm_forward.1} parent=1 // pred_check
      _
    $region11: #{adapt_rm_forward.1} parent=1 // pred_check_branch
      %39 = sbr.rel (0) target = $region13
    $region12: #{adapt_rm_forward.1} parent=1 // pred_region
      %41 = vsyncadd [#allocation5], 0
      %s43 = sshll.u32 %s2, 4
      %s44 = int_to_ptr.hbm [resolvable:$true] %s43
      %s45 = sshll.u32 [#allocation4], 4
      %s46 = int_to_ptr.vmem [resolvable:$true] %s45
      %48 = dma.hbm_to_vmem [thread:$0]  %s44, 16, %s46, [#allocation5]
    $region13: #{adapt_rm_forward.1} parent=1 // pred_fallthru
      _
    // Predicated region
    $region14: #{adapt_rm_forward.1} parent=1 // pred_check
      _
    $region15: #{adapt_rm_forward.1} parent=1 // pred_check_branch
      %50 = sbr.rel (0) target = $region17
    $region16: #{adapt_rm_forward.1} parent=1 // pred_region
      _
    $region17: #{adapt_rm_forward.1} parent=1 // pred_fallthru
      _
    // Predicated region
    $region18: #{adapt_rm_forward.1} parent=1 // pred_check
      _
    $region19: #{adapt_rm_forward.1} parent=1 // pred_check_branch
      %52 = sbr.rel (0) target = $region21
    $region20: #{adapt_rm_forward.1} parent=1 // pred_region
      %54 = vsyncadd [#allocation5], 0
      %s56 = sshll.u32 %s4, 4
      %s57 = int_to_ptr.hbm [resolvable:$true] %s56
      %s58 = sshll.u32 [#allocation6], 4
      %s59 = int_to_ptr.vmem [resolvable:$true] %s58
      %61 = dma.hbm_to_vmem [thread:$0]  %s57, 16, %s59, [#allocation5]
    $region21: #{adapt_rm_forward.1} parent=1 // pred_fallthru
      _
    // Predicated region
    $region22: #{adapt_rm_forward.1} parent=1 // pred_check
      _
    $region23: #{adapt_rm_forward.1} parent=1 // pred_check_branch
      %63 = sbr.rel (0) target = $region25
    $region24: #{adapt_rm_forward.1} parent=1 // pred_region
      _
    $region25: #{adapt_rm_forward.1} parent=1 // pred_fallthru
      _
    // Predicated region
    $region26: #{adapt_rm_forward.1} parent=1 // pred_check
      _
    $region27: #{adapt_rm_forward.1} parent=1 // pred_check_branch
      %65 = sbr.rel (0) target = $region29
    $region28: #{adapt_rm_forward.1} parent=1 // pred_region
      %67 = vsyncadd [#allocation8], 0
      %s69 = sshll.u32 %s6, 4
      %s70 = int_to_ptr.hbm [resolvable:$true] %s69
      %s71 = sshll.u32 [#allocation7], 4
      %s72 = int_to_ptr.vmem [resolvable:$true] %s71
      %74 = dma.hbm_to_vmem [thread:$0]  %s70, 16, %s72, [#allocation8]
    $region29: #{adapt_rm_forward.1} parent=1 // pred_fallthru
      _
    // Predicated region
    $region30: #{adapt_rm_forward.1} parent=1 // pred_check
      _
    $region31: #{adapt_rm_forward.1} parent=1 // pred_check_branch
      %76 = sbr.rel (0) target = $region33
    $region32: #{adapt_rm_forward.1} parent=1 // pred_region
      _
    $region33: #{adapt_rm_forward.1} parent=1 // pred_fallthru
      _
    // Predicated region
    $region34: #{adapt_rm_forward.1} parent=1 // pred_check
      _
    $region35: #{adapt_rm_forward.1} parent=1 // pred_check_branch
      %78 = sbr.rel (0) target = $region37
    $region36: #{adapt_rm_forward.1} parent=1 // pred_region
      %80 = vsyncadd [#allocation8], 0
      %s82 = sshll.u32 %s8, 4
      %s83 = int_to_ptr.hbm [resolvable:$true] %s82
      %s84 = sshll.u32 [#allocation9], 4
      %s85 = int_to_ptr.vmem [resolvable:$true] %s84
      %87 = dma.hbm_to_vmem [thread:$0]  %s83, 16, %s85, [#allocation8]
    $region37: #{adapt_rm_forward.1} parent=1 // pred_fallthru
      _
    // Predicated region
    $region38: #{adapt_rm_forward.1} parent=1 // pred_check
      _
    $region39: #{adapt_rm_forward.1} parent=1 // pred_check_branch
      %89 = sbr.rel (0) target = $region41
    $region40: #{adapt_rm_forward.1} parent=1 // pred_region
      %91 = vsyncadd [#allocation11], 0
      %s92 = sshll.u32 %s9, 4
      %s93 = int_to_ptr.hbm [resolvable:$true] %s92
      %s94 = sshll.u32 [#allocation10], 4
      %s95 = int_to_ptr.vmem [resolvable:$true] %s94
      %100 = dma.hbm_to_vmem [thread:$0]  %s93, 57344, %s95, [#allocation11], 1024, 1024, 64
    $region41: #{adapt_rm_forward.1} parent=1 // pred_fallthru
      _
    // Predicated region
    $region42: #{adapt_rm_forward.1} parent=1 // pred_check
      _
    $region43: #{adapt_rm_forward.1} parent=1 // pred_check_branch
      %102 = sbr.rel (0) target = $region45
    $region44: #{adapt_rm_forward.1} parent=1 // pred_region
      %104 = vsyncadd [#allocation11], 0
      %s106 = sshll.u32 %s10, 4
      %s107 = int_to_ptr.hbm [resolvable:$true] %s106
      %s108 = sshll.u32 [#allocation12], 4
      %s109 = int_to_ptr.vmem [resolvable:$true] %s108
      %111 = dma.hbm_to_vmem [thread:$0]  %s107, 256, %s109, [#allocation11]
    $region45: #{adapt_rm_forward.1} parent=1 // pred_fallthru
      _
    // Predicated region
    $region46: #{adapt_rm_forward.1} parent=1 // pred_check
      _
    $region47: #{adapt_rm_forward.1} parent=1 // pred_check_branch
      %113 = sbr.rel (0) target = $region49
    $region48: #{adapt_rm_forward.1} parent=1 // pred_region
      %115 = vsyncadd [#allocation14], 0
      %s116 = sshll.u32 %s11, 4
      %s117 = int_to_ptr.hbm [resolvable:$true] %s116
      %s118 = sshll.u32 [#allocation13], 4
      %s119 = int_to_ptr.vmem [resolvable:$true] %s118
      %124 = dma.hbm_to_vmem [thread:$0]  %s117, 16384, %s119, [#allocation14], 64, 64, 4
    $region49: #{adapt_rm_forward.1} parent=1 // pred_fallthru
      _
    // Predicated region
    $region50: #{adapt_rm_forward.1} parent=1 // pred_check
      _
    $region51: #{adapt_rm_forward.1} parent=1 // pred_check_branch
      %126 = sbr.rel (0) target = $region53
    $region52: #{adapt_rm_forward.1} parent=1 // pred_region
      %128 = vsyncadd [#allocation14], 0
      %s130 = sshll.u32 %s12, 4
      %s131 = int_to_ptr.hbm [resolvable:$true] %s130
      %s132 = sshll.u32 [#allocation15], 4
      %s133 = int_to_ptr.vmem [resolvable:$true] %s132
      %135 = dma.hbm_to_vmem [thread:$0]  %s131, 16, %s133, [#allocation14]
    $region53: #{adapt_rm_forward.1} parent=1 // pred_fallthru
      _
    // Predicated region
    $region54: #{adapt_rm_forward.1} parent=1 // pred_check
      _
    $region55: #{adapt_rm_forward.1} parent=1 // pred_check_branch
      %137 = sbr.rel (0) target = $region57
    $region56: #{adapt_rm_forward.1} parent=1 // pred_region
      %139 = dma.done [#allocation3], 512
    $region57: #{adapt_rm_forward.1} parent=1 // pred_fallthru
      _
    // Predicated region
    $region58: #{adapt_rm_forward.1} parent=1 // pred_check
      _
    $region59: #{adapt_rm_forward.1} parent=1 // pred_check_branch
      %141 = sbr.rel (0) target = $region61
    $region60: #{adapt_rm_forward.1} parent=1 // pred_region
      %143 = dma.done [#allocation5], 16
    $region61: #{adapt_rm_forward.1} parent=1 // pred_fallthru
      _
    // Predicated region
    $region62: #{adapt_rm_forward.1} parent=1 // pred_check
      _
    $region63: #{adapt_rm_forward.1} parent=1 // pred_check_branch
      %145 = sbr.rel (0) target = $region65
    $region64: #{adapt_rm_forward.1} parent=1 // pred_region
      %147 = dma.done [#allocation5], 16
    $region65: #{adapt_rm_forward.1} parent=1 // pred_fallthru
      _
    // Predicated region
    $region66: #{adapt_rm_forward.1} parent=1 // pred_check
      _
    $region67: #{adapt_rm_forward.1} parent=1 // pred_check_branch
      %149 = sbr.rel (0) target = $region69
    $region68: #{adapt_rm_forward.1} parent=1 // pred_region
      %151 = dma.done [#allocation8], 16
    $region69: #{adapt_rm_forward.1} parent=1 // pred_fallthru
      _
    // Predicated region
    $region70: #{adapt_rm_forward.1} parent=1 // pred_check
      _
    $region71: #{adapt_rm_forward.1} parent=1 // pred_check_branch
      %153 = sbr.rel (0) target = $region73
    $region72: #{adapt_rm_forward.1} parent=1 // pred_region
      %155 = dma.done [#allocation8], 16
    $region73: #{adapt_rm_forward.1} parent=1 // pred_fallthru
      _
    // Predicated region
    $region74: #{adapt_rm_forward.1} parent=1 // pred_check
      _
    $region75: #{adapt_rm_forward.1} parent=1 // pred_check_branch
      %157 = sbr.rel (0) target = $region77
    $region76: #{adapt_rm_forward.1} parent=1 // pred_region
      %159 = dma.done [#allocation11], 57344
    $region77: #{adapt_rm_forward.1} parent=1 // pred_fallthru
      _
    // Predicated region
    $region78: #{adapt_rm_forward.1} parent=1 // pred_check
      _
    $region79: #{adapt_rm_forward.1} parent=1 // pred_check_branch
      %161 = sbr.rel (0) target = $region81
    $region80: #{adapt_rm_forward.1} parent=1 // pred_region
      %163 = dma.done [#allocation11], 256
    $region81: #{adapt_rm_forward.1} parent=1 // pred_fallthru
      _
    // Predicated region
    $region82: #{adapt_rm_forward.1} parent=1 // pred_check
      _
    $region83: #{adapt_rm_forward.1} parent=1 // pred_check_branch
      %165 = sbr.rel (0) target = $region85
    $region84: #{adapt_rm_forward.1} parent=1 // pred_region
      %167 = dma.done [#allocation14], 16384
    $region85: #{adapt_rm_forward.1} parent=1 // pred_fallthru
      _
    // Predicated region
    $region86: #{adapt_rm_forward.1} parent=1 // pred_check
      _
    $region87: #{adapt_rm_forward.1} parent=1 // pred_check_branch
      %169 = sbr.rel (0) target = $region89
    $region88: #{adapt_rm_forward.1} parent=1 // pred_region
      %171 = dma.done [#allocation14], 16
    $region89: #{adapt_rm_forward.1} parent=1 // pred_fallthru
      _
    %v173 = vld [vmem:[%s0] sm:$0xff]
    %v174 = vld [vmem:[%s0 + $0x8] sm:$0xff]
    %v175 = vld [vmem:[%s0 + $0x10] sm:$0xff]
    %v176 = vld [vmem:[%s0 + $0x18] sm:$0xff]
    %v177 = vld [vmem:[%s0 + $0x20] sm:$0xff]
    %v178 = vld [vmem:[%s0 + $0x28] sm:$0xff]
    %v179 = vld [vmem:[%s0 + $0x30] sm:$0xff]
    %v180 = vld [vmem:[%s0 + $0x38] sm:$0xff]
    %v181 = vld [vmem:[%s0 + $0x40] sm:$0xff]
    %v182 = vld [vmem:[%s0 + $0x48] sm:$0xff]
    %v183 = vld [vmem:[%s0 + $0x50] sm:$0xff]
    %v184 = vld [vmem:[%s0 + $0x58] sm:$0xff]
    %v185 = vld [vmem:[%s0 + $0x60] sm:$0xff]
    %v186 = vld [vmem:[%s0 + $0x68] sm:$0xff]
    %v187 = vld [vmem:[%s0 + $0x70] sm:$0xff]
    %v188 = vld [vmem:[%s0 + $0x78] sm:$0xff]
    %v189 = vld [vmem:[%s0 + $0x80] sm:$0xff]
    %v190 = vld [vmem:[%s0 + $0x88] sm:$0xff]
    %v191 = vld [vmem:[%s0 + $0x90] sm:$0xff]
    %v192 = vld [vmem:[%s0 + $0x98] sm:$0xff]
    %v193 = vld [vmem:[%s0 + $0xa0] sm:$0xff]
    %v194 = vld [vmem:[%s0 + $0xa8] sm:$0xff]
    %v195 = vld [vmem:[%s0 + $0xb0] sm:$0xff]
    %v196 = vld [vmem:[%s0 + $0xb8] sm:$0xff]
    %v197 = vld [vmem:[%s0 + $0xc0] sm:$0xff]
    %v198 = vld [vmem:[%s0 + $0xc8] sm:$0xff]
    %v199 = vld [vmem:[%s0 + $0xd0] sm:$0xff]
    %v200 = vld [vmem:[%s0 + $0xd8] sm:$0xff]
    %v201 = vld [vmem:[%s0 + $0xe0] sm:$0xff]
    %v202 = vld [vmem:[%s0 + $0xe8] sm:$0xff]
    %v203 = vld [vmem:[%s0 + $0xf0] sm:$0xff]
    %v204 = vld [vmem:[%s0 + $0xf8] sm:$0xff]
    %v205 = vld [vmem:[%s0 + $0x100] sm:$0xff]
    %v206 = vld [vmem:[%s0 + $0x108] sm:$0xff]
    %v207 = vld [vmem:[%s0 + $0x110] sm:$0xff]
    %v208 = vld [vmem:[%s0 + $0x118] sm:$0xff]
    %v209 = vld [vmem:[%s0 + $0x120] sm:$0xff]
    %v210 = vld [vmem:[%s0 + $0x128] sm:$0xff]
    %v211 = vld [vmem:[%s0 + $0x130] sm:$0xff]
    %v212 = vld [vmem:[%s0 + $0x138] sm:$0xff]
    %v213 = vld [vmem:[%s0 + $0x140] sm:$0xff]
    %v214 = vld [vmem:[%s0 + $0x148] sm:$0xff]
    %v215 = vld [vmem:[%s0 + $0x150] sm:$0xff]
    %v216 = vld [vmem:[%s0 + $0x158] sm:$0xff]
    %v217 = vld [vmem:[%s0 + $0x160] sm:$0xff]
    %v218 = vld [vmem:[%s0 + $0x168] sm:$0xff]
    %v219 = vld [vmem:[%s0 + $0x170] sm:$0xff]
    %v220 = vld [vmem:[%s0 + $0x178] sm:$0xff]
    %v221 = vld [vmem:[%s0 + $0x180] sm:$0xff]
    %v222 = vld [vmem:[%s0 + $0x188] sm:$0xff]
    %267 = vrot.lane.b32.xlu0 %v174, 4
    %v268 = vpop.permute.xlu0 %267
    %269 = vrot.lane.b32.xlu0 %v175, 4
    %v270 = vpop.permute.xlu0 %269
    %271 = vrot.lane.b32.xlu0 %v176, 4
    %v272 = vpop.permute.xlu0 %271
    %273 = vrot.lane.b32.xlu0 %v177, 4
    %v274 = vpop.permute.xlu0 %273
    %275 = vrot.lane.b32.xlu0 %v178, 4
    %v276 = vpop.permute.xlu0 %275
    %277 = vrot.lane.b32.xlu0 %v179, 4
    %v278 = vpop.permute.xlu0 %277
    %279 = vrot.lane.b32.xlu0 %v180, 4
    %v280 = vpop.permute.xlu0 %279
    %281 = vrot.lane.b32.xlu0 %v181, 4
    %v282 = vpop.permute.xlu0 %281
    %283 = vrot.lane.b32.xlu0 %v182, 4
    %v284 = vpop.permute.xlu0 %283
    %285 = vrot.lane.b32.xlu0 %v183, 4
    %v286 = vpop.permute.xlu0 %285
    %287 = vrot.lane.b32.xlu0 %v184, 4
    %v288 = vpop.permute.xlu0 %287
    %289 = vrot.lane.b32.xlu0 %v185, 4
    %v290 = vpop.permute.xlu0 %289
    %291 = vrot.lane.b32.xlu0 %v186, 4
    %v292 = vpop.permute.xlu0 %291
    %293 = vrot.lane.b32.xlu0 %v187, 4
    %v294 = vpop.permute.xlu0 %293
    %295 = vrot.lane.b32.xlu0 %v188, 4
    %v296 = vpop.permute.xlu0 %295
    %297 = vrot.lane.b32.xlu0 %v189, 4
    %v298 = vpop.permute.xlu0 %297
    %299 = vrot.lane.b32.xlu0 %v190, 4
    %v300 = vpop.permute.xlu0 %299
    %301 = vrot.lane.b32.xlu0 %v191, 4
    %v302 = vpop.permute.xlu0 %301
    %303 = vrot.lane.b32.xlu0 %v192, 4
    %v304 = vpop.permute.xlu0 %303
    %305 = vrot.lane.b32.xlu0 %v193, 4
    %v306 = vpop.permute.xlu0 %305
    %307 = vrot.lane.b32.xlu0 %v194, 4
    %v308 = vpop.permute.xlu0 %307
    %309 = vrot.lane.b32.xlu0 %v195, 4
    %v310 = vpop.permute.xlu0 %309
    %311 = vrot.lane.b32.xlu0 %v196, 4
    %v312 = vpop.permute.xlu0 %311
    %313 = vrot.lane.b32.xlu0 %v197, 4
    %v314 = vpop.permute.xlu0 %313
    %315 = vrot.lane.b32.xlu0 %v198, 4
    %v316 = vpop.permute.xlu0 %315
    %317 = vrot.lane.b32.xlu0 %v199, 4
    %v318 = vpop.permute.xlu0 %317
    %319 = vrot.lane.b32.xlu0 %v200, 4
    %v320 = vpop.permute.xlu0 %319
    %321 = vrot.lane.b32.xlu0 %v201, 4
    %v322 = vpop.permute.xlu0 %321
    %323 = vrot.lane.b32.xlu0 %v202, 4
    %v324 = vpop.permute.xlu0 %323
    %325 = vrot.lane.b32.xlu0 %v203, 4
    %v326 = vpop.permute.xlu0 %325
    %327 = vrot.lane.b32.xlu0 %v204, 4
    %v328 = vpop.permute.xlu0 %327
    %329 = vrot.lane.b32.xlu0 %v205, 4
    %v330 = vpop.permute.xlu0 %329
    %331 = vrot.lane.b32.xlu0 %v206, 4
    %v332 = vpop.permute.xlu0 %331
    %333 = vrot.lane.b32.xlu0 %v207, 4
    %v334 = vpop.permute.xlu0 %333
    %335 = vrot.lane.b32.xlu0 %v208, 4
    %v336 = vpop.permute.xlu0 %335
    %337 = vrot.lane.b32.xlu0 %v209, 4
    %v338 = vpop.permute.xlu0 %337
    %339 = vrot.lane.b32.xlu0 %v210, 4
    %v340 = vpop.permute.xlu0 %339
    %341 = vrot.lane.b32.xlu0 %v211, 4
    %v342 = vpop.permute.xlu0 %341
    %343 = vrot.lane.b32.xlu0 %v212, 4
    %v344 = vpop.permute.xlu0 %343
    %345 = vrot.lane.b32.xlu0 %v213, 4
    %v346 = vpop.permute.xlu0 %345
    %347 = vrot.lane.b32.xlu0 %v214, 4
    %v348 = vpop.permute.xlu0 %347
    %349 = vrot.lane.b32.xlu0 %v215, 4
    %v350 = vpop.permute.xlu0 %349
    %351 = vrot.lane.b32.xlu0 %v216, 4
    %v352 = vpop.permute.xlu0 %351
    %353 = vrot.lane.b32.xlu0 %v217, 4
    %v354 = vpop.permute.xlu0 %353
    %400 = vrot.lane.b32.xlu0 %v175, 8
    %v401 = vpop.permute.xlu0 %400
    %402 = vrot.lane.b32.xlu0 %v176, 8
    %v403 = vpop.permute.xlu0 %402
    %404 = vrot.lane.b32.xlu0 %v177, 8
    %v405 = vpop.permute.xlu0 %404
    %406 = vrot.lane.b32.xlu0 %v178, 8
    %v407 = vpop.permute.xlu0 %406
    %408 = vrot.lane.b32.xlu0 %v179, 8
    %v409 = vpop.permute.xlu0 %408
    %410 = vrot.lane.b32.xlu0 %v180, 8
    %v411 = vpop.permute.xlu0 %410
    %412 = vrot.lane.b32.xlu0 %v181, 8
    %v413 = vpop.permute.xlu0 %412
    %414 = vrot.lane.b32.xlu0 %v182, 8
    %v415 = vpop.permute.xlu0 %414
    %416 = vrot.lane.b32.xlu0 %v183, 8
    %v417 = vpop.permute.xlu0 %416
    %418 = vrot.lane.b32.xlu0 %v184, 8
    %v419 = vpop.permute.xlu0 %418
    %420 = vrot.lane.b32.xlu0 %v185, 8
    %v421 = vpop.permute.xlu0 %420
    %422 = vrot.lane.b32.xlu0 %v186, 8
    %v423 = vpop.permute.xlu0 %422
    %424 = vrot.lane.b32.xlu0 %v187, 8
    %v425 = vpop.permute.xlu0 %424
    %426 = vrot.lane.b32.xlu0 %v188, 8
    %v427 = vpop.permute.xlu0 %426
    %428 = vrot.lane.b32.xlu0 %v189, 8
    %v429 = vpop.permute.xlu0 %428
    %430 = vrot.lane.b32.xlu0 %v190, 8
    %v431 = vpop.permute.xlu0 %430
    %432 = vrot.lane.b32.xlu0 %v191, 8
    %v433 = vpop.permute.xlu0 %432
    %434 = vrot.lane.b32.xlu0 %v192, 8
    %v435 = vpop.permute.xlu0 %434
    %436 = vrot.lane.b32.xlu0 %v193, 8
    %v437 = vpop.permute.xlu0 %436
    %438 = vrot.lane.b32.xlu0 %v194, 8
    %v439 = vpop.permute.xlu0 %438
    %440 = vrot.lane.b32.xlu0 %v195, 8
    %v441 = vpop.permute.xlu0 %440
    %442 = vrot.lane.b32.xlu0 %v196, 8
    %v443 = vpop.permute.xlu0 %442
    %444 = vrot.lane.b32.xlu0 %v197, 8
    %v445 = vpop.permute.xlu0 %444
    %446 = vrot.lane.b32.xlu0 %v198, 8
    %v447 = vpop.permute.xlu0 %446
    %448 = vrot.lane.b32.xlu0 %v199, 8
    %v449 = vpop.permute.xlu0 %448
    %450 = vrot.lane.b32.xlu0 %v200, 8
    %v451 = vpop.permute.xlu0 %450
    %452 = vrot.lane.b32.xlu0 %v201, 8
    %v453 = vpop.permute.xlu0 %452
    %454 = vrot.lane.b32.xlu0 %v202, 8
    %v455 = vpop.permute.xlu0 %454
    %456 = vrot.lane.b32.xlu0 %v203, 8
    %v457 = vpop.permute.xlu0 %456
    %458 = vrot.lane.b32.xlu0 %v204, 8
    %v459 = vpop.permute.xlu0 %458
    %460 = vrot.lane.b32.xlu0 %v205, 8
    %v461 = vpop.permute.xlu0 %460
    %462 = vrot.lane.b32.xlu0 %v206, 8
    %v463 = vpop.permute.xlu0 %462
    %464 = vrot.lane.b32.xlu0 %v207, 8
    %v465 = vpop.permute.xlu0 %464
    %466 = vrot.lane.b32.xlu0 %v208, 8
    %v467 = vpop.permute.xlu0 %466
    %468 = vrot.lane.b32.xlu0 %v209, 8
    %v469 = vpop.permute.xlu0 %468
    %470 = vrot.lane.b32.xlu0 %v210, 8
    %v471 = vpop.permute.xlu0 %470
    %472 = vrot.lane.b32.xlu0 %v211, 8
    %v473 = vpop.permute.xlu0 %472
    %474 = vrot.lane.b32.xlu0 %v212, 8
    %v475 = vpop.permute.xlu0 %474
    %476 = vrot.lane.b32.xlu0 %v213, 8
    %v477 = vpop.permute.xlu0 %476
    %478 = vrot.lane.b32.xlu0 %v214, 8
    %v479 = vpop.permute.xlu0 %478
    %480 = vrot.lane.b32.xlu0 %v215, 8
    %v481 = vpop.permute.xlu0 %480
    %482 = vrot.lane.b32.xlu0 %v216, 8
    %v483 = vpop.permute.xlu0 %482
    %484 = vrot.lane.b32.xlu0 %v217, 8
    %v485 = vpop.permute.xlu0 %484
    %486 = vrot.lane.b32.xlu0 %v218, 8
    %v487 = vpop.permute.xlu0 %486
    %533 = vrot.lane.b32.xlu0 %v176, 12
    %v534 = vpop.permute.xlu0 %533
    %535 = vrot.lane.b32.xlu0 %v177, 12
    %v536 = vpop.permute.xlu0 %535
    %537 = vrot.lane.b32.xlu0 %v178, 12
    %v538 = vpop.permute.xlu0 %537
    %539 = vrot.lane.b32.xlu0 %v179, 12
    %v540 = vpop.permute.xlu0 %539
    %541 = vrot.lane.b32.xlu0 %v180, 12
    %v542 = vpop.permute.xlu0 %541
    %543 = vrot.lane.b32.xlu0 %v181, 12
    %v544 = vpop.permute.xlu0 %543
    %545 = vrot.lane.b32.xlu0 %v182, 12
    %v546 = vpop.permute.xlu0 %545
    %547 = vrot.lane.b32.xlu0 %v183, 12
    %v548 = vpop.permute.xlu0 %547
    %549 = vrot.lane.b32.xlu0 %v184, 12
    %v550 = vpop.permute.xlu0 %549
    %551 = vrot.lane.b32.xlu0 %v185, 12
    %v552 = vpop.permute.xlu0 %551
    %553 = vrot.lane.b32.xlu0 %v186, 12
    %v554 = vpop.permute.xlu0 %553
    %555 = vrot.lane.b32.xlu0 %v187, 12
    %v556 = vpop.permute.xlu0 %555
    %557 = vrot.lane.b32.xlu0 %v188, 12
    %v558 = vpop.permute.xlu0 %557
    %559 = vrot.lane.b32.xlu0 %v189, 12
    %v560 = vpop.permute.xlu0 %559
    %561 = vrot.lane.b32.xlu0 %v190, 12
    %v562 = vpop.permute.xlu0 %561
    %563 = vrot.lane.b32.xlu0 %v191, 12
    %v564 = vpop.permute.xlu0 %563
    %565 = vrot.lane.b32.xlu0 %v192, 12
    %v566 = vpop.permute.xlu0 %565
    %567 = vrot.lane.b32.xlu0 %v193, 12
    %v568 = vpop.permute.xlu0 %567
    %569 = vrot.lane.b32.xlu0 %v194, 12
    %v570 = vpop.permute.xlu0 %569
    %571 = vrot.lane.b32.xlu0 %v195, 12
    %v572 = vpop.permute.xlu0 %571
    %573 = vrot.lane.b32.xlu0 %v196, 12
    %v574 = vpop.permute.xlu0 %573
    %575 = vrot.lane.b32.xlu0 %v197, 12
    %v576 = vpop.permute.xlu0 %575
    %577 = vrot.lane.b32.xlu0 %v198, 12
    %v578 = vpop.permute.xlu0 %577
    %579 = vrot.lane.b32.xlu0 %v199, 12
    %v580 = vpop.permute.xlu0 %579
    %581 = vrot.lane.b32.xlu0 %v200, 12
    %v582 = vpop.permute.xlu0 %581
    %583 = vrot.lane.b32.xlu0 %v201, 12
    %v584 = vpop.permute.xlu0 %583
    %585 = vrot.lane.b32.xlu0 %v202, 12
    %v586 = vpop.permute.xlu0 %585
    %587 = vrot.lane.b32.xlu0 %v203, 12
    %v588 = vpop.permute.xlu0 %587
    %589 = vrot.lane.b32.xlu0 %v204, 12
    %v590 = vpop.permute.xlu0 %589
    %591 = vrot.lane.b32.xlu0 %v205, 12
    %v592 = vpop.permute.xlu0 %591
    %593 = vrot.lane.b32.xlu0 %v206, 12
    %v594 = vpop.permute.xlu0 %593
    %595 = vrot.lane.b32.xlu0 %v207, 12
    %v596 = vpop.permute.xlu0 %595
    %597 = vrot.lane.b32.xlu0 %v208, 12
    %v598 = vpop.permute.xlu0 %597
    %599 = vrot.lane.b32.xlu0 %v209, 12
    %v600 = vpop.permute.xlu0 %599
    %601 = vrot.lane.b32.xlu0 %v210, 12
    %v602 = vpop.permute.xlu0 %601
    %603 = vrot.lane.b32.xlu0 %v211, 12
    %v604 = vpop.permute.xlu0 %603
    %605 = vrot.lane.b32.xlu0 %v212, 12
    %v606 = vpop.permute.xlu0 %605
    %607 = vrot.lane.b32.xlu0 %v213, 12
    %v608 = vpop.permute.xlu0 %607
    %609 = vrot.lane.b32.xlu0 %v214, 12
    %v610 = vpop.permute.xlu0 %609
    %611 = vrot.lane.b32.xlu0 %v215, 12
    %v612 = vpop.permute.xlu0 %611
    %613 = vrot.lane.b32.xlu0 %v216, 12
    %v614 = vpop.permute.xlu0 %613
    %615 = vrot.lane.b32.xlu0 %v217, 12
    %v616 = vpop.permute.xlu0 %615
    %617 = vrot.lane.b32.xlu0 %v218, 12
    %v618 = vpop.permute.xlu0 %617
    %619 = vrot.lane.b32.xlu0 %v219, 12
    %v620 = vpop.permute.xlu0 %619
    %666 = vrot.lane.b32.xlu0 %v177, 16
    %v667 = vpop.permute.xlu0 %666
    %668 = vrot.lane.b32.xlu0 %v178, 16
    %v669 = vpop.permute.xlu0 %668
    %670 = vrot.lane.b32.xlu0 %v179, 16
    %v671 = vpop.permute.xlu0 %670
    %672 = vrot.lane.b32.xlu0 %v180, 16
    %v673 = vpop.permute.xlu0 %672
    %674 = vrot.lane.b32.xlu0 %v181, 16
    %v675 = vpop.permute.xlu0 %674
    %676 = vrot.lane.b32.xlu0 %v182, 16
    %v677 = vpop.permute.xlu0 %676
    %678 = vrot.lane.b32.xlu0 %v183, 16
    %v679 = vpop.permute.xlu0 %678
    %680 = vrot.lane.b32.xlu0 %v184, 16
    %v681 = vpop.permute.xlu0 %680
    %682 = vrot.lane.b32.xlu0 %v185, 16
    %v683 = vpop.permute.xlu0 %682
    %684 = vrot.lane.b32.xlu0 %v186, 16
    %v685 = vpop.permute.xlu0 %684
    %686 = vrot.lane.b32.xlu0 %v187, 16
    %v687 = vpop.permute.xlu0 %686
    %688 = vrot.lane.b32.xlu0 %v188, 16
    %v689 = vpop.permute.xlu0 %688
    %690 = vrot.lane.b32.xlu0 %v189, 16
    %v691 = vpop.permute.xlu0 %690
    %692 = vrot.lane.b32.xlu0 %v190, 16
    %v693 = vpop.permute.xlu0 %692
    %694 = vrot.lane.b32.xlu0 %v191, 16
    %v695 = vpop.permute.xlu0 %694
    %696 = vrot.lane.b32.xlu0 %v192, 16
    %v697 = vpop.permute.xlu0 %696
    %698 = vrot.lane.b32.xlu0 %v193, 16
    %v699 = vpop.permute.xlu0 %698
    %700 = vrot.lane.b32.xlu0 %v194, 16
    %v701 = vpop.permute.xlu0 %700
    %702 = vrot.lane.b32.xlu0 %v195, 16
    %v703 = vpop.permute.xlu0 %702
    %704 = vrot.lane.b32.xlu0 %v196, 16
    %v705 = vpop.permute.xlu0 %704
    %706 = vrot.lane.b32.xlu0 %v197, 16
    %v707 = vpop.permute.xlu0 %706
    %708 = vrot.lane.b32.xlu0 %v198, 16
    %v709 = vpop.permute.xlu0 %708
    %710 = vrot.lane.b32.xlu0 %v199, 16
    %v711 = vpop.permute.xlu0 %710
    %712 = vrot.lane.b32.xlu0 %v200, 16
    %v713 = vpop.permute.xlu0 %712
    %714 = vrot.lane.b32.xlu0 %v201, 16
    %v715 = vpop.permute.xlu0 %714
    %716 = vrot.lane.b32.xlu0 %v202, 16
    %v717 = vpop.permute.xlu0 %716
    %718 = vrot.lane.b32.xlu0 %v203, 16
    %v719 = vpop.permute.xlu0 %718
    %720 = vrot.lane.b32.xlu0 %v204, 16
    %v721 = vpop.permute.xlu0 %720
    %722 = vrot.lane.b32.xlu0 %v205, 16
    %v723 = vpop.permute.xlu0 %722
    %724 = vrot.lane.b32.xlu0 %v206, 16
    %v725 = vpop.permute.xlu0 %724
    %726 = vrot.lane.b32.xlu0 %v207, 16
    %v727 = vpop.permute.xlu0 %726
    %728 = vrot.lane.b32.xlu0 %v208, 16
    %v729 = vpop.permute.xlu0 %728
    %730 = vrot.lane.b32.xlu0 %v209, 16
    %v731 = vpop.permute.xlu0 %730
    %732 = vrot.lane.b32.xlu0 %v210, 16
    %v733 = vpop.permute.xlu0 %732
    %734 = vrot.lane.b32.xlu0 %v211, 16
    %v735 = vpop.permute.xlu0 %734
    %736 = vrot.lane.b32.xlu0 %v212, 16
    %v737 = vpop.permute.xlu0 %736
    %738 = vrot.lane.b32.xlu0 %v213, 16
    %v739 = vpop.permute.xlu0 %738
    %740 = vrot.lane.b32.xlu0 %v214, 16
    %v741 = vpop.permute.xlu0 %740
    %742 = vrot.lane.b32.xlu0 %v215, 16
    %v743 = vpop.permute.xlu0 %742
    %744 = vrot.lane.b32.xlu0 %v216, 16
    %v745 = vpop.permute.xlu0 %744
    %746 = vrot.lane.b32.xlu0 %v217, 16
    %v747 = vpop.permute.xlu0 %746
    %748 = vrot.lane.b32.xlu0 %v218, 16
    %v749 = vpop.permute.xlu0 %748
    %750 = vrot.lane.b32.xlu0 %v219, 16
    %v751 = vpop.permute.xlu0 %750
    %752 = vrot.lane.b32.xlu0 %v220, 16
    %v753 = vpop.permute.xlu0 %752
    %799 = vrot.lane.b32.xlu0 %v178, 20
    %v800 = vpop.permute.xlu0 %799
    %801 = vrot.lane.b32.xlu0 %v179, 20
    %v802 = vpop.permute.xlu0 %801
    %803 = vrot.lane.b32.xlu0 %v180, 20
    %v804 = vpop.permute.xlu0 %803
    %805 = vrot.lane.b32.xlu0 %v181, 20
    %v806 = vpop.permute.xlu0 %805
    %807 = vrot.lane.b32.xlu0 %v182, 20
    %v808 = vpop.permute.xlu0 %807
    %809 = vrot.lane.b32.xlu0 %v183, 20
    %v810 = vpop.permute.xlu0 %809
    %811 = vrot.lane.b32.xlu0 %v184, 20
    %v812 = vpop.permute.xlu0 %811
    %813 = vrot.lane.b32.xlu0 %v185, 20
    %v814 = vpop.permute.xlu0 %813
    %815 = vrot.lane.b32.xlu0 %v186, 20
    %v816 = vpop.permute.xlu0 %815
    %817 = vrot.lane.b32.xlu0 %v187, 20
    %v818 = vpop.permute.xlu0 %817
    %819 = vrot.lane.b32.xlu0 %v188, 20
    %v820 = vpop.permute.xlu0 %819
    %821 = vrot.lane.b32.xlu0 %v189, 20
    %v822 = vpop.permute.xlu0 %821
    %823 = vrot.lane.b32.xlu0 %v190, 20
    %v824 = vpop.permute.xlu0 %823
    %825 = vrot.lane.b32.xlu0 %v191, 20
    %v826 = vpop.permute.xlu0 %825
    %827 = vrot.lane.b32.xlu0 %v192, 20
    %v828 = vpop.permute.xlu0 %827
    %829 = vrot.lane.b32.xlu0 %v193, 20
    %v830 = vpop.permute.xlu0 %829
    %831 = vrot.lane.b32.xlu0 %v194, 20
    %v832 = vpop.permute.xlu0 %831
    %833 = vrot.lane.b32.xlu0 %v195, 20
    %v834 = vpop.permute.xlu0 %833
    %835 = vrot.lane.b32.xlu0 %v196, 20
    %v836 = vpop.permute.xlu0 %835
    %837 = vrot.lane.b32.xlu0 %v197, 20
    %v838 = vpop.permute.xlu0 %837
    %839 = vrot.lane.b32.xlu0 %v198, 20
    %v840 = vpop.permute.xlu0 %839
    %841 = vrot.lane.b32.xlu0 %v199, 20
    %v842 = vpop.permute.xlu0 %841
    %843 = vrot.lane.b32.xlu0 %v200, 20
    %v844 = vpop.permute.xlu0 %843
    %845 = vrot.lane.b32.xlu0 %v201, 20
    %v846 = vpop.permute.xlu0 %845
    %847 = vrot.lane.b32.xlu0 %v202, 20
    %v848 = vpop.permute.xlu0 %847
    %849 = vrot.lane.b32.xlu0 %v203, 20
    %v850 = vpop.permute.xlu0 %849
    %851 = vrot.lane.b32.xlu0 %v204, 20
    %v852 = vpop.permute.xlu0 %851
    %853 = vrot.lane.b32.xlu0 %v205, 20
    %v854 = vpop.permute.xlu0 %853
    %855 = vrot.lane.b32.xlu0 %v206, 20
    %v856 = vpop.permute.xlu0 %855
    %857 = vrot.lane.b32.xlu0 %v207, 20
    %v858 = vpop.permute.xlu0 %857
    %859 = vrot.lane.b32.xlu0 %v208, 20
    %v860 = vpop.permute.xlu0 %859
    %861 = vrot.lane.b32.xlu0 %v209, 20
    %v862 = vpop.permute.xlu0 %861
    %863 = vrot.lane.b32.xlu0 %v210, 20
    %v864 = vpop.permute.xlu0 %863
    %865 = vrot.lane.b32.xlu0 %v211, 20
    %v866 = vpop.permute.xlu0 %865
    %867 = vrot.lane.b32.xlu0 %v212, 20
    %v868 = vpop.permute.xlu0 %867
    %869 = vrot.lane.b32.xlu0 %v213, 20
    %v870 = vpop.permute.xlu0 %869
    %871 = vrot.lane.b32.xlu0 %v214, 20
    %v872 = vpop.permute.xlu0 %871
    %873 = vrot.lane.b32.xlu0 %v215, 20
    %v874 = vpop.permute.xlu0 %873
    %875 = vrot.lane.b32.xlu0 %v216, 20
    %v876 = vpop.permute.xlu0 %875
    %877 = vrot.lane.b32.xlu0 %v217, 20
    %v878 = vpop.permute.xlu0 %877
    %879 = vrot.lane.b32.xlu0 %v218, 20
    %v880 = vpop.permute.xlu0 %879
    %881 = vrot.lane.b32.xlu0 %v219, 20
    %v882 = vpop.permute.xlu0 %881
    %883 = vrot.lane.b32.xlu0 %v220, 20
    %v884 = vpop.permute.xlu0 %883
    %885 = vrot.lane.b32.xlu0 %v221, 20
    %v886 = vpop.permute.xlu0 %885
    %932 = vrot.lane.b32.xlu0 %v179, 24
    %v933 = vpop.permute.xlu0 %932
    %934 = vrot.lane.b32.xlu0 %v180, 24
    %v935 = vpop.permute.xlu0 %934
    %936 = vrot.lane.b32.xlu0 %v181, 24
    %v937 = vpop.permute.xlu0 %936
    %938 = vrot.lane.b32.xlu0 %v182, 24
    %v939 = vpop.permute.xlu0 %938
    %940 = vrot.lane.b32.xlu0 %v183, 24
    %v941 = vpop.permute.xlu0 %940
    %942 = vrot.lane.b32.xlu0 %v184, 24
    %v943 = vpop.permute.xlu0 %942
    %944 = vrot.lane.b32.xlu0 %v185, 24
    %v945 = vpop.permute.xlu0 %944
    %946 = vrot.lane.b32.xlu0 %v186, 24
    %v947 = vpop.permute.xlu0 %946
    %948 = vrot.lane.b32.xlu0 %v187, 24
    %v949 = vpop.permute.xlu0 %948
    %950 = vrot.lane.b32.xlu0 %v188, 24
    %v951 = vpop.permute.xlu0 %950
    %952 = vrot.lane.b32.xlu0 %v189, 24
    %v953 = vpop.permute.xlu0 %952
    %954 = vrot.lane.b32.xlu0 %v190, 24
    %v955 = vpop.permute.xlu0 %954
    %956 = vrot.lane.b32.xlu0 %v191, 24
    %v957 = vpop.permute.xlu0 %956
    %958 = vrot.lane.b32.xlu0 %v192, 24
    %v959 = vpop.permute.xlu0 %958
    %960 = vrot.lane.b32.xlu0 %v193, 24
    %v961 = vpop.permute.xlu0 %960
    %962 = vrot.lane.b32.xlu0 %v194, 24
    %v963 = vpop.permute.xlu0 %962
    %964 = vrot.lane.b32.xlu0 %v195, 24
    %v965 = vpop.permute.xlu0 %964
    %966 = vrot.lane.b32.xlu0 %v196, 24
    %v967 = vpop.permute.xlu0 %966
    %968 = vrot.lane.b32.xlu0 %v197, 24
    %v969 = vpop.permute.xlu0 %968
    %970 = vrot.lane.b32.xlu0 %v198, 24
    %v971 = vpop.permute.xlu0 %970
    %972 = vrot.lane.b32.xlu0 %v199, 24
    %v973 = vpop.permute.xlu0 %972
    %974 = vrot.lane.b32.xlu0 %v200, 24
    %v975 = vpop.permute.xlu0 %974
    %976 = vrot.lane.b32.xlu0 %v201, 24
    %v977 = vpop.permute.xlu0 %976
    %978 = vrot.lane.b32.xlu0 %v202, 24
    %v979 = vpop.permute.xlu0 %978
    %980 = vrot.lane.b32.xlu0 %v203, 24
    %v981 = vpop.permute.xlu0 %980
    %982 = vrot.lane.b32.xlu0 %v204, 24
    %v983 = vpop.permute.xlu0 %982
    %984 = vrot.lane.b32.xlu0 %v205, 24
    %v985 = vpop.permute.xlu0 %984
    %986 = vrot.lane.b32.xlu0 %v206, 24
    %v987 = vpop.permute.xlu0 %986
    %988 = vrot.lane.b32.xlu0 %v207, 24
    %v989 = vpop.permute.xlu0 %988
    %990 = vrot.lane.b32.xlu0 %v208, 24
    %v991 = vpop.permute.xlu0 %990
    %992 = vrot.lane.b32.xlu0 %v209, 24
    %v993 = vpop.permute.xlu0 %992
    %994 = vrot.lane.b32.xlu0 %v210, 24
    %v995 = vpop.permute.xlu0 %994
    %996 = vrot.lane.b32.xlu0 %v211, 24
    %v997 = vpop.permute.xlu0 %996
    %998 = vrot.lane.b32.xlu0 %v212, 24
    %v999 = vpop.permute.xlu0 %998
    %1000 = vrot.lane.b32.xlu0 %v213, 24
    %v1001 = vpop.permute.xlu0 %1000
    %1002 = vrot.lane.b32.xlu0 %v214, 24
    %v1003 = vpop.permute.xlu0 %1002
    %1004 = vrot.lane.b32.xlu0 %v215, 24
    %v1005 = vpop.permute.xlu0 %1004
    %1006 = vrot.lane.b32.xlu0 %v216, 24
    %v1007 = vpop.permute.xlu0 %1006
    %1008 = vrot.lane.b32.xlu0 %v217, 24
    %v1009 = vpop.permute.xlu0 %1008
    %1010 = vrot.lane.b32.xlu0 %v218, 24
    %v1011 = vpop.permute.xlu0 %1010
    %1012 = vrot.lane.b32.xlu0 %v219, 24
    %v1013 = vpop.permute.xlu0 %1012
    %1014 = vrot.lane.b32.xlu0 %v220, 24
    %v1015 = vpop.permute.xlu0 %1014
    %1016 = vrot.lane.b32.xlu0 %v221, 24
    %v1017 = vpop.permute.xlu0 %1016
    %1018 = vrot.lane.b32.xlu0 %v222, 24
    %v1019 = vpop.permute.xlu0 %1018
    %vm1064 = vcmask 31744
    %v1065 = vsel %vm1064, %v173, %v268
    %v1066 = vsel %vm1064, %v174, %v270
    %v1067 = vsel %vm1064, %v175, %v272
    %v1068 = vsel %vm1064, %v176, %v274
    %v1069 = vsel %vm1064, %v177, %v276
    %v1070 = vsel %vm1064, %v178, %v278
    %v1071 = vsel %vm1064, %v179, %v280
    %v1072 = vsel %vm1064, %v180, %v282
    %v1073 = vsel %vm1064, %v181, %v284
    %v1074 = vsel %vm1064, %v182, %v286
    %v1075 = vsel %vm1064, %v183, %v288
    %v1076 = vsel %vm1064, %v184, %v290
    %v1077 = vsel %vm1064, %v185, %v292
    %v1078 = vsel %vm1064, %v186, %v294
    %v1079 = vsel %vm1064, %v187, %v296
    %v1080 = vsel %vm1064, %v188, %v298
    %v1081 = vsel %vm1064, %v189, %v300
    %v1082 = vsel %vm1064, %v190, %v302
    %v1083 = vsel %vm1064, %v191, %v304
    %v1084 = vsel %vm1064, %v192, %v306
    %v1085 = vsel %vm1064, %v193, %v308
    %v1086 = vsel %vm1064, %v194, %v310
    %v1087 = vsel %vm1064, %v195, %v312
    %v1088 = vsel %vm1064, %v196, %v314
    %v1089 = vsel %vm1064, %v197, %v316
    %v1090 = vsel %vm1064, %v198, %v318
    %v1091 = vsel %vm1064, %v199, %v320
    %v1092 = vsel %vm1064, %v200, %v322
    %v1093 = vsel %vm1064, %v201, %v324
    %v1094 = vsel %vm1064, %v202, %v326
    %v1095 = vsel %vm1064, %v203, %v328
    %v1096 = vsel %vm1064, %v204, %v330
    %v1097 = vsel %vm1064, %v205, %v332
    %v1098 = vsel %vm1064, %v206, %v334
    %v1099 = vsel %vm1064, %v207, %v336
    %v1100 = vsel %vm1064, %v208, %v338
    %v1101 = vsel %vm1064, %v209, %v340
    %v1102 = vsel %vm1064, %v210, %v342
    %v1103 = vsel %vm1064, %v211, %v344
    %v1104 = vsel %vm1064, %v212, %v346
    %v1105 = vsel %vm1064, %v213, %v348
    %v1106 = vsel %vm1064, %v214, %v350
    %v1107 = vsel %vm1064, %v215, %v352
    %v1108 = vsel %vm1064, %v216, %v354
    %vm1109 = vcmask 64512
    %v1110 = vsel %vm1109, %v1065, %v401
    %v1111 = vsel %vm1109, %v1066, %v403
    %v1112 = vsel %vm1109, %v1067, %v405
    %v1113 = vsel %vm1109, %v1068, %v407
    %v1114 = vsel %vm1109, %v1069, %v409
    %v1115 = vsel %vm1109, %v1070, %v411
    %v1116 = vsel %vm1109, %v1071, %v413
    %v1117 = vsel %vm1109, %v1072, %v415
    %v1118 = vsel %vm1109, %v1073, %v417
    %v1119 = vsel %vm1109, %v1074, %v419
    %v1120 = vsel %vm1109, %v1075, %v421
    %v1121 = vsel %vm1109, %v1076, %v423
    %v1122 = vsel %vm1109, %v1077, %v425
    %v1123 = vsel %vm1109, %v1078, %v427
    %v1124 = vsel %vm1109, %v1079, %v429
    %v1125 = vsel %vm1109, %v1080, %v431
    %v1126 = vsel %vm1109, %v1081, %v433
    %v1127 = vsel %vm1109, %v1082, %v435
    %v1128 = vsel %vm1109, %v1083, %v437
    %v1129 = vsel %vm1109, %v1084, %v439
    %v1130 = vsel %vm1109, %v1085, %v441
    %v1131 = vsel %vm1109, %v1086, %v443
    %v1132 = vsel %vm1109, %v1087, %v445
    %v1133 = vsel %vm1109, %v1088, %v447
    %v1134 = vsel %vm1109, %v1089, %v449
    %v1135 = vsel %vm1109, %v1090, %v451
    %v1136 = vsel %vm1109, %v1091, %v453
    %v1137 = vsel %vm1109, %v1092, %v455
    %v1138 = vsel %vm1109, %v1093, %v457
    %v1139 = vsel %vm1109, %v1094, %v459
    %v1140 = vsel %vm1109, %v1095, %v461
    %v1141 = vsel %vm1109, %v1096, %v463
    %v1142 = vsel %vm1109, %v1097, %v465
    %v1143 = vsel %vm1109, %v1098, %v467
    %v1144 = vsel %vm1109, %v1099, %v469
    %v1145 = vsel %vm1109, %v1100, %v471
    %v1146 = vsel %vm1109, %v1101, %v473
    %v1147 = vsel %vm1109, %v1102, %v475
    %v1148 = vsel %vm1109, %v1103, %v477
    %v1149 = vsel %vm1109, %v1104, %v479
    %v1150 = vsel %vm1109, %v1105, %v481
    %v1151 = vsel %vm1109, %v1106, %v483
    %v1152 = vsel %vm1109, %v1107, %v485
    %v1153 = vsel %vm1109, %v1108, %v487
    %vm1154 = vcmask 97280
    %v1155 = vsel %vm1154, %v1110, %v534
    %v1156 = vsel %vm1154, %v1111, %v536
    %v1157 = vsel %vm1154, %v1112, %v538
    %v1158 = vsel %vm1154, %v1113, %v540
    %v1159 = vsel %vm1154, %v1114, %v542
    %v1160 = vsel %vm1154, %v1115, %v544
    %v1161 = vsel %vm1154, %v1116, %v546
    %v1162 = vsel %vm1154, %v1117, %v548
    %v1163 = vsel %vm1154, %v1118, %v550
    %v1164 = vsel %vm1154, %v1119, %v552
    %v1165 = vsel %vm1154, %v1120, %v554
    %v1166 = vsel %vm1154, %v1121, %v556
    %v1167 = vsel %vm1154, %v1122, %v558
    %v1168 = vsel %vm1154, %v1123, %v560
    %v1169 = vsel %vm1154, %v1124, %v562
    %v1170 = vsel %vm1154, %v1125, %v564
    %v1171 = vsel %vm1154, %v1126, %v566
    %v1172 = vsel %vm1154, %v1127, %v568
    %v1173 = vsel %vm1154, %v1128, %v570
    %v1174 = vsel %vm1154, %v1129, %v572
    %v1175 = vsel %vm1154, %v1130, %v574
    %v1176 = vsel %vm1154, %v1131, %v576
    %v1177 = vsel %vm1154, %v1132, %v578
    %v1178 = vsel %vm1154, %v1133, %v580
    %v1179 = vsel %vm1154, %v1134, %v582
    %v1180 = vsel %vm1154, %v1135, %v584
    %v1181 = vsel %vm1154, %v1136, %v586
    %v1182 = vsel %vm1154, %v1137, %v588
    %v1183 = vsel %vm1154, %v1138, %v590
    %v1184 = vsel %vm1154, %v1139, %v592
    %v1185 = vsel %vm1154, %v1140, %v594
    %v1186 = vsel %vm1154, %v1141, %v596
    %v1187 = vsel %vm1154, %v1142, %v598
    %v1188 = vsel %vm1154, %v1143, %v600
    %v1189 = vsel %vm1154, %v1144, %v602
    %v1190 = vsel %vm1154, %v1145, %v604
    %v1191 = vsel %vm1154, %v1146, %v606
    %v1192 = vsel %vm1154, %v1147, %v608
    %v1193 = vsel %vm1154, %v1148, %v610
    %v1194 = vsel %vm1154, %v1149, %v612
    %v1195 = vsel %vm1154, %v1150, %v614
    %v1196 = vsel %vm1154, %v1151, %v616
    %v1197 = vsel %vm1154, %v1152, %v618
    %v1198 = vsel %vm1154, %v1153, %v620
    %vm1199 = vcmask 130048
    %v1200 = vsel %vm1199, %v1155, %v667
    %v1201 = vsel %vm1199, %v1156, %v669
    %v1202 = vsel %vm1199, %v1157, %v671
    %v1203 = vsel %vm1199, %v1158, %v673
    %v1204 = vsel %vm1199, %v1159, %v675
    %v1205 = vsel %vm1199, %v1160, %v677
    %v1206 = vsel %vm1199, %v1161, %v679
    %v1207 = vsel %vm1199, %v1162, %v681
    %v1208 = vsel %vm1199, %v1163, %v683
    %v1209 = vsel %vm1199, %v1164, %v685
    %v1210 = vsel %vm1199, %v1165, %v687
    %v1211 = vsel %vm1199, %v1166, %v689
    %v1212 = vsel %vm1199, %v1167, %v691
    %v1213 = vsel %vm1199, %v1168, %v693
    %v1214 = vsel %vm1199, %v1169, %v695
    %v1215 = vsel %vm1199, %v1170, %v697
    %v1216 = vsel %vm1199, %v1171, %v699
    %v1217 = vsel %vm1199, %v1172, %v701
    %v1218 = vsel %vm1199, %v1173, %v703
    %v1219 = vsel %vm1199, %v1174, %v705
    %v1220 = vsel %vm1199, %v1175, %v707
    %v1221 = vsel %vm1199, %v1176, %v709
    %v1222 = vsel %vm1199, %v1177, %v711
    %v1223 = vsel %vm1199, %v1178, %v713
    %v1224 = vsel %vm1199, %v1179, %v715
    %v1225 = vsel %vm1199, %v1180, %v717
    %v1226 = vsel %vm1199, %v1181, %v719
    %v1227 = vsel %vm1199, %v1182, %v721
    %v1228 = vsel %vm1199, %v1183, %v723
    %v1229 = vsel %vm1199, %v1184, %v725
    %v1230 = vsel %vm1199, %v1185, %v727
    %v1231 = vsel %vm1199, %v1186, %v729
    %v1232 = vsel %vm1199, %v1187, %v731
    %v1233 = vsel %vm1199, %v1188, %v733
    %v1234 = vsel %vm1199, %v1189, %v735
    %v1235 = vsel %vm1199, %v1190, %v737
    %v1236 = vsel %vm1199, %v1191, %v739
    %v1237 = vsel %vm1199, %v1192, %v741
    %v1238 = vsel %vm1199, %v1193, %v743
    %v1239 = vsel %vm1199, %v1194, %v745
    %v1240 = vsel %vm1199, %v1195, %v747
    %v1241 = vsel %vm1199, %v1196, %v749
    %v1242 = vsel %vm1199, %v1197, %v751
    %v1243 = vsel %vm1199, %v1198, %v753
    %vm1244 = vcmask 162816
    %v1245 = vsel %vm1244, %v1200, %v800
    %v1246 = vsel %vm1244, %v1201, %v802
    %v1247 = vsel %vm1244, %v1202, %v804
    %v1248 = vsel %vm1244, %v1203, %v806
    %v1249 = vsel %vm1244, %v1204, %v808
    %v1250 = vsel %vm1244, %v1205, %v810
    %v1251 = vsel %vm1244, %v1206, %v812
    %v1252 = vsel %vm1244, %v1207, %v814
    %v1253 = vsel %vm1244, %v1208, %v816
    %v1254 = vsel %vm1244, %v1209, %v818
    %v1255 = vsel %vm1244, %v1210, %v820
    %v1256 = vsel %vm1244, %v1211, %v822
    %v1257 = vsel %vm1244, %v1212, %v824
    %v1258 = vsel %vm1244, %v1213, %v826
    %v1259 = vsel %vm1244, %v1214, %v828
    %v1260 = vsel %vm1244, %v1215, %v830
    %v1261 = vsel %vm1244, %v1216, %v832
    %v1262 = vsel %vm1244, %v1217, %v834
    %v1263 = vsel %vm1244, %v1218, %v836
    %v1264 = vsel %vm1244, %v1219, %v838
    %v1265 = vsel %vm1244, %v1220, %v840
    %v1266 = vsel %vm1244, %v1221, %v842
    %v1267 = vsel %vm1244, %v1222, %v844
    %v1268 = vsel %vm1244, %v1223, %v846
    %v1269 = vsel %vm1244, %v1224, %v848
    %v1270 = vsel %vm1244, %v1225, %v850
    %v1271 = vsel %vm1244, %v1226, %v852
    %v1272 = vsel %vm1244, %v1227, %v854
    %v1273 = vsel %vm1244, %v1228, %v856
    %v1274 = vsel %vm1244, %v1229, %v858
    %v1275 = vsel %vm1244, %v1230, %v860
    %v1276 = vsel %vm1244, %v1231, %v862
    %v1277 = vsel %vm1244, %v1232, %v864
    %v1278 = vsel %vm1244, %v1233, %v866
    %v1279 = vsel %vm1244, %v1234, %v868
    %v1280 = vsel %vm1244, %v1235, %v870
    %v1281 = vsel %vm1244, %v1236, %v872
    %v1282 = vsel %vm1244, %v1237, %v874
    %v1283 = vsel %vm1244, %v1238, %v876
    %v1284 = vsel %vm1244, %v1239, %v878
    %v1285 = vsel %vm1244, %v1240, %v880
    %v1286 = vsel %vm1244, %v1241, %v882
    %v1287 = vsel %vm1244, %v1242, %v884
    %v1288 = vsel %vm1244, %v1243, %v886
    %vm1289 = vcmask 195584
    %v1290 = vsel %vm1289, %v1245, %v933
    %v1291 = vsel %vm1289, %v1246, %v935
    %v1292 = vsel %vm1289, %v1247, %v937
    %v1293 = vsel %vm1289, %v1248, %v939
    %v1294 = vsel %vm1289, %v1249, %v941
    %v1295 = vsel %vm1289, %v1250, %v943
    %v1296 = vsel %vm1289, %v1251, %v945
    %v1297 = vsel %vm1289, %v1252, %v947
    %v1298 = vsel %vm1289, %v1253, %v949
    %v1299 = vsel %vm1289, %v1254, %v951
    %v1300 = vsel %vm1289, %v1255, %v953
    %v1301 = vsel %vm1289, %v1256, %v955
    %v1302 = vsel %vm1289, %v1257, %v957
    %v1303 = vsel %vm1289, %v1258, %v959
    %v1304 = vsel %vm1289, %v1259, %v961
    %v1305 = vsel %vm1289, %v1260, %v963
    %v1306 = vsel %vm1289, %v1261, %v965
    %v1307 = vsel %vm1289, %v1262, %v967
    %v1308 = vsel %vm1289, %v1263, %v969
    %v1309 = vsel %vm1289, %v1264, %v971
    %v1310 = vsel %vm1289, %v1265, %v973
    %v1311 = vsel %vm1289, %v1266, %v975
    %v1312 = vsel %vm1289, %v1267, %v977
    %v1313 = vsel %vm1289, %v1268, %v979
    %v1314 = vsel %vm1289, %v1269, %v981
    %v1315 = vsel %vm1289, %v1270, %v983
    %v1316 = vsel %vm1289, %v1271, %v985
    %v1317 = vsel %vm1289, %v1272, %v987
    %v1318 = vsel %vm1289, %v1273, %v989
    %v1319 = vsel %vm1289, %v1274, %v991
    %v1320 = vsel %vm1289, %v1275, %v993
    %v1321 = vsel %vm1289, %v1276, %v995
    %v1322 = vsel %vm1289, %v1277, %v997
    %v1323 = vsel %vm1289, %v1278, %v999
    %v1324 = vsel %vm1289, %v1279, %v1001
    %v1325 = vsel %vm1289, %v1280, %v1003
    %v1326 = vsel %vm1289, %v1281, %v1005
    %v1327 = vsel %vm1289, %v1282, %v1007
    %v1328 = vsel %vm1289, %v1283, %v1009
    %v1329 = vsel %vm1289, %v1284, %v1011
    %v1330 = vsel %vm1289, %v1285, %v1013
    %v1331 = vsel %vm1289, %v1286, %v1015
    %v1332 = vsel %vm1289, %v1287, %v1017
    %v1333 = vsel %vm1289, %v1288, %v1019
    %v1334 = vld [vmem:[#allocation2] sm:$0xff]
    %v1335 = vld [vmem:[#allocation2 + $0x8] sm:$0xff]
    %v1336 = vld [vmem:[#allocation2 + $0x10] sm:$0xff]
    %v1337 = vld [vmem:[#allocation2 + $0x18] sm:$0xf]
    %v1338 = vld [vmem:[#allocation4] sm:$0x1]
    %v1340 = vperm.slane %v1338, 0
    %vm1342 = vcmask 228352
    %v1344 = vsel %vm1342, %v1290, 0
    %v1347 = vsel %vm1342, %v1291, 0
    %v1350 = vsel %vm1342, %v1292, 0
    %v1353 = vsel %vm1342, %v1293, 0
    %v1356 = vsel %vm1342, %v1294, 0
    %v1359 = vsel %vm1342, %v1295, 0
    %v1362 = vsel %vm1342, %v1296, 0
    %v1365 = vsel %vm1342, %v1297, 0
    %v1368 = vsel %vm1342, %v1298, 0
    %v1371 = vsel %vm1342, %v1299, 0
    %v1374 = vsel %vm1342, %v1300, 0
    %v1377 = vsel %vm1342, %v1301, 0
    %v1380 = vsel %vm1342, %v1302, 0
    %v1383 = vsel %vm1342, %v1303, 0
    %v1386 = vsel %vm1342, %v1304, 0
    %v1389 = vsel %vm1342, %v1305, 0
    %v1392 = vsel %vm1342, %v1306, 0
    %v1395 = vsel %vm1342, %v1307, 0
    %v1398 = vsel %vm1342, %v1308, 0
    %v1401 = vsel %vm1342, %v1309, 0
    %v1404 = vsel %vm1342, %v1310, 0
    %v1407 = vsel %vm1342, %v1311, 0
    %v1410 = vsel %vm1342, %v1312, 0
    %v1413 = vsel %vm1342, %v1313, 0
    %v1416 = vsel %vm1342, %v1314, 0
    %v1419 = vsel %vm1342, %v1315, 0
    %v1422 = vsel %vm1342, %v1316, 0
    %v1425 = vsel %vm1342, %v1317, 0
    %v1428 = vsel %vm1342, %v1318, 0
    %v1431 = vsel %vm1342, %v1319, 0
    %v1434 = vsel %vm1342, %v1320, 0
    %v1437 = vsel %vm1342, %v1321, 0
    %v1440 = vsel %vm1342, %v1322, 0
    %v1443 = vsel %vm1342, %v1323, 0
    %v1446 = vsel %vm1342, %v1324, 0
    %v1449 = vsel %vm1342, %v1325, 0
    %v1452 = vsel %vm1342, %v1326, 0
    %v1455 = vsel %vm1342, %v1327, 0
    %v1458 = vsel %vm1342, %v1328, 0
    %v1461 = vsel %vm1342, %v1329, 0
    %v1464 = vsel %vm1342, %v1330, 0
    %v1467 = vsel %vm1342, %v1331, 0
    %v1470 = vsel %vm1342, %v1332, 0
    %v1473 = vsel %vm1342, %v1333, 0
    %vm1475 = vcmask 1043456
    %v1477 = vsel %vm1475, %v1337, 0
    %1479 = vmatpush.msra.mxu0 0.0
    %1480 = vmatpush.msra.mxu0 0.0
    %1481 = vmatpush.msra.mxu0 0.0
    %1482 = vmatpush.msra.mxu0 0.0
    %1483 = vmatpush.msra.mxu0 0.0
    %1484 = vmatpush.msra.mxu0 0.0
    %1485 = vmatpush.msra.mxu0 0.0
    %1486 = vmatpush.msra.mxu0 0.0
    %1487 = vmatpush.msra.mxu0 0.0
    %1488 = vmatpush.msra.mxu0 0.0
    %1489 = vmatpush.msra.mxu0 0.0
    %1490 = vmatpush.msra.mxu0 0.0
    %1491 = vmatpush.msra.mxu0 %v1477
    %1492 = vmatpush.msra.mxu0 %v1336
    %1493 = vmatpush.msra.mxu0 %v1335
    %1494 = vmatpush.msra.mxu0 %v1334
    %1495 = vmatmul.f32.gmra.mxu0 %v1344
    %v1496 = vpop.f32.mrf.mxu0
    %v1497 = vadd.f32 %v1340, %v1496
    %1498 = vmatmul.f32.gmra.mxu0 %v1347
    %v1499 = vpop.f32.mrf.mxu0
    %v1500 = vadd.f32 %v1340, %v1499
    %1501 = vmatmul.f32.gmra.mxu0 %v1350
    %v1502 = vpop.f32.mrf.mxu0
    %v1503 = vadd.f32 %v1340, %v1502
    %1504 = vmatmul.f32.gmra.mxu0 %v1353
    %v1505 = vpop.f32.mrf.mxu0
    %v1506 = vadd.f32 %v1340, %v1505
    %1507 = vmatmul.f32.gmra.mxu0 %v1356
    %v1508 = vpop.f32.mrf.mxu0
    %v1509 = vadd.f32 %v1340, %v1508
    %1510 = vmatmul.f32.gmra.mxu0 %v1359
    %v1511 = vpop.f32.mrf.mxu0
    %v1512 = vadd.f32 %v1340, %v1511
    %1513 = vmatmul.f32.gmra.mxu0 %v1362
    %v1514 = vpop.f32.mrf.mxu0
    %v1515 = vadd.f32 %v1340, %v1514
    %1516 = vmatmul.f32.gmra.mxu0 %v1365
    %v1517 = vpop.f32.mrf.mxu0
    %v1518 = vadd.f32 %v1340, %v1517
    %1519 = vmatmul.f32.gmra.mxu0 %v1368
    %v1520 = vpop.f32.mrf.mxu0
    %v1521 = vadd.f32 %v1340, %v1520
    %1522 = vmatmul.f32.gmra.mxu0 %v1371
    %v1523 = vpop.f32.mrf.mxu0
    %v1524 = vadd.f32 %v1340, %v1523
    %1525 = vmatmul.f32.gmra.mxu0 %v1374
    %v1526 = vpop.f32.mrf.mxu0
    %v1527 = vadd.f32 %v1340, %v1526
    %1528 = vmatmul.f32.gmra.mxu0 %v1377
    %v1529 = vpop.f32.mrf.mxu0
    %v1530 = vadd.f32 %v1340, %v1529
    %1531 = vmatmul.f32.gmra.mxu0 %v1380
    %v1532 = vpop.f32.mrf.mxu0
    %v1533 = vadd.f32 %v1340, %v1532
    %1534 = vmatmul.f32.gmra.mxu0 %v1383
    %v1535 = vpop.f32.mrf.mxu0
    %v1536 = vadd.f32 %v1340, %v1535
    %1537 = vmatmul.f32.gmra.mxu0 %v1386
    %v1538 = vpop.f32.mrf.mxu0
    %v1539 = vadd.f32 %v1340, %v1538
    %1540 = vmatmul.f32.gmra.mxu0 %v1389
    %v1541 = vpop.f32.mrf.mxu0
    %v1542 = vadd.f32 %v1340, %v1541
    %1543 = vmatmul.f32.gmra.mxu0 %v1392
    %v1544 = vpop.f32.mrf.mxu0
    %v1545 = vadd.f32 %v1340, %v1544
    %1546 = vmatmul.f32.gmra.mxu0 %v1395
    %v1547 = vpop.f32.mrf.mxu0
    %v1548 = vadd.f32 %v1340, %v1547
    %1549 = vmatmul.f32.gmra.mxu0 %v1398
    %v1550 = vpop.f32.mrf.mxu0
    %v1551 = vadd.f32 %v1340, %v1550
    %1552 = vmatmul.f32.gmra.mxu0 %v1401
    %v1553 = vpop.f32.mrf.mxu0
    %v1554 = vadd.f32 %v1340, %v1553
    %1555 = vmatmul.f32.gmra.mxu0 %v1404
    %v1556 = vpop.f32.mrf.mxu0
    %v1557 = vadd.f32 %v1340, %v1556
    %1558 = vmatmul.f32.gmra.mxu0 %v1407
    %v1559 = vpop.f32.mrf.mxu0
    %v1560 = vadd.f32 %v1340, %v1559
    %1561 = vmatmul.f32.gmra.mxu0 %v1410
    %v1562 = vpop.f32.mrf.mxu0
    %v1563 = vadd.f32 %v1340, %v1562
    %1564 = vmatmul.f32.gmra.mxu0 %v1413
    %v1565 = vpop.f32.mrf.mxu0
    %v1566 = vadd.f32 %v1340, %v1565
    %1567 = vmatmul.f32.gmra.mxu0 %v1416
    %v1568 = vpop.f32.mrf.mxu0
    %v1569 = vadd.f32 %v1340, %v1568
    %1570 = vmatmul.f32.gmra.mxu0 %v1419
    %v1571 = vpop.f32.mrf.mxu0
    %v1572 = vadd.f32 %v1340, %v1571
    %1573 = vmatmul.f32.gmra.mxu0 %v1422
    %v1574 = vpop.f32.mrf.mxu0
    %v1575 = vadd.f32 %v1340, %v1574
    %1576 = vmatmul.f32.gmra.mxu0 %v1425
    %v1577 = vpop.f32.mrf.mxu0
    %v1578 = vadd.f32 %v1340, %v1577
    %1579 = vmatmul.f32.gmra.mxu0 %v1428
    %v1580 = vpop.f32.mrf.mxu0
    %v1581 = vadd.f32 %v1340, %v1580
    %1582 = vmatmul.f32.gmra.mxu0 %v1431
    %v1583 = vpop.f32.mrf.mxu0
    %v1584 = vadd.f32 %v1340, %v1583
    %1585 = vmatmul.f32.gmra.mxu0 %v1434
    %v1586 = vpop.f32.mrf.mxu0
    %v1587 = vadd.f32 %v1340, %v1586
    %1588 = vmatmul.f32.gmra.mxu0 %v1437
    %v1589 = vpop.f32.mrf.mxu0
    %v1590 = vadd.f32 %v1340, %v1589
    %1591 = vmatmul.f32.gmra.mxu0 %v1440
    %v1592 = vpop.f32.mrf.mxu0
    %v1593 = vadd.f32 %v1340, %v1592
    %1594 = vmatmul.f32.gmra.mxu0 %v1443
    %v1595 = vpop.f32.mrf.mxu0
    %v1596 = vadd.f32 %v1340, %v1595
    %1597 = vmatmul.f32.gmra.mxu0 %v1446
    %v1598 = vpop.f32.mrf.mxu0
    %v1599 = vadd.f32 %v1340, %v1598
    %1600 = vmatmul.f32.gmra.mxu0 %v1449
    %v1601 = vpop.f32.mrf.mxu0
    %v1602 = vadd.f32 %v1340, %v1601
    %1603 = vmatmul.f32.gmra.mxu0 %v1452
    %v1604 = vpop.f32.mrf.mxu0
    %v1605 = vadd.f32 %v1340, %v1604
    %1606 = vmatmul.f32.gmra.mxu0 %v1455
    %v1607 = vpop.f32.mrf.mxu0
    %v1608 = vadd.f32 %v1340, %v1607
    %1609 = vmatmul.f32.gmra.mxu0 %v1458
    %v1610 = vpop.f32.mrf.mxu0
    %v1611 = vadd.f32 %v1340, %v1610
    %1612 = vmatmul.f32.gmra.mxu0 %v1461
    %v1613 = vpop.f32.mrf.mxu0
    %v1614 = vadd.f32 %v1340, %v1613
    %1615 = vmatmul.f32.gmra.mxu0 %v1464
    %v1616 = vpop.f32.mrf.mxu0
    %v1617 = vadd.f32 %v1340, %v1616
    %1618 = vmatmul.f32.gmra.mxu0 %v1467
    %v1619 = vpop.f32.mrf.mxu0
    %v1620 = vadd.f32 %v1340, %v1619
    %1621 = vmatmul.f32.gmra.mxu0 %v1470
    %v1622 = vpop.f32.mrf.mxu0
    %v1623 = vadd.f32 %v1340, %v1622
    %1624 = vmatmul.f32.gmra.mxu0 %v1473
    %v1625 = vpop.f32.mrf.mxu0
    %v1626 = vadd.f32 %v1340, %v1625
    %1627 = vdwg.mxu0
    %v1628 = vmax.f32 %v1497, 0.0
    %v1629 = vmax.f32 %v1500, 0.0
    %v1630 = vmax.f32 %v1503, 0.0
    %v1631 = vmax.f32 %v1506, 0.0
    %v1632 = vmax.f32 %v1509, 0.0
    %v1633 = vmax.f32 %v1512, 0.0
    %v1634 = vmax.f32 %v1515, 0.0
    %v1635 = vmax.f32 %v1518, 0.0
    %v1636 = vmax.f32 %v1521, 0.0
    %v1637 = vmax.f32 %v1524, 0.0
    %v1638 = vmax.f32 %v1527, 0.0
    %v1639 = vmax.f32 %v1530, 0.0
    %v1640 = vmax.f32 %v1533, 0.0
    %v1641 = vmax.f32 %v1536, 0.0
    %v1642 = vmax.f32 %v1539, 0.0
    %v1643 = vmax.f32 %v1542, 0.0
    %v1644 = vmax.f32 %v1545, 0.0
    %v1645 = vmax.f32 %v1548, 0.0
    %v1646 = vmax.f32 %v1551, 0.0
    %v1647 = vmax.f32 %v1554, 0.0
    %v1648 = vmax.f32 %v1557, 0.0
    %v1649 = vmax.f32 %v1560, 0.0
    %v1650 = vmax.f32 %v1563, 0.0
    %v1651 = vmax.f32 %v1566, 0.0
    %v1652 = vmax.f32 %v1569, 0.0
    %v1653 = vmax.f32 %v1572, 0.0
    %v1654 = vmax.f32 %v1575, 0.0
    %v1655 = vmax.f32 %v1578, 0.0
    %v1656 = vmax.f32 %v1581, 0.0
    %v1657 = vmax.f32 %v1584, 0.0
    %v1658 = vmax.f32 %v1587, 0.0
    %v1659 = vmax.f32 %v1590, 0.0
    %v1660 = vmax.f32 %v1593, 0.0
    %v1661 = vmax.f32 %v1596, 0.0
    %v1662 = vmax.f32 %v1599, 0.0
    %v1663 = vmax.f32 %v1602, 0.0
    %v1664 = vmax.f32 %v1605, 0.0
    %v1665 = vmax.f32 %v1608, 0.0
    %v1666 = vmax.f32 %v1611, 0.0
    %v1667 = vmax.f32 %v1614, 0.0
    %v1668 = vmax.f32 %v1617, 0.0
    %v1669 = vmax.f32 %v1620, 0.0
    %v1670 = vmax.f32 %v1623, 0.0
    %v1671 = vmax.f32 %v1626, 0.0
    %1710 = vrot.lane.b32.xlu0 %v1629, 32
    %v1711 = vpop.permute.xlu0 %1710
    %1712 = vrot.lane.b32.xlu0 %v1630, 32
    %v1713 = vpop.permute.xlu0 %1712
    %1714 = vrot.lane.b32.xlu0 %v1631, 32
    %v1715 = vpop.permute.xlu0 %1714
    %1716 = vrot.lane.b32.xlu0 %v1632, 32
    %v1717 = vpop.permute.xlu0 %1716
    %1718 = vrot.lane.b32.xlu0 %v1633, 32
    %v1719 = vpop.permute.xlu0 %1718
    %1720 = vrot.lane.b32.xlu0 %v1634, 32
    %v1721 = vpop.permute.xlu0 %1720
    %1722 = vrot.lane.b32.xlu0 %v1635, 32
    %v1723 = vpop.permute.xlu0 %1722
    %1724 = vrot.lane.b32.xlu0 %v1636, 32
    %v1725 = vpop.permute.xlu0 %1724
    %1726 = vrot.lane.b32.xlu0 %v1637, 32
    %v1727 = vpop.permute.xlu0 %1726
    %1728 = vrot.lane.b32.xlu0 %v1638, 32
    %v1729 = vpop.permute.xlu0 %1728
    %1730 = vrot.lane.b32.xlu0 %v1639, 32
    %v1731 = vpop.permute.xlu0 %1730
    %1732 = vrot.lane.b32.xlu0 %v1640, 32
    %v1733 = vpop.permute.xlu0 %1732
    %1734 = vrot.lane.b32.xlu0 %v1641, 32
    %v1735 = vpop.permute.xlu0 %1734
    %1736 = vrot.lane.b32.xlu0 %v1642, 32
    %v1737 = vpop.permute.xlu0 %1736
    %1738 = vrot.lane.b32.xlu0 %v1643, 32
    %v1739 = vpop.permute.xlu0 %1738
    %1740 = vrot.lane.b32.xlu0 %v1644, 32
    %v1741 = vpop.permute.xlu0 %1740
    %1742 = vrot.lane.b32.xlu0 %v1645, 32
    %v1743 = vpop.permute.xlu0 %1742
    %1744 = vrot.lane.b32.xlu0 %v1646, 32
    %v1745 = vpop.permute.xlu0 %1744
    %1746 = vrot.lane.b32.xlu0 %v1647, 32
    %v1747 = vpop.permute.xlu0 %1746
    %1748 = vrot.lane.b32.xlu0 %v1648, 32
    %v1749 = vpop.permute.xlu0 %1748
    %1750 = vrot.lane.b32.xlu0 %v1649, 32
    %v1751 = vpop.permute.xlu0 %1750
    %1752 = vrot.lane.b32.xlu0 %v1650, 32
    %v1753 = vpop.permute.xlu0 %1752
    %1754 = vrot.lane.b32.xlu0 %v1651, 32
    %v1755 = vpop.permute.xlu0 %1754
    %1756 = vrot.lane.b32.xlu0 %v1652, 32
    %v1757 = vpop.permute.xlu0 %1756
    %1758 = vrot.lane.b32.xlu0 %v1653, 32
    %v1759 = vpop.permute.xlu0 %1758
    %1760 = vrot.lane.b32.xlu0 %v1654, 32
    %v1761 = vpop.permute.xlu0 %1760
    %1762 = vrot.lane.b32.xlu0 %v1655, 32
    %v1763 = vpop.permute.xlu0 %1762
    %1764 = vrot.lane.b32.xlu0 %v1656, 32
    %v1765 = vpop.permute.xlu0 %1764
    %1766 = vrot.lane.b32.xlu0 %v1657, 32
    %v1767 = vpop.permute.xlu0 %1766
    %1768 = vrot.lane.b32.xlu0 %v1658, 32
    %v1769 = vpop.permute.xlu0 %1768
    %1770 = vrot.lane.b32.xlu0 %v1659, 32
    %v1771 = vpop.permute.xlu0 %1770
    %1772 = vrot.lane.b32.xlu0 %v1660, 32
    %v1773 = vpop.permute.xlu0 %1772
    %1774 = vrot.lane.b32.xlu0 %v1661, 32
    %v1775 = vpop.permute.xlu0 %1774
    %1776 = vrot.lane.b32.xlu0 %v1662, 32
    %v1777 = vpop.permute.xlu0 %1776
    %1778 = vrot.lane.b32.xlu0 %v1663, 32
    %v1779 = vpop.permute.xlu0 %1778
    %1780 = vrot.lane.b32.xlu0 %v1664, 32
    %v1781 = vpop.permute.xlu0 %1780
    %1782 = vrot.lane.b32.xlu0 %v1665, 32
    %v1783 = vpop.permute.xlu0 %1782
    %1784 = vrot.lane.b32.xlu0 %v1666, 32
    %v1785 = vpop.permute.xlu0 %1784
    %1825 = vrot.lane.b32.xlu0 %v1630, 64
    %v1826 = vpop.permute.xlu0 %1825
    %1827 = vrot.lane.b32.xlu0 %v1631, 64
    %v1828 = vpop.permute.xlu0 %1827
    %1829 = vrot.lane.b32.xlu0 %v1632, 64
    %v1830 = vpop.permute.xlu0 %1829
    %1831 = vrot.lane.b32.xlu0 %v1633, 64
    %v1832 = vpop.permute.xlu0 %1831
    %1833 = vrot.lane.b32.xlu0 %v1634, 64
    %v1834 = vpop.permute.xlu0 %1833
    %1835 = vrot.lane.b32.xlu0 %v1635, 64
    %v1836 = vpop.permute.xlu0 %1835
    %1837 = vrot.lane.b32.xlu0 %v1636, 64
    %v1838 = vpop.permute.xlu0 %1837
    %1839 = vrot.lane.b32.xlu0 %v1637, 64
    %v1840 = vpop.permute.xlu0 %1839
    %1841 = vrot.lane.b32.xlu0 %v1638, 64
    %v1842 = vpop.permute.xlu0 %1841
    %1843 = vrot.lane.b32.xlu0 %v1639, 64
    %v1844 = vpop.permute.xlu0 %1843
    %1845 = vrot.lane.b32.xlu0 %v1640, 64
    %v1846 = vpop.permute.xlu0 %1845
    %1847 = vrot.lane.b32.xlu0 %v1641, 64
    %v1848 = vpop.permute.xlu0 %1847
    %1849 = vrot.lane.b32.xlu0 %v1642, 64
    %v1850 = vpop.permute.xlu0 %1849
    %1851 = vrot.lane.b32.xlu0 %v1643, 64
    %v1852 = vpop.permute.xlu0 %1851
    %1853 = vrot.lane.b32.xlu0 %v1644, 64
    %v1854 = vpop.permute.xlu0 %1853
    %1855 = vrot.lane.b32.xlu0 %v1645, 64
    %v1856 = vpop.permute.xlu0 %1855
    %1857 = vrot.lane.b32.xlu0 %v1646, 64
    %v1858 = vpop.permute.xlu0 %1857
    %1859 = vrot.lane.b32.xlu0 %v1647, 64
    %v1860 = vpop.permute.xlu0 %1859
    %1861 = vrot.lane.b32.xlu0 %v1648, 64
    %v1862 = vpop.permute.xlu0 %1861
    %1863 = vrot.lane.b32.xlu0 %v1649, 64
    %v1864 = vpop.permute.xlu0 %1863
    %1865 = vrot.lane.b32.xlu0 %v1650, 64
    %v1866 = vpop.permute.xlu0 %1865
    %1867 = vrot.lane.b32.xlu0 %v1651, 64
    %v1868 = vpop.permute.xlu0 %1867
    %1869 = vrot.lane.b32.xlu0 %v1652, 64
    %v1870 = vpop.permute.xlu0 %1869
    %1871 = vrot.lane.b32.xlu0 %v1653, 64
    %v1872 = vpop.permute.xlu0 %1871
    %1873 = vrot.lane.b32.xlu0 %v1654, 64
    %v1874 = vpop.permute.xlu0 %1873
    %1875 = vrot.lane.b32.xlu0 %v1655, 64
    %v1876 = vpop.permute.xlu0 %1875
    %1877 = vrot.lane.b32.xlu0 %v1656, 64
    %v1878 = vpop.permute.xlu0 %1877
    %1879 = vrot.lane.b32.xlu0 %v1657, 64
    %v1880 = vpop.permute.xlu0 %1879
    %1881 = vrot.lane.b32.xlu0 %v1658, 64
    %v1882 = vpop.permute.xlu0 %1881
    %1883 = vrot.lane.b32.xlu0 %v1659, 64
    %v1884 = vpop.permute.xlu0 %1883
    %1885 = vrot.lane.b32.xlu0 %v1660, 64
    %v1886 = vpop.permute.xlu0 %1885
    %1887 = vrot.lane.b32.xlu0 %v1661, 64
    %v1888 = vpop.permute.xlu0 %1887
    %1889 = vrot.lane.b32.xlu0 %v1662, 64
    %v1890 = vpop.permute.xlu0 %1889
    %1891 = vrot.lane.b32.xlu0 %v1663, 64
    %v1892 = vpop.permute.xlu0 %1891
    %1893 = vrot.lane.b32.xlu0 %v1664, 64
    %v1894 = vpop.permute.xlu0 %1893
    %1895 = vrot.lane.b32.xlu0 %v1665, 64
    %v1896 = vpop.permute.xlu0 %1895
    %1897 = vrot.lane.b32.xlu0 %v1666, 64
    %v1898 = vpop.permute.xlu0 %1897
    %1899 = vrot.lane.b32.xlu0 %v1667, 64
    %v1900 = vpop.permute.xlu0 %1899
    %1940 = vrot.lane.b32.xlu0 %v1631, 96
    %v1941 = vpop.permute.xlu0 %1940
    %1942 = vrot.lane.b32.xlu0 %v1632, 96
    %v1943 = vpop.permute.xlu0 %1942
    %1944 = vrot.lane.b32.xlu0 %v1633, 96
    %v1945 = vpop.permute.xlu0 %1944
    %1946 = vrot.lane.b32.xlu0 %v1634, 96
    %v1947 = vpop.permute.xlu0 %1946
    %1948 = vrot.lane.b32.xlu0 %v1635, 96
    %v1949 = vpop.permute.xlu0 %1948
    %1950 = vrot.lane.b32.xlu0 %v1636, 96
    %v1951 = vpop.permute.xlu0 %1950
    %1952 = vrot.lane.b32.xlu0 %v1637, 96
    %v1953 = vpop.permute.xlu0 %1952
    %1954 = vrot.lane.b32.xlu0 %v1638, 96
    %v1955 = vpop.permute.xlu0 %1954
    %1956 = vrot.lane.b32.xlu0 %v1639, 96
    %v1957 = vpop.permute.xlu0 %1956
    %1958 = vrot.lane.b32.xlu0 %v1640, 96
    %v1959 = vpop.permute.xlu0 %1958
    %1960 = vrot.lane.b32.xlu0 %v1641, 96
    %v1961 = vpop.permute.xlu0 %1960
    %1962 = vrot.lane.b32.xlu0 %v1642, 96
    %v1963 = vpop.permute.xlu0 %1962
    %1964 = vrot.lane.b32.xlu0 %v1643, 96
    %v1965 = vpop.permute.xlu0 %1964
    %1966 = vrot.lane.b32.xlu0 %v1644, 96
    %v1967 = vpop.permute.xlu0 %1966
    %1968 = vrot.lane.b32.xlu0 %v1645, 96
    %v1969 = vpop.permute.xlu0 %1968
    %1970 = vrot.lane.b32.xlu0 %v1646, 96
    %v1971 = vpop.permute.xlu0 %1970
    %1972 = vrot.lane.b32.xlu0 %v1647, 96
    %v1973 = vpop.permute.xlu0 %1972
    %1974 = vrot.lane.b32.xlu0 %v1648, 96
    %v1975 = vpop.permute.xlu0 %1974
    %1976 = vrot.lane.b32.xlu0 %v1649, 96
    %v1977 = vpop.permute.xlu0 %1976
    %1978 = vrot.lane.b32.xlu0 %v1650, 96
    %v1979 = vpop.permute.xlu0 %1978
    %1980 = vrot.lane.b32.xlu0 %v1651, 96
    %v1981 = vpop.permute.xlu0 %1980
    %1982 = vrot.lane.b32.xlu0 %v1652, 96
    %v1983 = vpop.permute.xlu0 %1982
    %1984 = vrot.lane.b32.xlu0 %v1653, 96
    %v1985 = vpop.permute.xlu0 %1984
    %1986 = vrot.lane.b32.xlu0 %v1654, 96
    %v1987 = vpop.permute.xlu0 %1986
    %1988 = vrot.lane.b32.xlu0 %v1655, 96
    %v1989 = vpop.permute.xlu0 %1988
    %1990 = vrot.lane.b32.xlu0 %v1656, 96
    %v1991 = vpop.permute.xlu0 %1990
    %1992 = vrot.lane.b32.xlu0 %v1657, 96
    %v1993 = vpop.permute.xlu0 %1992
    %1994 = vrot.lane.b32.xlu0 %v1658, 96
    %v1995 = vpop.permute.xlu0 %1994
    %1996 = vrot.lane.b32.xlu0 %v1659, 96
    %v1997 = vpop.permute.xlu0 %1996
    %1998 = vrot.lane.b32.xlu0 %v1660, 96
    %v1999 = vpop.permute.xlu0 %1998
    %2000 = vrot.lane.b32.xlu0 %v1661, 96
    %v2001 = vpop.permute.xlu0 %2000
    %2002 = vrot.lane.b32.xlu0 %v1662, 96
    %v2003 = vpop.permute.xlu0 %2002
    %2004 = vrot.lane.b32.xlu0 %v1663, 96
    %v2005 = vpop.permute.xlu0 %2004
    %2006 = vrot.lane.b32.xlu0 %v1664, 96
    %v2007 = vpop.permute.xlu0 %2006
    %2008 = vrot.lane.b32.xlu0 %v1665, 96
    %v2009 = vpop.permute.xlu0 %2008
    %2010 = vrot.lane.b32.xlu0 %v1666, 96
    %v2011 = vpop.permute.xlu0 %2010
    %2012 = vrot.lane.b32.xlu0 %v1667, 96
    %v2013 = vpop.permute.xlu0 %2012
    %2014 = vrot.lane.b32.xlu0 %v1668, 96
    %v2015 = vpop.permute.xlu0 %2014
    %2056 = vrot.lane.b32.xlu0 %v1667, 32
    %v2057 = vpop.permute.xlu0 %2056
    %2058 = vrot.lane.b32.xlu0 %v1668, 32
    %v2059 = vpop.permute.xlu0 %2058
    %2060 = vrot.lane.b32.xlu0 %v1669, 32
    %v2061 = vpop.permute.xlu0 %2060
    %2062 = vrot.lane.b32.xlu0 %v1670, 32
    %v2063 = vpop.permute.xlu0 %2062
    %2069 = vrot.lane.b32.xlu0 %v1668, 64
    %v2070 = vpop.permute.xlu0 %2069
    %2071 = vrot.lane.b32.xlu0 %v1669, 64
    %v2072 = vpop.permute.xlu0 %2071
    %2073 = vrot.lane.b32.xlu0 %v1670, 64
    %v2074 = vpop.permute.xlu0 %2073
    %2075 = vrot.lane.b32.xlu0 %v1671, 64
    %v2076 = vpop.permute.xlu0 %2075
    %vm2081 = vcmask 261120
    %v2082 = vsel %vm2081, %v1628, %v1711
    %v2083 = vsel %vm2081, %v1629, %v1713
    %v2084 = vsel %vm2081, %v1630, %v1715
    %v2085 = vsel %vm2081, %v1631, %v1717
    %v2086 = vsel %vm2081, %v1632, %v1719
    %v2087 = vsel %vm2081, %v1633, %v1721
    %v2088 = vsel %vm2081, %v1634, %v1723
    %v2089 = vsel %vm2081, %v1635, %v1725
    %v2090 = vsel %vm2081, %v1636, %v1727
    %v2091 = vsel %vm2081, %v1637, %v1729
    %v2092 = vsel %vm2081, %v1638, %v1731
    %v2093 = vsel %vm2081, %v1639, %v1733
    %v2094 = vsel %vm2081, %v1640, %v1735
    %v2095 = vsel %vm2081, %v1641, %v1737
    %v2096 = vsel %vm2081, %v1642, %v1739
    %v2097 = vsel %vm2081, %v1643, %v1741
    %v2098 = vsel %vm2081, %v1644, %v1743
    %v2099 = vsel %vm2081, %v1645, %v1745
    %v2100 = vsel %vm2081, %v1646, %v1747
    %v2101 = vsel %vm2081, %v1647, %v1749
    %v2102 = vsel %vm2081, %v1648, %v1751
    %v2103 = vsel %vm2081, %v1649, %v1753
    %v2104 = vsel %vm2081, %v1650, %v1755
    %v2105 = vsel %vm2081, %v1651, %v1757
    %v2106 = vsel %vm2081, %v1652, %v1759
    %v2107 = vsel %vm2081, %v1653, %v1761
    %v2108 = vsel %vm2081, %v1654, %v1763
    %v2109 = vsel %vm2081, %v1655, %v1765
    %v2110 = vsel %vm2081, %v1656, %v1767
    %v2111 = vsel %vm2081, %v1657, %v1769
    %v2112 = vsel %vm2081, %v1658, %v1771
    %v2113 = vsel %vm2081, %v1659, %v1773
    %v2114 = vsel %vm2081, %v1660, %v1775
    %v2115 = vsel %vm2081, %v1661, %v1777
    %v2116 = vsel %vm2081, %v1662, %v1779
    %v2117 = vsel %vm2081, %v1663, %v1781
    %v2118 = vsel %vm2081, %v1664, %v1783
    %v2119 = vsel %vm2081, %v1665, %v1785
    %vm2120 = vcmask 523264
    %v2121 = vsel %vm2120, %v2082, %v1826
    %v2122 = vsel %vm2120, %v2083, %v1828
    %v2123 = vsel %vm2120, %v2084, %v1830
    %v2124 = vsel %vm2120, %v2085, %v1832
    %v2125 = vsel %vm2120, %v2086, %v1834
    %v2126 = vsel %vm2120, %v2087, %v1836
    %v2127 = vsel %vm2120, %v2088, %v1838
    %v2128 = vsel %vm2120, %v2089, %v1840
    %v2129 = vsel %vm2120, %v2090, %v1842
    %v2130 = vsel %vm2120, %v2091, %v1844
    %v2131 = vsel %vm2120, %v2092, %v1846
    %v2132 = vsel %vm2120, %v2093, %v1848
    %v2133 = vsel %vm2120, %v2094, %v1850
    %v2134 = vsel %vm2120, %v2095, %v1852
    %v2135 = vsel %vm2120, %v2096, %v1854
    %v2136 = vsel %vm2120, %v2097, %v1856
    %v2137 = vsel %vm2120, %v2098, %v1858
    %v2138 = vsel %vm2120, %v2099, %v1860
    %v2139 = vsel %vm2120, %v2100, %v1862
    %v2140 = vsel %vm2120, %v2101, %v1864
    %v2141 = vsel %vm2120, %v2102, %v1866
    %v2142 = vsel %vm2120, %v2103, %v1868
    %v2143 = vsel %vm2120, %v2104, %v1870
    %v2144 = vsel %vm2120, %v2105, %v1872
    %v2145 = vsel %vm2120, %v2106, %v1874
    %v2146 = vsel %vm2120, %v2107, %v1876
    %v2147 = vsel %vm2120, %v2108, %v1878
    %v2148 = vsel %vm2120, %v2109, %v1880
    %v2149 = vsel %vm2120, %v2110, %v1882
    %v2150 = vsel %vm2120, %v2111, %v1884
    %v2151 = vsel %vm2120, %v2112, %v1886
    %v2152 = vsel %vm2120, %v2113, %v1888
    %v2153 = vsel %vm2120, %v2114, %v1890
    %v2154 = vsel %vm2120, %v2115, %v1892
    %v2155 = vsel %vm2120, %v2116, %v1894
    %v2156 = vsel %vm2120, %v2117, %v1896
    %v2157 = vsel %vm2120, %v2118, %v1898
    %v2158 = vsel %vm2120, %v2119, %v1900
    %vm2159 = vcmask 785408
    %v2160 = vsel %vm2159, %v2121, %v1941
    %v2161 = vsel %vm2159, %v2122, %v1943
    %v2162 = vsel %vm2159, %v2123, %v1945
    %v2163 = vsel %vm2159, %v2124, %v1947
    %v2164 = vsel %vm2159, %v2125, %v1949
    %v2165 = vsel %vm2159, %v2126, %v1951
    %v2166 = vsel %vm2159, %v2127, %v1953
    %v2167 = vsel %vm2159, %v2128, %v1955
    %v2168 = vsel %vm2159, %v2129, %v1957
    %v2169 = vsel %vm2159, %v2130, %v1959
    %v2170 = vsel %vm2159, %v2131, %v1961
    %v2171 = vsel %vm2159, %v2132, %v1963
    %v2172 = vsel %vm2159, %v2133, %v1965
    %v2173 = vsel %vm2159, %v2134, %v1967
    %v2174 = vsel %vm2159, %v2135, %v1969
    %v2175 = vsel %vm2159, %v2136, %v1971
    %v2176 = vsel %vm2159, %v2137, %v1973
    %v2177 = vsel %vm2159, %v2138, %v1975
    %v2178 = vsel %vm2159, %v2139, %v1977
    %v2179 = vsel %vm2159, %v2140, %v1979
    %v2180 = vsel %vm2159, %v2141, %v1981
    %v2181 = vsel %vm2159, %v2142, %v1983
    %v2182 = vsel %vm2159, %v2143, %v1985
    %v2183 = vsel %vm2159, %v2144, %v1987
    %v2184 = vsel %vm2159, %v2145, %v1989
    %v2185 = vsel %vm2159, %v2146, %v1991
    %v2186 = vsel %vm2159, %v2147, %v1993
    %v2187 = vsel %vm2159, %v2148, %v1995
    %v2188 = vsel %vm2159, %v2149, %v1997
    %v2189 = vsel %vm2159, %v2150, %v1999
    %v2190 = vsel %vm2159, %v2151, %v2001
    %v2191 = vsel %vm2159, %v2152, %v2003
    %v2192 = vsel %vm2159, %v2153, %v2005
    %v2193 = vsel %vm2159, %v2154, %v2007
    %v2194 = vsel %vm2159, %v2155, %v2009
    %v2195 = vsel %vm2159, %v2156, %v2011
    %v2196 = vsel %vm2159, %v2157, %v2013
    %v2197 = vsel %vm2159, %v2158, %v2015
    %v2198 = vsel %vm2081, %v1666, %v2057
    %v2199 = vsel %vm2081, %v1667, %v2059
    %v2200 = vsel %vm2081, %v1668, %v2061
    %v2201 = vsel %vm2081, %v1669, %v2063
    %v2202 = vsel %vm2120, %v2198, %v2070
    %v2203 = vsel %vm2120, %v2199, %v2072
    %v2204 = vsel %vm2120, %v2200, %v2074
    %v2205 = vsel %vm2120, %v2201, %v2076
    %v2206 = vld [vmem:[%s3] sm:$0xff]
    %v2207 = vld [vmem:[%s3 + $0x8] sm:$0xff]
    %v2208 = vld [vmem:[%s3 + $0x10] sm:$0xff]
    %v2209 = vld [vmem:[%s3 + $0x18] sm:$0xff]
    %v2210 = vld [vmem:[%s3 + $0x20] sm:$0xff]
    %v2211 = vld [vmem:[%s3 + $0x28] sm:$0xff]
    %v2212 = vld [vmem:[%s3 + $0x30] sm:$0xff]
    %v2213 = vld [vmem:[%s3 + $0x38] sm:$0xff]
    %v2214 = vld [vmem:[%s3 + $0x40] sm:$0xff]
    %v2215 = vld [vmem:[%s3 + $0x48] sm:$0xff]
    %v2216 = vld [vmem:[%s3 + $0x50] sm:$0xff]
    %v2217 = vld [vmem:[%s3 + $0x58] sm:$0xff]
    %v2218 = vld [vmem:[%s3 + $0x60] sm:$0xff]
    %v2219 = vld [vmem:[%s3 + $0x68] sm:$0xff]
    %v2220 = vld [vmem:[%s3 + $0x70] sm:$0xff]
    %v2221 = vld [vmem:[%s3 + $0x78] sm:$0xff]
    %v2222 = vld [vmem:[%s3 + $0x80] sm:$0xff]
    %v2223 = vld [vmem:[%s3 + $0x88] sm:$0xff]
    %v2224 = vld [vmem:[%s3 + $0x90] sm:$0xff]
    %v2225 = vld [vmem:[%s3 + $0x98] sm:$0xff]
    %v2226 = vld [vmem:[%s3 + $0xa0] sm:$0xff]
    %v2227 = vld [vmem:[%s3 + $0xa8] sm:$0xff]
    %v2228 = vld [vmem:[%s3 + $0xb0] sm:$0xff]
    %v2229 = vld [vmem:[%s3 + $0xb8] sm:$0xff]
    %v2230 = vld [vmem:[%s3 + $0xc0] sm:$0xff]
    %v2231 = vld [vmem:[%s3 + $0xc8] sm:$0xff]
    %v2232 = vld [vmem:[%s3 + $0xd0] sm:$0xff]
    %v2233 = vld [vmem:[%s3 + $0xd8] sm:$0xff]
    %v2234 = vld [vmem:[#allocation6] sm:$0x1]
    %v2236 = vperm.slane %v2234, 0
    %v2239 = vsel %vm2159, %v2125, 0
    %v2242 = vsel %vm2159, %v2126, 0
    %v2245 = vsel %vm2159, %v2127, 0
    %v2248 = vsel %vm2159, %v2128, 0
    %v2251 = vsel %vm2159, %v2129, 0
    %v2254 = vsel %vm2159, %v2130, 0
    %v2257 = vsel %vm2159, %v2131, 0
    %v2260 = vsel %vm2159, %v2132, 0
    %v2263 = vsel %vm2159, %v2133, 0
    %v2266 = vsel %vm2159, %v2134, 0
    %v2269 = vsel %vm2159, %v2135, 0
    %v2272 = vsel %vm2159, %v2136, 0
    %v2275 = vsel %vm2159, %v2137, 0
    %v2278 = vsel %vm2159, %v2138, 0
    %v2281 = vsel %vm2159, %v2139, 0
    %v2284 = vsel %vm2159, %v2140, 0
    %v2287 = vsel %vm2159, %v2141, 0
    %v2290 = vsel %vm2159, %v2142, 0
    %v2293 = vsel %vm2159, %v2143, 0
    %v2296 = vsel %vm2159, %v2144, 0
    %v2299 = vsel %vm2159, %v2145, 0
    %v2302 = vsel %vm2159, %v2146, 0
    %v2305 = vsel %vm2159, %v2147, 0
    %v2308 = vsel %vm2159, %v2148, 0
    %v2311 = vsel %vm2159, %v2149, 0
    %v2314 = vsel %vm2159, %v2150, 0
    %v2317 = vsel %vm2159, %v2151, 0
    %v2320 = vsel %vm2159, %v2152, 0
    %v2323 = vsel %vm2159, %v2153, 0
    %v2326 = vsel %vm2159, %v2154, 0
    %v2329 = vsel %vm2159, %v2155, 0
    %v2332 = vsel %vm2159, %v2156, 0
    %v2335 = vsel %vm2159, %v2157, 0
    %v2338 = vsel %vm2159, %v2158, 0
    %v2341 = vsel %vm2159, %v2202, 0
    %v2344 = vsel %vm2159, %v2203, 0
    %v2347 = vsel %vm2159, %v2204, 0
    %v2350 = vsel %vm2159, %v2205, 0
    %2352 = vmatpush.msra.mxu0 %v2221
    %2353 = vmatpush.msra.mxu0 %v2220
    %2354 = vmatpush.msra.mxu0 %v2219
    %2355 = vmatpush.msra.mxu0 %v2218
    %2356 = vmatpush.msra.mxu0 %v2217
    %2357 = vmatpush.msra.mxu0 %v2216
    %2358 = vmatpush.msra.mxu0 %v2215
    %2359 = vmatpush.msra.mxu0 %v2214
    %2360 = vmatpush.msra.mxu0 %v2213
    %2361 = vmatpush.msra.mxu0 %v2212
    %2362 = vmatpush.msra.mxu0 %v2211
    %2363 = vmatpush.msra.mxu0 %v2210
    %2364 = vmatpush.msra.mxu0 %v2209
    %2365 = vmatpush.msra.mxu0 %v2208
    %2366 = vmatpush.msra.mxu0 %v2207
    %2367 = vmatpush.msra.mxu0 %v2206
    %2368 = vmatmul.f32.gmra.mxu0 %v2160
    %v2369 = vpop.f32.mrf.mxu0
    %v2370 = vadd.f32 %v2236, %v2369
    %2371 = vmatmul.f32.gmra.mxu0 %v2161
    %v2372 = vpop.f32.mrf.mxu0
    %v2373 = vadd.f32 %v2236, %v2372
    %2374 = vmatmul.f32.gmra.mxu0 %v2162
    %v2375 = vpop.f32.mrf.mxu0
    %v2376 = vadd.f32 %v2236, %v2375
    %2377 = vmatmul.f32.gmra.mxu0 %v2163
    %v2378 = vpop.f32.mrf.mxu0
    %v2379 = vadd.f32 %v2236, %v2378
    %2380 = vmatmul.f32.gmra.mxu0 %v2164
    %v2381 = vpop.f32.mrf.mxu0
    %v2382 = vadd.f32 %v2236, %v2381
    %2383 = vmatmul.f32.gmra.mxu0 %v2165
    %v2384 = vpop.f32.mrf.mxu0
    %v2385 = vadd.f32 %v2236, %v2384
    %2386 = vmatmul.f32.gmra.mxu0 %v2166
    %v2387 = vpop.f32.mrf.mxu0
    %v2388 = vadd.f32 %v2236, %v2387
    %2389 = vmatmul.f32.gmra.mxu0 %v2167
    %v2390 = vpop.f32.mrf.mxu0
    %v2391 = vadd.f32 %v2236, %v2390
    %2392 = vmatmul.f32.gmra.mxu0 %v2168
    %v2393 = vpop.f32.mrf.mxu0
    %v2394 = vadd.f32 %v2236, %v2393
    %2395 = vmatmul.f32.gmra.mxu0 %v2169
    %v2396 = vpop.f32.mrf.mxu0
    %v2397 = vadd.f32 %v2236, %v2396
    %2398 = vmatmul.f32.gmra.mxu0 %v2170
    %v2399 = vpop.f32.mrf.mxu0
    %v2400 = vadd.f32 %v2236, %v2399
    %2401 = vmatmul.f32.gmra.mxu0 %v2171
    %v2402 = vpop.f32.mrf.mxu0
    %v2403 = vadd.f32 %v2236, %v2402
    %2404 = vmatmul.f32.gmra.mxu0 %v2172
    %v2405 = vpop.f32.mrf.mxu0
    %v2406 = vadd.f32 %v2236, %v2405
    %2407 = vmatmul.f32.gmra.mxu0 %v2173
    %v2408 = vpop.f32.mrf.mxu0
    %v2409 = vadd.f32 %v2236, %v2408
    %2410 = vmatmul.f32.gmra.mxu0 %v2174
    %v2411 = vpop.f32.mrf.mxu0
    %v2412 = vadd.f32 %v2236, %v2411
    %2413 = vmatmul.f32.gmra.mxu0 %v2175
    %v2414 = vpop.f32.mrf.mxu0
    %v2415 = vadd.f32 %v2236, %v2414
    %2416 = vmatmul.f32.gmra.mxu0 %v2176
    %v2417 = vpop.f32.mrf.mxu0
    %v2418 = vadd.f32 %v2236, %v2417
    %2419 = vmatmul.f32.gmra.mxu0 %v2177
    %v2420 = vpop.f32.mrf.mxu0
    %v2421 = vadd.f32 %v2236, %v2420
    %2422 = vmatmul.f32.gmra.mxu0 %v2178
    %v2423 = vpop.f32.mrf.mxu0
    %v2424 = vadd.f32 %v2236, %v2423
    %2425 = vmatmul.f32.gmra.mxu0 %v2179
    %v2426 = vpop.f32.mrf.mxu0
    %v2427 = vadd.f32 %v2236, %v2426
    %2428 = vmatmul.f32.gmra.mxu0 %v2180
    %v2429 = vpop.f32.mrf.mxu0
    %v2430 = vadd.f32 %v2236, %v2429
    %2431 = vmatmul.f32.gmra.mxu0 %v2181
    %v2432 = vpop.f32.mrf.mxu0
    %v2433 = vadd.f32 %v2236, %v2432
    %2434 = vmatmul.f32.gmra.mxu0 %v2182
    %v2435 = vpop.f32.mrf.mxu0
    %v2436 = vadd.f32 %v2236, %v2435
    %2437 = vmatmul.f32.gmra.mxu0 %v2183
    %v2438 = vpop.f32.mrf.mxu0
    %v2439 = vadd.f32 %v2236, %v2438
    %2440 = vmatmul.f32.gmra.mxu0 %v2184
    %v2441 = vpop.f32.mrf.mxu0
    %v2442 = vadd.f32 %v2236, %v2441
    %2443 = vmatmul.f32.gmra.mxu0 %v2185
    %v2444 = vpop.f32.mrf.mxu0
    %v2445 = vadd.f32 %v2236, %v2444
    %2446 = vmatmul.f32.gmra.mxu0 %v2186
    %v2447 = vpop.f32.mrf.mxu0
    %v2448 = vadd.f32 %v2236, %v2447
    %2449 = vmatmul.f32.gmra.mxu0 %v2187
    %v2450 = vpop.f32.mrf.mxu0
    %v2451 = vadd.f32 %v2236, %v2450
    %2452 = vmatmul.f32.gmra.mxu0 %v2188
    %v2453 = vpop.f32.mrf.mxu0
    %v2454 = vadd.f32 %v2236, %v2453
    %2455 = vmatmul.f32.gmra.mxu0 %v2189
    %v2456 = vpop.f32.mrf.mxu0
    %v2457 = vadd.f32 %v2236, %v2456
    %2458 = vmatmul.f32.gmra.mxu0 %v2190
    %v2459 = vpop.f32.mrf.mxu0
    %v2460 = vadd.f32 %v2236, %v2459
    %2461 = vmatmul.f32.gmra.mxu0 %v2191
    %v2462 = vpop.f32.mrf.mxu0
    %v2463 = vadd.f32 %v2236, %v2462
    %2464 = vmatmul.f32.gmra.mxu0 %v2192
    %v2465 = vpop.f32.mrf.mxu0
    %v2466 = vadd.f32 %v2236, %v2465
    %2467 = vmatmul.f32.gmra.mxu0 %v2193
    %v2468 = vpop.f32.mrf.mxu0
    %v2469 = vadd.f32 %v2236, %v2468
    %2470 = vmatmul.f32.gmra.mxu0 %v2194
    %v2471 = vpop.f32.mrf.mxu0
    %v2472 = vadd.f32 %v2236, %v2471
    %2473 = vmatmul.f32.gmra.mxu0 %v2195
    %v2474 = vpop.f32.mrf.mxu0
    %v2475 = vadd.f32 %v2236, %v2474
    %2476 = vmatmul.f32.gmra.mxu0 %v2196
    %v2477 = vpop.f32.mrf.mxu0
    %v2478 = vadd.f32 %v2236, %v2477
    %2479 = vmatmul.f32.gmra.mxu0 %v2197
    %v2480 = vpop.f32.mrf.mxu0
    %v2481 = vadd.f32 %v2236, %v2480
    %2482 = vdwg.mxu0
    %2483 = vmatpush.msra.mxu0 0.0
    %2484 = vmatpush.msra.mxu0 0.0
    %2485 = vmatpush.msra.mxu0 0.0
    %2486 = vmatpush.msra.mxu0 0.0
    %2487 = vmatpush.msra.mxu0 %v2233
    %2488 = vmatpush.msra.mxu0 %v2232
    %2489 = vmatpush.msra.mxu0 %v2231
    %2490 = vmatpush.msra.mxu0 %v2230
    %2491 = vmatpush.msra.mxu0 %v2229
    %2492 = vmatpush.msra.mxu0 %v2228
    %2493 = vmatpush.msra.mxu0 %v2227
    %2494 = vmatpush.msra.mxu0 %v2226
    %2495 = vmatpush.msra.mxu0 %v2225
    %2496 = vmatpush.msra.mxu0 %v2224
    %2497 = vmatpush.msra.mxu0 %v2223
    %2498 = vmatpush.msra.mxu0 %v2222
    %2499 = vmatmul.f32.gmra.mxu0 %v2239
    %v2500 = vpop.f32.mrf.mxu0
    %v2501 = vadd.f32 %v2370, %v2500
    %2502 = vmatmul.f32.gmra.mxu0 %v2242
    %v2503 = vpop.f32.mrf.mxu0
    %v2504 = vadd.f32 %v2373, %v2503
    %2505 = vmatmul.f32.gmra.mxu0 %v2245
    %v2506 = vpop.f32.mrf.mxu0
    %v2507 = vadd.f32 %v2376, %v2506
    %2508 = vmatmul.f32.gmra.mxu0 %v2248
    %v2509 = vpop.f32.mrf.mxu0
    %v2510 = vadd.f32 %v2379, %v2509
    %2511 = vmatmul.f32.gmra.mxu0 %v2251
    %v2512 = vpop.f32.mrf.mxu0
    %v2513 = vadd.f32 %v2382, %v2512
    %2514 = vmatmul.f32.gmra.mxu0 %v2254
    %v2515 = vpop.f32.mrf.mxu0
    %v2516 = vadd.f32 %v2385, %v2515
    %2517 = vmatmul.f32.gmra.mxu0 %v2257
    %v2518 = vpop.f32.mrf.mxu0
    %v2519 = vadd.f32 %v2388, %v2518
    %2520 = vmatmul.f32.gmra.mxu0 %v2260
    %v2521 = vpop.f32.mrf.mxu0
    %v2522 = vadd.f32 %v2391, %v2521
    %2523 = vmatmul.f32.gmra.mxu0 %v2263
    %v2524 = vpop.f32.mrf.mxu0
    %v2525 = vadd.f32 %v2394, %v2524
    %2526 = vmatmul.f32.gmra.mxu0 %v2266
    %v2527 = vpop.f32.mrf.mxu0
    %v2528 = vadd.f32 %v2397, %v2527
    %2529 = vmatmul.f32.gmra.mxu0 %v2269
    %v2530 = vpop.f32.mrf.mxu0
    %v2531 = vadd.f32 %v2400, %v2530
    %2532 = vmatmul.f32.gmra.mxu0 %v2272
    %v2533 = vpop.f32.mrf.mxu0
    %v2534 = vadd.f32 %v2403, %v2533
    %2535 = vmatmul.f32.gmra.mxu0 %v2275
    %v2536 = vpop.f32.mrf.mxu0
    %v2537 = vadd.f32 %v2406, %v2536
    %2538 = vmatmul.f32.gmra.mxu0 %v2278
    %v2539 = vpop.f32.mrf.mxu0
    %v2540 = vadd.f32 %v2409, %v2539
    %2541 = vmatmul.f32.gmra.mxu0 %v2281
    %v2542 = vpop.f32.mrf.mxu0
    %v2543 = vadd.f32 %v2412, %v2542
    %2544 = vmatmul.f32.gmra.mxu0 %v2284
    %v2545 = vpop.f32.mrf.mxu0
    %v2546 = vadd.f32 %v2415, %v2545
    %2547 = vmatmul.f32.gmra.mxu0 %v2287
    %v2548 = vpop.f32.mrf.mxu0
    %v2549 = vadd.f32 %v2418, %v2548
    %2550 = vmatmul.f32.gmra.mxu0 %v2290
    %v2551 = vpop.f32.mrf.mxu0
    %v2552 = vadd.f32 %v2421, %v2551
    %2553 = vmatmul.f32.gmra.mxu0 %v2293
    %v2554 = vpop.f32.mrf.mxu0
    %v2555 = vadd.f32 %v2424, %v2554
    %2556 = vmatmul.f32.gmra.mxu0 %v2296
    %v2557 = vpop.f32.mrf.mxu0
    %v2558 = vadd.f32 %v2427, %v2557
    %2559 = vmatmul.f32.gmra.mxu0 %v2299
    %v2560 = vpop.f32.mrf.mxu0
    %v2561 = vadd.f32 %v2430, %v2560
    %2562 = vmatmul.f32.gmra.mxu0 %v2302
    %v2563 = vpop.f32.mrf.mxu0
    %v2564 = vadd.f32 %v2433, %v2563
    %2565 = vmatmul.f32.gmra.mxu0 %v2305
    %v2566 = vpop.f32.mrf.mxu0
    %v2567 = vadd.f32 %v2436, %v2566
    %2568 = vmatmul.f32.gmra.mxu0 %v2308
    %v2569 = vpop.f32.mrf.mxu0
    %v2570 = vadd.f32 %v2439, %v2569
    %2571 = vmatmul.f32.gmra.mxu0 %v2311
    %v2572 = vpop.f32.mrf.mxu0
    %v2573 = vadd.f32 %v2442, %v2572
    %2574 = vmatmul.f32.gmra.mxu0 %v2314
    %v2575 = vpop.f32.mrf.mxu0
    %v2576 = vadd.f32 %v2445, %v2575
    %2577 = vmatmul.f32.gmra.mxu0 %v2317
    %v2578 = vpop.f32.mrf.mxu0
    %v2579 = vadd.f32 %v2448, %v2578
    %2580 = vmatmul.f32.gmra.mxu0 %v2320
    %v2581 = vpop.f32.mrf.mxu0
    %v2582 = vadd.f32 %v2451, %v2581
    %2583 = vmatmul.f32.gmra.mxu0 %v2323
    %v2584 = vpop.f32.mrf.mxu0
    %v2585 = vadd.f32 %v2454, %v2584
    %2586 = vmatmul.f32.gmra.mxu0 %v2326
    %v2587 = vpop.f32.mrf.mxu0
    %v2588 = vadd.f32 %v2457, %v2587
    %2589 = vmatmul.f32.gmra.mxu0 %v2329
    %v2590 = vpop.f32.mrf.mxu0
    %v2591 = vadd.f32 %v2460, %v2590
    %2592 = vmatmul.f32.gmra.mxu0 %v2332
    %v2593 = vpop.f32.mrf.mxu0
    %v2594 = vadd.f32 %v2463, %v2593
    %2595 = vmatmul.f32.gmra.mxu0 %v2335
    %v2596 = vpop.f32.mrf.mxu0
    %v2597 = vadd.f32 %v2466, %v2596
    %2598 = vmatmul.f32.gmra.mxu0 %v2338
    %v2599 = vpop.f32.mrf.mxu0
    %v2600 = vadd.f32 %v2469, %v2599
    %2601 = vmatmul.f32.gmra.mxu0 %v2341
    %v2602 = vpop.f32.mrf.mxu0
    %v2603 = vadd.f32 %v2472, %v2602
    %2604 = vmatmul.f32.gmra.mxu0 %v2344
    %v2605 = vpop.f32.mrf.mxu0
    %v2606 = vadd.f32 %v2475, %v2605
    %2607 = vmatmul.f32.gmra.mxu0 %v2347
    %v2608 = vpop.f32.mrf.mxu0
    %v2609 = vadd.f32 %v2478, %v2608
    %2610 = vmatmul.f32.gmra.mxu0 %v2350
    %v2611 = vpop.f32.mrf.mxu0
    %v2612 = vadd.f32 %v2481, %v2611
    %2613 = vdwg.mxu0
    %v2614 = vmax.f32 %v2501, 0.0
    %v2615 = vmax.f32 %v2504, 0.0
    %v2616 = vmax.f32 %v2507, 0.0
    %v2617 = vmax.f32 %v2510, 0.0
    %v2618 = vmax.f32 %v2513, 0.0
    %v2619 = vmax.f32 %v2516, 0.0
    %v2620 = vmax.f32 %v2519, 0.0
    %v2621 = vmax.f32 %v2522, 0.0
    %v2622 = vmax.f32 %v2525, 0.0
    %v2623 = vmax.f32 %v2528, 0.0
    %v2624 = vmax.f32 %v2531, 0.0
    %v2625 = vmax.f32 %v2534, 0.0
    %v2626 = vmax.f32 %v2537, 0.0
    %v2627 = vmax.f32 %v2540, 0.0
    %v2628 = vmax.f32 %v2543, 0.0
    %v2629 = vmax.f32 %v2546, 0.0
    %v2630 = vmax.f32 %v2549, 0.0
    %v2631 = vmax.f32 %v2552, 0.0
    %v2632 = vmax.f32 %v2555, 0.0
    %v2633 = vmax.f32 %v2558, 0.0
    %v2634 = vmax.f32 %v2561, 0.0
    %v2635 = vmax.f32 %v2564, 0.0
    %v2636 = vmax.f32 %v2567, 0.0
    %v2637 = vmax.f32 %v2570, 0.0
    %v2638 = vmax.f32 %v2573, 0.0
    %v2639 = vmax.f32 %v2576, 0.0
    %v2640 = vmax.f32 %v2579, 0.0
    %v2641 = vmax.f32 %v2582, 0.0
    %v2642 = vmax.f32 %v2585, 0.0
    %v2643 = vmax.f32 %v2588, 0.0
    %v2644 = vmax.f32 %v2591, 0.0
    %v2645 = vmax.f32 %v2594, 0.0
    %v2646 = vmax.f32 %v2597, 0.0
    %v2647 = vmax.f32 %v2600, 0.0
    %v2648 = vmax.f32 %v2603, 0.0
    %v2649 = vmax.f32 %v2606, 0.0
    %v2650 = vmax.f32 %v2609, 0.0
    %v2651 = vmax.f32 %v2612, 0.0
    %v2652 = vadd.f32 %v2614, %v2615
    %v2653 = vmul.f32 %v2652, 0.5
    %v2654 = vadd.f32 %v2616, %v2617
    %v2655 = vmul.f32 %v2654, 0.5
    %v2656 = vadd.f32 %v2618, %v2619
    %v2657 = vmul.f32 %v2656, 0.5
    %v2658 = vadd.f32 %v2620, %v2621
    %v2659 = vmul.f32 %v2658, 0.5
    %v2660 = vadd.f32 %v2622, %v2623
    %v2661 = vmul.f32 %v2660, 0.5
    %v2662 = vadd.f32 %v2624, %v2625
    %v2663 = vmul.f32 %v2662, 0.5
    %v2664 = vadd.f32 %v2626, %v2627
    %v2665 = vmul.f32 %v2664, 0.5
    %v2666 = vadd.f32 %v2628, %v2629
    %v2667 = vmul.f32 %v2666, 0.5
    %v2668 = vadd.f32 %v2630, %v2631
    %v2669 = vmul.f32 %v2668, 0.5
    %v2670 = vadd.f32 %v2632, %v2633
    %v2671 = vmul.f32 %v2670, 0.5
    %v2672 = vadd.f32 %v2634, %v2635
    %v2673 = vmul.f32 %v2672, 0.5
    %v2674 = vadd.f32 %v2636, %v2637
    %v2675 = vmul.f32 %v2674, 0.5
    %v2676 = vadd.f32 %v2638, %v2639
    %v2677 = vmul.f32 %v2676, 0.5
    %v2678 = vadd.f32 %v2640, %v2641
    %v2679 = vmul.f32 %v2678, 0.5
    %v2680 = vadd.f32 %v2642, %v2643
    %v2681 = vmul.f32 %v2680, 0.5
    %v2682 = vadd.f32 %v2644, %v2645
    %v2683 = vmul.f32 %v2682, 0.5
    %v2684 = vadd.f32 %v2646, %v2647
    %v2685 = vmul.f32 %v2684, 0.5
    %v2686 = vadd.f32 %v2648, %v2649
    %v2687 = vmul.f32 %v2686, 0.5
    %v2688 = vadd.f32 %v2650, %v2651
    %v2689 = vmul.f32 %v2688, 0.5
    %2703 = vrot.lane.b32.xlu0 %v2655, 64
    %v2704 = vpop.permute.xlu0 %2703
    %2705 = vrot.lane.b32.xlu0 %v2657, 64
    %v2706 = vpop.permute.xlu0 %2705
    %2707 = vrot.lane.b32.xlu0 %v2659, 64
    %v2708 = vpop.permute.xlu0 %2707
    %2709 = vrot.lane.b32.xlu0 %v2661, 64
    %v2710 = vpop.permute.xlu0 %2709
    %2711 = vrot.lane.b32.xlu0 %v2663, 64
    %v2712 = vpop.permute.xlu0 %2711
    %2713 = vrot.lane.b32.xlu0 %v2665, 64
    %v2714 = vpop.permute.xlu0 %2713
    %2715 = vrot.lane.b32.xlu0 %v2667, 64
    %v2716 = vpop.permute.xlu0 %2715
    %2717 = vrot.lane.b32.xlu0 %v2669, 64
    %v2718 = vpop.permute.xlu0 %2717
    %2719 = vrot.lane.b32.xlu0 %v2671, 64
    %v2720 = vpop.permute.xlu0 %2719
    %2721 = vrot.lane.b32.xlu0 %v2673, 64
    %v2722 = vpop.permute.xlu0 %2721
    %2723 = vrot.lane.b32.xlu0 %v2675, 64
    %v2724 = vpop.permute.xlu0 %2723
    %2725 = vrot.lane.b32.xlu0 %v2677, 64
    %v2726 = vpop.permute.xlu0 %2725
    %2727 = vrot.lane.b32.xlu0 %v2679, 64
    %v2728 = vpop.permute.xlu0 %2727
    %2744 = vrot.lane.b32.xlu0 %v2681, 64
    %v2745 = vpop.permute.xlu0 %2744
    %2746 = vrot.lane.b32.xlu0 %v2683, 64
    %v2747 = vpop.permute.xlu0 %2746
    %2752 = vrot.lane.b32.xlu0 %v2685, 64
    %v2753 = vpop.permute.xlu0 %2752
    %2754 = vrot.lane.b32.xlu0 %v2687, 64
    %v2755 = vpop.permute.xlu0 %2754
    %v2758 = vsel %vm2120, %v2653, %v2704
    %v2759 = vsel %vm2120, %v2655, %v2706
    %v2760 = vsel %vm2120, %v2657, %v2708
    %v2761 = vsel %vm2120, %v2659, %v2710
    %v2762 = vsel %vm2120, %v2661, %v2712
    %v2763 = vsel %vm2120, %v2663, %v2714
    %v2764 = vsel %vm2120, %v2665, %v2716
    %v2765 = vsel %vm2120, %v2667, %v2718
    %v2766 = vsel %vm2120, %v2669, %v2720
    %v2767 = vsel %vm2120, %v2671, %v2722
    %v2768 = vsel %vm2120, %v2673, %v2724
    %v2769 = vsel %vm2120, %v2675, %v2726
    %v2770 = vsel %vm2120, %v2677, %v2728
    %v2771 = vsel %vm2120, %v2679, %v2745
    %v2772 = vsel %vm2120, %v2681, %v2747
    %v2773 = vsel %vm2120, %v2683, %v2753
    %v2774 = vsel %vm2120, %v2685, %v2755
    %v2775 = vld [vmem:[%s5] sm:$0xff]
    %v2776 = vld [vmem:[%s5 + $0x8] sm:$0xff]
    %v2777 = vld [vmem:[%s5 + $0x10] sm:$0xff]
    %v2778 = vld [vmem:[%s5 + $0x18] sm:$0xff]
    %v2779 = vld [vmem:[%s5 + $0x20] sm:$0xff]
    %v2780 = vld [vmem:[%s5 + $0x28] sm:$0xff]
    %v2781 = vld [vmem:[%s5 + $0x30] sm:$0xff]
    %v2782 = vld [vmem:[%s5 + $0x38] sm:$0xff]
    %v2783 = vld [vmem:[%s5 + $0x40] sm:$0xff]
    %v2784 = vld [vmem:[%s5 + $0x48] sm:$0xff]
    %v2785 = vld [vmem:[%s5 + $0x50] sm:$0xff]
    %v2786 = vld [vmem:[%s5 + $0x58] sm:$0xff]
    %v2787 = vld [vmem:[%s5 + $0x60] sm:$0xff]
    %v2788 = vld [vmem:[%s5 + $0x68] sm:$0xff]
    %v2789 = vld [vmem:[%s5 + $0x70] sm:$0xff]
    %v2790 = vld [vmem:[%s5 + $0x78] sm:$0xff]
    %v2791 = vld [vmem:[%s5 + $0x80] sm:$0xff]
    %v2792 = vld [vmem:[%s5 + $0x88] sm:$0xff]
    %v2793 = vld [vmem:[%s5 + $0x90] sm:$0xff]
    %v2794 = vld [vmem:[%s5 + $0x98] sm:$0xff]
    %v2795 = vld [vmem:[%s5 + $0xa0] sm:$0xff]
    %v2796 = vld [vmem:[%s5 + $0xa8] sm:$0xff]
    %v2797 = vld [vmem:[%s5 + $0xb0] sm:$0xff]
    %v2798 = vld [vmem:[%s5 + $0xb8] sm:$0xff]
    %v2799 = vld [vmem:[%s5 + $0xc0] sm:$0xff]
    %v2800 = vld [vmem:[%s5 + $0xc8] sm:$0xff]
    %v2801 = vld [vmem:[%s5 + $0xd0] sm:$0xff]
    %v2802 = vld [vmem:[%s5 + $0xd8] sm:$0xff]
    %v2803 = vld [vmem:[%s5 + $0xe0] sm:$0xff]
    %v2804 = vld [vmem:[%s5 + $0xe8] sm:$0xff]
    %v2805 = vld [vmem:[%s5 + $0xf0] sm:$0xff]
    %v2806 = vld [vmem:[%s5 + $0xf8] sm:$0xff]
    %v2807 = vld [vmem:[%s5 + $0x100] sm:$0xff]
    %v2808 = vld [vmem:[%s5 + $0x108] sm:$0xff]
    %v2809 = vld [vmem:[%s5 + $0x110] sm:$0xff]
    %v2810 = vld [vmem:[%s5 + $0x118] sm:$0xff]
    %v2811 = vld [vmem:[%s5 + $0x120] sm:$0xff]
    %v2812 = vld [vmem:[%s5 + $0x128] sm:$0xff]
    %v2813 = vld [vmem:[%s5 + $0x130] sm:$0xff]
    %v2814 = vld [vmem:[%s5 + $0x138] sm:$0xff]
    %v2815 = vld [vmem:[%s5 + $0x140] sm:$0xff]
    %v2816 = vld [vmem:[%s5 + $0x148] sm:$0xff]
    %v2817 = vld [vmem:[%s5 + $0x150] sm:$0xff]
    %v2818 = vld [vmem:[%s5 + $0x158] sm:$0xff]
    %v2819 = vld [vmem:[%s5 + $0x160] sm:$0xff]
    %v2820 = vld [vmem:[%s5 + $0x168] sm:$0xff]
    %v2821 = vld [vmem:[%s5 + $0x170] sm:$0xff]
    %v2822 = vld [vmem:[%s5 + $0x178] sm:$0xff]
    %v2823 = vld [vmem:[%s5 + $0x180] sm:$0xff]
    %v2824 = vld [vmem:[%s5 + $0x188] sm:$0xff]
    %v2825 = vld [vmem:[%s5 + $0x190] sm:$0xff]
    %v2826 = vld [vmem:[%s5 + $0x198] sm:$0xff]
    %v2827 = vld [vmem:[%s5 + $0x1a0] sm:$0xff]
    %v2828 = vld [vmem:[%s5 + $0x1a8] sm:$0xff]
    %v2829 = vld [vmem:[%s5 + $0x1b0] sm:$0xff]
    %v2830 = vld [vmem:[%s5 + $0x1b8] sm:$0xff]
    %v2831 = vld [vmem:[#allocation7] sm:$0x1]
    %v2833 = vperm.slane %v2831, 0
    %v2835 = vsel %vm2120, %v2665, 0
    %v2837 = vsel %vm2120, %v2667, 0
    %v2839 = vsel %vm2120, %v2669, 0
    %v2841 = vsel %vm2120, %v2671, 0
    %v2843 = vsel %vm2120, %v2673, 0
    %v2845 = vsel %vm2120, %v2675, 0
    %v2847 = vsel %vm2120, %v2677, 0
    %v2849 = vsel %vm2120, %v2679, 0
    %v2851 = vsel %vm2120, %v2681, 0
    %v2853 = vsel %vm2120, %v2683, 0
    %v2855 = vsel %vm2120, %v2685, 0
    %v2857 = vsel %vm2120, %v2687, 0
    %v2860 = vsel %vm2120, %v2689, 0
    %2862 = vmatpush.msra.mxu0 %v2790
    %2863 = vmatpush.msra.mxu0 %v2789
    %2864 = vmatpush.msra.mxu0 %v2788
    %2865 = vmatpush.msra.mxu0 %v2787
    %2866 = vmatpush.msra.mxu0 %v2786
    %2867 = vmatpush.msra.mxu0 %v2785
    %2868 = vmatpush.msra.mxu0 %v2784
    %2869 = vmatpush.msra.mxu0 %v2783
    %2870 = vmatpush.msra.mxu0 %v2782
    %2871 = vmatpush.msra.mxu0 %v2781
    %2872 = vmatpush.msra.mxu0 %v2780
    %2873 = vmatpush.msra.mxu0 %v2779
    %2874 = vmatpush.msra.mxu0 %v2778
    %2875 = vmatpush.msra.mxu0 %v2777
    %2876 = vmatpush.msra.mxu0 %v2776
    %2877 = vmatpush.msra.mxu0 %v2775
    %2878 = vmatmul.f32.gmra.mxu0 %v2758
    %v2879 = vpop.f32.mrf.mxu0
    %v2880 = vadd.f32 %v2833, %v2879
    %2881 = vmatmul.f32.gmra.mxu0 %v2759
    %v2882 = vpop.f32.mrf.mxu0
    %v2883 = vadd.f32 %v2833, %v2882
    %2884 = vmatmul.f32.gmra.mxu0 %v2760
    %v2885 = vpop.f32.mrf.mxu0
    %v2886 = vadd.f32 %v2833, %v2885
    %2887 = vmatmul.f32.gmra.mxu0 %v2761
    %v2888 = vpop.f32.mrf.mxu0
    %v2889 = vadd.f32 %v2833, %v2888
    %2890 = vmatmul.f32.gmra.mxu0 %v2762
    %v2891 = vpop.f32.mrf.mxu0
    %v2892 = vadd.f32 %v2833, %v2891
    %2893 = vmatmul.f32.gmra.mxu0 %v2763
    %v2894 = vpop.f32.mrf.mxu0
    %v2895 = vadd.f32 %v2833, %v2894
    %2896 = vmatmul.f32.gmra.mxu0 %v2764
    %v2897 = vpop.f32.mrf.mxu0
    %v2898 = vadd.f32 %v2833, %v2897
    %2899 = vmatmul.f32.gmra.mxu0 %v2765
    %v2900 = vpop.f32.mrf.mxu0
    %v2901 = vadd.f32 %v2833, %v2900
    %2902 = vmatmul.f32.gmra.mxu0 %v2766
    %v2903 = vpop.f32.mrf.mxu0
    %v2904 = vadd.f32 %v2833, %v2903
    %2905 = vmatmul.f32.gmra.mxu0 %v2767
    %v2906 = vpop.f32.mrf.mxu0
    %v2907 = vadd.f32 %v2833, %v2906
    %2908 = vmatmul.f32.gmra.mxu0 %v2768
    %v2909 = vpop.f32.mrf.mxu0
    %v2910 = vadd.f32 %v2833, %v2909
    %2911 = vmatmul.f32.gmra.mxu0 %v2769
    %v2912 = vpop.f32.mrf.mxu0
    %v2913 = vadd.f32 %v2833, %v2912
    %2914 = vmatmul.f32.gmra.mxu0 %v2770
    %v2915 = vpop.f32.mrf.mxu0
    %v2916 = vadd.f32 %v2833, %v2915
    %2917 = vdwg.mxu0
    %2918 = vmatpush.msra.mxu0 %v2806
    %2919 = vmatpush.msra.mxu0 %v2805
    %2920 = vmatpush.msra.mxu0 %v2804
    %2921 = vmatpush.msra.mxu0 %v2803
    %2922 = vmatpush.msra.mxu0 %v2802
    %2923 = vmatpush.msra.mxu0 %v2801
    %2924 = vmatpush.msra.mxu0 %v2800
    %2925 = vmatpush.msra.mxu0 %v2799
    %2926 = vmatpush.msra.mxu0 %v2798
    %2927 = vmatpush.msra.mxu0 %v2797
    %2928 = vmatpush.msra.mxu0 %v2796
    %2929 = vmatpush.msra.mxu0 %v2795
    %2930 = vmatpush.msra.mxu0 %v2794
    %2931 = vmatpush.msra.mxu0 %v2793
    %2932 = vmatpush.msra.mxu0 %v2792
    %2933 = vmatpush.msra.mxu0 %v2791
    %2934 = vmatmul.f32.gmra.mxu0 %v2760
    %v2935 = vpop.f32.mrf.mxu0
    %v2936 = vadd.f32 %v2880, %v2935
    %2937 = vmatmul.f32.gmra.mxu0 %v2761
    %v2938 = vpop.f32.mrf.mxu0
    %v2939 = vadd.f32 %v2883, %v2938
    %2940 = vmatmul.f32.gmra.mxu0 %v2762
    %v2941 = vpop.f32.mrf.mxu0
    %v2942 = vadd.f32 %v2886, %v2941
    %2943 = vmatmul.f32.gmra.mxu0 %v2763
    %v2944 = vpop.f32.mrf.mxu0
    %v2945 = vadd.f32 %v2889, %v2944
    %2946 = vmatmul.f32.gmra.mxu0 %v2764
    %v2947 = vpop.f32.mrf.mxu0
    %v2948 = vadd.f32 %v2892, %v2947
    %2949 = vmatmul.f32.gmra.mxu0 %v2765
    %v2950 = vpop.f32.mrf.mxu0
    %v2951 = vadd.f32 %v2895, %v2950
    %2952 = vmatmul.f32.gmra.mxu0 %v2766
    %v2953 = vpop.f32.mrf.mxu0
    %v2954 = vadd.f32 %v2898, %v2953
    %2955 = vmatmul.f32.gmra.mxu0 %v2767
    %v2956 = vpop.f32.mrf.mxu0
    %v2957 = vadd.f32 %v2901, %v2956
    %2958 = vmatmul.f32.gmra.mxu0 %v2768
    %v2959 = vpop.f32.mrf.mxu0
    %v2960 = vadd.f32 %v2904, %v2959
    %2961 = vmatmul.f32.gmra.mxu0 %v2769
    %v2962 = vpop.f32.mrf.mxu0
    %v2963 = vadd.f32 %v2907, %v2962
    %2964 = vmatmul.f32.gmra.mxu0 %v2770
    %v2965 = vpop.f32.mrf.mxu0
    %v2966 = vadd.f32 %v2910, %v2965
    %2967 = vmatmul.f32.gmra.mxu0 %v2771
    %v2968 = vpop.f32.mrf.mxu0
    %v2969 = vadd.f32 %v2913, %v2968
    %2970 = vmatmul.f32.gmra.mxu0 %v2772
    %v2971 = vpop.f32.mrf.mxu0
    %v2972 = vadd.f32 %v2916, %v2971
    %2973 = vdwg.mxu0
    %2974 = vmatpush.msra.mxu0 %v2822
    %2975 = vmatpush.msra.mxu0 %v2821
    %2976 = vmatpush.msra.mxu0 %v2820
    %2977 = vmatpush.msra.mxu0 %v2819
    %2978 = vmatpush.msra.mxu0 %v2818
    %2979 = vmatpush.msra.mxu0 %v2817
    %2980 = vmatpush.msra.mxu0 %v2816
    %2981 = vmatpush.msra.mxu0 %v2815
    %2982 = vmatpush.msra.mxu0 %v2814
    %2983 = vmatpush.msra.mxu0 %v2813
    %2984 = vmatpush.msra.mxu0 %v2812
    %2985 = vmatpush.msra.mxu0 %v2811
    %2986 = vmatpush.msra.mxu0 %v2810
    %2987 = vmatpush.msra.mxu0 %v2809
    %2988 = vmatpush.msra.mxu0 %v2808
    %2989 = vmatpush.msra.mxu0 %v2807
    %2990 = vmatmul.f32.gmra.mxu0 %v2762
    %v2991 = vpop.f32.mrf.mxu0
    %v2992 = vadd.f32 %v2936, %v2991
    %2993 = vmatmul.f32.gmra.mxu0 %v2763
    %v2994 = vpop.f32.mrf.mxu0
    %v2995 = vadd.f32 %v2939, %v2994
    %2996 = vmatmul.f32.gmra.mxu0 %v2764
    %v2997 = vpop.f32.mrf.mxu0
    %v2998 = vadd.f32 %v2942, %v2997
    %2999 = vmatmul.f32.gmra.mxu0 %v2765
    %v3000 = vpop.f32.mrf.mxu0
    %v3001 = vadd.f32 %v2945, %v3000
    %3002 = vmatmul.f32.gmra.mxu0 %v2766
    %v3003 = vpop.f32.mrf.mxu0
    %v3004 = vadd.f32 %v2948, %v3003
    %3005 = vmatmul.f32.gmra.mxu0 %v2767
    %v3006 = vpop.f32.mrf.mxu0
    %v3007 = vadd.f32 %v2951, %v3006
    %3008 = vmatmul.f32.gmra.mxu0 %v2768
    %v3009 = vpop.f32.mrf.mxu0
    %v3010 = vadd.f32 %v2954, %v3009
    %3011 = vmatmul.f32.gmra.mxu0 %v2769
    %v3012 = vpop.f32.mrf.mxu0
    %v3013 = vadd.f32 %v2957, %v3012
    %3014 = vmatmul.f32.gmra.mxu0 %v2770
    %v3015 = vpop.f32.mrf.mxu0
    %v3016 = vadd.f32 %v2960, %v3015
    %3017 = vmatmul.f32.gmra.mxu0 %v2771
    %v3018 = vpop.f32.mrf.mxu0
    %v3019 = vadd.f32 %v2963, %v3018
    %3020 = vmatmul.f32.gmra.mxu0 %v2772
    %v3021 = vpop.f32.mrf.mxu0
    %v3022 = vadd.f32 %v2966, %v3021
    %3023 = vmatmul.f32.gmra.mxu0 %v2773
    %v3024 = vpop.f32.mrf.mxu0
    %v3025 = vadd.f32 %v2969, %v3024
    %3026 = vmatmul.f32.gmra.mxu0 %v2774
    %v3027 = vpop.f32.mrf.mxu0
    %v3028 = vadd.f32 %v2972, %v3027
    %3029 = vdwg.mxu0
    %3030 = vmatpush.msra.mxu0 0.0
    %3031 = vmatpush.msra.mxu0 0.0
    %3032 = vmatpush.msra.mxu0 0.0
    %3033 = vmatpush.msra.mxu0 0.0
    %3034 = vmatpush.msra.mxu0 0.0
    %3035 = vmatpush.msra.mxu0 0.0
    %3036 = vmatpush.msra.mxu0 0.0
    %3037 = vmatpush.msra.mxu0 0.0
    %3038 = vmatpush.msra.mxu0 %v2830
    %3039 = vmatpush.msra.mxu0 %v2829
    %3040 = vmatpush.msra.mxu0 %v2828
    %3041 = vmatpush.msra.mxu0 %v2827
    %3042 = vmatpush.msra.mxu0 %v2826
    %3043 = vmatpush.msra.mxu0 %v2825
    %3044 = vmatpush.msra.mxu0 %v2824
    %3045 = vmatpush.msra.mxu0 %v2823
    %3046 = vmatmul.f32.gmra.mxu0 %v2835
    %v3047 = vpop.f32.mrf.mxu0
    %v3048 = vadd.f32 %v2992, %v3047
    %3049 = vmatmul.f32.gmra.mxu0 %v2837
    %v3050 = vpop.f32.mrf.mxu0
    %v3051 = vadd.f32 %v2995, %v3050
    %3052 = vmatmul.f32.gmra.mxu0 %v2839
    %v3053 = vpop.f32.mrf.mxu0
    %v3054 = vadd.f32 %v2998, %v3053
    %3055 = vmatmul.f32.gmra.mxu0 %v2841
    %v3056 = vpop.f32.mrf.mxu0
    %v3057 = vadd.f32 %v3001, %v3056
    %3058 = vmatmul.f32.gmra.mxu0 %v2843
    %v3059 = vpop.f32.mrf.mxu0
    %v3060 = vadd.f32 %v3004, %v3059
    %3061 = vmatmul.f32.gmra.mxu0 %v2845
    %v3062 = vpop.f32.mrf.mxu0
    %v3063 = vadd.f32 %v3007, %v3062
    %3064 = vmatmul.f32.gmra.mxu0 %v2847
    %v3065 = vpop.f32.mrf.mxu0
    %v3066 = vadd.f32 %v3010, %v3065
    %3067 = vmatmul.f32.gmra.mxu0 %v2849
    %v3068 = vpop.f32.mrf.mxu0
    %v3069 = vadd.f32 %v3013, %v3068
    %3070 = vmatmul.f32.gmra.mxu0 %v2851
    %v3071 = vpop.f32.mrf.mxu0
    %v3072 = vadd.f32 %v3016, %v3071
    %3073 = vmatmul.f32.gmra.mxu0 %v2853
    %v3074 = vpop.f32.mrf.mxu0
    %v3075 = vadd.f32 %v3019, %v3074
    %3076 = vmatmul.f32.gmra.mxu0 %v2855
    %v3077 = vpop.f32.mrf.mxu0
    %v3078 = vadd.f32 %v3022, %v3077
    %3079 = vmatmul.f32.gmra.mxu0 %v2857
    %v3080 = vpop.f32.mrf.mxu0
    %v3081 = vadd.f32 %v3025, %v3080
    %3082 = vmatmul.f32.gmra.mxu0 %v2860
    %v3083 = vpop.f32.mrf.mxu0
    %v3084 = vadd.f32 %v3028, %v3083
    %3085 = vdwg.mxu0
    %v3086 = vmax.f32 %v3048, 0.0
    %v3087 = vmax.f32 %v3051, 0.0
    %v3088 = vmax.f32 %v3054, 0.0
    %v3089 = vmax.f32 %v3057, 0.0
    %v3090 = vmax.f32 %v3060, 0.0
    %v3091 = vmax.f32 %v3063, 0.0
    %v3092 = vmax.f32 %v3066, 0.0
    %v3093 = vmax.f32 %v3069, 0.0
    %v3094 = vmax.f32 %v3072, 0.0
    %v3095 = vmax.f32 %v3075, 0.0
    %v3096 = vmax.f32 %v3078, 0.0
    %v3097 = vmax.f32 %v3081, 0.0
    %v3098 = vmax.f32 %v3084, 0.0
    %3106 = vrot.lane.b32.xlu0 %v3087, 32
    %v3107 = vpop.permute.xlu0 %3106
    %3108 = vrot.lane.b32.xlu0 %v3088, 32
    %v3109 = vpop.permute.xlu0 %3108
    %3110 = vrot.lane.b32.xlu0 %v3089, 32
    %v3111 = vpop.permute.xlu0 %3110
    %3112 = vrot.lane.b32.xlu0 %v3090, 32
    %v3113 = vpop.permute.xlu0 %3112
    %3114 = vrot.lane.b32.xlu0 %v3091, 32
    %v3115 = vpop.permute.xlu0 %3114
    %3116 = vrot.lane.b32.xlu0 %v3092, 32
    %v3117 = vpop.permute.xlu0 %3116
    %3118 = vrot.lane.b32.xlu0 %v3093, 32
    %v3119 = vpop.permute.xlu0 %3118
    %3128 = vrot.lane.b32.xlu0 %v3088, 64
    %v3129 = vpop.permute.xlu0 %3128
    %3130 = vrot.lane.b32.xlu0 %v3089, 64
    %v3131 = vpop.permute.xlu0 %3130
    %3132 = vrot.lane.b32.xlu0 %v3090, 64
    %v3133 = vpop.permute.xlu0 %3132
    %3134 = vrot.lane.b32.xlu0 %v3091, 64
    %v3135 = vpop.permute.xlu0 %3134
    %3136 = vrot.lane.b32.xlu0 %v3092, 64
    %v3137 = vpop.permute.xlu0 %3136
    %3138 = vrot.lane.b32.xlu0 %v3093, 64
    %v3139 = vpop.permute.xlu0 %3138
    %3140 = vrot.lane.b32.xlu0 %v3094, 64
    %v3141 = vpop.permute.xlu0 %3140
    %3150 = vrot.lane.b32.xlu0 %v3089, 96
    %v3151 = vpop.permute.xlu0 %3150
    %3152 = vrot.lane.b32.xlu0 %v3090, 96
    %v3153 = vpop.permute.xlu0 %3152
    %3154 = vrot.lane.b32.xlu0 %v3091, 96
    %v3155 = vpop.permute.xlu0 %3154
    %3156 = vrot.lane.b32.xlu0 %v3092, 96
    %v3157 = vpop.permute.xlu0 %3156
    %3158 = vrot.lane.b32.xlu0 %v3093, 96
    %v3159 = vpop.permute.xlu0 %3158
    %3160 = vrot.lane.b32.xlu0 %v3094, 96
    %v3161 = vpop.permute.xlu0 %3160
    %3162 = vrot.lane.b32.xlu0 %v3095, 96
    %v3163 = vpop.permute.xlu0 %3162
    %3173 = vrot.lane.b32.xlu0 %v3094, 32
    %v3174 = vpop.permute.xlu0 %3173
    %3175 = vrot.lane.b32.xlu0 %v3095, 32
    %v3176 = vpop.permute.xlu0 %3175
    %3177 = vrot.lane.b32.xlu0 %v3096, 32
    %v3178 = vpop.permute.xlu0 %3177
    %3179 = vrot.lane.b32.xlu0 %v3097, 32
    %v3180 = vpop.permute.xlu0 %3179
    %3186 = vrot.lane.b32.xlu0 %v3095, 64
    %v3187 = vpop.permute.xlu0 %3186
    %3188 = vrot.lane.b32.xlu0 %v3096, 64
    %v3189 = vpop.permute.xlu0 %3188
    %3190 = vrot.lane.b32.xlu0 %v3097, 64
    %v3191 = vpop.permute.xlu0 %3190
    %3192 = vrot.lane.b32.xlu0 %v3098, 64
    %v3193 = vpop.permute.xlu0 %3192
    %v3198 = vsel %vm2081, %v3086, %v3107
    %v3199 = vsel %vm2081, %v3087, %v3109
    %v3200 = vsel %vm2081, %v3088, %v3111
    %v3201 = vsel %vm2081, %v3089, %v3113
    %v3202 = vsel %vm2081, %v3090, %v3115
    %v3203 = vsel %vm2081, %v3091, %v3117
    %v3204 = vsel %vm2081, %v3092, %v3119
    %v3205 = vsel %vm2120, %v3198, %v3129
    %v3206 = vsel %vm2120, %v3199, %v3131
    %v3207 = vsel %vm2120, %v3200, %v3133
    %v3208 = vsel %vm2120, %v3201, %v3135
    %v3209 = vsel %vm2120, %v3202, %v3137
    %v3210 = vsel %vm2120, %v3203, %v3139
    %v3211 = vsel %vm2120, %v3204, %v3141
    %v3212 = vsel %vm2159, %v3205, %v3151
    %v3213 = vsel %vm2159, %v3206, %v3153
    %v3214 = vsel %vm2159, %v3207, %v3155
    %v3215 = vsel %vm2159, %v3208, %v3157
    %v3216 = vsel %vm2159, %v3209, %v3159
    %v3217 = vsel %vm2159, %v3210, %v3161
    %v3218 = vsel %vm2159, %v3211, %v3163
    %v3219 = vsel %vm2081, %v3093, %v3174
    %v3220 = vsel %vm2081, %v3094, %v3176
    %v3221 = vsel %vm2081, %v3095, %v3178
    %v3222 = vsel %vm2081, %v3096, %v3180
    %v3223 = vsel %vm2120, %v3219, %v3187
    %v3224 = vsel %vm2120, %v3220, %v3189
    %v3225 = vsel %vm2120, %v3221, %v3191
    %v3226 = vsel %vm2120, %v3222, %v3193
    %v3227 = vld [vmem:[%s7] sm:$0xff]
    %v3228 = vld [vmem:[%s7 + $0x8] sm:$0xff]
    %v3229 = vld [vmem:[%s7 + $0x10] sm:$0xff]
    %v3230 = vld [vmem:[%s7 + $0x18] sm:$0xff]
    %v3231 = vld [vmem:[%s7 + $0x20] sm:$0xff]
    %v3232 = vld [vmem:[%s7 + $0x28] sm:$0xff]
    %v3233 = vld [vmem:[%s7 + $0x30] sm:$0xff]
    %v3234 = vld [vmem:[%s7 + $0x38] sm:$0xff]
    %v3235 = vld [vmem:[%s7 + $0x40] sm:$0xff]
    %v3236 = vld [vmem:[%s7 + $0x48] sm:$0xff]
    %v3237 = vld [vmem:[%s7 + $0x50] sm:$0xff]
    %v3238 = vld [vmem:[%s7 + $0x58] sm:$0xff]
    %v3239 = vld [vmem:[%s7 + $0x60] sm:$0xff]
    %v3240 = vld [vmem:[%s7 + $0x68] sm:$0xff]
    %v3241 = vld [vmem:[%s7 + $0x70] sm:$0xff]
    %v3242 = vld [vmem:[%s7 + $0x78] sm:$0xff]
    %v3243 = vld [vmem:[%s7 + $0x80] sm:$0xff]
    %v3244 = vld [vmem:[%s7 + $0x88] sm:$0xff]
    %v3245 = vld [vmem:[%s7 + $0x90] sm:$0xff]
    %v3246 = vld [vmem:[%s7 + $0x98] sm:$0xff]
    %v3247 = vld [vmem:[%s7 + $0xa0] sm:$0xff]
    %v3248 = vld [vmem:[%s7 + $0xa8] sm:$0xff]
    %v3249 = vld [vmem:[%s7 + $0xb0] sm:$0xff]
    %v3250 = vld [vmem:[%s7 + $0xb8] sm:$0xff]
    %v3251 = vld [vmem:[%s7 + $0xc0] sm:$0xff]
    %v3252 = vld [vmem:[%s7 + $0xc8] sm:$0xff]
    %v3253 = vld [vmem:[%s7 + $0xd0] sm:$0xff]
    %v3254 = vld [vmem:[%s7 + $0xd8] sm:$0xff]
    %v3255 = vld [vmem:[#allocation9] sm:$0x1]
    %v3257 = vperm.slane %v3255, 0
    %v3260 = vsel %vm2159, %v3209, 0
    %v3263 = vsel %vm2159, %v3210, 0
    %v3266 = vsel %vm2159, %v3211, 0
    %v3269 = vsel %vm2159, %v3223, 0
    %v3272 = vsel %vm2159, %v3224, 0
    %v3275 = vsel %vm2159, %v3225, 0
    %v3278 = vsel %vm2159, %v3226, 0
    %3280 = vmatpush.msra.mxu0 %v3242
    %3281 = vmatpush.msra.mxu0 %v3241
    %3282 = vmatpush.msra.mxu0 %v3240
    %3283 = vmatpush.msra.mxu0 %v3239
    %3284 = vmatpush.msra.mxu0 %v3238
    %3285 = vmatpush.msra.mxu0 %v3237
    %3286 = vmatpush.msra.mxu0 %v3236
    %3287 = vmatpush.msra.mxu0 %v3235
    %3288 = vmatpush.msra.mxu0 %v3234
    %3289 = vmatpush.msra.mxu0 %v3233
    %3290 = vmatpush.msra.mxu0 %v3232
    %3291 = vmatpush.msra.mxu0 %v3231
    %3292 = vmatpush.msra.mxu0 %v3230
    %3293 = vmatpush.msra.mxu0 %v3229
    %3294 = vmatpush.msra.mxu0 %v3228
    %3295 = vmatpush.msra.mxu0 %v3227
    %3296 = vmatmul.f32.gmra.mxu0 %v3212
    %v3297 = vpop.f32.mrf.mxu0
    %v3298 = vadd.f32 %v3257, %v3297
    %3299 = vmatmul.f32.gmra.mxu0 %v3213
    %v3300 = vpop.f32.mrf.mxu0
    %v3301 = vadd.f32 %v3257, %v3300
    %3302 = vmatmul.f32.gmra.mxu0 %v3214
    %v3303 = vpop.f32.mrf.mxu0
    %v3304 = vadd.f32 %v3257, %v3303
    %3305 = vmatmul.f32.gmra.mxu0 %v3215
    %v3306 = vpop.f32.mrf.mxu0
    %v3307 = vadd.f32 %v3257, %v3306
    %3308 = vmatmul.f32.gmra.mxu0 %v3216
    %v3309 = vpop.f32.mrf.mxu0
    %v3310 = vadd.f32 %v3257, %v3309
    %3311 = vmatmul.f32.gmra.mxu0 %v3217
    %v3312 = vpop.f32.mrf.mxu0
    %v3313 = vadd.f32 %v3257, %v3312
    %3314 = vmatmul.f32.gmra.mxu0 %v3218
    %v3315 = vpop.f32.mrf.mxu0
    %v3316 = vadd.f32 %v3257, %v3315
    %3317 = vdwg.mxu0
    %3318 = vmatpush.msra.mxu0 0.0
    %3319 = vmatpush.msra.mxu0 0.0
    %3320 = vmatpush.msra.mxu0 0.0
    %3321 = vmatpush.msra.mxu0 0.0
    %3322 = vmatpush.msra.mxu0 %v3254
    %3323 = vmatpush.msra.mxu0 %v3253
    %3324 = vmatpush.msra.mxu0 %v3252
    %3325 = vmatpush.msra.mxu0 %v3251
    %3326 = vmatpush.msra.mxu0 %v3250
    %3327 = vmatpush.msra.mxu0 %v3249
    %3328 = vmatpush.msra.mxu0 %v3248
    %3329 = vmatpush.msra.mxu0 %v3247
    %3330 = vmatpush.msra.mxu0 %v3246
    %3331 = vmatpush.msra.mxu0 %v3245
    %3332 = vmatpush.msra.mxu0 %v3244
    %3333 = vmatpush.msra.mxu0 %v3243
    %3334 = vmatmul.f32.gmra.mxu0 %v3260
    %v3335 = vpop.f32.mrf.mxu0
    %v3336 = vadd.f32 %v3298, %v3335
    %3337 = vmatmul.f32.gmra.mxu0 %v3263
    %v3338 = vpop.f32.mrf.mxu0
    %v3339 = vadd.f32 %v3301, %v3338
    %3340 = vmatmul.f32.gmra.mxu0 %v3266
    %v3341 = vpop.f32.mrf.mxu0
    %v3342 = vadd.f32 %v3304, %v3341
    %3343 = vmatmul.f32.gmra.mxu0 %v3269
    %v3344 = vpop.f32.mrf.mxu0
    %v3345 = vadd.f32 %v3307, %v3344
    %3346 = vmatmul.f32.gmra.mxu0 %v3272
    %v3347 = vpop.f32.mrf.mxu0
    %v3348 = vadd.f32 %v3310, %v3347
    %3349 = vmatmul.f32.gmra.mxu0 %v3275
    %v3350 = vpop.f32.mrf.mxu0
    %v3351 = vadd.f32 %v3313, %v3350
    %3352 = vmatmul.f32.gmra.mxu0 %v3278
    %v3353 = vpop.f32.mrf.mxu0
    %v3354 = vadd.f32 %v3316, %v3353
    %3355 = vdwg.mxu0
    %v3356 = vmax.f32 %v3336, 0.0
    %v3357 = vmax.f32 %v3339, 0.0
    %v3358 = vmax.f32 %v3342, 0.0
    %v3359 = vmax.f32 %v3345, 0.0
    %v3360 = vmax.f32 %v3348, 0.0
    %v3361 = vmax.f32 %v3351, 0.0
    %v3362 = vmax.f32 %v3354, 0.0
    %3364 = vrot.lane.b32.xlu0 %v3357, 64
    %v3365 = vpop.permute.xlu0 %3364
    %3368 = vrot.lane.b32.xlu0 %v3359, 64
    %v3369 = vpop.permute.xlu0 %3368
    %3372 = vrot.lane.b32.xlu0 %v3361, 64
    %v3373 = vpop.permute.xlu0 %3372
    %v3375 = vsel %vm2120, %v3356, %v3365
    %v3376 = vsel %vm2120, %v3358, %v3369
    %v3377 = vsel %vm2120, %v3360, %v3373
    %v3378 = vpack.c.bf16 %v3375, %v3375
    %v3379 = vpack.c.bf16 %v3376, %v3376
    %v3380 = vpack.c.bf16 %v3377, %v3377
    %v3381 = vpack.c.bf16 %v3362, %v3362
    %v3382 = vld [vmem:[#allocation10] sm:$0xff]
    %v3383 = vld [vmem:[#allocation10 + $0x8] sm:$0xff]
    %v3384 = vld [vmem:[#allocation10 + $0x10] sm:$0xff]
    %v3385 = vld [vmem:[#allocation10 + $0x18] sm:$0xff]
    %v3386 = vld [vmem:[#allocation10 + $0x20] sm:$0xff]
    %v3387 = vld [vmem:[#allocation10 + $0x28] sm:$0xff]
    %v3388 = vld [vmem:[#allocation10 + $0x30] sm:$0xff]
    %v3389 = vld [vmem:[#allocation10 + $0x38] sm:$0xff]
    %v3390 = vld [vmem:[#allocation10 + $0x40] sm:$0xff]
    %v3391 = vld [vmem:[#allocation10 + $0x48] sm:$0xff]
    %v3392 = vld [vmem:[#allocation10 + $0x50] sm:$0xff]
    %v3393 = vld [vmem:[#allocation10 + $0x58] sm:$0xff]
    %v3394 = vld [vmem:[#allocation10 + $0x60] sm:$0xff]
    %v3395 = vld [vmem:[#allocation10 + $0x68] sm:$0xff]
    %v3396 = vld [vmem:[#allocation10 + $0x70] sm:$0xff]
    %v3397 = vld [vmem:[#allocation10 + $0x78] sm:$0xff]
    %v3398 = vld [vmem:[#allocation10 + $0x80] sm:$0xff]
    %v3399 = vld [vmem:[#allocation10 + $0x88] sm:$0xff]
    %v3400 = vld [vmem:[#allocation10 + $0x90] sm:$0xff]
    %v3401 = vld [vmem:[#allocation10 + $0x98] sm:$0xff]
    %v3402 = vld [vmem:[#allocation10 + $0xa0] sm:$0xff]
    %v3403 = vld [vmem:[#allocation10 + $0xa8] sm:$0xff]
    %v3404 = vld [vmem:[#allocation10 + $0xb0] sm:$0xff]
    %v3405 = vld [vmem:[#allocation10 + $0xb8] sm:$0xff]
    %v3406 = vld [vmem:[#allocation10 + $0xc0] sm:$0xff]
    %v3407 = vld [vmem:[#allocation10 + $0xc8] sm:$0xff]
    %v3408 = vld [vmem:[#allocation10 + $0xd0] sm:$0xff]
    %v3409 = vld [vmem:[#allocation10 + $0xd8] sm:$0xff]
    %v3410 = vld [vmem:[#allocation10 + $0xe0] sm:$0xff]
    %v3411 = vld [vmem:[#allocation10 + $0xe8] sm:$0xff]
    %v3412 = vld [vmem:[#allocation10 + $0xf0] sm:$0xff]
    %v3413 = vld [vmem:[#allocation10 + $0xf8] sm:$0xff]
    %v3414 = vld [vmem:[#allocation10 + $0x100] sm:$0xff]
    %v3415 = vld [vmem:[#allocation10 + $0x108] sm:$0xff]
    %v3416 = vld [vmem:[#allocation10 + $0x110] sm:$0xff]
    %v3417 = vld [vmem:[#allocation10 + $0x118] sm:$0xff]
    %v3418 = vld [vmem:[#allocation10 + $0x120] sm:$0xff]
    %v3419 = vld [vmem:[#allocation10 + $0x128] sm:$0xff]
    %v3420 = vld [vmem:[#allocation10 + $0x130] sm:$0xff]
    %v3421 = vld [vmem:[#allocation10 + $0x138] sm:$0xff]
    %v3422 = vld [vmem:[#allocation10 + $0x140] sm:$0xff]
    %v3423 = vld [vmem:[#allocation10 + $0x148] sm:$0xff]
    %v3424 = vld [vmem:[#allocation10 + $0x150] sm:$0xff]
    %v3425 = vld [vmem:[#allocation10 + $0x158] sm:$0xff]
    %v3426 = vld [vmem:[#allocation10 + $0x160] sm:$0xff]
    %v3427 = vld [vmem:[#allocation10 + $0x168] sm:$0xff]
    %v3428 = vld [vmem:[#allocation10 + $0x170] sm:$0xff]
    %v3429 = vld [vmem:[#allocation10 + $0x178] sm:$0xff]
    %v3430 = vld [vmem:[#allocation10 + $0x180] sm:$0xff]
    %v3431 = vld [vmem:[#allocation10 + $0x188] sm:$0xff]
    %v3432 = vld [vmem:[#allocation10 + $0x190] sm:$0xff]
    %v3433 = vld [vmem:[#allocation10 + $0x198] sm:$0xff]
    %v3434 = vld [vmem:[#allocation10 + $0x1a0] sm:$0xff]
    %v3435 = vld [vmem:[#allocation10 + $0x1a8] sm:$0xff]
    %v3436 = vld [vmem:[#allocation10 + $0x1b0] sm:$0xff]
    %v3437 = vld [vmem:[#allocation10 + $0x1b8] sm:$0xff]
    %v3438 = vld [vmem:[#allocation10 + $0x1c0] sm:$0xff]
    %v3439 = vld [vmem:[#allocation10 + $0x1c8] sm:$0xff]
    %v3440 = vld [vmem:[#allocation10 + $0x1d0] sm:$0xff]
    %v3441 = vld [vmem:[#allocation10 + $0x1d8] sm:$0xff]
    %v3442 = vld [vmem:[#allocation10 + $0x1e0] sm:$0xff]
    %v3443 = vld [vmem:[#allocation10 + $0x1e8] sm:$0xff]
    %v3444 = vld [vmem:[#allocation10 + $0x1f0] sm:$0xff]
    %v3445 = vld [vmem:[#allocation10 + $0x1f8] sm:$0xff]
    %v3446 = vld [vmem:[#allocation10 + $0x200] sm:$0xff]
    %v3447 = vld [vmem:[#allocation10 + $0x208] sm:$0xff]
    %v3448 = vld [vmem:[#allocation10 + $0x210] sm:$0xff]
    %v3449 = vld [vmem:[#allocation10 + $0x218] sm:$0xff]
    %v3450 = vld [vmem:[#allocation10 + $0x220] sm:$0xff]
    %v3451 = vld [vmem:[#allocation10 + $0x228] sm:$0xff]
    %v3452 = vld [vmem:[#allocation10 + $0x230] sm:$0xff]
    %v3453 = vld [vmem:[#allocation10 + $0x238] sm:$0xff]
    %v3454 = vld [vmem:[#allocation10 + $0x240] sm:$0xff]
    %v3455 = vld [vmem:[#allocation10 + $0x248] sm:$0xff]
    %v3456 = vld [vmem:[#allocation10 + $0x250] sm:$0xff]
    %v3457 = vld [vmem:[#allocation10 + $0x258] sm:$0xff]
    %v3458 = vld [vmem:[#allocation10 + $0x260] sm:$0xff]
    %v3459 = vld [vmem:[#allocation10 + $0x268] sm:$0xff]
    %v3460 = vld [vmem:[#allocation10 + $0x270] sm:$0xff]
    %v3461 = vld [vmem:[#allocation10 + $0x278] sm:$0xff]
    %v3462 = vld [vmem:[#allocation10 + $0x280] sm:$0xff]
    %v3463 = vld [vmem:[#allocation10 + $0x288] sm:$0xff]
    %v3464 = vld [vmem:[#allocation10 + $0x290] sm:$0xff]
    %v3465 = vld [vmem:[#allocation10 + $0x298] sm:$0xff]
    %v3466 = vld [vmem:[#allocation10 + $0x2a0] sm:$0xff]
    %v3467 = vld [vmem:[#allocation10 + $0x2a8] sm:$0xff]
    %v3468 = vld [vmem:[#allocation10 + $0x2b0] sm:$0xff]
    %v3469 = vld [vmem:[#allocation10 + $0x2b8] sm:$0xff]
    %v3470 = vld [vmem:[#allocation10 + $0x2c0] sm:$0xff]
    %v3471 = vld [vmem:[#allocation10 + $0x2c8] sm:$0xff]
    %v3472 = vld [vmem:[#allocation10 + $0x2d0] sm:$0xff]
    %v3473 = vld [vmem:[#allocation10 + $0x2d8] sm:$0xff]
    %v3474 = vld [vmem:[#allocation10 + $0x2e0] sm:$0xff]
    %v3475 = vld [vmem:[#allocation10 + $0x2e8] sm:$0xff]
    %v3476 = vld [vmem:[#allocation10 + $0x2f0] sm:$0xff]
    %v3477 = vld [vmem:[#allocation10 + $0x2f8] sm:$0xff]
    %v3478 = vld [vmem:[#allocation10 + $0x300] sm:$0xff]
    %v3479 = vld [vmem:[#allocation10 + $0x308] sm:$0xff]
    %v3480 = vld [vmem:[#allocation10 + $0x310] sm:$0xff]
    %v3481 = vld [vmem:[#allocation10 + $0x318] sm:$0xff]
    %v3482 = vld [vmem:[#allocation10 + $0x320] sm:$0xff]
    %v3483 = vld [vmem:[#allocation10 + $0x328] sm:$0xff]
    %v3484 = vld [vmem:[#allocation10 + $0x330] sm:$0xff]
    %v3485 = vld [vmem:[#allocation10 + $0x338] sm:$0xff]
    %v3486 = vld [vmem:[#allocation10 + $0x340] sm:$0xff]
    %v3487 = vld [vmem:[#allocation10 + $0x348] sm:$0xff]
    %v3488 = vld [vmem:[#allocation10 + $0x350] sm:$0xff]
    %v3489 = vld [vmem:[#allocation10 + $0x358] sm:$0xff]
    %v3490 = vld [vmem:[#allocation10 + $0x360] sm:$0xff]
    %v3491 = vld [vmem:[#allocation10 + $0x368] sm:$0xff]
    %v3492 = vld [vmem:[#allocation10 + $0x370] sm:$0xff]
    %v3493 = vld [vmem:[#allocation10 + $0x378] sm:$0xff]
    %v3494 = vld [vmem:[#allocation10 + $0x380] sm:$0xff]
    %v3495 = vld [vmem:[#allocation10 + $0x388] sm:$0xff]
    %v3496 = vld [vmem:[#allocation10 + $0x390] sm:$0xff]
    %v3497 = vld [vmem:[#allocation10 + $0x398] sm:$0xff]
    %v3498 = vld [vmem:[#allocation10 + $0x3a0] sm:$0xff]
    %v3499 = vld [vmem:[#allocation10 + $0x3a8] sm:$0xff]
    %v3500 = vld [vmem:[#allocation10 + $0x3b0] sm:$0xff]
    %v3501 = vld [vmem:[#allocation10 + $0x3b8] sm:$0xff]
    %v3502 = vld [vmem:[#allocation10 + $0x3c0] sm:$0xff]
    %v3503 = vld [vmem:[#allocation10 + $0x3c8] sm:$0xff]
    %v3504 = vld [vmem:[#allocation10 + $0x3d0] sm:$0xff]
    %v3505 = vld [vmem:[#allocation10 + $0x3d8] sm:$0xff]
    %v3506 = vld [vmem:[#allocation10 + $0x3e0] sm:$0xff]
    %v3507 = vld [vmem:[#allocation10 + $0x3e8] sm:$0xff]
    %v3508 = vld [vmem:[#allocation10 + $0x3f0] sm:$0xff]
    %v3509 = vld [vmem:[#allocation10 + $0x3f8] sm:$0xff]
    %v3510 = vld [vmem:[#allocation10 + $0x400] sm:$0xff]
    %v3511 = vld [vmem:[#allocation10 + $0x408] sm:$0xff]
    %v3512 = vld [vmem:[#allocation10 + $0x410] sm:$0xff]
    %v3513 = vld [vmem:[#allocation10 + $0x418] sm:$0xff]
    %v3514 = vld [vmem:[#allocation10 + $0x420] sm:$0xff]
    %v3515 = vld [vmem:[#allocation10 + $0x428] sm:$0xff]
    %v3516 = vld [vmem:[#allocation10 + $0x430] sm:$0xff]
    %v3517 = vld [vmem:[#allocation10 + $0x438] sm:$0xff]
    %v3518 = vld [vmem:[#allocation10 + $0x440] sm:$0xff]
    %v3519 = vld [vmem:[#allocation10 + $0x448] sm:$0xff]
    %v3520 = vld [vmem:[#allocation10 + $0x450] sm:$0xff]
    %v3521 = vld [vmem:[#allocation10 + $0x458] sm:$0xff]
    %v3522 = vld [vmem:[#allocation10 + $0x460] sm:$0xff]
    %v3523 = vld [vmem:[#allocation10 + $0x468] sm:$0xff]
    %v3524 = vld [vmem:[#allocation10 + $0x470] sm:$0xff]
    %v3525 = vld [vmem:[#allocation10 + $0x478] sm:$0xff]
    %v3526 = vld [vmem:[#allocation10 + $0x480] sm:$0xff]
    %v3527 = vld [vmem:[#allocation10 + $0x488] sm:$0xff]
    %v3528 = vld [vmem:[#allocation10 + $0x490] sm:$0xff]
    %v3529 = vld [vmem:[#allocation10 + $0x498] sm:$0xff]
    %v3530 = vld [vmem:[#allocation10 + $0x4a0] sm:$0xff]
    %v3531 = vld [vmem:[#allocation10 + $0x4a8] sm:$0xff]
    %v3532 = vld [vmem:[#allocation10 + $0x4b0] sm:$0xff]
    %v3533 = vld [vmem:[#allocation10 + $0x4b8] sm:$0xff]
    %v3534 = vld [vmem:[#allocation10 + $0x4c0] sm:$0xff]
    %v3535 = vld [vmem:[#allocation10 + $0x4c8] sm:$0xff]
    %v3536 = vld [vmem:[#allocation10 + $0x4d0] sm:$0xff]
    %v3537 = vld [vmem:[#allocation10 + $0x4d8] sm:$0xff]
    %v3538 = vld [vmem:[#allocation10 + $0x4e0] sm:$0xff]
    %v3539 = vld [vmem:[#allocation10 + $0x4e8] sm:$0xff]
    %v3540 = vld [vmem:[#allocation10 + $0x4f0] sm:$0xff]
    %v3541 = vld [vmem:[#allocation10 + $0x4f8] sm:$0xff]
    %v3542 = vld [vmem:[#allocation10 + $0x500] sm:$0xff]
    %v3543 = vld [vmem:[#allocation10 + $0x508] sm:$0xff]
    %v3544 = vld [vmem:[#allocation10 + $0x510] sm:$0xff]
    %v3545 = vld [vmem:[#allocation10 + $0x518] sm:$0xff]
    %v3546 = vld [vmem:[#allocation10 + $0x520] sm:$0xff]
    %v3547 = vld [vmem:[#allocation10 + $0x528] sm:$0xff]
    %v3548 = vld [vmem:[#allocation10 + $0x530] sm:$0xff]
    %v3549 = vld [vmem:[#allocation10 + $0x538] sm:$0xff]
    %v3550 = vld [vmem:[#allocation10 + $0x540] sm:$0xff]
    %v3551 = vld [vmem:[#allocation10 + $0x548] sm:$0xff]
    %v3552 = vld [vmem:[#allocation10 + $0x550] sm:$0xff]
    %v3553 = vld [vmem:[#allocation10 + $0x558] sm:$0xff]
    %v3554 = vld [vmem:[#allocation10 + $0x560] sm:$0xff]
    %v3555 = vld [vmem:[#allocation10 + $0x568] sm:$0xff]
    %v3556 = vld [vmem:[#allocation10 + $0x570] sm:$0xff]
    %v3557 = vld [vmem:[#allocation10 + $0x578] sm:$0xff]
    %v3558 = vld [vmem:[#allocation10 + $0x580] sm:$0xff]
    %v3559 = vld [vmem:[#allocation10 + $0x588] sm:$0xff]
    %v3560 = vld [vmem:[#allocation10 + $0x590] sm:$0xff]
    %v3561 = vld [vmem:[#allocation10 + $0x598] sm:$0xff]
    %v3562 = vld [vmem:[#allocation10 + $0x5a0] sm:$0xff]
    %v3563 = vld [vmem:[#allocation10 + $0x5a8] sm:$0xff]
    %v3564 = vld [vmem:[#allocation10 + $0x5b0] sm:$0xff]
    %v3565 = vld [vmem:[#allocation10 + $0x5b8] sm:$0xff]
    %v3566 = vld [vmem:[#allocation10 + $0x5c0] sm:$0xff]
    %v3567 = vld [vmem:[#allocation10 + $0x5c8] sm:$0xff]
    %v3568 = vld [vmem:[#allocation10 + $0x5d0] sm:$0xff]
    %v3569 = vld [vmem:[#allocation10 + $0x5d8] sm:$0xff]
    %v3570 = vld [vmem:[#allocation10 + $0x5e0] sm:$0xff]
    %v3571 = vld [vmem:[#allocation10 + $0x5e8] sm:$0xff]
    %v3572 = vld [vmem:[#allocation10 + $0x5f0] sm:$0xff]
    %v3573 = vld [vmem:[#allocation10 + $0x5f8] sm:$0xff]
    %v3574 = vld [vmem:[#allocation10 + $0x600] sm:$0xff]
    %v3575 = vld [vmem:[#allocation10 + $0x608] sm:$0xff]
    %v3576 = vld [vmem:[#allocation10 + $0x610] sm:$0xff]
    %v3577 = vld [vmem:[#allocation10 + $0x618] sm:$0xff]
    %v3578 = vld [vmem:[#allocation10 + $0x620] sm:$0xff]
    %v3579 = vld [vmem:[#allocation10 + $0x628] sm:$0xff]
    %v3580 = vld [vmem:[#allocation10 + $0x630] sm:$0xff]
    %v3581 = vld [vmem:[#allocation10 + $0x638] sm:$0xff]
    %v3582 = vld [vmem:[#allocation10 + $0x640] sm:$0xff]
    %v3583 = vld [vmem:[#allocation10 + $0x648] sm:$0xff]
    %v3584 = vld [vmem:[#allocation10 + $0x650] sm:$0xff]
    %v3585 = vld [vmem:[#allocation10 + $0x658] sm:$0xff]
    %v3586 = vld [vmem:[#allocation10 + $0x660] sm:$0xff]
    %v3587 = vld [vmem:[#allocation10 + $0x668] sm:$0xff]
    %v3588 = vld [vmem:[#allocation10 + $0x670] sm:$0xff]
    %v3589 = vld [vmem:[#allocation10 + $0x678] sm:$0xff]
    %v3590 = vld [vmem:[#allocation10 + $0x680] sm:$0xff]
    %v3591 = vld [vmem:[#allocation10 + $0x688] sm:$0xff]
    %v3592 = vld [vmem:[#allocation10 + $0x690] sm:$0xff]
    %v3593 = vld [vmem:[#allocation10 + $0x698] sm:$0xff]
    %v3594 = vld [vmem:[#allocation10 + $0x6a0] sm:$0xff]
    %v3595 = vld [vmem:[#allocation10 + $0x6a8] sm:$0xff]
    %v3596 = vld [vmem:[#allocation10 + $0x6b0] sm:$0xff]
    %v3597 = vld [vmem:[#allocation10 + $0x6b8] sm:$0xff]
    %v3598 = vld [vmem:[#allocation10 + $0x6c0] sm:$0xff]
    %v3599 = vld [vmem:[#allocation10 + $0x6c8] sm:$0xff]
    %v3600 = vld [vmem:[#allocation10 + $0x6d0] sm:$0xff]
    %v3601 = vld [vmem:[#allocation10 + $0x6d8] sm:$0xff]
    %v3602 = vld [vmem:[#allocation10 + $0x6e0] sm:$0xff]
    %v3603 = vld [vmem:[#allocation10 + $0x6e8] sm:$0xff]
    %v3604 = vld [vmem:[#allocation10 + $0x6f0] sm:$0xff]
    %v3605 = vld [vmem:[#allocation10 + $0x6f8] sm:$0xff]
    %v3606 = vld [vmem:[#allocation10 + $0x700] sm:$0xff]
    %v3607 = vld [vmem:[#allocation10 + $0x708] sm:$0xff]
    %v3608 = vld [vmem:[#allocation10 + $0x710] sm:$0xff]
    %v3609 = vld [vmem:[#allocation10 + $0x718] sm:$0xff]
    %v3610 = vld [vmem:[#allocation10 + $0x720] sm:$0xff]
    %v3611 = vld [vmem:[#allocation10 + $0x728] sm:$0xff]
    %v3612 = vld [vmem:[#allocation10 + $0x730] sm:$0xff]
    %v3613 = vld [vmem:[#allocation10 + $0x738] sm:$0xff]
    %v3614 = vld [vmem:[#allocation10 + $0x740] sm:$0xff]
    %v3615 = vld [vmem:[#allocation10 + $0x748] sm:$0xff]
    %v3616 = vld [vmem:[#allocation10 + $0x750] sm:$0xff]
    %v3617 = vld [vmem:[#allocation10 + $0x758] sm:$0xff]
    %v3618 = vld [vmem:[#allocation10 + $0x760] sm:$0xff]
    %v3619 = vld [vmem:[#allocation10 + $0x768] sm:$0xff]
    %v3620 = vld [vmem:[#allocation10 + $0x770] sm:$0xff]
    %v3621 = vld [vmem:[#allocation10 + $0x778] sm:$0xff]
    %v3622 = vld [vmem:[#allocation10 + $0x780] sm:$0xff]
    %v3623 = vld [vmem:[#allocation10 + $0x788] sm:$0xff]
    %v3624 = vld [vmem:[#allocation10 + $0x790] sm:$0xff]
    %v3625 = vld [vmem:[#allocation10 + $0x798] sm:$0xff]
    %v3626 = vld [vmem:[#allocation10 + $0x7a0] sm:$0xff]
    %v3627 = vld [vmem:[#allocation10 + $0x7a8] sm:$0xff]
    %v3628 = vld [vmem:[#allocation10 + $0x7b0] sm:$0xff]
    %v3629 = vld [vmem:[#allocation10 + $0x7b8] sm:$0xff]
    %v3630 = vld [vmem:[#allocation10 + $0x7c0] sm:$0xff]
    %v3631 = vld [vmem:[#allocation10 + $0x7c8] sm:$0xff]
    %v3632 = vld [vmem:[#allocation10 + $0x7d0] sm:$0xff]
    %v3633 = vld [vmem:[#allocation10 + $0x7d8] sm:$0xff]
    %v3634 = vld [vmem:[#allocation10 + $0x7e0] sm:$0xff]
    %v3635 = vld [vmem:[#allocation10 + $0x7e8] sm:$0xff]
    %v3636 = vld [vmem:[#allocation10 + $0x7f0] sm:$0xff]
    %v3637 = vld [vmem:[#allocation10 + $0x7f8] sm:$0xff]
    %v3638 = vld [vmem:[#allocation10 + $0x800] sm:$0xff]
    %v3639 = vld [vmem:[#allocation10 + $0x808] sm:$0xff]
    %v3640 = vld [vmem:[#allocation10 + $0x810] sm:$0xff]
    %v3641 = vld [vmem:[#allocation10 + $0x818] sm:$0xff]
    %v3642 = vld [vmem:[#allocation10 + $0x820] sm:$0xff]
    %v3643 = vld [vmem:[#allocation10 + $0x828] sm:$0xff]
    %v3644 = vld [vmem:[#allocation10 + $0x830] sm:$0xff]
    %v3645 = vld [vmem:[#allocation10 + $0x838] sm:$0xff]
    %v3646 = vld [vmem:[#allocation10 + $0x840] sm:$0xff]
    %v3647 = vld [vmem:[#allocation10 + $0x848] sm:$0xff]
    %v3648 = vld [vmem:[#allocation10 + $0x850] sm:$0xff]
    %v3649 = vld [vmem:[#allocation10 + $0x858] sm:$0xff]
    %v3650 = vld [vmem:[#allocation10 + $0x860] sm:$0xff]
    %v3651 = vld [vmem:[#allocation10 + $0x868] sm:$0xff]
    %v3652 = vld [vmem:[#allocation10 + $0x870] sm:$0xff]
    %v3653 = vld [vmem:[#allocation10 + $0x878] sm:$0xff]
    %v3654 = vld [vmem:[#allocation10 + $0x880] sm:$0xff]
    %v3655 = vld [vmem:[#allocation10 + $0x888] sm:$0xff]
    %v3656 = vld [vmem:[#allocation10 + $0x890] sm:$0xff]
    %v3657 = vld [vmem:[#allocation10 + $0x898] sm:$0xff]
    %v3658 = vld [vmem:[#allocation10 + $0x8a0] sm:$0xff]
    %v3659 = vld [vmem:[#allocation10 + $0x8a8] sm:$0xff]
    %v3660 = vld [vmem:[#allocation10 + $0x8b0] sm:$0xff]
    %v3661 = vld [vmem:[#allocation10 + $0x8b8] sm:$0xff]
    %v3662 = vld [vmem:[#allocation10 + $0x8c0] sm:$0xff]
    %v3663 = vld [vmem:[#allocation10 + $0x8c8] sm:$0xff]
    %v3664 = vld [vmem:[#allocation10 + $0x8d0] sm:$0xff]
    %v3665 = vld [vmem:[#allocation10 + $0x8d8] sm:$0xff]
    %v3666 = vld [vmem:[#allocation10 + $0x8e0] sm:$0xff]
    %v3667 = vld [vmem:[#allocation10 + $0x8e8] sm:$0xff]
    %v3668 = vld [vmem:[#allocation10 + $0x8f0] sm:$0xff]
    %v3669 = vld [vmem:[#allocation10 + $0x8f8] sm:$0xff]
    %v3670 = vld [vmem:[#allocation10 + $0x900] sm:$0xff]
    %v3671 = vld [vmem:[#allocation10 + $0x908] sm:$0xff]
    %v3672 = vld [vmem:[#allocation10 + $0x910] sm:$0xff]
    %v3673 = vld [vmem:[#allocation10 + $0x918] sm:$0xff]
    %v3674 = vld [vmem:[#allocation10 + $0x920] sm:$0xff]
    %v3675 = vld [vmem:[#allocation10 + $0x928] sm:$0xff]
    %v3676 = vld [vmem:[#allocation10 + $0x930] sm:$0xff]
    %v3677 = vld [vmem:[#allocation10 + $0x938] sm:$0xff]
    %v3678 = vld [vmem:[#allocation10 + $0x940] sm:$0xff]
    %v3679 = vld [vmem:[#allocation10 + $0x948] sm:$0xff]
    %v3680 = vld [vmem:[#allocation10 + $0x950] sm:$0xff]
    %v3681 = vld [vmem:[#allocation10 + $0x958] sm:$0xff]
    %v3682 = vld [vmem:[#allocation10 + $0x960] sm:$0xff]
    %v3683 = vld [vmem:[#allocation10 + $0x968] sm:$0xff]
    %v3684 = vld [vmem:[#allocation10 + $0x970] sm:$0xff]
    %v3685 = vld [vmem:[#allocation10 + $0x978] sm:$0xff]
    %v3686 = vld [vmem:[#allocation10 + $0x980] sm:$0xff]
    %v3687 = vld [vmem:[#allocation10 + $0x988] sm:$0xff]
    %v3688 = vld [vmem:[#allocation10 + $0x990] sm:$0xff]
    %v3689 = vld [vmem:[#allocation10 + $0x998] sm:$0xff]
    %v3690 = vld [vmem:[#allocation10 + $0x9a0] sm:$0xff]
    %v3691 = vld [vmem:[#allocation10 + $0x9a8] sm:$0xff]
    %v3692 = vld [vmem:[#allocation10 + $0x9b0] sm:$0xff]
    %v3693 = vld [vmem:[#allocation10 + $0x9b8] sm:$0xff]
    %v3694 = vld [vmem:[#allocation10 + $0x9c0] sm:$0xff]
    %v3695 = vld [vmem:[#allocation10 + $0x9c8] sm:$0xff]
    %v3696 = vld [vmem:[#allocation10 + $0x9d0] sm:$0xff]
    %v3697 = vld [vmem:[#allocation10 + $0x9d8] sm:$0xff]
    %v3698 = vld [vmem:[#allocation10 + $0x9e0] sm:$0xff]
    %v3699 = vld [vmem:[#allocation10 + $0x9e8] sm:$0xff]
    %v3700 = vld [vmem:[#allocation10 + $0x9f0] sm:$0xff]
    %v3701 = vld [vmem:[#allocation10 + $0x9f8] sm:$0xff]
    %v3702 = vld [vmem:[#allocation10 + $0xa00] sm:$0xff]
    %v3703 = vld [vmem:[#allocation10 + $0xa08] sm:$0xff]
    %v3704 = vld [vmem:[#allocation10 + $0xa10] sm:$0xff]
    %v3705 = vld [vmem:[#allocation10 + $0xa18] sm:$0xff]
    %v3706 = vld [vmem:[#allocation10 + $0xa20] sm:$0xff]
    %v3707 = vld [vmem:[#allocation10 + $0xa28] sm:$0xff]
    %v3708 = vld [vmem:[#allocation10 + $0xa30] sm:$0xff]
    %v3709 = vld [vmem:[#allocation10 + $0xa38] sm:$0xff]
    %v3710 = vld [vmem:[#allocation10 + $0xa40] sm:$0xff]
    %v3711 = vld [vmem:[#allocation10 + $0xa48] sm:$0xff]
    %v3712 = vld [vmem:[#allocation10 + $0xa50] sm:$0xff]
    %v3713 = vld [vmem:[#allocation10 + $0xa58] sm:$0xff]
    %v3714 = vld [vmem:[#allocation10 + $0xa60] sm:$0xff]
    %v3715 = vld [vmem:[#allocation10 + $0xa68] sm:$0xff]
    %v3716 = vld [vmem:[#allocation10 + $0xa70] sm:$0xff]
    %v3717 = vld [vmem:[#allocation10 + $0xa78] sm:$0xff]
    %v3718 = vld [vmem:[#allocation10 + $0xa80] sm:$0xff]
    %v3719 = vld [vmem:[#allocation10 + $0xa88] sm:$0xff]
    %v3720 = vld [vmem:[#allocation10 + $0xa90] sm:$0xff]
    %v3721 = vld [vmem:[#allocation10 + $0xa98] sm:$0xff]
    %v3722 = vld [vmem:[#allocation10 + $0xaa0] sm:$0xff]
    %v3723 = vld [vmem:[#allocation10 + $0xaa8] sm:$0xff]
    %v3724 = vld [vmem:[#allocation10 + $0xab0] sm:$0xff]
    %v3725 = vld [vmem:[#allocation10 + $0xab8] sm:$0xff]
    %v3726 = vld [vmem:[#allocation10 + $0xac0] sm:$0xff]
    %v3727 = vld [vmem:[#allocation10 + $0xac8] sm:$0xff]
    %v3728 = vld [vmem:[#allocation10 + $0xad0] sm:$0xff]
    %v3729 = vld [vmem:[#allocation10 + $0xad8] sm:$0xff]
    %v3730 = vld [vmem:[#allocation10 + $0xae0] sm:$0xff]
    %v3731 = vld [vmem:[#allocation10 + $0xae8] sm:$0xff]
    %v3732 = vld [vmem:[#allocation10 + $0xaf0] sm:$0xff]
    %v3733 = vld [vmem:[#allocation10 + $0xaf8] sm:$0xff]
    %v3734 = vld [vmem:[#allocation10 + $0xb00] sm:$0xff]
    %v3735 = vld [vmem:[#allocation10 + $0xb08] sm:$0xff]
    %v3736 = vld [vmem:[#allocation10 + $0xb10] sm:$0xff]
    %v3737 = vld [vmem:[#allocation10 + $0xb18] sm:$0xff]
    %v3738 = vld [vmem:[#allocation10 + $0xb20] sm:$0xff]
    %v3739 = vld [vmem:[#allocation10 + $0xb28] sm:$0xff]
    %v3740 = vld [vmem:[#allocation10 + $0xb30] sm:$0xff]
    %v3741 = vld [vmem:[#allocation10 + $0xb38] sm:$0xff]
    %v3742 = vld [vmem:[#allocation10 + $0xb40] sm:$0xff]
    %v3743 = vld [vmem:[#allocation10 + $0xb48] sm:$0xff]
    %v3744 = vld [vmem:[#allocation10 + $0xb50] sm:$0xff]
    %v3745 = vld [vmem:[#allocation10 + $0xb58] sm:$0xff]
    %v3746 = vld [vmem:[#allocation10 + $0xb60] sm:$0xff]
    %v3747 = vld [vmem:[#allocation10 + $0xb68] sm:$0xff]
    %v3748 = vld [vmem:[#allocation10 + $0xb70] sm:$0xff]
    %v3749 = vld [vmem:[#allocation10 + $0xb78] sm:$0xff]
    %v3750 = vld [vmem:[#allocation10 + $0xb80] sm:$0xff]
    %v3751 = vld [vmem:[#allocation10 + $0xb88] sm:$0xff]
    %v3752 = vld [vmem:[#allocation10 + $0xb90] sm:$0xff]
    %v3753 = vld [vmem:[#allocation10 + $0xb98] sm:$0xff]
    %v3754 = vld [vmem:[#allocation10 + $0xba0] sm:$0xff]
    %v3755 = vld [vmem:[#allocation10 + $0xba8] sm:$0xff]
    %v3756 = vld [vmem:[#allocation10 + $0xbb0] sm:$0xff]
    %v3757 = vld [vmem:[#allocation10 + $0xbb8] sm:$0xff]
    %v3758 = vld [vmem:[#allocation10 + $0xbc0] sm:$0xff]
    %v3759 = vld [vmem:[#allocation10 + $0xbc8] sm:$0xff]
    %v3760 = vld [vmem:[#allocation10 + $0xbd0] sm:$0xff]
    %v3761 = vld [vmem:[#allocation10 + $0xbd8] sm:$0xff]
    %v3762 = vld [vmem:[#allocation10 + $0xbe0] sm:$0xff]
    %v3763 = vld [vmem:[#allocation10 + $0xbe8] sm:$0xff]
    %v3764 = vld [vmem:[#allocation10 + $0xbf0] sm:$0xff]
    %v3765 = vld [vmem:[#allocation10 + $0xbf8] sm:$0xff]
    %v3766 = vld [vmem:[#allocation10 + $0xc00] sm:$0xff]
    %v3767 = vld [vmem:[#allocation10 + $0xc08] sm:$0xff]
    %v3768 = vld [vmem:[#allocation10 + $0xc10] sm:$0xff]
    %v3769 = vld [vmem:[#allocation10 + $0xc18] sm:$0xff]
    %v3770 = vld [vmem:[#allocation10 + $0xc20] sm:$0xff]
    %v3771 = vld [vmem:[#allocation10 + $0xc28] sm:$0xff]
    %v3772 = vld [vmem:[#allocation10 + $0xc30] sm:$0xff]
    %v3773 = vld [vmem:[#allocation10 + $0xc38] sm:$0xff]
    %v3774 = vld [vmem:[#allocation10 + $0xc40] sm:$0xff]
    %v3775 = vld [vmem:[#allocation10 + $0xc48] sm:$0xff]
    %v3776 = vld [vmem:[#allocation10 + $0xc50] sm:$0xff]
    %v3777 = vld [vmem:[#allocation10 + $0xc58] sm:$0xff]
    %v3778 = vld [vmem:[#allocation10 + $0xc60] sm:$0xff]
    %v3779 = vld [vmem:[#allocation10 + $0xc68] sm:$0xff]
    %v3780 = vld [vmem:[#allocation10 + $0xc70] sm:$0xff]
    %v3781 = vld [vmem:[#allocation10 + $0xc78] sm:$0xff]
    %v3782 = vld [vmem:[#allocation10 + $0xc80] sm:$0xff]
    %v3783 = vld [vmem:[#allocation10 + $0xc88] sm:$0xff]
    %v3784 = vld [vmem:[#allocation10 + $0xc90] sm:$0xff]
    %v3785 = vld [vmem:[#allocation10 + $0xc98] sm:$0xff]
    %v3786 = vld [vmem:[#allocation10 + $0xca0] sm:$0xff]
    %v3787 = vld [vmem:[#allocation10 + $0xca8] sm:$0xff]
    %v3788 = vld [vmem:[#allocation10 + $0xcb0] sm:$0xff]
    %v3789 = vld [vmem:[#allocation10 + $0xcb8] sm:$0xff]
    %v3790 = vld [vmem:[#allocation10 + $0xcc0] sm:$0xff]
    %v3791 = vld [vmem:[#allocation10 + $0xcc8] sm:$0xff]
    %v3792 = vld [vmem:[#allocation10 + $0xcd0] sm:$0xff]
    %v3793 = vld [vmem:[#allocation10 + $0xcd8] sm:$0xff]
    %v3794 = vld [vmem:[#allocation10 + $0xce0] sm:$0xff]
    %v3795 = vld [vmem:[#allocation10 + $0xce8] sm:$0xff]
    %v3796 = vld [vmem:[#allocation10 + $0xcf0] sm:$0xff]
    %v3797 = vld [vmem:[#allocation10 + $0xcf8] sm:$0xff]
    %v3798 = vld [vmem:[#allocation10 + $0xd00] sm:$0xff]
    %v3799 = vld [vmem:[#allocation10 + $0xd08] sm:$0xff]
    %v3800 = vld [vmem:[#allocation10 + $0xd10] sm:$0xff]
    %v3801 = vld [vmem:[#allocation10 + $0xd18] sm:$0xff]
    %v3802 = vld [vmem:[#allocation10 + $0xd20] sm:$0xff]
    %v3803 = vld [vmem:[#allocation10 + $0xd28] sm:$0xff]
    %v3804 = vld [vmem:[#allocation10 + $0xd30] sm:$0xff]
    %v3805 = vld [vmem:[#allocation10 + $0xd38] sm:$0xff]
    %v3806 = vld [vmem:[#allocation10 + $0xd40] sm:$0xff]
    %v3807 = vld [vmem:[#allocation10 + $0xd48] sm:$0xff]
    %v3808 = vld [vmem:[#allocation10 + $0xd50] sm:$0xff]
    %v3809 = vld [vmem:[#allocation10 + $0xd58] sm:$0xff]
    %v3810 = vld [vmem:[#allocation10 + $0xd60] sm:$0xff]
    %v3811 = vld [vmem:[#allocation10 + $0xd68] sm:$0xff]
    %v3812 = vld [vmem:[#allocation10 + $0xd70] sm:$0xff]
    %v3813 = vld [vmem:[#allocation10 + $0xd78] sm:$0xff]
    %v3814 = vld [vmem:[#allocation10 + $0xd80] sm:$0xff]
    %v3815 = vld [vmem:[#allocation10 + $0xd88] sm:$0xff]
    %v3816 = vld [vmem:[#allocation10 + $0xd90] sm:$0xff]
    %v3817 = vld [vmem:[#allocation10 + $0xd98] sm:$0xff]
    %v3818 = vld [vmem:[#allocation10 + $0xda0] sm:$0xff]
    %v3819 = vld [vmem:[#allocation10 + $0xda8] sm:$0xff]
    %v3820 = vld [vmem:[#allocation10 + $0xdb0] sm:$0xff]
    %v3821 = vld [vmem:[#allocation10 + $0xdb8] sm:$0xff]
    %v3822 = vld [vmem:[#allocation10 + $0xdc0] sm:$0xff]
    %v3823 = vld [vmem:[#allocation10 + $0xdc8] sm:$0xff]
    %v3824 = vld [vmem:[#allocation10 + $0xdd0] sm:$0xff]
    %v3825 = vld [vmem:[#allocation10 + $0xdd8] sm:$0xff]
    %v3826 = vld [vmem:[#allocation10 + $0xde0] sm:$0xff]
    %v3827 = vld [vmem:[#allocation10 + $0xde8] sm:$0xff]
    %v3828 = vld [vmem:[#allocation10 + $0xdf0] sm:$0xff]
    %v3829 = vld [vmem:[#allocation10 + $0xdf8] sm:$0xff]
    %v3830 = vld [vmem:[#allocation12] sm:$0xff]
    %v3831 = vld [vmem:[#allocation12 + $0x8] sm:$0xff]
    %v3834 = vperm.slane %v3830, 0
    %v3835 = vperm.slane %v3830, 1
    %v3836 = vperm.slane %v3830, 2
    %v3837 = vperm.slane %v3830, 3
    %v3838 = vperm.slane %v3830, 4
    %v3839 = vperm.slane %v3830, 5
    %v3840 = vperm.slane %v3830, 6
    %v3841 = vperm.slane %v3830, 7
    %v3842 = vperm.slane %v3831, 0
    %v3843 = vperm.slane %v3831, 1
    %v3844 = vperm.slane %v3831, 2
    %v3845 = vperm.slane %v3831, 3
    %v3846 = vperm.slane %v3831, 4
    %v3847 = vperm.slane %v3831, 5
    %v3848 = vperm.slane %v3831, 6
    %v3849 = vperm.slane %v3831, 7
    %v4314 = vunpack.c.l.b16 %v3382
    %v4315 = vunpack.c.h.b16 %v3382
    %v4316 = vunpack.c.l.b16 %v3383
    %v4317 = vunpack.c.h.b16 %v3383
    %v4318 = vunpack.c.l.b16 %v3384
    %v4319 = vunpack.c.h.b16 %v3384
    %v4320 = vunpack.c.l.b16 %v3385
    %v4321 = vunpack.c.h.b16 %v3385
    %v4322 = vunpack.c.l.b16 %v3386
    %v4323 = vunpack.c.h.b16 %v3386
    %v4324 = vunpack.c.l.b16 %v3387
    %v4325 = vunpack.c.h.b16 %v3387
    %v4326 = vunpack.c.l.b16 %v3388
    %v4327 = vunpack.c.h.b16 %v3388
    %v4328 = vunpack.c.l.b16 %v3389
    %v4329 = vunpack.c.h.b16 %v3389
    %v4330 = vunpack.c.l.b16 %v3390
    %v4331 = vunpack.c.h.b16 %v3390
    %v4332 = vunpack.c.l.b16 %v3391
    %v4333 = vunpack.c.h.b16 %v3391
    %v4334 = vunpack.c.l.b16 %v3392
    %v4335 = vunpack.c.h.b16 %v3392
    %v4336 = vunpack.c.l.b16 %v3393
    %v4337 = vunpack.c.h.b16 %v3393
    %v4338 = vunpack.c.l.b16 %v3394
    %v4339 = vunpack.c.h.b16 %v3394
    %v4340 = vunpack.c.l.b16 %v3395
    %v4341 = vunpack.c.h.b16 %v3395
    %v4342 = vunpack.c.l.b16 %v3396
    %v4343 = vunpack.c.h.b16 %v3396
    %v4344 = vunpack.c.l.b16 %v3397
    %v4345 = vunpack.c.h.b16 %v3397
    %v4346 = vunpack.c.l.b16 %v3398
    %v4347 = vunpack.c.h.b16 %v3398
    %v4348 = vunpack.c.l.b16 %v3399
    %v4349 = vunpack.c.h.b16 %v3399
    %v4350 = vunpack.c.l.b16 %v3400
    %v4351 = vunpack.c.h.b16 %v3400
    %v4352 = vunpack.c.l.b16 %v3401
    %v4353 = vunpack.c.h.b16 %v3401
    %v4354 = vunpack.c.l.b16 %v3402
    %v4355 = vunpack.c.h.b16 %v3402
    %v4356 = vunpack.c.l.b16 %v3403
    %v4357 = vunpack.c.h.b16 %v3403
    %v4358 = vunpack.c.l.b16 %v3404
    %v4359 = vunpack.c.h.b16 %v3404
    %v4360 = vunpack.c.l.b16 %v3405
    %v4361 = vunpack.c.h.b16 %v3405
    %v4362 = vunpack.c.l.b16 %v3406
    %v4363 = vunpack.c.h.b16 %v3406
    %v4364 = vunpack.c.l.b16 %v3407
    %v4365 = vunpack.c.h.b16 %v3407
    %v4366 = vunpack.c.l.b16 %v3408
    %v4367 = vunpack.c.h.b16 %v3408
    %v4368 = vunpack.c.l.b16 %v3409
    %v4369 = vunpack.c.h.b16 %v3409
    %v4370 = vunpack.c.l.b16 %v3410
    %v4371 = vunpack.c.h.b16 %v3410
    %v4372 = vunpack.c.l.b16 %v3411
    %v4373 = vunpack.c.h.b16 %v3411
    %v4374 = vunpack.c.l.b16 %v3412
    %v4375 = vunpack.c.h.b16 %v3412
    %v4376 = vunpack.c.l.b16 %v3413
    %v4377 = vunpack.c.h.b16 %v3413
    %v4378 = vunpack.c.l.b16 %v3414
    %v4379 = vunpack.c.h.b16 %v3414
    %v4380 = vunpack.c.l.b16 %v3415
    %v4381 = vunpack.c.h.b16 %v3415
    %v4382 = vunpack.c.l.b16 %v3416
    %v4383 = vunpack.c.h.b16 %v3416
    %v4384 = vunpack.c.l.b16 %v3417
    %v4385 = vunpack.c.h.b16 %v3417
    %v4386 = vunpack.c.l.b16 %v3418
    %v4387 = vunpack.c.h.b16 %v3418
    %v4388 = vunpack.c.l.b16 %v3419
    %v4389 = vunpack.c.h.b16 %v3419
    %v4390 = vunpack.c.l.b16 %v3420
    %v4391 = vunpack.c.h.b16 %v3420
    %v4392 = vunpack.c.l.b16 %v3421
    %v4393 = vunpack.c.h.b16 %v3421
    %v4394 = vunpack.c.l.b16 %v3422
    %v4395 = vunpack.c.h.b16 %v3422
    %v4396 = vunpack.c.l.b16 %v3423
    %v4397 = vunpack.c.h.b16 %v3423
    %v4398 = vunpack.c.l.b16 %v3424
    %v4399 = vunpack.c.h.b16 %v3424
    %v4400 = vunpack.c.l.b16 %v3425
    %v4401 = vunpack.c.h.b16 %v3425
    %v4402 = vunpack.c.l.b16 %v3426
    %v4403 = vunpack.c.h.b16 %v3426
    %v4404 = vunpack.c.l.b16 %v3427
    %v4405 = vunpack.c.h.b16 %v3427
    %v4406 = vunpack.c.l.b16 %v3428
    %v4407 = vunpack.c.h.b16 %v3428
    %v4408 = vunpack.c.l.b16 %v3429
    %v4409 = vunpack.c.h.b16 %v3429
    %v4410 = vunpack.c.l.b16 %v3430
    %v4411 = vunpack.c.h.b16 %v3430
    %v4412 = vunpack.c.l.b16 %v3431
    %v4413 = vunpack.c.h.b16 %v3431
    %v4414 = vunpack.c.l.b16 %v3432
    %v4415 = vunpack.c.h.b16 %v3432
    %v4416 = vunpack.c.l.b16 %v3433
    %v4417 = vunpack.c.h.b16 %v3433
    %v4418 = vunpack.c.l.b16 %v3434
    %v4419 = vunpack.c.h.b16 %v3434
    %v4420 = vunpack.c.l.b16 %v3435
    %v4421 = vunpack.c.h.b16 %v3435
    %v4422 = vunpack.c.l.b16 %v3436
    %v4423 = vunpack.c.h.b16 %v3436
    %v4424 = vunpack.c.l.b16 %v3437
    %v4425 = vunpack.c.h.b16 %v3437
    %v4426 = vunpack.c.l.b16 %v3438
    %v4427 = vunpack.c.h.b16 %v3438
    %v4428 = vunpack.c.l.b16 %v3439
    %v4429 = vunpack.c.h.b16 %v3439
    %v4430 = vunpack.c.l.b16 %v3440
    %v4431 = vunpack.c.h.b16 %v3440
    %v4432 = vunpack.c.l.b16 %v3441
    %v4433 = vunpack.c.h.b16 %v3441
    %v4434 = vunpack.c.l.b16 %v3442
    %v4435 = vunpack.c.h.b16 %v3442
    %v4436 = vunpack.c.l.b16 %v3443
    %v4437 = vunpack.c.h.b16 %v3443
    %v4438 = vunpack.c.l.b16 %v3444
    %v4439 = vunpack.c.h.b16 %v3444
    %v4440 = vunpack.c.l.b16 %v3445
    %v4441 = vunpack.c.h.b16 %v3445
    %v4442 = vunpack.c.l.b16 %v3446
    %v4443 = vunpack.c.h.b16 %v3446
    %v4444 = vunpack.c.l.b16 %v3447
    %v4445 = vunpack.c.h.b16 %v3447
    %v4446 = vunpack.c.l.b16 %v3448
    %v4447 = vunpack.c.h.b16 %v3448
    %v4448 = vunpack.c.l.b16 %v3449
    %v4449 = vunpack.c.h.b16 %v3449
    %v4450 = vunpack.c.l.b16 %v3450
    %v4451 = vunpack.c.h.b16 %v3450
    %v4452 = vunpack.c.l.b16 %v3451
    %v4453 = vunpack.c.h.b16 %v3451
    %v4454 = vunpack.c.l.b16 %v3452
    %v4455 = vunpack.c.h.b16 %v3452
    %v4456 = vunpack.c.l.b16 %v3453
    %v4457 = vunpack.c.h.b16 %v3453
    %v4458 = vunpack.c.l.b16 %v3454
    %v4459 = vunpack.c.h.b16 %v3454
    %v4460 = vunpack.c.l.b16 %v3455
    %v4461 = vunpack.c.h.b16 %v3455
    %v4462 = vunpack.c.l.b16 %v3456
    %v4463 = vunpack.c.h.b16 %v3456
    %v4464 = vunpack.c.l.b16 %v3457
    %v4465 = vunpack.c.h.b16 %v3457
    %v4466 = vunpack.c.l.b16 %v3458
    %v4467 = vunpack.c.h.b16 %v3458
    %v4468 = vunpack.c.l.b16 %v3459
    %v4469 = vunpack.c.h.b16 %v3459
    %v4470 = vunpack.c.l.b16 %v3460
    %v4471 = vunpack.c.h.b16 %v3460
    %v4472 = vunpack.c.l.b16 %v3461
    %v4473 = vunpack.c.h.b16 %v3461
    %v4474 = vunpack.c.l.b16 %v3462
    %v4475 = vunpack.c.h.b16 %v3462
    %v4476 = vunpack.c.l.b16 %v3463
    %v4477 = vunpack.c.h.b16 %v3463
    %v4478 = vunpack.c.l.b16 %v3464
    %v4479 = vunpack.c.h.b16 %v3464
    %v4480 = vunpack.c.l.b16 %v3465
    %v4481 = vunpack.c.h.b16 %v3465
    %v4482 = vunpack.c.l.b16 %v3466
    %v4483 = vunpack.c.h.b16 %v3466
    %v4484 = vunpack.c.l.b16 %v3467
    %v4485 = vunpack.c.h.b16 %v3467
    %v4486 = vunpack.c.l.b16 %v3468
    %v4487 = vunpack.c.h.b16 %v3468
    %v4488 = vunpack.c.l.b16 %v3469
    %v4489 = vunpack.c.h.b16 %v3469
    %v4490 = vunpack.c.l.b16 %v3470
    %v4491 = vunpack.c.h.b16 %v3470
    %v4492 = vunpack.c.l.b16 %v3471
    %v4493 = vunpack.c.h.b16 %v3471
    %v4494 = vunpack.c.l.b16 %v3472
    %v4495 = vunpack.c.h.b16 %v3472
    %v4496 = vunpack.c.l.b16 %v3473
    %v4497 = vunpack.c.h.b16 %v3473
    %v4498 = vunpack.c.l.b16 %v3474
    %v4499 = vunpack.c.h.b16 %v3474
    %v4500 = vunpack.c.l.b16 %v3475
    %v4501 = vunpack.c.h.b16 %v3475
    %v4502 = vunpack.c.l.b16 %v3476
    %v4503 = vunpack.c.h.b16 %v3476
    %v4504 = vunpack.c.l.b16 %v3477
    %v4505 = vunpack.c.h.b16 %v3477
    %v4506 = vunpack.c.l.b16 %v3478
    %v4507 = vunpack.c.h.b16 %v3478
    %v4508 = vunpack.c.l.b16 %v3479
    %v4509 = vunpack.c.h.b16 %v3479
    %v4510 = vunpack.c.l.b16 %v3480
    %v4511 = vunpack.c.h.b16 %v3480
    %v4512 = vunpack.c.l.b16 %v3481
    %v4513 = vunpack.c.h.b16 %v3481
    %v4514 = vunpack.c.l.b16 %v3482
    %v4515 = vunpack.c.h.b16 %v3482
    %v4516 = vunpack.c.l.b16 %v3483
    %v4517 = vunpack.c.h.b16 %v3483
    %v4518 = vunpack.c.l.b16 %v3484
    %v4519 = vunpack.c.h.b16 %v3484
    %v4520 = vunpack.c.l.b16 %v3485
    %v4521 = vunpack.c.h.b16 %v3485
    %v4522 = vunpack.c.l.b16 %v3486
    %v4523 = vunpack.c.h.b16 %v3486
    %v4524 = vunpack.c.l.b16 %v3487
    %v4525 = vunpack.c.h.b16 %v3487
    %v4526 = vunpack.c.l.b16 %v3488
    %v4527 = vunpack.c.h.b16 %v3488
    %v4528 = vunpack.c.l.b16 %v3489
    %v4529 = vunpack.c.h.b16 %v3489
    %v4530 = vunpack.c.l.b16 %v3490
    %v4531 = vunpack.c.h.b16 %v3490
    %v4532 = vunpack.c.l.b16 %v3491
    %v4533 = vunpack.c.h.b16 %v3491
    %v4534 = vunpack.c.l.b16 %v3492
    %v4535 = vunpack.c.h.b16 %v3492
    %v4536 = vunpack.c.l.b16 %v3493
    %v4537 = vunpack.c.h.b16 %v3493
    %v4538 = vunpack.c.l.b16 %v3494
    %v4539 = vunpack.c.h.b16 %v3494
    %v4540 = vunpack.c.l.b16 %v3495
    %v4541 = vunpack.c.h.b16 %v3495
    %v4542 = vunpack.c.l.b16 %v3496
    %v4543 = vunpack.c.h.b16 %v3496
    %v4544 = vunpack.c.l.b16 %v3497
    %v4545 = vunpack.c.h.b16 %v3497
    %v4546 = vunpack.c.l.b16 %v3498
    %v4547 = vunpack.c.h.b16 %v3498
    %v4548 = vunpack.c.l.b16 %v3499
    %v4549 = vunpack.c.h.b16 %v3499
    %v4550 = vunpack.c.l.b16 %v3500
    %v4551 = vunpack.c.h.b16 %v3500
    %v4552 = vunpack.c.l.b16 %v3501
    %v4553 = vunpack.c.h.b16 %v3501
    %v4554 = vunpack.c.l.b16 %v3502
    %v4555 = vunpack.c.h.b16 %v3502
    %v4556 = vunpack.c.l.b16 %v3503
    %v4557 = vunpack.c.h.b16 %v3503
    %v4558 = vunpack.c.l.b16 %v3504
    %v4559 = vunpack.c.h.b16 %v3504
    %v4560 = vunpack.c.l.b16 %v3505
    %v4561 = vunpack.c.h.b16 %v3505
    %v4562 = vunpack.c.l.b16 %v3506
    %v4563 = vunpack.c.h.b16 %v3506
    %v4564 = vunpack.c.l.b16 %v3507
    %v4565 = vunpack.c.h.b16 %v3507
    %v4566 = vunpack.c.l.b16 %v3508
    %v4567 = vunpack.c.h.b16 %v3508
    %v4568 = vunpack.c.l.b16 %v3509
    %v4569 = vunpack.c.h.b16 %v3509
    %v4570 = vunpack.c.l.b16 %v3510
    %v4571 = vunpack.c.h.b16 %v3510
    %v4572 = vunpack.c.l.b16 %v3511
    %v4573 = vunpack.c.h.b16 %v3511
    %v4574 = vunpack.c.l.b16 %v3512
    %v4575 = vunpack.c.h.b16 %v3512
    %v4576 = vunpack.c.l.b16 %v3513
    %v4577 = vunpack.c.h.b16 %v3513
    %v4578 = vunpack.c.l.b16 %v3514
    %v4579 = vunpack.c.h.b16 %v3514
    %v4580 = vunpack.c.l.b16 %v3515
    %v4581 = vunpack.c.h.b16 %v3515
    %v4582 = vunpack.c.l.b16 %v3516
    %v4583 = vunpack.c.h.b16 %v3516
    %v4584 = vunpack.c.l.b16 %v3517
    %v4585 = vunpack.c.h.b16 %v3517
    %v4586 = vunpack.c.l.b16 %v3518
    %v4587 = vunpack.c.h.b16 %v3518
    %v4588 = vunpack.c.l.b16 %v3519
    %v4589 = vunpack.c.h.b16 %v3519
    %v4590 = vunpack.c.l.b16 %v3520
    %v4591 = vunpack.c.h.b16 %v3520
    %v4592 = vunpack.c.l.b16 %v3521
    %v4593 = vunpack.c.h.b16 %v3521
    %v4594 = vunpack.c.l.b16 %v3522
    %v4595 = vunpack.c.h.b16 %v3522
    %v4596 = vunpack.c.l.b16 %v3523
    %v4597 = vunpack.c.h.b16 %v3523
    %v4598 = vunpack.c.l.b16 %v3524
    %v4599 = vunpack.c.h.b16 %v3524
    %v4600 = vunpack.c.l.b16 %v3525
    %v4601 = vunpack.c.h.b16 %v3525
    %v4602 = vunpack.c.l.b16 %v3526
    %v4603 = vunpack.c.h.b16 %v3526
    %v4604 = vunpack.c.l.b16 %v3527
    %v4605 = vunpack.c.h.b16 %v3527
    %v4606 = vunpack.c.l.b16 %v3528
    %v4607 = vunpack.c.h.b16 %v3528
    %v4608 = vunpack.c.l.b16 %v3529
    %v4609 = vunpack.c.h.b16 %v3529
    %v4610 = vunpack.c.l.b16 %v3530
    %v4611 = vunpack.c.h.b16 %v3530
    %v4612 = vunpack.c.l.b16 %v3531
    %v4613 = vunpack.c.h.b16 %v3531
    %v4614 = vunpack.c.l.b16 %v3532
    %v4615 = vunpack.c.h.b16 %v3532
    %v4616 = vunpack.c.l.b16 %v3533
    %v4617 = vunpack.c.h.b16 %v3533
    %v4618 = vunpack.c.l.b16 %v3534
    %v4619 = vunpack.c.h.b16 %v3534
    %v4620 = vunpack.c.l.b16 %v3535
    %v4621 = vunpack.c.h.b16 %v3535
    %v4622 = vunpack.c.l.b16 %v3536
    %v4623 = vunpack.c.h.b16 %v3536
    %v4624 = vunpack.c.l.b16 %v3537
    %v4625 = vunpack.c.h.b16 %v3537
    %v4626 = vunpack.c.l.b16 %v3538
    %v4627 = vunpack.c.h.b16 %v3538
    %v4628 = vunpack.c.l.b16 %v3539
    %v4629 = vunpack.c.h.b16 %v3539
    %v4630 = vunpack.c.l.b16 %v3540
    %v4631 = vunpack.c.h.b16 %v3540
    %v4632 = vunpack.c.l.b16 %v3541
    %v4633 = vunpack.c.h.b16 %v3541
    %v4634 = vunpack.c.l.b16 %v3542
    %v4635 = vunpack.c.h.b16 %v3542
    %v4636 = vunpack.c.l.b16 %v3543
    %v4637 = vunpack.c.h.b16 %v3543
    %v4638 = vunpack.c.l.b16 %v3544
    %v4639 = vunpack.c.h.b16 %v3544
    %v4640 = vunpack.c.l.b16 %v3545
    %v4641 = vunpack.c.h.b16 %v3545
    %v4642 = vunpack.c.l.b16 %v3546
    %v4643 = vunpack.c.h.b16 %v3546
    %v4644 = vunpack.c.l.b16 %v3547
    %v4645 = vunpack.c.h.b16 %v3547
    %v4646 = vunpack.c.l.b16 %v3548
    %v4647 = vunpack.c.h.b16 %v3548
    %v4648 = vunpack.c.l.b16 %v3549
    %v4649 = vunpack.c.h.b16 %v3549
    %v4650 = vunpack.c.l.b16 %v3550
    %v4651 = vunpack.c.h.b16 %v3550
    %v4652 = vunpack.c.l.b16 %v3551
    %v4653 = vunpack.c.h.b16 %v3551
    %v4654 = vunpack.c.l.b16 %v3552
    %v4655 = vunpack.c.h.b16 %v3552
    %v4656 = vunpack.c.l.b16 %v3553
    %v4657 = vunpack.c.h.b16 %v3553
    %v4658 = vunpack.c.l.b16 %v3554
    %v4659 = vunpack.c.h.b16 %v3554
    %v4660 = vunpack.c.l.b16 %v3555
    %v4661 = vunpack.c.h.b16 %v3555
    %v4662 = vunpack.c.l.b16 %v3556
    %v4663 = vunpack.c.h.b16 %v3556
    %v4664 = vunpack.c.l.b16 %v3557
    %v4665 = vunpack.c.h.b16 %v3557
    %v4666 = vunpack.c.l.b16 %v3558
    %v4667 = vunpack.c.h.b16 %v3558
    %v4668 = vunpack.c.l.b16 %v3559
    %v4669 = vunpack.c.h.b16 %v3559
    %v4670 = vunpack.c.l.b16 %v3560
    %v4671 = vunpack.c.h.b16 %v3560
    %v4672 = vunpack.c.l.b16 %v3561
    %v4673 = vunpack.c.h.b16 %v3561
    %v4674 = vunpack.c.l.b16 %v3562
    %v4675 = vunpack.c.h.b16 %v3562
    %v4676 = vunpack.c.l.b16 %v3563
    %v4677 = vunpack.c.h.b16 %v3563
    %v4678 = vunpack.c.l.b16 %v3564
    %v4679 = vunpack.c.h.b16 %v3564
    %v4680 = vunpack.c.l.b16 %v3565
    %v4681 = vunpack.c.h.b16 %v3565
    %v4682 = vunpack.c.l.b16 %v3566
    %v4683 = vunpack.c.h.b16 %v3566
    %v4684 = vunpack.c.l.b16 %v3567
    %v4685 = vunpack.c.h.b16 %v3567
    %v4686 = vunpack.c.l.b16 %v3568
    %v4687 = vunpack.c.h.b16 %v3568
    %v4688 = vunpack.c.l.b16 %v3569
    %v4689 = vunpack.c.h.b16 %v3569
    %v4690 = vunpack.c.l.b16 %v3570
    %v4691 = vunpack.c.h.b16 %v3570
    %v4692 = vunpack.c.l.b16 %v3571
    %v4693 = vunpack.c.h.b16 %v3571
    %v4694 = vunpack.c.l.b16 %v3572
    %v4695 = vunpack.c.h.b16 %v3572
    %v4696 = vunpack.c.l.b16 %v3573
    %v4697 = vunpack.c.h.b16 %v3573
    %v4698 = vunpack.c.l.b16 %v3574
    %v4699 = vunpack.c.h.b16 %v3574
    %v4700 = vunpack.c.l.b16 %v3575
    %v4701 = vunpack.c.h.b16 %v3575
    %v4702 = vunpack.c.l.b16 %v3576
    %v4703 = vunpack.c.h.b16 %v3576
    %v4704 = vunpack.c.l.b16 %v3577
    %v4705 = vunpack.c.h.b16 %v3577
    %v4706 = vunpack.c.l.b16 %v3578
    %v4707 = vunpack.c.h.b16 %v3578
    %v4708 = vunpack.c.l.b16 %v3579
    %v4709 = vunpack.c.h.b16 %v3579
    %v4710 = vunpack.c.l.b16 %v3580
    %v4711 = vunpack.c.h.b16 %v3580
    %v4712 = vunpack.c.l.b16 %v3581
    %v4713 = vunpack.c.h.b16 %v3581
    %v4714 = vunpack.c.l.b16 %v3582
    %v4715 = vunpack.c.h.b16 %v3582
    %v4716 = vunpack.c.l.b16 %v3583
    %v4717 = vunpack.c.h.b16 %v3583
    %v4718 = vunpack.c.l.b16 %v3584
    %v4719 = vunpack.c.h.b16 %v3584
    %v4720 = vunpack.c.l.b16 %v3585
    %v4721 = vunpack.c.h.b16 %v3585
    %v4722 = vunpack.c.l.b16 %v3586
    %v4723 = vunpack.c.h.b16 %v3586
    %v4724 = vunpack.c.l.b16 %v3587
    %v4725 = vunpack.c.h.b16 %v3587
    %v4726 = vunpack.c.l.b16 %v3588
    %v4727 = vunpack.c.h.b16 %v3588
    %v4728 = vunpack.c.l.b16 %v3589
    %v4729 = vunpack.c.h.b16 %v3589
    %v4730 = vunpack.c.l.b16 %v3590
    %v4731 = vunpack.c.h.b16 %v3590
    %v4732 = vunpack.c.l.b16 %v3591
    %v4733 = vunpack.c.h.b16 %v3591
    %v4734 = vunpack.c.l.b16 %v3592
    %v4735 = vunpack.c.h.b16 %v3592
    %v4736 = vunpack.c.l.b16 %v3593
    %v4737 = vunpack.c.h.b16 %v3593
    %v4738 = vunpack.c.l.b16 %v3594
    %v4739 = vunpack.c.h.b16 %v3594
    %v4740 = vunpack.c.l.b16 %v3595
    %v4741 = vunpack.c.h.b16 %v3595
    %v4742 = vunpack.c.l.b16 %v3596
    %v4743 = vunpack.c.h.b16 %v3596
    %v4744 = vunpack.c.l.b16 %v3597
    %v4745 = vunpack.c.h.b16 %v3597
    %v4746 = vunpack.c.l.b16 %v3598
    %v4747 = vunpack.c.h.b16 %v3598
    %v4748 = vunpack.c.l.b16 %v3599
    %v4749 = vunpack.c.h.b16 %v3599
    %v4750 = vunpack.c.l.b16 %v3600
    %v4751 = vunpack.c.h.b16 %v3600
    %v4752 = vunpack.c.l.b16 %v3601
    %v4753 = vunpack.c.h.b16 %v3601
    %v4754 = vunpack.c.l.b16 %v3602
    %v4755 = vunpack.c.h.b16 %v3602
    %v4756 = vunpack.c.l.b16 %v3603
    %v4757 = vunpack.c.h.b16 %v3603
    %v4758 = vunpack.c.l.b16 %v3604
    %v4759 = vunpack.c.h.b16 %v3604
    %v4760 = vunpack.c.l.b16 %v3605
    %v4761 = vunpack.c.h.b16 %v3605
    %v4762 = vunpack.c.l.b16 %v3606
    %v4763 = vunpack.c.h.b16 %v3606
    %v4764 = vunpack.c.l.b16 %v3607
    %v4765 = vunpack.c.h.b16 %v3607
    %v4766 = vunpack.c.l.b16 %v3608
    %v4767 = vunpack.c.h.b16 %v3608
    %v4768 = vunpack.c.l.b16 %v3609
    %v4769 = vunpack.c.h.b16 %v3609
    %v4770 = vunpack.c.l.b16 %v3610
    %v4771 = vunpack.c.h.b16 %v3610
    %v4772 = vunpack.c.l.b16 %v3611
    %v4773 = vunpack.c.h.b16 %v3611
    %v4774 = vunpack.c.l.b16 %v3612
    %v4775 = vunpack.c.h.b16 %v3612
    %v4776 = vunpack.c.l.b16 %v3613
    %v4777 = vunpack.c.h.b16 %v3613
    %v4778 = vunpack.c.l.b16 %v3614
    %v4779 = vunpack.c.h.b16 %v3614
    %v4780 = vunpack.c.l.b16 %v3615
    %v4781 = vunpack.c.h.b16 %v3615
    %v4782 = vunpack.c.l.b16 %v3616
    %v4783 = vunpack.c.h.b16 %v3616
    %v4784 = vunpack.c.l.b16 %v3617
    %v4785 = vunpack.c.h.b16 %v3617
    %v4786 = vunpack.c.l.b16 %v3618
    %v4787 = vunpack.c.h.b16 %v3618
    %v4788 = vunpack.c.l.b16 %v3619
    %v4789 = vunpack.c.h.b16 %v3619
    %v4790 = vunpack.c.l.b16 %v3620
    %v4791 = vunpack.c.h.b16 %v3620
    %v4792 = vunpack.c.l.b16 %v3621
    %v4793 = vunpack.c.h.b16 %v3621
    %v4794 = vunpack.c.l.b16 %v3622
    %v4795 = vunpack.c.h.b16 %v3622
    %v4796 = vunpack.c.l.b16 %v3623
    %v4797 = vunpack.c.h.b16 %v3623
    %v4798 = vunpack.c.l.b16 %v3624
    %v4799 = vunpack.c.h.b16 %v3624
    %v4800 = vunpack.c.l.b16 %v3625
    %v4801 = vunpack.c.h.b16 %v3625
    %v4802 = vunpack.c.l.b16 %v3626
    %v4803 = vunpack.c.h.b16 %v3626
    %v4804 = vunpack.c.l.b16 %v3627
    %v4805 = vunpack.c.h.b16 %v3627
    %v4806 = vunpack.c.l.b16 %v3628
    %v4807 = vunpack.c.h.b16 %v3628
    %v4808 = vunpack.c.l.b16 %v3629
    %v4809 = vunpack.c.h.b16 %v3629
    %v4810 = vunpack.c.l.b16 %v3630
    %v4811 = vunpack.c.h.b16 %v3630
    %v4812 = vunpack.c.l.b16 %v3631
    %v4813 = vunpack.c.h.b16 %v3631
    %v4814 = vunpack.c.l.b16 %v3632
    %v4815 = vunpack.c.h.b16 %v3632
    %v4816 = vunpack.c.l.b16 %v3633
    %v4817 = vunpack.c.h.b16 %v3633
    %v4818 = vunpack.c.l.b16 %v3634
    %v4819 = vunpack.c.h.b16 %v3634
    %v4820 = vunpack.c.l.b16 %v3635
    %v4821 = vunpack.c.h.b16 %v3635
    %v4822 = vunpack.c.l.b16 %v3636
    %v4823 = vunpack.c.h.b16 %v3636
    %v4824 = vunpack.c.l.b16 %v3637
    %v4825 = vunpack.c.h.b16 %v3637
    %v4826 = vunpack.c.l.b16 %v3638
    %v4827 = vunpack.c.h.b16 %v3638
    %v4828 = vunpack.c.l.b16 %v3639
    %v4829 = vunpack.c.h.b16 %v3639
    %v4830 = vunpack.c.l.b16 %v3640
    %v4831 = vunpack.c.h.b16 %v3640
    %v4832 = vunpack.c.l.b16 %v3641
    %v4833 = vunpack.c.h.b16 %v3641
    %v4834 = vunpack.c.l.b16 %v3642
    %v4835 = vunpack.c.h.b16 %v3642
    %v4836 = vunpack.c.l.b16 %v3643
    %v4837 = vunpack.c.h.b16 %v3643
    %v4838 = vunpack.c.l.b16 %v3644
    %v4839 = vunpack.c.h.b16 %v3644
    %v4840 = vunpack.c.l.b16 %v3645
    %v4841 = vunpack.c.h.b16 %v3645
    %v4842 = vunpack.c.l.b16 %v3646
    %v4843 = vunpack.c.h.b16 %v3646
    %v4844 = vunpack.c.l.b16 %v3647
    %v4845 = vunpack.c.h.b16 %v3647
    %v4846 = vunpack.c.l.b16 %v3648
    %v4847 = vunpack.c.h.b16 %v3648
    %v4848 = vunpack.c.l.b16 %v3649
    %v4849 = vunpack.c.h.b16 %v3649
    %v4850 = vunpack.c.l.b16 %v3650
    %v4851 = vunpack.c.h.b16 %v3650
    %v4852 = vunpack.c.l.b16 %v3651
    %v4853 = vunpack.c.h.b16 %v3651
    %v4854 = vunpack.c.l.b16 %v3652
    %v4855 = vunpack.c.h.b16 %v3652
    %v4856 = vunpack.c.l.b16 %v3653
    %v4857 = vunpack.c.h.b16 %v3653
    %v4858 = vunpack.c.l.b16 %v3654
    %v4859 = vunpack.c.h.b16 %v3654
    %v4860 = vunpack.c.l.b16 %v3655
    %v4861 = vunpack.c.h.b16 %v3655
    %v4862 = vunpack.c.l.b16 %v3656
    %v4863 = vunpack.c.h.b16 %v3656
    %v4864 = vunpack.c.l.b16 %v3657
    %v4865 = vunpack.c.h.b16 %v3657
    %v4866 = vunpack.c.l.b16 %v3658
    %v4867 = vunpack.c.h.b16 %v3658
    %v4868 = vunpack.c.l.b16 %v3659
    %v4869 = vunpack.c.h.b16 %v3659
    %v4870 = vunpack.c.l.b16 %v3660
    %v4871 = vunpack.c.h.b16 %v3660
    %v4872 = vunpack.c.l.b16 %v3661
    %v4873 = vunpack.c.h.b16 %v3661
    %v4874 = vunpack.c.l.b16 %v3662
    %v4875 = vunpack.c.h.b16 %v3662
    %v4876 = vunpack.c.l.b16 %v3663
    %v4877 = vunpack.c.h.b16 %v3663
    %v4878 = vunpack.c.l.b16 %v3664
    %v4879 = vunpack.c.h.b16 %v3664
    %v4880 = vunpack.c.l.b16 %v3665
    %v4881 = vunpack.c.h.b16 %v3665
    %v4882 = vunpack.c.l.b16 %v3666
    %v4883 = vunpack.c.h.b16 %v3666
    %v4884 = vunpack.c.l.b16 %v3667
    %v4885 = vunpack.c.h.b16 %v3667
    %v4886 = vunpack.c.l.b16 %v3668
    %v4887 = vunpack.c.h.b16 %v3668
    %v4888 = vunpack.c.l.b16 %v3669
    %v4889 = vunpack.c.h.b16 %v3669
    %v4890 = vunpack.c.l.b16 %v3670
    %v4891 = vunpack.c.h.b16 %v3670
    %v4892 = vunpack.c.l.b16 %v3671
    %v4893 = vunpack.c.h.b16 %v3671
    %v4894 = vunpack.c.l.b16 %v3672
    %v4895 = vunpack.c.h.b16 %v3672
    %v4896 = vunpack.c.l.b16 %v3673
    %v4897 = vunpack.c.h.b16 %v3673
    %v4898 = vunpack.c.l.b16 %v3674
    %v4899 = vunpack.c.h.b16 %v3674
    %v4900 = vunpack.c.l.b16 %v3675
    %v4901 = vunpack.c.h.b16 %v3675
    %v4902 = vunpack.c.l.b16 %v3676
    %v4903 = vunpack.c.h.b16 %v3676
    %v4904 = vunpack.c.l.b16 %v3677
    %v4905 = vunpack.c.h.b16 %v3677
    %v4906 = vunpack.c.l.b16 %v3678
    %v4907 = vunpack.c.h.b16 %v3678
    %v4908 = vunpack.c.l.b16 %v3679
    %v4909 = vunpack.c.h.b16 %v3679
    %v4910 = vunpack.c.l.b16 %v3680
    %v4911 = vunpack.c.h.b16 %v3680
    %v4912 = vunpack.c.l.b16 %v3681
    %v4913 = vunpack.c.h.b16 %v3681
    %v4914 = vunpack.c.l.b16 %v3682
    %v4915 = vunpack.c.h.b16 %v3682
    %v4916 = vunpack.c.l.b16 %v3683
    %v4917 = vunpack.c.h.b16 %v3683
    %v4918 = vunpack.c.l.b16 %v3684
    %v4919 = vunpack.c.h.b16 %v3684
    %v4920 = vunpack.c.l.b16 %v3685
    %v4921 = vunpack.c.h.b16 %v3685
    %v4922 = vunpack.c.l.b16 %v3686
    %v4923 = vunpack.c.h.b16 %v3686
    %v4924 = vunpack.c.l.b16 %v3687
    %v4925 = vunpack.c.h.b16 %v3687
    %v4926 = vunpack.c.l.b16 %v3688
    %v4927 = vunpack.c.h.b16 %v3688
    %v4928 = vunpack.c.l.b16 %v3689
    %v4929 = vunpack.c.h.b16 %v3689
    %v4930 = vunpack.c.l.b16 %v3690
    %v4931 = vunpack.c.h.b16 %v3690
    %v4932 = vunpack.c.l.b16 %v3691
    %v4933 = vunpack.c.h.b16 %v3691
    %v4934 = vunpack.c.l.b16 %v3692
    %v4935 = vunpack.c.h.b16 %v3692
    %v4936 = vunpack.c.l.b16 %v3693
    %v4937 = vunpack.c.h.b16 %v3693
    %v4938 = vunpack.c.l.b16 %v3694
    %v4939 = vunpack.c.h.b16 %v3694
    %v4940 = vunpack.c.l.b16 %v3695
    %v4941 = vunpack.c.h.b16 %v3695
    %v4942 = vunpack.c.l.b16 %v3696
    %v4943 = vunpack.c.h.b16 %v3696
    %v4944 = vunpack.c.l.b16 %v3697
    %v4945 = vunpack.c.h.b16 %v3697
    %v4946 = vunpack.c.l.b16 %v3698
    %v4947 = vunpack.c.h.b16 %v3698
    %v4948 = vunpack.c.l.b16 %v3699
    %v4949 = vunpack.c.h.b16 %v3699
    %v4950 = vunpack.c.l.b16 %v3700
    %v4951 = vunpack.c.h.b16 %v3700
    %v4952 = vunpack.c.l.b16 %v3701
    %v4953 = vunpack.c.h.b16 %v3701
    %v4954 = vunpack.c.l.b16 %v3702
    %v4955 = vunpack.c.h.b16 %v3702
    %v4956 = vunpack.c.l.b16 %v3703
    %v4957 = vunpack.c.h.b16 %v3703
    %v4958 = vunpack.c.l.b16 %v3704
    %v4959 = vunpack.c.h.b16 %v3704
    %v4960 = vunpack.c.l.b16 %v3705
    %v4961 = vunpack.c.h.b16 %v3705
    %v4962 = vunpack.c.l.b16 %v3706
    %v4963 = vunpack.c.h.b16 %v3706
    %v4964 = vunpack.c.l.b16 %v3707
    %v4965 = vunpack.c.h.b16 %v3707
    %v4966 = vunpack.c.l.b16 %v3708
    %v4967 = vunpack.c.h.b16 %v3708
    %v4968 = vunpack.c.l.b16 %v3709
    %v4969 = vunpack.c.h.b16 %v3709
    %v4970 = vunpack.c.l.b16 %v3710
    %v4971 = vunpack.c.h.b16 %v3710
    %v4972 = vunpack.c.l.b16 %v3711
    %v4973 = vunpack.c.h.b16 %v3711
    %v4974 = vunpack.c.l.b16 %v3712
    %v4975 = vunpack.c.h.b16 %v3712
    %v4976 = vunpack.c.l.b16 %v3713
    %v4977 = vunpack.c.h.b16 %v3713
    %v4978 = vunpack.c.l.b16 %v3714
    %v4979 = vunpack.c.h.b16 %v3714
    %v4980 = vunpack.c.l.b16 %v3715
    %v4981 = vunpack.c.h.b16 %v3715
    %v4982 = vunpack.c.l.b16 %v3716
    %v4983 = vunpack.c.h.b16 %v3716
    %v4984 = vunpack.c.l.b16 %v3717
    %v4985 = vunpack.c.h.b16 %v3717
    %v4986 = vunpack.c.l.b16 %v3718
    %v4987 = vunpack.c.h.b16 %v3718
    %v4988 = vunpack.c.l.b16 %v3719
    %v4989 = vunpack.c.h.b16 %v3719
    %v4990 = vunpack.c.l.b16 %v3720
    %v4991 = vunpack.c.h.b16 %v3720
    %v4992 = vunpack.c.l.b16 %v3721
    %v4993 = vunpack.c.h.b16 %v3721
    %v4994 = vunpack.c.l.b16 %v3722
    %v4995 = vunpack.c.h.b16 %v3722
    %v4996 = vunpack.c.l.b16 %v3723
    %v4997 = vunpack.c.h.b16 %v3723
    %v4998 = vunpack.c.l.b16 %v3724
    %v4999 = vunpack.c.h.b16 %v3724
    %v5000 = vunpack.c.l.b16 %v3725
    %v5001 = vunpack.c.h.b16 %v3725
    %v5002 = vunpack.c.l.b16 %v3726
    %v5003 = vunpack.c.h.b16 %v3726
    %v5004 = vunpack.c.l.b16 %v3727
    %v5005 = vunpack.c.h.b16 %v3727
    %v5006 = vunpack.c.l.b16 %v3728
    %v5007 = vunpack.c.h.b16 %v3728
    %v5008 = vunpack.c.l.b16 %v3729
    %v5009 = vunpack.c.h.b16 %v3729
    %v5010 = vunpack.c.l.b16 %v3730
    %v5011 = vunpack.c.h.b16 %v3730
    %v5012 = vunpack.c.l.b16 %v3731
    %v5013 = vunpack.c.h.b16 %v3731
    %v5014 = vunpack.c.l.b16 %v3732
    %v5015 = vunpack.c.h.b16 %v3732
    %v5016 = vunpack.c.l.b16 %v3733
    %v5017 = vunpack.c.h.b16 %v3733
    %v5018 = vunpack.c.l.b16 %v3734
    %v5019 = vunpack.c.h.b16 %v3734
    %v5020 = vunpack.c.l.b16 %v3735
    %v5021 = vunpack.c.h.b16 %v3735
    %v5022 = vunpack.c.l.b16 %v3736
    %v5023 = vunpack.c.h.b16 %v3736
    %v5024 = vunpack.c.l.b16 %v3737
    %v5025 = vunpack.c.h.b16 %v3737
    %v5026 = vunpack.c.l.b16 %v3738
    %v5027 = vunpack.c.h.b16 %v3738
    %v5028 = vunpack.c.l.b16 %v3739
    %v5029 = vunpack.c.h.b16 %v3739
    %v5030 = vunpack.c.l.b16 %v3740
    %v5031 = vunpack.c.h.b16 %v3740
    %v5032 = vunpack.c.l.b16 %v3741
    %v5033 = vunpack.c.h.b16 %v3741
    %v5034 = vunpack.c.l.b16 %v3742
    %v5035 = vunpack.c.h.b16 %v3742
    %v5036 = vunpack.c.l.b16 %v3743
    %v5037 = vunpack.c.h.b16 %v3743
    %v5038 = vunpack.c.l.b16 %v3744
    %v5039 = vunpack.c.h.b16 %v3744
    %v5040 = vunpack.c.l.b16 %v3745
    %v5041 = vunpack.c.h.b16 %v3745
    %v5042 = vunpack.c.l.b16 %v3746
    %v5043 = vunpack.c.h.b16 %v3746
    %v5044 = vunpack.c.l.b16 %v3747
    %v5045 = vunpack.c.h.b16 %v3747
    %v5046 = vunpack.c.l.b16 %v3748
    %v5047 = vunpack.c.h.b16 %v3748
    %v5048 = vunpack.c.l.b16 %v3749
    %v5049 = vunpack.c.h.b16 %v3749
    %v5050 = vunpack.c.l.b16 %v3750
    %v5051 = vunpack.c.h.b16 %v3750
    %v5052 = vunpack.c.l.b16 %v3751
    %v5053 = vunpack.c.h.b16 %v3751
    %v5054 = vunpack.c.l.b16 %v3752
    %v5055 = vunpack.c.h.b16 %v3752
    %v5056 = vunpack.c.l.b16 %v3753
    %v5057 = vunpack.c.h.b16 %v3753
    %v5058 = vunpack.c.l.b16 %v3754
    %v5059 = vunpack.c.h.b16 %v3754
    %v5060 = vunpack.c.l.b16 %v3755
    %v5061 = vunpack.c.h.b16 %v3755
    %v5062 = vunpack.c.l.b16 %v3756
    %v5063 = vunpack.c.h.b16 %v3756
    %v5064 = vunpack.c.l.b16 %v3757
    %v5065 = vunpack.c.h.b16 %v3757
    %v5066 = vunpack.c.l.b16 %v3758
    %v5067 = vunpack.c.h.b16 %v3758
    %v5068 = vunpack.c.l.b16 %v3759
    %v5069 = vunpack.c.h.b16 %v3759
    %v5070 = vunpack.c.l.b16 %v3760
    %v5071 = vunpack.c.h.b16 %v3760
    %v5072 = vunpack.c.l.b16 %v3761
    %v5073 = vunpack.c.h.b16 %v3761
    %v5074 = vunpack.c.l.b16 %v3762
    %v5075 = vunpack.c.h.b16 %v3762
    %v5076 = vunpack.c.l.b16 %v3763
    %v5077 = vunpack.c.h.b16 %v3763
    %v5078 = vunpack.c.l.b16 %v3764
    %v5079 = vunpack.c.h.b16 %v3764
    %v5080 = vunpack.c.l.b16 %v3765
    %v5081 = vunpack.c.h.b16 %v3765
    %v5082 = vunpack.c.l.b16 %v3766
    %v5083 = vunpack.c.h.b16 %v3766
    %v5084 = vunpack.c.l.b16 %v3767
    %v5085 = vunpack.c.h.b16 %v3767
    %v5086 = vunpack.c.l.b16 %v3768
    %v5087 = vunpack.c.h.b16 %v3768
    %v5088 = vunpack.c.l.b16 %v3769
    %v5089 = vunpack.c.h.b16 %v3769
    %v5090 = vunpack.c.l.b16 %v3770
    %v5091 = vunpack.c.h.b16 %v3770
    %v5092 = vunpack.c.l.b16 %v3771
    %v5093 = vunpack.c.h.b16 %v3771
    %v5094 = vunpack.c.l.b16 %v3772
    %v5095 = vunpack.c.h.b16 %v3772
    %v5096 = vunpack.c.l.b16 %v3773
    %v5097 = vunpack.c.h.b16 %v3773
    %v5098 = vunpack.c.l.b16 %v3774
    %v5099 = vunpack.c.h.b16 %v3774
    %v5100 = vunpack.c.l.b16 %v3775
    %v5101 = vunpack.c.h.b16 %v3775
    %v5102 = vunpack.c.l.b16 %v3776
    %v5103 = vunpack.c.h.b16 %v3776
    %v5104 = vunpack.c.l.b16 %v3777
    %v5105 = vunpack.c.h.b16 %v3777
    %v5106 = vunpack.c.l.b16 %v3778
    %v5107 = vunpack.c.h.b16 %v3778
    %v5108 = vunpack.c.l.b16 %v3779
    %v5109 = vunpack.c.h.b16 %v3779
    %v5110 = vunpack.c.l.b16 %v3780
    %v5111 = vunpack.c.h.b16 %v3780
    %v5112 = vunpack.c.l.b16 %v3781
    %v5113 = vunpack.c.h.b16 %v3781
    %v5114 = vunpack.c.l.b16 %v3782
    %v5115 = vunpack.c.h.b16 %v3782
    %v5116 = vunpack.c.l.b16 %v3783
    %v5117 = vunpack.c.h.b16 %v3783
    %v5118 = vunpack.c.l.b16 %v3784
    %v5119 = vunpack.c.h.b16 %v3784
    %v5120 = vunpack.c.l.b16 %v3785
    %v5121 = vunpack.c.h.b16 %v3785
    %v5122 = vunpack.c.l.b16 %v3786
    %v5123 = vunpack.c.h.b16 %v3786
    %v5124 = vunpack.c.l.b16 %v3787
    %v5125 = vunpack.c.h.b16 %v3787
    %v5126 = vunpack.c.l.b16 %v3788
    %v5127 = vunpack.c.h.b16 %v3788
    %v5128 = vunpack.c.l.b16 %v3789
    %v5129 = vunpack.c.h.b16 %v3789
    %v5130 = vunpack.c.l.b16 %v3790
    %v5131 = vunpack.c.h.b16 %v3790
    %v5132 = vunpack.c.l.b16 %v3791
    %v5133 = vunpack.c.h.b16 %v3791
    %v5134 = vunpack.c.l.b16 %v3792
    %v5135 = vunpack.c.h.b16 %v3792
    %v5136 = vunpack.c.l.b16 %v3793
    %v5137 = vunpack.c.h.b16 %v3793
    %v5138 = vunpack.c.l.b16 %v3794
    %v5139 = vunpack.c.h.b16 %v3794
    %v5140 = vunpack.c.l.b16 %v3795
    %v5141 = vunpack.c.h.b16 %v3795
    %v5142 = vunpack.c.l.b16 %v3796
    %v5143 = vunpack.c.h.b16 %v3796
    %v5144 = vunpack.c.l.b16 %v3797
    %v5145 = vunpack.c.h.b16 %v3797
    %v5146 = vunpack.c.l.b16 %v3798
    %v5147 = vunpack.c.h.b16 %v3798
    %v5148 = vunpack.c.l.b16 %v3799
    %v5149 = vunpack.c.h.b16 %v3799
    %v5150 = vunpack.c.l.b16 %v3800
    %v5151 = vunpack.c.h.b16 %v3800
    %v5152 = vunpack.c.l.b16 %v3801
    %v5153 = vunpack.c.h.b16 %v3801
    %v5154 = vunpack.c.l.b16 %v3802
    %v5155 = vunpack.c.h.b16 %v3802
    %v5156 = vunpack.c.l.b16 %v3803
    %v5157 = vunpack.c.h.b16 %v3803
    %v5158 = vunpack.c.l.b16 %v3804
    %v5159 = vunpack.c.h.b16 %v3804
    %v5160 = vunpack.c.l.b16 %v3805
    %v5161 = vunpack.c.h.b16 %v3805
    %v5162 = vunpack.c.l.b16 %v3806
    %v5163 = vunpack.c.h.b16 %v3806
    %v5164 = vunpack.c.l.b16 %v3807
    %v5165 = vunpack.c.h.b16 %v3807
    %v5166 = vunpack.c.l.b16 %v3808
    %v5167 = vunpack.c.h.b16 %v3808
    %v5168 = vunpack.c.l.b16 %v3809
    %v5169 = vunpack.c.h.b16 %v3809
    %v5170 = vunpack.c.l.b16 %v3810
    %v5171 = vunpack.c.h.b16 %v3810
    %v5172 = vunpack.c.l.b16 %v3811
    %v5173 = vunpack.c.h.b16 %v3811
    %v5174 = vunpack.c.l.b16 %v3812
    %v5175 = vunpack.c.h.b16 %v3812
    %v5176 = vunpack.c.l.b16 %v3813
    %v5177 = vunpack.c.h.b16 %v3813
    %v5178 = vunpack.c.l.b16 %v3814
    %v5179 = vunpack.c.h.b16 %v3814
    %v5180 = vunpack.c.l.b16 %v3815
    %v5181 = vunpack.c.h.b16 %v3815
    %v5182 = vunpack.c.l.b16 %v3816
    %v5183 = vunpack.c.h.b16 %v3816
    %v5184 = vunpack.c.l.b16 %v3817
    %v5185 = vunpack.c.h.b16 %v3817
    %v5186 = vunpack.c.l.b16 %v3818
    %v5187 = vunpack.c.h.b16 %v3818
    %v5188 = vunpack.c.l.b16 %v3819
    %v5189 = vunpack.c.h.b16 %v3819
    %v5190 = vunpack.c.l.b16 %v3820
    %v5191 = vunpack.c.h.b16 %v3820
    %v5192 = vunpack.c.l.b16 %v3821
    %v5193 = vunpack.c.h.b16 %v3821
    %v5194 = vunpack.c.l.b16 %v3822
    %v5195 = vunpack.c.h.b16 %v3822
    %v5196 = vunpack.c.l.b16 %v3823
    %v5197 = vunpack.c.h.b16 %v3823
    %v5198 = vunpack.c.l.b16 %v3824
    %v5199 = vunpack.c.h.b16 %v3824
    %v5200 = vunpack.c.l.b16 %v3825
    %v5201 = vunpack.c.h.b16 %v3825
    %v5202 = vunpack.c.l.b16 %v3826
    %v5203 = vunpack.c.h.b16 %v3826
    %v5204 = vunpack.c.l.b16 %v3827
    %v5205 = vunpack.c.h.b16 %v3827
    %v5206 = vunpack.c.l.b16 %v3828
    %v5207 = vunpack.c.h.b16 %v3828
    %v5208 = vunpack.c.l.b16 %v3829
    %v5209 = vunpack.c.h.b16 %v3829
    %v5210 = vpack.c.b16 %v4330, %v4314
    %v5211 = vpack.c.b16 %v4331, %v4315
    %v5212 = vpack.c.b16 %v4332, %v4316
    %v5213 = vpack.c.b16 %v4333, %v4317
    %v5214 = vpack.c.b16 %v4334, %v4318
    %v5215 = vpack.c.b16 %v4335, %v4319
    %v5216 = vpack.c.b16 %v4336, %v4320
    %v5217 = vpack.c.b16 %v4337, %v4321
    %v5218 = vpack.c.b16 %v4338, %v4322
    %v5219 = vpack.c.b16 %v4339, %v4323
    %v5220 = vpack.c.b16 %v4340, %v4324
    %v5221 = vpack.c.b16 %v4341, %v4325
    %v5222 = vpack.c.b16 %v4342, %v4326
    %v5223 = vpack.c.b16 %v4343, %v4327
    %v5224 = vpack.c.b16 %v4344, %v4328
    %v5225 = vpack.c.b16 %v4345, %v4329
    %v5226 = vpack.c.b16 %v4362, %v4346
    %v5227 = vpack.c.b16 %v4363, %v4347
    %v5228 = vpack.c.b16 %v4364, %v4348
    %v5229 = vpack.c.b16 %v4365, %v4349
    %v5230 = vpack.c.b16 %v4366, %v4350
    %v5231 = vpack.c.b16 %v4367, %v4351
    %v5232 = vpack.c.b16 %v4368, %v4352
    %v5233 = vpack.c.b16 %v4369, %v4353
    %v5234 = vpack.c.b16 %v4370, %v4354
    %v5235 = vpack.c.b16 %v4371, %v4355
    %v5236 = vpack.c.b16 %v4372, %v4356
    %v5237 = vpack.c.b16 %v4373, %v4357
    %v5238 = vpack.c.b16 %v4374, %v4358
    %v5239 = vpack.c.b16 %v4375, %v4359
    %v5240 = vpack.c.b16 %v4376, %v4360
    %v5241 = vpack.c.b16 %v4377, %v4361
    %v5242 = vpack.c.b16 %v4394, %v4378
    %v5243 = vpack.c.b16 %v4395, %v4379
    %v5244 = vpack.c.b16 %v4396, %v4380
    %v5245 = vpack.c.b16 %v4397, %v4381
    %v5246 = vpack.c.b16 %v4398, %v4382
    %v5247 = vpack.c.b16 %v4399, %v4383
    %v5248 = vpack.c.b16 %v4400, %v4384
    %v5249 = vpack.c.b16 %v4401, %v4385
    %v5250 = vpack.c.b16 %v4402, %v4386
    %v5251 = vpack.c.b16 %v4403, %v4387
    %v5252 = vpack.c.b16 %v4404, %v4388
    %v5253 = vpack.c.b16 %v4405, %v4389
    %v5254 = vpack.c.b16 %v4406, %v4390
    %v5255 = vpack.c.b16 %v4407, %v4391
    %v5256 = vpack.c.b16 %v4408, %v4392
    %v5257 = vpack.c.b16 %v4409, %v4393
    %v5258 = vpack.c.b16 %v4426, %v4410
    %v5259 = vpack.c.b16 %v4427, %v4411
    %v5260 = vpack.c.b16 %v4428, %v4412
    %v5261 = vpack.c.b16 %v4429, %v4413
    %v5262 = vpack.c.b16 %v4430, %v4414
    %v5263 = vpack.c.b16 %v4431, %v4415
    %v5264 = vpack.c.b16 %v4432, %v4416
    %v5265 = vpack.c.b16 %v4433, %v4417
    %v5266 = vpack.c.b16 %v4434, %v4418
    %v5267 = vpack.c.b16 %v4435, %v4419
    %v5268 = vpack.c.b16 %v4436, %v4420
    %v5269 = vpack.c.b16 %v4437, %v4421
    %v5270 = vpack.c.b16 %v4438, %v4422
    %v5271 = vpack.c.b16 %v4439, %v4423
    %v5272 = vpack.c.b16 %v4440, %v4424
    %v5273 = vpack.c.b16 %v4441, %v4425
    %v5274 = vpack.c.b16 %v4458, %v4442
    %v5275 = vpack.c.b16 %v4459, %v4443
    %v5276 = vpack.c.b16 %v4460, %v4444
    %v5277 = vpack.c.b16 %v4461, %v4445
    %v5278 = vpack.c.b16 %v4462, %v4446
    %v5279 = vpack.c.b16 %v4463, %v4447
    %v5280 = vpack.c.b16 %v4464, %v4448
    %v5281 = vpack.c.b16 %v4465, %v4449
    %v5282 = vpack.c.b16 %v4466, %v4450
    %v5283 = vpack.c.b16 %v4467, %v4451
    %v5284 = vpack.c.b16 %v4468, %v4452
    %v5285 = vpack.c.b16 %v4469, %v4453
    %v5286 = vpack.c.b16 %v4470, %v4454
    %v5287 = vpack.c.b16 %v4471, %v4455
    %v5288 = vpack.c.b16 %v4472, %v4456
    %v5289 = vpack.c.b16 %v4473, %v4457
    %v5290 = vpack.c.b16 %v4490, %v4474
    %v5291 = vpack.c.b16 %v4491, %v4475
    %v5292 = vpack.c.b16 %v4492, %v4476
    %v5293 = vpack.c.b16 %v4493, %v4477
    %v5294 = vpack.c.b16 %v4494, %v4478
    %v5295 = vpack.c.b16 %v4495, %v4479
    %v5296 = vpack.c.b16 %v4496, %v4480
    %v5297 = vpack.c.b16 %v4497, %v4481
    %v5298 = vpack.c.b16 %v4498, %v4482
    %v5299 = vpack.c.b16 %v4499, %v4483
    %v5300 = vpack.c.b16 %v4500, %v4484
    %v5301 = vpack.c.b16 %v4501, %v4485
    %v5302 = vpack.c.b16 %v4502, %v4486
    %v5303 = vpack.c.b16 %v4503, %v4487
    %v5304 = vpack.c.b16 %v4504, %v4488
    %v5305 = vpack.c.b16 %v4505, %v4489
    %v5306 = vpack.c.b16 %v4522, %v4506
    %v5307 = vpack.c.b16 %v4523, %v4507
    %v5308 = vpack.c.b16 %v4524, %v4508
    %v5309 = vpack.c.b16 %v4525, %v4509
    %v5310 = vpack.c.b16 %v4526, %v4510
    %v5311 = vpack.c.b16 %v4527, %v4511
    %v5312 = vpack.c.b16 %v4528, %v4512
    %v5313 = vpack.c.b16 %v4529, %v4513
    %v5314 = vpack.c.b16 %v4530, %v4514
    %v5315 = vpack.c.b16 %v4531, %v4515
    %v5316 = vpack.c.b16 %v4532, %v4516
    %v5317 = vpack.c.b16 %v4533, %v4517
    %v5318 = vpack.c.b16 %v4534, %v4518
    %v5319 = vpack.c.b16 %v4535, %v4519
    %v5320 = vpack.c.b16 %v4536, %v4520
    %v5321 = vpack.c.b16 %v4537, %v4521
    %v5322 = vpack.c.b16 %v4554, %v4538
    %v5323 = vpack.c.b16 %v4555, %v4539
    %v5324 = vpack.c.b16 %v4556, %v4540
    %v5325 = vpack.c.b16 %v4557, %v4541
    %v5326 = vpack.c.b16 %v4558, %v4542
    %v5327 = vpack.c.b16 %v4559, %v4543
    %v5328 = vpack.c.b16 %v4560, %v4544
    %v5329 = vpack.c.b16 %v4561, %v4545
    %v5330 = vpack.c.b16 %v4562, %v4546
    %v5331 = vpack.c.b16 %v4563, %v4547
    %v5332 = vpack.c.b16 %v4564, %v4548
    %v5333 = vpack.c.b16 %v4565, %v4549
    %v5334 = vpack.c.b16 %v4566, %v4550
    %v5335 = vpack.c.b16 %v4567, %v4551
    %v5336 = vpack.c.b16 %v4568, %v4552
    %v5337 = vpack.c.b16 %v4569, %v4553
    %v5338 = vpack.c.b16 %v4586, %v4570
    %v5339 = vpack.c.b16 %v4587, %v4571
    %v5340 = vpack.c.b16 %v4588, %v4572
    %v5341 = vpack.c.b16 %v4589, %v4573
    %v5342 = vpack.c.b16 %v4590, %v4574
    %v5343 = vpack.c.b16 %v4591, %v4575
    %v5344 = vpack.c.b16 %v4592, %v4576
    %v5345 = vpack.c.b16 %v4593, %v4577
    %v5346 = vpack.c.b16 %v4594, %v4578
    %v5347 = vpack.c.b16 %v4595, %v4579
    %v5348 = vpack.c.b16 %v4596, %v4580
    %v5349 = vpack.c.b16 %v4597, %v4581
    %v5350 = vpack.c.b16 %v4598, %v4582
    %v5351 = vpack.c.b16 %v4599, %v4583
    %v5352 = vpack.c.b16 %v4600, %v4584
    %v5353 = vpack.c.b16 %v4601, %v4585
    %v5354 = vpack.c.b16 %v4618, %v4602
    %v5355 = vpack.c.b16 %v4619, %v4603
    %v5356 = vpack.c.b16 %v4620, %v4604
    %v5357 = vpack.c.b16 %v4621, %v4605
    %v5358 = vpack.c.b16 %v4622, %v4606
    %v5359 = vpack.c.b16 %v4623, %v4607
    %v5360 = vpack.c.b16 %v4624, %v4608
    %v5361 = vpack.c.b16 %v4625, %v4609
    %v5362 = vpack.c.b16 %v4626, %v4610
    %v5363 = vpack.c.b16 %v4627, %v4611
    %v5364 = vpack.c.b16 %v4628, %v4612
    %v5365 = vpack.c.b16 %v4629, %v4613
    %v5366 = vpack.c.b16 %v4630, %v4614
    %v5367 = vpack.c.b16 %v4631, %v4615
    %v5368 = vpack.c.b16 %v4632, %v4616
    %v5369 = vpack.c.b16 %v4633, %v4617
    %v5370 = vpack.c.b16 %v4650, %v4634
    %v5371 = vpack.c.b16 %v4651, %v4635
    %v5372 = vpack.c.b16 %v4652, %v4636
    %v5373 = vpack.c.b16 %v4653, %v4637
    %v5374 = vpack.c.b16 %v4654, %v4638
    %v5375 = vpack.c.b16 %v4655, %v4639
    %v5376 = vpack.c.b16 %v4656, %v4640
    %v5377 = vpack.c.b16 %v4657, %v4641
    %v5378 = vpack.c.b16 %v4658, %v4642
    %v5379 = vpack.c.b16 %v4659, %v4643
    %v5380 = vpack.c.b16 %v4660, %v4644
    %v5381 = vpack.c.b16 %v4661, %v4645
    %v5382 = vpack.c.b16 %v4662, %v4646
    %v5383 = vpack.c.b16 %v4663, %v4647
    %v5384 = vpack.c.b16 %v4664, %v4648
    %v5385 = vpack.c.b16 %v4665, %v4649
    %v5386 = vpack.c.b16 %v4682, %v4666
    %v5387 = vpack.c.b16 %v4683, %v4667
    %v5388 = vpack.c.b16 %v4684, %v4668
    %v5389 = vpack.c.b16 %v4685, %v4669
    %v5390 = vpack.c.b16 %v4686, %v4670
    %v5391 = vpack.c.b16 %v4687, %v4671
    %v5392 = vpack.c.b16 %v4688, %v4672
    %v5393 = vpack.c.b16 %v4689, %v4673
    %v5394 = vpack.c.b16 %v4690, %v4674
    %v5395 = vpack.c.b16 %v4691, %v4675
    %v5396 = vpack.c.b16 %v4692, %v4676
    %v5397 = vpack.c.b16 %v4693, %v4677
    %v5398 = vpack.c.b16 %v4694, %v4678
    %v5399 = vpack.c.b16 %v4695, %v4679
    %v5400 = vpack.c.b16 %v4696, %v4680
    %v5401 = vpack.c.b16 %v4697, %v4681
    %v5402 = vpack.c.b16 %v4714, %v4698
    %v5403 = vpack.c.b16 %v4715, %v4699
    %v5404 = vpack.c.b16 %v4716, %v4700
    %v5405 = vpack.c.b16 %v4717, %v4701
    %v5406 = vpack.c.b16 %v4718, %v4702
    %v5407 = vpack.c.b16 %v4719, %v4703
    %v5408 = vpack.c.b16 %v4720, %v4704
    %v5409 = vpack.c.b16 %v4721, %v4705
    %v5410 = vpack.c.b16 %v4722, %v4706
    %v5411 = vpack.c.b16 %v4723, %v4707
    %v5412 = vpack.c.b16 %v4724, %v4708
    %v5413 = vpack.c.b16 %v4725, %v4709
    %v5414 = vpack.c.b16 %v4726, %v4710
    %v5415 = vpack.c.b16 %v4727, %v4711
    %v5416 = vpack.c.b16 %v4728, %v4712
    %v5417 = vpack.c.b16 %v4729, %v4713
    %v5418 = vpack.c.b16 %v4746, %v4730
    %v5419 = vpack.c.b16 %v4747, %v4731
    %v5420 = vpack.c.b16 %v4748, %v4732
    %v5421 = vpack.c.b16 %v4749, %v4733
    %v5422 = vpack.c.b16 %v4750, %v4734
    %v5423 = vpack.c.b16 %v4751, %v4735
    %v5424 = vpack.c.b16 %v4752, %v4736
    %v5425 = vpack.c.b16 %v4753, %v4737
    %v5426 = vpack.c.b16 %v4754, %v4738
    %v5427 = vpack.c.b16 %v4755, %v4739
    %v5428 = vpack.c.b16 %v4756, %v4740
    %v5429 = vpack.c.b16 %v4757, %v4741
    %v5430 = vpack.c.b16 %v4758, %v4742
    %v5431 = vpack.c.b16 %v4759, %v4743
    %v5432 = vpack.c.b16 %v4760, %v4744
    %v5433 = vpack.c.b16 %v4761, %v4745
    %v5434 = vpack.c.b16 %v4778, %v4762
    %v5435 = vpack.c.b16 %v4779, %v4763
    %v5436 = vpack.c.b16 %v4780, %v4764
    %v5437 = vpack.c.b16 %v4781, %v4765
    %v5438 = vpack.c.b16 %v4782, %v4766
    %v5439 = vpack.c.b16 %v4783, %v4767
    %v5440 = vpack.c.b16 %v4784, %v4768
    %v5441 = vpack.c.b16 %v4785, %v4769
    %v5442 = vpack.c.b16 %v4786, %v4770
    %v5443 = vpack.c.b16 %v4787, %v4771
    %v5444 = vpack.c.b16 %v4788, %v4772
    %v5445 = vpack.c.b16 %v4789, %v4773
    %v5446 = vpack.c.b16 %v4790, %v4774
    %v5447 = vpack.c.b16 %v4791, %v4775
    %v5448 = vpack.c.b16 %v4792, %v4776
    %v5449 = vpack.c.b16 %v4793, %v4777
    %v5450 = vpack.c.b16 %v4810, %v4794
    %v5451 = vpack.c.b16 %v4811, %v4795
    %v5452 = vpack.c.b16 %v4812, %v4796
    %v5453 = vpack.c.b16 %v4813, %v4797
    %v5454 = vpack.c.b16 %v4814, %v4798
    %v5455 = vpack.c.b16 %v4815, %v4799
    %v5456 = vpack.c.b16 %v4816, %v4800
    %v5457 = vpack.c.b16 %v4817, %v4801
    %v5458 = vpack.c.b16 %v4818, %v4802
    %v5459 = vpack.c.b16 %v4819, %v4803
    %v5460 = vpack.c.b16 %v4820, %v4804
    %v5461 = vpack.c.b16 %v4821, %v4805
    %v5462 = vpack.c.b16 %v4822, %v4806
    %v5463 = vpack.c.b16 %v4823, %v4807
    %v5464 = vpack.c.b16 %v4824, %v4808
    %v5465 = vpack.c.b16 %v4825, %v4809
    %v5466 = vpack.c.b16 %v4842, %v4826
    %v5467 = vpack.c.b16 %v4843, %v4827
    %v5468 = vpack.c.b16 %v4844, %v4828
    %v5469 = vpack.c.b16 %v4845, %v4829
    %v5470 = vpack.c.b16 %v4846, %v4830
    %v5471 = vpack.c.b16 %v4847, %v4831
    %v5472 = vpack.c.b16 %v4848, %v4832
    %v5473 = vpack.c.b16 %v4849, %v4833
    %v5474 = vpack.c.b16 %v4850, %v4834
    %v5475 = vpack.c.b16 %v4851, %v4835
    %v5476 = vpack.c.b16 %v4852, %v4836
    %v5477 = vpack.c.b16 %v4853, %v4837
    %v5478 = vpack.c.b16 %v4854, %v4838
    %v5479 = vpack.c.b16 %v4855, %v4839
    %v5480 = vpack.c.b16 %v4856, %v4840
    %v5481 = vpack.c.b16 %v4857, %v4841
    %v5482 = vpack.c.b16 %v4874, %v4858
    %v5483 = vpack.c.b16 %v4875, %v4859
    %v5484 = vpack.c.b16 %v4876, %v4860
    %v5485 = vpack.c.b16 %v4877, %v4861
    %v5486 = vpack.c.b16 %v4878, %v4862
    %v5487 = vpack.c.b16 %v4879, %v4863
    %v5488 = vpack.c.b16 %v4880, %v4864
    %v5489 = vpack.c.b16 %v4881, %v4865
    %v5490 = vpack.c.b16 %v4882, %v4866
    %v5491 = vpack.c.b16 %v4883, %v4867
    %v5492 = vpack.c.b16 %v4884, %v4868
    %v5493 = vpack.c.b16 %v4885, %v4869
    %v5494 = vpack.c.b16 %v4886, %v4870
    %v5495 = vpack.c.b16 %v4887, %v4871
    %v5496 = vpack.c.b16 %v4888, %v4872
    %v5497 = vpack.c.b16 %v4889, %v4873
    %v5498 = vpack.c.b16 %v4906, %v4890
    %v5499 = vpack.c.b16 %v4907, %v4891
    %v5500 = vpack.c.b16 %v4908, %v4892
    %v5501 = vpack.c.b16 %v4909, %v4893
    %v5502 = vpack.c.b16 %v4910, %v4894
    %v5503 = vpack.c.b16 %v4911, %v4895
    %v5504 = vpack.c.b16 %v4912, %v4896
    %v5505 = vpack.c.b16 %v4913, %v4897
    %v5506 = vpack.c.b16 %v4914, %v4898
    %v5507 = vpack.c.b16 %v4915, %v4899
    %v5508 = vpack.c.b16 %v4916, %v4900
    %v5509 = vpack.c.b16 %v4917, %v4901
    %v5510 = vpack.c.b16 %v4918, %v4902
    %v5511 = vpack.c.b16 %v4919, %v4903
    %v5512 = vpack.c.b16 %v4920, %v4904
    %v5513 = vpack.c.b16 %v4921, %v4905
    %v5514 = vpack.c.b16 %v4938, %v4922
    %v5515 = vpack.c.b16 %v4939, %v4923
    %v5516 = vpack.c.b16 %v4940, %v4924
    %v5517 = vpack.c.b16 %v4941, %v4925
    %v5518 = vpack.c.b16 %v4942, %v4926
    %v5519 = vpack.c.b16 %v4943, %v4927
    %v5520 = vpack.c.b16 %v4944, %v4928
    %v5521 = vpack.c.b16 %v4945, %v4929
    %v5522 = vpack.c.b16 %v4946, %v4930
    %v5523 = vpack.c.b16 %v4947, %v4931
    %v5524 = vpack.c.b16 %v4948, %v4932
    %v5525 = vpack.c.b16 %v4949, %v4933
    %v5526 = vpack.c.b16 %v4950, %v4934
    %v5527 = vpack.c.b16 %v4951, %v4935
    %v5528 = vpack.c.b16 %v4952, %v4936
    %v5529 = vpack.c.b16 %v4953, %v4937
    %v5530 = vpack.c.b16 %v4970, %v4954
    %v5531 = vpack.c.b16 %v4971, %v4955
    %v5532 = vpack.c.b16 %v4972, %v4956
    %v5533 = vpack.c.b16 %v4973, %v4957
    %v5534 = vpack.c.b16 %v4974, %v4958
    %v5535 = vpack.c.b16 %v4975, %v4959
    %v5536 = vpack.c.b16 %v4976, %v4960
    %v5537 = vpack.c.b16 %v4977, %v4961
    %v5538 = vpack.c.b16 %v4978, %v4962
    %v5539 = vpack.c.b16 %v4979, %v4963
    %v5540 = vpack.c.b16 %v4980, %v4964
    %v5541 = vpack.c.b16 %v4981, %v4965
    %v5542 = vpack.c.b16 %v4982, %v4966
    %v5543 = vpack.c.b16 %v4983, %v4967
    %v5544 = vpack.c.b16 %v4984, %v4968
    %v5545 = vpack.c.b16 %v4985, %v4969
    %v5546 = vpack.c.b16 %v5002, %v4986
    %v5547 = vpack.c.b16 %v5003, %v4987
    %v5548 = vpack.c.b16 %v5004, %v4988
    %v5549 = vpack.c.b16 %v5005, %v4989
    %v5550 = vpack.c.b16 %v5006, %v4990
    %v5551 = vpack.c.b16 %v5007, %v4991
    %v5552 = vpack.c.b16 %v5008, %v4992
    %v5553 = vpack.c.b16 %v5009, %v4993
    %v5554 = vpack.c.b16 %v5010, %v4994
    %v5555 = vpack.c.b16 %v5011, %v4995
    %v5556 = vpack.c.b16 %v5012, %v4996
    %v5557 = vpack.c.b16 %v5013, %v4997
    %v5558 = vpack.c.b16 %v5014, %v4998
    %v5559 = vpack.c.b16 %v5015, %v4999
    %v5560 = vpack.c.b16 %v5016, %v5000
    %v5561 = vpack.c.b16 %v5017, %v5001
    %v5562 = vpack.c.b16 %v5034, %v5018
    %v5563 = vpack.c.b16 %v5035, %v5019
    %v5564 = vpack.c.b16 %v5036, %v5020
    %v5565 = vpack.c.b16 %v5037, %v5021
    %v5566 = vpack.c.b16 %v5038, %v5022
    %v5567 = vpack.c.b16 %v5039, %v5023
    %v5568 = vpack.c.b16 %v5040, %v5024
    %v5569 = vpack.c.b16 %v5041, %v5025
    %v5570 = vpack.c.b16 %v5042, %v5026
    %v5571 = vpack.c.b16 %v5043, %v5027
    %v5572 = vpack.c.b16 %v5044, %v5028
    %v5573 = vpack.c.b16 %v5045, %v5029
    %v5574 = vpack.c.b16 %v5046, %v5030
    %v5575 = vpack.c.b16 %v5047, %v5031
    %v5576 = vpack.c.b16 %v5048, %v5032
    %v5577 = vpack.c.b16 %v5049, %v5033
    %v5578 = vpack.c.b16 %v5066, %v5050
    %v5579 = vpack.c.b16 %v5067, %v5051
    %v5580 = vpack.c.b16 %v5068, %v5052
    %v5581 = vpack.c.b16 %v5069, %v5053
    %v5582 = vpack.c.b16 %v5070, %v5054
    %v5583 = vpack.c.b16 %v5071, %v5055
    %v5584 = vpack.c.b16 %v5072, %v5056
    %v5585 = vpack.c.b16 %v5073, %v5057
    %v5586 = vpack.c.b16 %v5074, %v5058
    %v5587 = vpack.c.b16 %v5075, %v5059
    %v5588 = vpack.c.b16 %v5076, %v5060
    %v5589 = vpack.c.b16 %v5077, %v5061
    %v5590 = vpack.c.b16 %v5078, %v5062
    %v5591 = vpack.c.b16 %v5079, %v5063
    %v5592 = vpack.c.b16 %v5080, %v5064
    %v5593 = vpack.c.b16 %v5081, %v5065
    %v5594 = vpack.c.b16 %v5098, %v5082
    %v5595 = vpack.c.b16 %v5099, %v5083
    %v5596 = vpack.c.b16 %v5100, %v5084
    %v5597 = vpack.c.b16 %v5101, %v5085
    %v5598 = vpack.c.b16 %v5102, %v5086
    %v5599 = vpack.c.b16 %v5103, %v5087
    %v5600 = vpack.c.b16 %v5104, %v5088
    %v5601 = vpack.c.b16 %v5105, %v5089
    %v5602 = vpack.c.b16 %v5106, %v5090
    %v5603 = vpack.c.b16 %v5107, %v5091
    %v5604 = vpack.c.b16 %v5108, %v5092
    %v5605 = vpack.c.b16 %v5109, %v5093
    %v5606 = vpack.c.b16 %v5110, %v5094
    %v5607 = vpack.c.b16 %v5111, %v5095
    %v5608 = vpack.c.b16 %v5112, %v5096
    %v5609 = vpack.c.b16 %v5113, %v5097
    %v5610 = vpack.c.b16 %v5130, %v5114
    %v5611 = vpack.c.b16 %v5131, %v5115
    %v5612 = vpack.c.b16 %v5132, %v5116
    %v5613 = vpack.c.b16 %v5133, %v5117
    %v5614 = vpack.c.b16 %v5134, %v5118
    %v5615 = vpack.c.b16 %v5135, %v5119
    %v5616 = vpack.c.b16 %v5136, %v5120
    %v5617 = vpack.c.b16 %v5137, %v5121
    %v5618 = vpack.c.b16 %v5138, %v5122
    %v5619 = vpack.c.b16 %v5139, %v5123
    %v5620 = vpack.c.b16 %v5140, %v5124
    %v5621 = vpack.c.b16 %v5141, %v5125
    %v5622 = vpack.c.b16 %v5142, %v5126
    %v5623 = vpack.c.b16 %v5143, %v5127
    %v5624 = vpack.c.b16 %v5144, %v5128
    %v5625 = vpack.c.b16 %v5145, %v5129
    %v5626 = vpack.c.b16 %v5162, %v5146
    %v5627 = vpack.c.b16 %v5163, %v5147
    %v5628 = vpack.c.b16 %v5164, %v5148
    %v5629 = vpack.c.b16 %v5165, %v5149
    %v5630 = vpack.c.b16 %v5166, %v5150
    %v5631 = vpack.c.b16 %v5167, %v5151
    %v5632 = vpack.c.b16 %v5168, %v5152
    %v5633 = vpack.c.b16 %v5169, %v5153
    %v5634 = vpack.c.b16 %v5170, %v5154
    %v5635 = vpack.c.b16 %v5171, %v5155
    %v5636 = vpack.c.b16 %v5172, %v5156
    %v5637 = vpack.c.b16 %v5173, %v5157
    %v5638 = vpack.c.b16 %v5174, %v5158
    %v5639 = vpack.c.b16 %v5175, %v5159
    %v5640 = vpack.c.b16 %v5176, %v5160
    %v5641 = vpack.c.b16 %v5177, %v5161
    %v5642 = vpack.c.b16 %v5194, %v5178
    %v5643 = vpack.c.b16 %v5195, %v5179
    %v5644 = vpack.c.b16 %v5196, %v5180
    %v5645 = vpack.c.b16 %v5197, %v5181
    %v5646 = vpack.c.b16 %v5198, %v5182
    %v5647 = vpack.c.b16 %v5199, %v5183
    %v5648 = vpack.c.b16 %v5200, %v5184
    %v5649 = vpack.c.b16 %v5201, %v5185
    %v5650 = vpack.c.b16 %v5202, %v5186
    %v5651 = vpack.c.b16 %v5203, %v5187
    %v5652 = vpack.c.b16 %v5204, %v5188
    %v5653 = vpack.c.b16 %v5205, %v5189
    %v5654 = vpack.c.b16 %v5206, %v5190
    %v5655 = vpack.c.b16 %v5207, %v5191
    %v5656 = vpack.c.b16 %v5208, %v5192
    %v5657 = vpack.c.b16 %v5209, %v5193
    %v6107 = vsel %vm2120, %v3381, 0
    %6109 = vmatpush.bf16.msra.mxu0 %v5322
    %6110 = vmatpush.bf16.msra.mxu0 %v5306
    %6111 = vmatpush.bf16.msra.mxu0 %v5290
    %6112 = vmatpush.bf16.msra.mxu0 %v5274
    %6113 = vmatpush.bf16.msra.mxu0 %v5258
    %6114 = vmatpush.bf16.msra.mxu0 %v5242
    %6115 = vmatpush.bf16.msra.mxu0 %v5226
    %6116 = vmatpush.bf16.msra.mxu0 %v5210
    %6117 = vmatmul.bf16.gmra.mxu0 %v3378
    %v6118 = vpop.f32.mrf.mxu0
    %v6119 = vadd.f32 %v3834, %v6118
    %v6120 = vpop.f32.mrf.mxu0
    %6121 = vdwg.mxu0
    %6122 = vmatpush.bf16.msra.mxu0 %v5450
    %6123 = vmatpush.bf16.msra.mxu0 %v5434
    %6124 = vmatpush.bf16.msra.mxu0 %v5418
    %6125 = vmatpush.bf16.msra.mxu0 %v5402
    %6126 = vmatpush.bf16.msra.mxu0 %v5386
    %6127 = vmatpush.bf16.msra.mxu0 %v5370
    %6128 = vmatpush.bf16.msra.mxu0 %v5354
    %6129 = vmatpush.bf16.msra.mxu0 %v5338
    %6130 = vmatmul.bf16.gmra.mxu0 %v3379
    %v6131 = vpop.f32.mrf.mxu0
    %v6132 = vadd.f32 %v6119, %v6131
    %v6133 = vpop.f32.mrf.mxu0
    %6134 = vdwg.mxu0
    %6135 = vmatpush.bf16.msra.mxu0 %v5578
    %6136 = vmatpush.bf16.msra.mxu0 %v5562
    %6137 = vmatpush.bf16.msra.mxu0 %v5546
    %6138 = vmatpush.bf16.msra.mxu0 %v5530
    %6139 = vmatpush.bf16.msra.mxu0 %v5514
    %6140 = vmatpush.bf16.msra.mxu0 %v5498
    %6141 = vmatpush.bf16.msra.mxu0 %v5482
    %6142 = vmatpush.bf16.msra.mxu0 %v5466
    %6143 = vmatmul.bf16.gmra.mxu0 %v3380
    %v6144 = vpop.f32.mrf.mxu0
    %v6145 = vadd.f32 %v6132, %v6144
    %v6146 = vpop.f32.mrf.mxu0
    %6147 = vdwg.mxu0
    %6148 = vmatpush.bf16.msra.mxu0 0
    %6149 = vmatpush.bf16.msra.mxu0 0
    %6150 = vmatpush.bf16.msra.mxu0 0
    %6151 = vmatpush.bf16.msra.mxu0 0
    %6152 = vmatpush.bf16.msra.mxu0 %v5642
    %6153 = vmatpush.bf16.msra.mxu0 %v5626
    %6154 = vmatpush.bf16.msra.mxu0 %v5610
    %6155 = vmatpush.bf16.msra.mxu0 %v5594
    %6156 = vmatmul.bf16.gmra.mxu0 %v6107
    %v6157 = vpop.f32.mrf.mxu0
    %v6158 = vadd.f32 %v6145, %v6157
    %v6159 = vpop.f32.mrf.mxu0
    %6160 = vdwg.mxu0
    %6161 = vmatpush.bf16.msra.mxu0 %v5323
    %6162 = vmatpush.bf16.msra.mxu0 %v5307
    %6163 = vmatpush.bf16.msra.mxu0 %v5291
    %6164 = vmatpush.bf16.msra.mxu0 %v5275
    %6165 = vmatpush.bf16.msra.mxu0 %v5259
    %6166 = vmatpush.bf16.msra.mxu0 %v5243
    %6167 = vmatpush.bf16.msra.mxu0 %v5227
    %6168 = vmatpush.bf16.msra.mxu0 %v5211
    %6169 = vmatmul.bf16.gmra.mxu0 %v3378
    %v6170 = vpop.f32.mrf.mxu0
    %v6171 = vadd.f32 %v3835, %v6170
    %v6172 = vpop.f32.mrf.mxu0
    %6173 = vdwg.mxu0
    %6174 = vmatpush.bf16.msra.mxu0 %v5451
    %6175 = vmatpush.bf16.msra.mxu0 %v5435
    %6176 = vmatpush.bf16.msra.mxu0 %v5419
    %6177 = vmatpush.bf16.msra.mxu0 %v5403
    %6178 = vmatpush.bf16.msra.mxu0 %v5387
    %6179 = vmatpush.bf16.msra.mxu0 %v5371
    %6180 = vmatpush.bf16.msra.mxu0 %v5355
    %6181 = vmatpush.bf16.msra.mxu0 %v5339
    %6182 = vmatmul.bf16.gmra.mxu0 %v3379
    %v6183 = vpop.f32.mrf.mxu0
    %v6184 = vadd.f32 %v6171, %v6183
    %v6185 = vpop.f32.mrf.mxu0
    %6186 = vdwg.mxu0
    %6187 = vmatpush.bf16.msra.mxu0 %v5579
    %6188 = vmatpush.bf16.msra.mxu0 %v5563
    %6189 = vmatpush.bf16.msra.mxu0 %v5547
    %6190 = vmatpush.bf16.msra.mxu0 %v5531
    %6191 = vmatpush.bf16.msra.mxu0 %v5515
    %6192 = vmatpush.bf16.msra.mxu0 %v5499
    %6193 = vmatpush.bf16.msra.mxu0 %v5483
    %6194 = vmatpush.bf16.msra.mxu0 %v5467
    %6195 = vmatmul.bf16.gmra.mxu0 %v3380
    %v6196 = vpop.f32.mrf.mxu0
    %v6197 = vadd.f32 %v6184, %v6196
    %v6198 = vpop.f32.mrf.mxu0
    %6199 = vdwg.mxu0
    %6200 = vmatpush.bf16.msra.mxu0 0
    %6201 = vmatpush.bf16.msra.mxu0 0
    %6202 = vmatpush.bf16.msra.mxu0 0
    %6203 = vmatpush.bf16.msra.mxu0 0
    %6204 = vmatpush.bf16.msra.mxu0 %v5643
    %6205 = vmatpush.bf16.msra.mxu0 %v5627
    %6206 = vmatpush.bf16.msra.mxu0 %v5611
    %6207 = vmatpush.bf16.msra.mxu0 %v5595
    %6208 = vmatmul.bf16.gmra.mxu0 %v6107
    %v6209 = vpop.f32.mrf.mxu0
    %v6210 = vadd.f32 %v6197, %v6209
    %v6211 = vpop.f32.mrf.mxu0
    %6212 = vdwg.mxu0
    %6213 = vmatpush.bf16.msra.mxu0 %v5324
    %6214 = vmatpush.bf16.msra.mxu0 %v5308
    %6215 = vmatpush.bf16.msra.mxu0 %v5292
    %6216 = vmatpush.bf16.msra.mxu0 %v5276
    %6217 = vmatpush.bf16.msra.mxu0 %v5260
    %6218 = vmatpush.bf16.msra.mxu0 %v5244
    %6219 = vmatpush.bf16.msra.mxu0 %v5228
    %6220 = vmatpush.bf16.msra.mxu0 %v5212
    %6221 = vmatmul.bf16.gmra.mxu0 %v3378
    %v6222 = vpop.f32.mrf.mxu0
    %v6223 = vadd.f32 %v3836, %v6222
    %v6224 = vpop.f32.mrf.mxu0
    %6225 = vdwg.mxu0
    %6226 = vmatpush.bf16.msra.mxu0 %v5452
    %6227 = vmatpush.bf16.msra.mxu0 %v5436
    %6228 = vmatpush.bf16.msra.mxu0 %v5420
    %6229 = vmatpush.bf16.msra.mxu0 %v5404
    %6230 = vmatpush.bf16.msra.mxu0 %v5388
    %6231 = vmatpush.bf16.msra.mxu0 %v5372
    %6232 = vmatpush.bf16.msra.mxu0 %v5356
    %6233 = vmatpush.bf16.msra.mxu0 %v5340
    %6234 = vmatmul.bf16.gmra.mxu0 %v3379
    %v6235 = vpop.f32.mrf.mxu0
    %v6236 = vadd.f32 %v6223, %v6235
    %v6237 = vpop.f32.mrf.mxu0
    %6238 = vdwg.mxu0
    %6239 = vmatpush.bf16.msra.mxu0 %v5580
    %6240 = vmatpush.bf16.msra.mxu0 %v5564
    %6241 = vmatpush.bf16.msra.mxu0 %v5548
    %6242 = vmatpush.bf16.msra.mxu0 %v5532
    %6243 = vmatpush.bf16.msra.mxu0 %v5516
    %6244 = vmatpush.bf16.msra.mxu0 %v5500
    %6245 = vmatpush.bf16.msra.mxu0 %v5484
    %6246 = vmatpush.bf16.msra.mxu0 %v5468
    %6247 = vmatmul.bf16.gmra.mxu0 %v3380
    %v6248 = vpop.f32.mrf.mxu0
    %v6249 = vadd.f32 %v6236, %v6248
    %v6250 = vpop.f32.mrf.mxu0
    %6251 = vdwg.mxu0
    %6252 = vmatpush.bf16.msra.mxu0 0
    %6253 = vmatpush.bf16.msra.mxu0 0
    %6254 = vmatpush.bf16.msra.mxu0 0
    %6255 = vmatpush.bf16.msra.mxu0 0
    %6256 = vmatpush.bf16.msra.mxu0 %v5644
    %6257 = vmatpush.bf16.msra.mxu0 %v5628
    %6258 = vmatpush.bf16.msra.mxu0 %v5612
    %6259 = vmatpush.bf16.msra.mxu0 %v5596
    %6260 = vmatmul.bf16.gmra.mxu0 %v6107
    %v6261 = vpop.f32.mrf.mxu0
    %v6262 = vadd.f32 %v6249, %v6261
    %v6263 = vpop.f32.mrf.mxu0
    %6264 = vdwg.mxu0
    %6265 = vmatpush.bf16.msra.mxu0 %v5325
    %6266 = vmatpush.bf16.msra.mxu0 %v5309
    %6267 = vmatpush.bf16.msra.mxu0 %v5293
    %6268 = vmatpush.bf16.msra.mxu0 %v5277
    %6269 = vmatpush.bf16.msra.mxu0 %v5261
    %6270 = vmatpush.bf16.msra.mxu0 %v5245
    %6271 = vmatpush.bf16.msra.mxu0 %v5229
    %6272 = vmatpush.bf16.msra.mxu0 %v5213
    %6273 = vmatmul.bf16.gmra.mxu0 %v3378
    %v6274 = vpop.f32.mrf.mxu0
    %v6275 = vadd.f32 %v3837, %v6274
    %v6276 = vpop.f32.mrf.mxu0
    %6277 = vdwg.mxu0
    %6278 = vmatpush.bf16.msra.mxu0 %v5453
    %6279 = vmatpush.bf16.msra.mxu0 %v5437
    %6280 = vmatpush.bf16.msra.mxu0 %v5421
    %6281 = vmatpush.bf16.msra.mxu0 %v5405
    %6282 = vmatpush.bf16.msra.mxu0 %v5389
    %6283 = vmatpush.bf16.msra.mxu0 %v5373
    %6284 = vmatpush.bf16.msra.mxu0 %v5357
    %6285 = vmatpush.bf16.msra.mxu0 %v5341
    %6286 = vmatmul.bf16.gmra.mxu0 %v3379
    %v6287 = vpop.f32.mrf.mxu0
    %v6288 = vadd.f32 %v6275, %v6287
    %v6289 = vpop.f32.mrf.mxu0
    %6290 = vdwg.mxu0
    %6291 = vmatpush.bf16.msra.mxu0 %v5581
    %6292 = vmatpush.bf16.msra.mxu0 %v5565
    %6293 = vmatpush.bf16.msra.mxu0 %v5549
    %6294 = vmatpush.bf16.msra.mxu0 %v5533
    %6295 = vmatpush.bf16.msra.mxu0 %v5517
    %6296 = vmatpush.bf16.msra.mxu0 %v5501
    %6297 = vmatpush.bf16.msra.mxu0 %v5485
    %6298 = vmatpush.bf16.msra.mxu0 %v5469
    %6299 = vmatmul.bf16.gmra.mxu0 %v3380
    %v6300 = vpop.f32.mrf.mxu0
    %v6301 = vadd.f32 %v6288, %v6300
    %v6302 = vpop.f32.mrf.mxu0
    %6303 = vdwg.mxu0
    %6304 = vmatpush.bf16.msra.mxu0 0
    %6305 = vmatpush.bf16.msra.mxu0 0
    %6306 = vmatpush.bf16.msra.mxu0 0
    %6307 = vmatpush.bf16.msra.mxu0 0
    %6308 = vmatpush.bf16.msra.mxu0 %v5645
    %6309 = vmatpush.bf16.msra.mxu0 %v5629
    %6310 = vmatpush.bf16.msra.mxu0 %v5613
    %6311 = vmatpush.bf16.msra.mxu0 %v5597
    %6312 = vmatmul.bf16.gmra.mxu0 %v6107
    %v6313 = vpop.f32.mrf.mxu0
    %v6314 = vadd.f32 %v6301, %v6313
    %v6315 = vpop.f32.mrf.mxu0
    %6316 = vdwg.mxu0
    %6317 = vmatpush.bf16.msra.mxu0 %v5326
    %6318 = vmatpush.bf16.msra.mxu0 %v5310
    %6319 = vmatpush.bf16.msra.mxu0 %v5294
    %6320 = vmatpush.bf16.msra.mxu0 %v5278
    %6321 = vmatpush.bf16.msra.mxu0 %v5262
    %6322 = vmatpush.bf16.msra.mxu0 %v5246
    %6323 = vmatpush.bf16.msra.mxu0 %v5230
    %6324 = vmatpush.bf16.msra.mxu0 %v5214
    %6325 = vmatmul.bf16.gmra.mxu0 %v3378
    %v6326 = vpop.f32.mrf.mxu0
    %v6327 = vadd.f32 %v3838, %v6326
    %v6328 = vpop.f32.mrf.mxu0
    %6329 = vdwg.mxu0
    %6330 = vmatpush.bf16.msra.mxu0 %v5454
    %6331 = vmatpush.bf16.msra.mxu0 %v5438
    %6332 = vmatpush.bf16.msra.mxu0 %v5422
    %6333 = vmatpush.bf16.msra.mxu0 %v5406
    %6334 = vmatpush.bf16.msra.mxu0 %v5390
    %6335 = vmatpush.bf16.msra.mxu0 %v5374
    %6336 = vmatpush.bf16.msra.mxu0 %v5358
    %6337 = vmatpush.bf16.msra.mxu0 %v5342
    %6338 = vmatmul.bf16.gmra.mxu0 %v3379
    %v6339 = vpop.f32.mrf.mxu0
    %v6340 = vadd.f32 %v6327, %v6339
    %v6341 = vpop.f32.mrf.mxu0
    %6342 = vdwg.mxu0
    %6343 = vmatpush.bf16.msra.mxu0 %v5582
    %6344 = vmatpush.bf16.msra.mxu0 %v5566
    %6345 = vmatpush.bf16.msra.mxu0 %v5550
    %6346 = vmatpush.bf16.msra.mxu0 %v5534
    %6347 = vmatpush.bf16.msra.mxu0 %v5518
    %6348 = vmatpush.bf16.msra.mxu0 %v5502
    %6349 = vmatpush.bf16.msra.mxu0 %v5486
    %6350 = vmatpush.bf16.msra.mxu0 %v5470
    %6351 = vmatmul.bf16.gmra.mxu0 %v3380
    %v6352 = vpop.f32.mrf.mxu0
    %v6353 = vadd.f32 %v6340, %v6352
    %v6354 = vpop.f32.mrf.mxu0
    %6355 = vdwg.mxu0
    %6356 = vmatpush.bf16.msra.mxu0 0
    %6357 = vmatpush.bf16.msra.mxu0 0
    %6358 = vmatpush.bf16.msra.mxu0 0
    %6359 = vmatpush.bf16.msra.mxu0 0
    %6360 = vmatpush.bf16.msra.mxu0 %v5646
    %6361 = vmatpush.bf16.msra.mxu0 %v5630
    %6362 = vmatpush.bf16.msra.mxu0 %v5614
    %6363 = vmatpush.bf16.msra.mxu0 %v5598
    %6364 = vmatmul.bf16.gmra.mxu0 %v6107
    %v6365 = vpop.f32.mrf.mxu0
    %v6366 = vadd.f32 %v6353, %v6365
    %v6367 = vpop.f32.mrf.mxu0
    %6368 = vdwg.mxu0
    %6369 = vmatpush.bf16.msra.mxu0 %v5327
    %6370 = vmatpush.bf16.msra.mxu0 %v5311
    %6371 = vmatpush.bf16.msra.mxu0 %v5295
    %6372 = vmatpush.bf16.msra.mxu0 %v5279
    %6373 = vmatpush.bf16.msra.mxu0 %v5263
    %6374 = vmatpush.bf16.msra.mxu0 %v5247
    %6375 = vmatpush.bf16.msra.mxu0 %v5231
    %6376 = vmatpush.bf16.msra.mxu0 %v5215
    %6377 = vmatmul.bf16.gmra.mxu0 %v3378
    %v6378 = vpop.f32.mrf.mxu0
    %v6379 = vadd.f32 %v3839, %v6378
    %v6380 = vpop.f32.mrf.mxu0
    %6381 = vdwg.mxu0
    %6382 = vmatpush.bf16.msra.mxu0 %v5455
    %6383 = vmatpush.bf16.msra.mxu0 %v5439
    %6384 = vmatpush.bf16.msra.mxu0 %v5423
    %6385 = vmatpush.bf16.msra.mxu0 %v5407
    %6386 = vmatpush.bf16.msra.mxu0 %v5391
    %6387 = vmatpush.bf16.msra.mxu0 %v5375
    %6388 = vmatpush.bf16.msra.mxu0 %v5359
    %6389 = vmatpush.bf16.msra.mxu0 %v5343
    %6390 = vmatmul.bf16.gmra.mxu0 %v3379
    %v6391 = vpop.f32.mrf.mxu0
    %v6392 = vadd.f32 %v6379, %v6391
    %v6393 = vpop.f32.mrf.mxu0
    %6394 = vdwg.mxu0
    %6395 = vmatpush.bf16.msra.mxu0 %v5583
    %6396 = vmatpush.bf16.msra.mxu0 %v5567
    %6397 = vmatpush.bf16.msra.mxu0 %v5551
    %6398 = vmatpush.bf16.msra.mxu0 %v5535
    %6399 = vmatpush.bf16.msra.mxu0 %v5519
    %6400 = vmatpush.bf16.msra.mxu0 %v5503
    %6401 = vmatpush.bf16.msra.mxu0 %v5487
    %6402 = vmatpush.bf16.msra.mxu0 %v5471
    %6403 = vmatmul.bf16.gmra.mxu0 %v3380
    %v6404 = vpop.f32.mrf.mxu0
    %v6405 = vadd.f32 %v6392, %v6404
    %v6406 = vpop.f32.mrf.mxu0
    %6407 = vdwg.mxu0
    %6408 = vmatpush.bf16.msra.mxu0 0
    %6409 = vmatpush.bf16.msra.mxu0 0
    %6410 = vmatpush.bf16.msra.mxu0 0
    %6411 = vmatpush.bf16.msra.mxu0 0
    %6412 = vmatpush.bf16.msra.mxu0 %v5647
    %6413 = vmatpush.bf16.msra.mxu0 %v5631
    %6414 = vmatpush.bf16.msra.mxu0 %v5615
    %6415 = vmatpush.bf16.msra.mxu0 %v5599
    %6416 = vmatmul.bf16.gmra.mxu0 %v6107
    %v6417 = vpop.f32.mrf.mxu0
    %v6418 = vadd.f32 %v6405, %v6417
    %v6419 = vpop.f32.mrf.mxu0
    %6420 = vdwg.mxu0
    %6421 = vmatpush.bf16.msra.mxu0 %v5328
    %6422 = vmatpush.bf16.msra.mxu0 %v5312
    %6423 = vmatpush.bf16.msra.mxu0 %v5296
    %6424 = vmatpush.bf16.msra.mxu0 %v5280
    %6425 = vmatpush.bf16.msra.mxu0 %v5264
    %6426 = vmatpush.bf16.msra.mxu0 %v5248
    %6427 = vmatpush.bf16.msra.mxu0 %v5232
    %6428 = vmatpush.bf16.msra.mxu0 %v5216
    %6429 = vmatmul.bf16.gmra.mxu0 %v3378
    %v6430 = vpop.f32.mrf.mxu0
    %v6431 = vadd.f32 %v3840, %v6430
    %v6432 = vpop.f32.mrf.mxu0
    %6433 = vdwg.mxu0
    %6434 = vmatpush.bf16.msra.mxu0 %v5456
    %6435 = vmatpush.bf16.msra.mxu0 %v5440
    %6436 = vmatpush.bf16.msra.mxu0 %v5424
    %6437 = vmatpush.bf16.msra.mxu0 %v5408
    %6438 = vmatpush.bf16.msra.mxu0 %v5392
    %6439 = vmatpush.bf16.msra.mxu0 %v5376
    %6440 = vmatpush.bf16.msra.mxu0 %v5360
    %6441 = vmatpush.bf16.msra.mxu0 %v5344
    %6442 = vmatmul.bf16.gmra.mxu0 %v3379
    %v6443 = vpop.f32.mrf.mxu0
    %v6444 = vadd.f32 %v6431, %v6443
    %v6445 = vpop.f32.mrf.mxu0
    %6446 = vdwg.mxu0
    %6447 = vmatpush.bf16.msra.mxu0 %v5584
    %6448 = vmatpush.bf16.msra.mxu0 %v5568
    %6449 = vmatpush.bf16.msra.mxu0 %v5552
    %6450 = vmatpush.bf16.msra.mxu0 %v5536
    %6451 = vmatpush.bf16.msra.mxu0 %v5520
    %6452 = vmatpush.bf16.msra.mxu0 %v5504
    %6453 = vmatpush.bf16.msra.mxu0 %v5488
    %6454 = vmatpush.bf16.msra.mxu0 %v5472
    %6455 = vmatmul.bf16.gmra.mxu0 %v3380
    %v6456 = vpop.f32.mrf.mxu0
    %v6457 = vadd.f32 %v6444, %v6456
    %v6458 = vpop.f32.mrf.mxu0
    %6459 = vdwg.mxu0
    %6460 = vmatpush.bf16.msra.mxu0 0
    %6461 = vmatpush.bf16.msra.mxu0 0
    %6462 = vmatpush.bf16.msra.mxu0 0
    %6463 = vmatpush.bf16.msra.mxu0 0
    %6464 = vmatpush.bf16.msra.mxu0 %v5648
    %6465 = vmatpush.bf16.msra.mxu0 %v5632
    %6466 = vmatpush.bf16.msra.mxu0 %v5616
    %6467 = vmatpush.bf16.msra.mxu0 %v5600
    %6468 = vmatmul.bf16.gmra.mxu0 %v6107
    %v6469 = vpop.f32.mrf.mxu0
    %v6470 = vadd.f32 %v6457, %v6469
    %v6471 = vpop.f32.mrf.mxu0
    %6472 = vdwg.mxu0
    %6473 = vmatpush.bf16.msra.mxu0 %v5329
    %6474 = vmatpush.bf16.msra.mxu0 %v5313
    %6475 = vmatpush.bf16.msra.mxu0 %v5297
    %6476 = vmatpush.bf16.msra.mxu0 %v5281
    %6477 = vmatpush.bf16.msra.mxu0 %v5265
    %6478 = vmatpush.bf16.msra.mxu0 %v5249
    %6479 = vmatpush.bf16.msra.mxu0 %v5233
    %6480 = vmatpush.bf16.msra.mxu0 %v5217
    %6481 = vmatmul.bf16.gmra.mxu0 %v3378
    %v6482 = vpop.f32.mrf.mxu0
    %v6483 = vadd.f32 %v3841, %v6482
    %v6484 = vpop.f32.mrf.mxu0
    %6485 = vdwg.mxu0
    %6486 = vmatpush.bf16.msra.mxu0 %v5457
    %6487 = vmatpush.bf16.msra.mxu0 %v5441
    %6488 = vmatpush.bf16.msra.mxu0 %v5425
    %6489 = vmatpush.bf16.msra.mxu0 %v5409
    %6490 = vmatpush.bf16.msra.mxu0 %v5393
    %6491 = vmatpush.bf16.msra.mxu0 %v5377
    %6492 = vmatpush.bf16.msra.mxu0 %v5361
    %6493 = vmatpush.bf16.msra.mxu0 %v5345
    %6494 = vmatmul.bf16.gmra.mxu0 %v3379
    %v6495 = vpop.f32.mrf.mxu0
    %v6496 = vadd.f32 %v6483, %v6495
    %v6497 = vpop.f32.mrf.mxu0
    %6498 = vdwg.mxu0
    %6499 = vmatpush.bf16.msra.mxu0 %v5585
    %6500 = vmatpush.bf16.msra.mxu0 %v5569
    %6501 = vmatpush.bf16.msra.mxu0 %v5553
    %6502 = vmatpush.bf16.msra.mxu0 %v5537
    %6503 = vmatpush.bf16.msra.mxu0 %v5521
    %6504 = vmatpush.bf16.msra.mxu0 %v5505
    %6505 = vmatpush.bf16.msra.mxu0 %v5489
    %6506 = vmatpush.bf16.msra.mxu0 %v5473
    %6507 = vmatmul.bf16.gmra.mxu0 %v3380
    %v6508 = vpop.f32.mrf.mxu0
    %v6509 = vadd.f32 %v6496, %v6508
    %v6510 = vpop.f32.mrf.mxu0
    %6511 = vdwg.mxu0
    %6512 = vmatpush.bf16.msra.mxu0 0
    %6513 = vmatpush.bf16.msra.mxu0 0
    %6514 = vmatpush.bf16.msra.mxu0 0
    %6515 = vmatpush.bf16.msra.mxu0 0
    %6516 = vmatpush.bf16.msra.mxu0 %v5649
    %6517 = vmatpush.bf16.msra.mxu0 %v5633
    %6518 = vmatpush.bf16.msra.mxu0 %v5617
    %6519 = vmatpush.bf16.msra.mxu0 %v5601
    %6520 = vmatmul.bf16.gmra.mxu0 %v6107
    %v6521 = vpop.f32.mrf.mxu0
    %v6522 = vadd.f32 %v6509, %v6521
    %v6523 = vpop.f32.mrf.mxu0
    %6524 = vdwg.mxu0
    %6525 = vmatpush.bf16.msra.mxu0 %v5330
    %6526 = vmatpush.bf16.msra.mxu0 %v5314
    %6527 = vmatpush.bf16.msra.mxu0 %v5298
    %6528 = vmatpush.bf16.msra.mxu0 %v5282
    %6529 = vmatpush.bf16.msra.mxu0 %v5266
    %6530 = vmatpush.bf16.msra.mxu0 %v5250
    %6531 = vmatpush.bf16.msra.mxu0 %v5234
    %6532 = vmatpush.bf16.msra.mxu0 %v5218
    %6533 = vmatmul.bf16.gmra.mxu0 %v3378
    %v6534 = vpop.f32.mrf.mxu0
    %v6535 = vadd.f32 %v3842, %v6534
    %v6536 = vpop.f32.mrf.mxu0
    %6537 = vdwg.mxu0
    %6538 = vmatpush.bf16.msra.mxu0 %v5458
    %6539 = vmatpush.bf16.msra.mxu0 %v5442
    %6540 = vmatpush.bf16.msra.mxu0 %v5426
    %6541 = vmatpush.bf16.msra.mxu0 %v5410
    %6542 = vmatpush.bf16.msra.mxu0 %v5394
    %6543 = vmatpush.bf16.msra.mxu0 %v5378
    %6544 = vmatpush.bf16.msra.mxu0 %v5362
    %6545 = vmatpush.bf16.msra.mxu0 %v5346
    %6546 = vmatmul.bf16.gmra.mxu0 %v3379
    %v6547 = vpop.f32.mrf.mxu0
    %v6548 = vadd.f32 %v6535, %v6547
    %v6549 = vpop.f32.mrf.mxu0
    %6550 = vdwg.mxu0
    %6551 = vmatpush.bf16.msra.mxu0 %v5586
    %6552 = vmatpush.bf16.msra.mxu0 %v5570
    %6553 = vmatpush.bf16.msra.mxu0 %v5554
    %6554 = vmatpush.bf16.msra.mxu0 %v5538
    %6555 = vmatpush.bf16.msra.mxu0 %v5522
    %6556 = vmatpush.bf16.msra.mxu0 %v5506
    %6557 = vmatpush.bf16.msra.mxu0 %v5490
    %6558 = vmatpush.bf16.msra.mxu0 %v5474
    %6559 = vmatmul.bf16.gmra.mxu0 %v3380
    %v6560 = vpop.f32.mrf.mxu0
    %v6561 = vadd.f32 %v6548, %v6560
    %v6562 = vpop.f32.mrf.mxu0
    %6563 = vdwg.mxu0
    %6564 = vmatpush.bf16.msra.mxu0 0
    %6565 = vmatpush.bf16.msra.mxu0 0
    %6566 = vmatpush.bf16.msra.mxu0 0
    %6567 = vmatpush.bf16.msra.mxu0 0
    %6568 = vmatpush.bf16.msra.mxu0 %v5650
    %6569 = vmatpush.bf16.msra.mxu0 %v5634
    %6570 = vmatpush.bf16.msra.mxu0 %v5618
    %6571 = vmatpush.bf16.msra.mxu0 %v5602
    %6572 = vmatmul.bf16.gmra.mxu0 %v6107
    %v6573 = vpop.f32.mrf.mxu0
    %v6574 = vadd.f32 %v6561, %v6573
    %v6575 = vpop.f32.mrf.mxu0
    %6576 = vdwg.mxu0
    %6577 = vmatpush.bf16.msra.mxu0 %v5331
    %6578 = vmatpush.bf16.msra.mxu0 %v5315
    %6579 = vmatpush.bf16.msra.mxu0 %v5299
    %6580 = vmatpush.bf16.msra.mxu0 %v5283
    %6581 = vmatpush.bf16.msra.mxu0 %v5267
    %6582 = vmatpush.bf16.msra.mxu0 %v5251
    %6583 = vmatpush.bf16.msra.mxu0 %v5235
    %6584 = vmatpush.bf16.msra.mxu0 %v5219
    %6585 = vmatmul.bf16.gmra.mxu0 %v3378
    %v6586 = vpop.f32.mrf.mxu0
    %v6587 = vadd.f32 %v3843, %v6586
    %v6588 = vpop.f32.mrf.mxu0
    %6589 = vdwg.mxu0
    %6590 = vmatpush.bf16.msra.mxu0 %v5459
    %6591 = vmatpush.bf16.msra.mxu0 %v5443
    %6592 = vmatpush.bf16.msra.mxu0 %v5427
    %6593 = vmatpush.bf16.msra.mxu0 %v5411
    %6594 = vmatpush.bf16.msra.mxu0 %v5395
    %6595 = vmatpush.bf16.msra.mxu0 %v5379
    %6596 = vmatpush.bf16.msra.mxu0 %v5363
    %6597 = vmatpush.bf16.msra.mxu0 %v5347
    %6598 = vmatmul.bf16.gmra.mxu0 %v3379
    %v6599 = vpop.f32.mrf.mxu0
    %v6600 = vadd.f32 %v6587, %v6599
    %v6601 = vpop.f32.mrf.mxu0
    %6602 = vdwg.mxu0
    %6603 = vmatpush.bf16.msra.mxu0 %v5587
    %6604 = vmatpush.bf16.msra.mxu0 %v5571
    %6605 = vmatpush.bf16.msra.mxu0 %v5555
    %6606 = vmatpush.bf16.msra.mxu0 %v5539
    %6607 = vmatpush.bf16.msra.mxu0 %v5523
    %6608 = vmatpush.bf16.msra.mxu0 %v5507
    %6609 = vmatpush.bf16.msra.mxu0 %v5491
    %6610 = vmatpush.bf16.msra.mxu0 %v5475
    %6611 = vmatmul.bf16.gmra.mxu0 %v3380
    %v6612 = vpop.f32.mrf.mxu0
    %v6613 = vadd.f32 %v6600, %v6612
    %v6614 = vpop.f32.mrf.mxu0
    %6615 = vdwg.mxu0
    %6616 = vmatpush.bf16.msra.mxu0 0
    %6617 = vmatpush.bf16.msra.mxu0 0
    %6618 = vmatpush.bf16.msra.mxu0 0
    %6619 = vmatpush.bf16.msra.mxu0 0
    %6620 = vmatpush.bf16.msra.mxu0 %v5651
    %6621 = vmatpush.bf16.msra.mxu0 %v5635
    %6622 = vmatpush.bf16.msra.mxu0 %v5619
    %6623 = vmatpush.bf16.msra.mxu0 %v5603
    %6624 = vmatmul.bf16.gmra.mxu0 %v6107
    %v6625 = vpop.f32.mrf.mxu0
    %v6626 = vadd.f32 %v6613, %v6625
    %v6627 = vpop.f32.mrf.mxu0
    %6628 = vdwg.mxu0
    %6629 = vmatpush.bf16.msra.mxu0 %v5332
    %6630 = vmatpush.bf16.msra.mxu0 %v5316
    %6631 = vmatpush.bf16.msra.mxu0 %v5300
    %6632 = vmatpush.bf16.msra.mxu0 %v5284
    %6633 = vmatpush.bf16.msra.mxu0 %v5268
    %6634 = vmatpush.bf16.msra.mxu0 %v5252
    %6635 = vmatpush.bf16.msra.mxu0 %v5236
    %6636 = vmatpush.bf16.msra.mxu0 %v5220
    %6637 = vmatmul.bf16.gmra.mxu0 %v3378
    %v6638 = vpop.f32.mrf.mxu0
    %v6639 = vadd.f32 %v3844, %v6638
    %v6640 = vpop.f32.mrf.mxu0
    %6641 = vdwg.mxu0
    %6642 = vmatpush.bf16.msra.mxu0 %v5460
    %6643 = vmatpush.bf16.msra.mxu0 %v5444
    %6644 = vmatpush.bf16.msra.mxu0 %v5428
    %6645 = vmatpush.bf16.msra.mxu0 %v5412
    %6646 = vmatpush.bf16.msra.mxu0 %v5396
    %6647 = vmatpush.bf16.msra.mxu0 %v5380
    %6648 = vmatpush.bf16.msra.mxu0 %v5364
    %6649 = vmatpush.bf16.msra.mxu0 %v5348
    %6650 = vmatmul.bf16.gmra.mxu0 %v3379
    %v6651 = vpop.f32.mrf.mxu0
    %v6652 = vadd.f32 %v6639, %v6651
    %v6653 = vpop.f32.mrf.mxu0
    %6654 = vdwg.mxu0
    %6655 = vmatpush.bf16.msra.mxu0 %v5588
    %6656 = vmatpush.bf16.msra.mxu0 %v5572
    %6657 = vmatpush.bf16.msra.mxu0 %v5556
    %6658 = vmatpush.bf16.msra.mxu0 %v5540
    %6659 = vmatpush.bf16.msra.mxu0 %v5524
    %6660 = vmatpush.bf16.msra.mxu0 %v5508
    %6661 = vmatpush.bf16.msra.mxu0 %v5492
    %6662 = vmatpush.bf16.msra.mxu0 %v5476
    %6663 = vmatmul.bf16.gmra.mxu0 %v3380
    %v6664 = vpop.f32.mrf.mxu0
    %v6665 = vadd.f32 %v6652, %v6664
    %v6666 = vpop.f32.mrf.mxu0
    %6667 = vdwg.mxu0
    %6668 = vmatpush.bf16.msra.mxu0 0
    %6669 = vmatpush.bf16.msra.mxu0 0
    %6670 = vmatpush.bf16.msra.mxu0 0
    %6671 = vmatpush.bf16.msra.mxu0 0
    %6672 = vmatpush.bf16.msra.mxu0 %v5652
    %6673 = vmatpush.bf16.msra.mxu0 %v5636
    %6674 = vmatpush.bf16.msra.mxu0 %v5620
    %6675 = vmatpush.bf16.msra.mxu0 %v5604
    %6676 = vmatmul.bf16.gmra.mxu0 %v6107
    %v6677 = vpop.f32.mrf.mxu0
    %v6678 = vadd.f32 %v6665, %v6677
    %v6679 = vpop.f32.mrf.mxu0
    %6680 = vdwg.mxu0
    %6681 = vmatpush.bf16.msra.mxu0 %v5333
    %6682 = vmatpush.bf16.msra.mxu0 %v5317
    %6683 = vmatpush.bf16.msra.mxu0 %v5301
    %6684 = vmatpush.bf16.msra.mxu0 %v5285
    %6685 = vmatpush.bf16.msra.mxu0 %v5269
    %6686 = vmatpush.bf16.msra.mxu0 %v5253
    %6687 = vmatpush.bf16.msra.mxu0 %v5237
    %6688 = vmatpush.bf16.msra.mxu0 %v5221
    %6689 = vmatmul.bf16.gmra.mxu0 %v3378
    %v6690 = vpop.f32.mrf.mxu0
    %v6691 = vadd.f32 %v3845, %v6690
    %v6692 = vpop.f32.mrf.mxu0
    %6693 = vdwg.mxu0
    %6694 = vmatpush.bf16.msra.mxu0 %v5461
    %6695 = vmatpush.bf16.msra.mxu0 %v5445
    %6696 = vmatpush.bf16.msra.mxu0 %v5429
    %6697 = vmatpush.bf16.msra.mxu0 %v5413
    %6698 = vmatpush.bf16.msra.mxu0 %v5397
    %6699 = vmatpush.bf16.msra.mxu0 %v5381
    %6700 = vmatpush.bf16.msra.mxu0 %v5365
    %6701 = vmatpush.bf16.msra.mxu0 %v5349
    %6702 = vmatmul.bf16.gmra.mxu0 %v3379
    %v6703 = vpop.f32.mrf.mxu0
    %v6704 = vadd.f32 %v6691, %v6703
    %v6705 = vpop.f32.mrf.mxu0
    %6706 = vdwg.mxu0
    %6707 = vmatpush.bf16.msra.mxu0 %v5589
    %6708 = vmatpush.bf16.msra.mxu0 %v5573
    %6709 = vmatpush.bf16.msra.mxu0 %v5557
    %6710 = vmatpush.bf16.msra.mxu0 %v5541
    %6711 = vmatpush.bf16.msra.mxu0 %v5525
    %6712 = vmatpush.bf16.msra.mxu0 %v5509
    %6713 = vmatpush.bf16.msra.mxu0 %v5493
    %6714 = vmatpush.bf16.msra.mxu0 %v5477
    %6715 = vmatmul.bf16.gmra.mxu0 %v3380
    %v6716 = vpop.f32.mrf.mxu0
    %v6717 = vadd.f32 %v6704, %v6716
    %v6718 = vpop.f32.mrf.mxu0
    %6719 = vdwg.mxu0
    %6720 = vmatpush.bf16.msra.mxu0 0
    %6721 = vmatpush.bf16.msra.mxu0 0
    %6722 = vmatpush.bf16.msra.mxu0 0
    %6723 = vmatpush.bf16.msra.mxu0 0
    %6724 = vmatpush.bf16.msra.mxu0 %v5653
    %6725 = vmatpush.bf16.msra.mxu0 %v5637
    %6726 = vmatpush.bf16.msra.mxu0 %v5621
    %6727 = vmatpush.bf16.msra.mxu0 %v5605
    %6728 = vmatmul.bf16.gmra.mxu0 %v6107
    %v6729 = vpop.f32.mrf.mxu0
    %v6730 = vadd.f32 %v6717, %v6729
    %v6731 = vpop.f32.mrf.mxu0
    %6732 = vdwg.mxu0
    %6733 = vmatpush.bf16.msra.mxu0 %v5334
    %6734 = vmatpush.bf16.msra.mxu0 %v5318
    %6735 = vmatpush.bf16.msra.mxu0 %v5302
    %6736 = vmatpush.bf16.msra.mxu0 %v5286
    %6737 = vmatpush.bf16.msra.mxu0 %v5270
    %6738 = vmatpush.bf16.msra.mxu0 %v5254
    %6739 = vmatpush.bf16.msra.mxu0 %v5238
    %6740 = vmatpush.bf16.msra.mxu0 %v5222
    %6741 = vmatmul.bf16.gmra.mxu0 %v3378
    %v6742 = vpop.f32.mrf.mxu0
    %v6743 = vadd.f32 %v3846, %v6742
    %v6744 = vpop.f32.mrf.mxu0
    %6745 = vdwg.mxu0
    %6746 = vmatpush.bf16.msra.mxu0 %v5462
    %6747 = vmatpush.bf16.msra.mxu0 %v5446
    %6748 = vmatpush.bf16.msra.mxu0 %v5430
    %6749 = vmatpush.bf16.msra.mxu0 %v5414
    %6750 = vmatpush.bf16.msra.mxu0 %v5398
    %6751 = vmatpush.bf16.msra.mxu0 %v5382
    %6752 = vmatpush.bf16.msra.mxu0 %v5366
    %6753 = vmatpush.bf16.msra.mxu0 %v5350
    %6754 = vmatmul.bf16.gmra.mxu0 %v3379
    %v6755 = vpop.f32.mrf.mxu0
    %v6756 = vadd.f32 %v6743, %v6755
    %v6757 = vpop.f32.mrf.mxu0
    %6758 = vdwg.mxu0
    %6759 = vmatpush.bf16.msra.mxu0 %v5590
    %6760 = vmatpush.bf16.msra.mxu0 %v5574
    %6761 = vmatpush.bf16.msra.mxu0 %v5558
    %6762 = vmatpush.bf16.msra.mxu0 %v5542
    %6763 = vmatpush.bf16.msra.mxu0 %v5526
    %6764 = vmatpush.bf16.msra.mxu0 %v5510
    %6765 = vmatpush.bf16.msra.mxu0 %v5494
    %6766 = vmatpush.bf16.msra.mxu0 %v5478
    %6767 = vmatmul.bf16.gmra.mxu0 %v3380
    %v6768 = vpop.f32.mrf.mxu0
    %v6769 = vadd.f32 %v6756, %v6768
    %v6770 = vpop.f32.mrf.mxu0
    %6771 = vdwg.mxu0
    %6772 = vmatpush.bf16.msra.mxu0 0
    %6773 = vmatpush.bf16.msra.mxu0 0
    %6774 = vmatpush.bf16.msra.mxu0 0
    %6775 = vmatpush.bf16.msra.mxu0 0
    %6776 = vmatpush.bf16.msra.mxu0 %v5654
    %6777 = vmatpush.bf16.msra.mxu0 %v5638
    %6778 = vmatpush.bf16.msra.mxu0 %v5622
    %6779 = vmatpush.bf16.msra.mxu0 %v5606
    %6780 = vmatmul.bf16.gmra.mxu0 %v6107
    %v6781 = vpop.f32.mrf.mxu0
    %v6782 = vadd.f32 %v6769, %v6781
    %v6783 = vpop.f32.mrf.mxu0
    %6784 = vdwg.mxu0
    %6785 = vmatpush.bf16.msra.mxu0 %v5335
    %6786 = vmatpush.bf16.msra.mxu0 %v5319
    %6787 = vmatpush.bf16.msra.mxu0 %v5303
    %6788 = vmatpush.bf16.msra.mxu0 %v5287
    %6789 = vmatpush.bf16.msra.mxu0 %v5271
    %6790 = vmatpush.bf16.msra.mxu0 %v5255
    %6791 = vmatpush.bf16.msra.mxu0 %v5239
    %6792 = vmatpush.bf16.msra.mxu0 %v5223
    %6793 = vmatmul.bf16.gmra.mxu0 %v3378
    %v6794 = vpop.f32.mrf.mxu0
    %v6795 = vadd.f32 %v3847, %v6794
    %v6796 = vpop.f32.mrf.mxu0
    %6797 = vdwg.mxu0
    %6798 = vmatpush.bf16.msra.mxu0 %v5463
    %6799 = vmatpush.bf16.msra.mxu0 %v5447
    %6800 = vmatpush.bf16.msra.mxu0 %v5431
    %6801 = vmatpush.bf16.msra.mxu0 %v5415
    %6802 = vmatpush.bf16.msra.mxu0 %v5399
    %6803 = vmatpush.bf16.msra.mxu0 %v5383
    %6804 = vmatpush.bf16.msra.mxu0 %v5367
    %6805 = vmatpush.bf16.msra.mxu0 %v5351
    %6806 = vmatmul.bf16.gmra.mxu0 %v3379
    %v6807 = vpop.f32.mrf.mxu0
    %v6808 = vadd.f32 %v6795, %v6807
    %v6809 = vpop.f32.mrf.mxu0
    %6810 = vdwg.mxu0
    %6811 = vmatpush.bf16.msra.mxu0 %v5591
    %6812 = vmatpush.bf16.msra.mxu0 %v5575
    %6813 = vmatpush.bf16.msra.mxu0 %v5559
    %6814 = vmatpush.bf16.msra.mxu0 %v5543
    %6815 = vmatpush.bf16.msra.mxu0 %v5527
    %6816 = vmatpush.bf16.msra.mxu0 %v5511
    %6817 = vmatpush.bf16.msra.mxu0 %v5495
    %6818 = vmatpush.bf16.msra.mxu0 %v5479
    %6819 = vmatmul.bf16.gmra.mxu0 %v3380
    %v6820 = vpop.f32.mrf.mxu0
    %v6821 = vadd.f32 %v6808, %v6820
    %v6822 = vpop.f32.mrf.mxu0
    %6823 = vdwg.mxu0
    %6824 = vmatpush.bf16.msra.mxu0 0
    %6825 = vmatpush.bf16.msra.mxu0 0
    %6826 = vmatpush.bf16.msra.mxu0 0
    %6827 = vmatpush.bf16.msra.mxu0 0
    %6828 = vmatpush.bf16.msra.mxu0 %v5655
    %6829 = vmatpush.bf16.msra.mxu0 %v5639
    %6830 = vmatpush.bf16.msra.mxu0 %v5623
    %6831 = vmatpush.bf16.msra.mxu0 %v5607
    %6832 = vmatmul.bf16.gmra.mxu0 %v6107
    %v6833 = vpop.f32.mrf.mxu0
    %v6834 = vadd.f32 %v6821, %v6833
    %v6835 = vpop.f32.mrf.mxu0
    %6836 = vdwg.mxu0
    %6837 = vmatpush.bf16.msra.mxu0 %v5336
    %6838 = vmatpush.bf16.msra.mxu0 %v5320
    %6839 = vmatpush.bf16.msra.mxu0 %v5304
    %6840 = vmatpush.bf16.msra.mxu0 %v5288
    %6841 = vmatpush.bf16.msra.mxu0 %v5272
    %6842 = vmatpush.bf16.msra.mxu0 %v5256
    %6843 = vmatpush.bf16.msra.mxu0 %v5240
    %6844 = vmatpush.bf16.msra.mxu0 %v5224
    %6845 = vmatmul.bf16.gmra.mxu0 %v3378
    %v6846 = vpop.f32.mrf.mxu0
    %v6847 = vadd.f32 %v3848, %v6846
    %v6848 = vpop.f32.mrf.mxu0
    %6849 = vdwg.mxu0
    %6850 = vmatpush.bf16.msra.mxu0 %v5464
    %6851 = vmatpush.bf16.msra.mxu0 %v5448
    %6852 = vmatpush.bf16.msra.mxu0 %v5432
    %6853 = vmatpush.bf16.msra.mxu0 %v5416
    %6854 = vmatpush.bf16.msra.mxu0 %v5400
    %6855 = vmatpush.bf16.msra.mxu0 %v5384
    %6856 = vmatpush.bf16.msra.mxu0 %v5368
    %6857 = vmatpush.bf16.msra.mxu0 %v5352
    %6858 = vmatmul.bf16.gmra.mxu0 %v3379
    %v6859 = vpop.f32.mrf.mxu0
    %v6860 = vadd.f32 %v6847, %v6859
    %v6861 = vpop.f32.mrf.mxu0
    %6862 = vdwg.mxu0
    %6863 = vmatpush.bf16.msra.mxu0 %v5592
    %6864 = vmatpush.bf16.msra.mxu0 %v5576
    %6865 = vmatpush.bf16.msra.mxu0 %v5560
    %6866 = vmatpush.bf16.msra.mxu0 %v5544
    %6867 = vmatpush.bf16.msra.mxu0 %v5528
    %6868 = vmatpush.bf16.msra.mxu0 %v5512
    %6869 = vmatpush.bf16.msra.mxu0 %v5496
    %6870 = vmatpush.bf16.msra.mxu0 %v5480
    %6871 = vmatmul.bf16.gmra.mxu0 %v3380
    %v6872 = vpop.f32.mrf.mxu0
    %v6873 = vadd.f32 %v6860, %v6872
    %v6874 = vpop.f32.mrf.mxu0
    %6875 = vdwg.mxu0
    %6876 = vmatpush.bf16.msra.mxu0 0
    %6877 = vmatpush.bf16.msra.mxu0 0
    %6878 = vmatpush.bf16.msra.mxu0 0
    %6879 = vmatpush.bf16.msra.mxu0 0
    %6880 = vmatpush.bf16.msra.mxu0 %v5656
    %6881 = vmatpush.bf16.msra.mxu0 %v5640
    %6882 = vmatpush.bf16.msra.mxu0 %v5624
    %6883 = vmatpush.bf16.msra.mxu0 %v5608
    %6884 = vmatmul.bf16.gmra.mxu0 %v6107
    %v6885 = vpop.f32.mrf.mxu0
    %v6886 = vadd.f32 %v6873, %v6885
    %v6887 = vpop.f32.mrf.mxu0
    %6888 = vdwg.mxu0
    %6889 = vmatpush.bf16.msra.mxu0 %v5337
    %6890 = vmatpush.bf16.msra.mxu0 %v5321
    %6891 = vmatpush.bf16.msra.mxu0 %v5305
    %6892 = vmatpush.bf16.msra.mxu0 %v5289
    %6893 = vmatpush.bf16.msra.mxu0 %v5273
    %6894 = vmatpush.bf16.msra.mxu0 %v5257
    %6895 = vmatpush.bf16.msra.mxu0 %v5241
    %6896 = vmatpush.bf16.msra.mxu0 %v5225
    %6897 = vmatmul.bf16.gmra.mxu0 %v3378
    %v6898 = vpop.f32.mrf.mxu0
    %v6899 = vadd.f32 %v3849, %v6898
    %v6900 = vpop.f32.mrf.mxu0
    %6901 = vdwg.mxu0
    %6902 = vmatpush.bf16.msra.mxu0 %v5465
    %6903 = vmatpush.bf16.msra.mxu0 %v5449
    %6904 = vmatpush.bf16.msra.mxu0 %v5433
    %6905 = vmatpush.bf16.msra.mxu0 %v5417
    %6906 = vmatpush.bf16.msra.mxu0 %v5401
    %6907 = vmatpush.bf16.msra.mxu0 %v5385
    %6908 = vmatpush.bf16.msra.mxu0 %v5369
    %6909 = vmatpush.bf16.msra.mxu0 %v5353
    %6910 = vmatmul.bf16.gmra.mxu0 %v3379
    %v6911 = vpop.f32.mrf.mxu0
    %v6912 = vadd.f32 %v6899, %v6911
    %v6913 = vpop.f32.mrf.mxu0
    %6914 = vdwg.mxu0
    %6915 = vmatpush.bf16.msra.mxu0 %v5593
    %6916 = vmatpush.bf16.msra.mxu0 %v5577
    %6917 = vmatpush.bf16.msra.mxu0 %v5561
    %6918 = vmatpush.bf16.msra.mxu0 %v5545
    %6919 = vmatpush.bf16.msra.mxu0 %v5529
    %6920 = vmatpush.bf16.msra.mxu0 %v5513
    %6921 = vmatpush.bf16.msra.mxu0 %v5497
    %6922 = vmatpush.bf16.msra.mxu0 %v5481
    %6923 = vmatmul.bf16.gmra.mxu0 %v3380
    %v6924 = vpop.f32.mrf.mxu0
    %v6925 = vadd.f32 %v6912, %v6924
    %v6926 = vpop.f32.mrf.mxu0
    %6927 = vdwg.mxu0
    %6928 = vmatpush.bf16.msra.mxu0 0
    %6929 = vmatpush.bf16.msra.mxu0 0
    %6930 = vmatpush.bf16.msra.mxu0 0
    %6931 = vmatpush.bf16.msra.mxu0 0
    %6932 = vmatpush.bf16.msra.mxu0 %v5657
    %6933 = vmatpush.bf16.msra.mxu0 %v5641
    %6934 = vmatpush.bf16.msra.mxu0 %v5625
    %6935 = vmatpush.bf16.msra.mxu0 %v5609
    %6936 = vmatmul.bf16.gmra.mxu0 %v6107
    %v6937 = vpop.f32.mrf.mxu0
    %v6938 = vadd.f32 %v6925, %v6937
    %v6939 = vpop.f32.mrf.mxu0
    %6940 = vdwg.mxu0
    %v6941 = vmax.f32 %v6158, 0.0
    %v6942 = vmax.f32 %v6210, 0.0
    %v6943 = vmax.f32 %v6262, 0.0
    %v6944 = vmax.f32 %v6314, 0.0
    %v6945 = vmax.f32 %v6366, 0.0
    %v6946 = vmax.f32 %v6418, 0.0
    %v6947 = vmax.f32 %v6470, 0.0
    %v6948 = vmax.f32 %v6522, 0.0
    %v6949 = vmax.f32 %v6574, 0.0
    %v6950 = vmax.f32 %v6626, 0.0
    %v6951 = vmax.f32 %v6678, 0.0
    %v6952 = vmax.f32 %v6730, 0.0
    %v6953 = vmax.f32 %v6782, 0.0
    %v6954 = vmax.f32 %v6834, 0.0
    %v6955 = vmax.f32 %v6886, 0.0
    %v6956 = vmax.f32 %v6938, 0.0
    %v6957 = vpack.c.bf16 %v6941, %v6941
    %v6958 = vpack.c.bf16 %v6942, %v6942
    %v6959 = vpack.c.bf16 %v6943, %v6943
    %v6960 = vpack.c.bf16 %v6944, %v6944
    %v6961 = vpack.c.bf16 %v6945, %v6945
    %v6962 = vpack.c.bf16 %v6946, %v6946
    %v6963 = vpack.c.bf16 %v6947, %v6947
    %v6964 = vpack.c.bf16 %v6948, %v6948
    %v6965 = vpack.c.bf16 %v6949, %v6949
    %v6966 = vpack.c.bf16 %v6950, %v6950
    %v6967 = vpack.c.bf16 %v6951, %v6951
    %v6968 = vpack.c.bf16 %v6952, %v6952
    %v6969 = vpack.c.bf16 %v6953, %v6953
    %v6970 = vpack.c.bf16 %v6954, %v6954
    %v6971 = vpack.c.bf16 %v6955, %v6955
    %v6972 = vpack.c.bf16 %v6956, %v6956
    %v6973 = vld [vmem:[#allocation13] sm:$0xf]
    %v6974 = vld [vmem:[#allocation13 + $0x4] sm:$0xf]
    %v6975 = vld [vmem:[#allocation13 + $0x8] sm:$0xf]
    %v6976 = vld [vmem:[#allocation13 + $0xc] sm:$0xf]
    %v6977 = vld [vmem:[#allocation13 + $0x10] sm:$0xf]
    %v6978 = vld [vmem:[#allocation13 + $0x14] sm:$0xf]
    %v6979 = vld [vmem:[#allocation13 + $0x18] sm:$0xf]
    %v6980 = vld [vmem:[#allocation13 + $0x1c] sm:$0xf]
    %v6981 = vld [vmem:[#allocation13 + $0x20] sm:$0xf]
    %v6982 = vld [vmem:[#allocation13 + $0x24] sm:$0xf]
    %v6983 = vld [vmem:[#allocation13 + $0x28] sm:$0xf]
    %v6984 = vld [vmem:[#allocation13 + $0x2c] sm:$0xf]
    %v6985 = vld [vmem:[#allocation13 + $0x30] sm:$0xf]
    %v6986 = vld [vmem:[#allocation13 + $0x34] sm:$0xf]
    %v6987 = vld [vmem:[#allocation13 + $0x38] sm:$0xf]
    %v6988 = vld [vmem:[#allocation13 + $0x3c] sm:$0xf]
    %v6989 = vld [vmem:[#allocation13 + $0x40] sm:$0xf]
    %v6990 = vld [vmem:[#allocation13 + $0x44] sm:$0xf]
    %v6991 = vld [vmem:[#allocation13 + $0x48] sm:$0xf]
    %v6992 = vld [vmem:[#allocation13 + $0x4c] sm:$0xf]
    %v6993 = vld [vmem:[#allocation13 + $0x50] sm:$0xf]
    %v6994 = vld [vmem:[#allocation13 + $0x54] sm:$0xf]
    %v6995 = vld [vmem:[#allocation13 + $0x58] sm:$0xf]
    %v6996 = vld [vmem:[#allocation13 + $0x5c] sm:$0xf]
    %v6997 = vld [vmem:[#allocation13 + $0x60] sm:$0xf]
    %v6998 = vld [vmem:[#allocation13 + $0x64] sm:$0xf]
    %v6999 = vld [vmem:[#allocation13 + $0x68] sm:$0xf]
    %v7000 = vld [vmem:[#allocation13 + $0x6c] sm:$0xf]
    %v7001 = vld [vmem:[#allocation13 + $0x70] sm:$0xf]
    %v7002 = vld [vmem:[#allocation13 + $0x74] sm:$0xf]
    %v7003 = vld [vmem:[#allocation13 + $0x78] sm:$0xf]
    %v7004 = vld [vmem:[#allocation13 + $0x7c] sm:$0xf]
    %v7005 = vld [vmem:[#allocation13 + $0x80] sm:$0xf]
    %v7006 = vld [vmem:[#allocation13 + $0x84] sm:$0xf]
    %v7007 = vld [vmem:[#allocation13 + $0x88] sm:$0xf]
    %v7008 = vld [vmem:[#allocation13 + $0x8c] sm:$0xf]
    %v7009 = vld [vmem:[#allocation13 + $0x90] sm:$0xf]
    %v7010 = vld [vmem:[#allocation13 + $0x94] sm:$0xf]
    %v7011 = vld [vmem:[#allocation13 + $0x98] sm:$0xf]
    %v7012 = vld [vmem:[#allocation13 + $0x9c] sm:$0xf]
    %v7013 = vld [vmem:[#allocation13 + $0xa0] sm:$0xf]
    %v7014 = vld [vmem:[#allocation13 + $0xa4] sm:$0xf]
    %v7015 = vld [vmem:[#allocation13 + $0xa8] sm:$0xf]
    %v7016 = vld [vmem:[#allocation13 + $0xac] sm:$0xf]
    %v7017 = vld [vmem:[#allocation13 + $0xb0] sm:$0xf]
    %v7018 = vld [vmem:[#allocation13 + $0xb4] sm:$0xf]
    %v7019 = vld [vmem:[#allocation13 + $0xb8] sm:$0xf]
    %v7020 = vld [vmem:[#allocation13 + $0xbc] sm:$0xf]
    %v7021 = vld [vmem:[#allocation13 + $0xc0] sm:$0xf]
    %v7022 = vld [vmem:[#allocation13 + $0xc4] sm:$0xf]
    %v7023 = vld [vmem:[#allocation13 + $0xc8] sm:$0xf]
    %v7024 = vld [vmem:[#allocation13 + $0xcc] sm:$0xf]
    %v7025 = vld [vmem:[#allocation13 + $0xd0] sm:$0xf]
    %v7026 = vld [vmem:[#allocation13 + $0xd4] sm:$0xf]
    %v7027 = vld [vmem:[#allocation13 + $0xd8] sm:$0xf]
    %v7028 = vld [vmem:[#allocation13 + $0xdc] sm:$0xf]
    %v7029 = vld [vmem:[#allocation13 + $0xe0] sm:$0xf]
    %v7030 = vld [vmem:[#allocation13 + $0xe4] sm:$0xf]
    %v7031 = vld [vmem:[#allocation13 + $0xe8] sm:$0xf]
    %v7032 = vld [vmem:[#allocation13 + $0xec] sm:$0xf]
    %v7033 = vld [vmem:[#allocation13 + $0xf0] sm:$0xf]
    %v7034 = vld [vmem:[#allocation13 + $0xf4] sm:$0xf]
    %v7035 = vld [vmem:[#allocation13 + $0xf8] sm:$0xf]
    %v7036 = vld [vmem:[#allocation13 + $0xfc] sm:$0xf]
    %v7037 = vld [vmem:[#allocation13 + $0x100] sm:$0xf]
    %v7038 = vld [vmem:[#allocation13 + $0x104] sm:$0xf]
    %v7039 = vld [vmem:[#allocation13 + $0x108] sm:$0xf]
    %v7040 = vld [vmem:[#allocation13 + $0x10c] sm:$0xf]
    %v7041 = vld [vmem:[#allocation13 + $0x110] sm:$0xf]
    %v7042 = vld [vmem:[#allocation13 + $0x114] sm:$0xf]
    %v7043 = vld [vmem:[#allocation13 + $0x118] sm:$0xf]
    %v7044 = vld [vmem:[#allocation13 + $0x11c] sm:$0xf]
    %v7045 = vld [vmem:[#allocation13 + $0x120] sm:$0xf]
    %v7046 = vld [vmem:[#allocation13 + $0x124] sm:$0xf]
    %v7047 = vld [vmem:[#allocation13 + $0x128] sm:$0xf]
    %v7048 = vld [vmem:[#allocation13 + $0x12c] sm:$0xf]
    %v7049 = vld [vmem:[#allocation13 + $0x130] sm:$0xf]
    %v7050 = vld [vmem:[#allocation13 + $0x134] sm:$0xf]
    %v7051 = vld [vmem:[#allocation13 + $0x138] sm:$0xf]
    %v7052 = vld [vmem:[#allocation13 + $0x13c] sm:$0xf]
    %v7053 = vld [vmem:[#allocation13 + $0x140] sm:$0xf]
    %v7054 = vld [vmem:[#allocation13 + $0x144] sm:$0xf]
    %v7055 = vld [vmem:[#allocation13 + $0x148] sm:$0xf]
    %v7056 = vld [vmem:[#allocation13 + $0x14c] sm:$0xf]
    %v7057 = vld [vmem:[#allocation13 + $0x150] sm:$0xf]
    %v7058 = vld [vmem:[#allocation13 + $0x154] sm:$0xf]
    %v7059 = vld [vmem:[#allocation13 + $0x158] sm:$0xf]
    %v7060 = vld [vmem:[#allocation13 + $0x15c] sm:$0xf]
    %v7061 = vld [vmem:[#allocation13 + $0x160] sm:$0xf]
    %v7062 = vld [vmem:[#allocation13 + $0x164] sm:$0xf]
    %v7063 = vld [vmem:[#allocation13 + $0x168] sm:$0xf]
    %v7064 = vld [vmem:[#allocation13 + $0x16c] sm:$0xf]
    %v7065 = vld [vmem:[#allocation13 + $0x170] sm:$0xf]
    %v7066 = vld [vmem:[#allocation13 + $0x174] sm:$0xf]
    %v7067 = vld [vmem:[#allocation13 + $0x178] sm:$0xf]
    %v7068 = vld [vmem:[#allocation13 + $0x17c] sm:$0xf]
    %v7069 = vld [vmem:[#allocation13 + $0x180] sm:$0xf]
    %v7070 = vld [vmem:[#allocation13 + $0x184] sm:$0xf]
    %v7071 = vld [vmem:[#allocation13 + $0x188] sm:$0xf]
    %v7072 = vld [vmem:[#allocation13 + $0x18c] sm:$0xf]
    %v7073 = vld [vmem:[#allocation13 + $0x190] sm:$0xf]
    %v7074 = vld [vmem:[#allocation13 + $0x194] sm:$0xf]
    %v7075 = vld [vmem:[#allocation13 + $0x198] sm:$0xf]
    %v7076 = vld [vmem:[#allocation13 + $0x19c] sm:$0xf]
    %v7077 = vld [vmem:[#allocation13 + $0x1a0] sm:$0xf]
    %v7078 = vld [vmem:[#allocation13 + $0x1a4] sm:$0xf]
    %v7079 = vld [vmem:[#allocation13 + $0x1a8] sm:$0xf]
    %v7080 = vld [vmem:[#allocation13 + $0x1ac] sm:$0xf]
    %v7081 = vld [vmem:[#allocation13 + $0x1b0] sm:$0xf]
    %v7082 = vld [vmem:[#allocation13 + $0x1b4] sm:$0xf]
    %v7083 = vld [vmem:[#allocation13 + $0x1b8] sm:$0xf]
    %v7084 = vld [vmem:[#allocation13 + $0x1bc] sm:$0xf]
    %v7085 = vld [vmem:[#allocation13 + $0x1c0] sm:$0xf]
    %v7086 = vld [vmem:[#allocation13 + $0x1c4] sm:$0xf]
    %v7087 = vld [vmem:[#allocation13 + $0x1c8] sm:$0xf]
    %v7088 = vld [vmem:[#allocation13 + $0x1cc] sm:$0xf]
    %v7089 = vld [vmem:[#allocation13 + $0x1d0] sm:$0xf]
    %v7090 = vld [vmem:[#allocation13 + $0x1d4] sm:$0xf]
    %v7091 = vld [vmem:[#allocation13 + $0x1d8] sm:$0xf]
    %v7092 = vld [vmem:[#allocation13 + $0x1dc] sm:$0xf]
    %v7093 = vld [vmem:[#allocation13 + $0x1e0] sm:$0xf]
    %v7094 = vld [vmem:[#allocation13 + $0x1e4] sm:$0xf]
    %v7095 = vld [vmem:[#allocation13 + $0x1e8] sm:$0xf]
    %v7096 = vld [vmem:[#allocation13 + $0x1ec] sm:$0xf]
    %v7097 = vld [vmem:[#allocation13 + $0x1f0] sm:$0xf]
    %v7098 = vld [vmem:[#allocation13 + $0x1f4] sm:$0xf]
    %v7099 = vld [vmem:[#allocation13 + $0x1f8] sm:$0xf]
    %v7100 = vld [vmem:[#allocation13 + $0x1fc] sm:$0xf]
    %v7101 = vld [vmem:[#allocation13 + $0x200] sm:$0xf]
    %v7102 = vld [vmem:[#allocation13 + $0x204] sm:$0xf]
    %v7103 = vld [vmem:[#allocation13 + $0x208] sm:$0xf]
    %v7104 = vld [vmem:[#allocation13 + $0x20c] sm:$0xf]
    %v7105 = vld [vmem:[#allocation13 + $0x210] sm:$0xf]
    %v7106 = vld [vmem:[#allocation13 + $0x214] sm:$0xf]
    %v7107 = vld [vmem:[#allocation13 + $0x218] sm:$0xf]
    %v7108 = vld [vmem:[#allocation13 + $0x21c] sm:$0xf]
    %v7109 = vld [vmem:[#allocation13 + $0x220] sm:$0xf]
    %v7110 = vld [vmem:[#allocation13 + $0x224] sm:$0xf]
    %v7111 = vld [vmem:[#allocation13 + $0x228] sm:$0xf]
    %v7112 = vld [vmem:[#allocation13 + $0x22c] sm:$0xf]
    %v7113 = vld [vmem:[#allocation13 + $0x230] sm:$0xf]
    %v7114 = vld [vmem:[#allocation13 + $0x234] sm:$0xf]
    %v7115 = vld [vmem:[#allocation13 + $0x238] sm:$0xf]
    %v7116 = vld [vmem:[#allocation13 + $0x23c] sm:$0xf]
    %v7117 = vld [vmem:[#allocation13 + $0x240] sm:$0xf]
    %v7118 = vld [vmem:[#allocation13 + $0x244] sm:$0xf]
    %v7119 = vld [vmem:[#allocation13 + $0x248] sm:$0xf]
    %v7120 = vld [vmem:[#allocation13 + $0x24c] sm:$0xf]
    %v7121 = vld [vmem:[#allocation13 + $0x250] sm:$0xf]
    %v7122 = vld [vmem:[#allocation13 + $0x254] sm:$0xf]
    %v7123 = vld [vmem:[#allocation13 + $0x258] sm:$0xf]
    %v7124 = vld [vmem:[#allocation13 + $0x25c] sm:$0xf]
    %v7125 = vld [vmem:[#allocation13 + $0x260] sm:$0xf]
    %v7126 = vld [vmem:[#allocation13 + $0x264] sm:$0xf]
    %v7127 = vld [vmem:[#allocation13 + $0x268] sm:$0xf]
    %v7128 = vld [vmem:[#allocation13 + $0x26c] sm:$0xf]
    %v7129 = vld [vmem:[#allocation13 + $0x270] sm:$0xf]
    %v7130 = vld [vmem:[#allocation13 + $0x274] sm:$0xf]
    %v7131 = vld [vmem:[#allocation13 + $0x278] sm:$0xf]
    %v7132 = vld [vmem:[#allocation13 + $0x27c] sm:$0xf]
    %v7133 = vld [vmem:[#allocation13 + $0x280] sm:$0xf]
    %v7134 = vld [vmem:[#allocation13 + $0x284] sm:$0xf]
    %v7135 = vld [vmem:[#allocation13 + $0x288] sm:$0xf]
    %v7136 = vld [vmem:[#allocation13 + $0x28c] sm:$0xf]
    %v7137 = vld [vmem:[#allocation13 + $0x290] sm:$0xf]
    %v7138 = vld [vmem:[#allocation13 + $0x294] sm:$0xf]
    %v7139 = vld [vmem:[#allocation13 + $0x298] sm:$0xf]
    %v7140 = vld [vmem:[#allocation13 + $0x29c] sm:$0xf]
    %v7141 = vld [vmem:[#allocation13 + $0x2a0] sm:$0xf]
    %v7142 = vld [vmem:[#allocation13 + $0x2a4] sm:$0xf]
    %v7143 = vld [vmem:[#allocation13 + $0x2a8] sm:$0xf]
    %v7144 = vld [vmem:[#allocation13 + $0x2ac] sm:$0xf]
    %v7145 = vld [vmem:[#allocation13 + $0x2b0] sm:$0xf]
    %v7146 = vld [vmem:[#allocation13 + $0x2b4] sm:$0xf]
    %v7147 = vld [vmem:[#allocation13 + $0x2b8] sm:$0xf]
    %v7148 = vld [vmem:[#allocation13 + $0x2bc] sm:$0xf]
    %v7149 = vld [vmem:[#allocation13 + $0x2c0] sm:$0xf]
    %v7150 = vld [vmem:[#allocation13 + $0x2c4] sm:$0xf]
    %v7151 = vld [vmem:[#allocation13 + $0x2c8] sm:$0xf]
    %v7152 = vld [vmem:[#allocation13 + $0x2cc] sm:$0xf]
    %v7153 = vld [vmem:[#allocation13 + $0x2d0] sm:$0xf]
    %v7154 = vld [vmem:[#allocation13 + $0x2d4] sm:$0xf]
    %v7155 = vld [vmem:[#allocation13 + $0x2d8] sm:$0xf]
    %v7156 = vld [vmem:[#allocation13 + $0x2dc] sm:$0xf]
    %v7157 = vld [vmem:[#allocation13 + $0x2e0] sm:$0xf]
    %v7158 = vld [vmem:[#allocation13 + $0x2e4] sm:$0xf]
    %v7159 = vld [vmem:[#allocation13 + $0x2e8] sm:$0xf]
    %v7160 = vld [vmem:[#allocation13 + $0x2ec] sm:$0xf]
    %v7161 = vld [vmem:[#allocation13 + $0x2f0] sm:$0xf]
    %v7162 = vld [vmem:[#allocation13 + $0x2f4] sm:$0xf]
    %v7163 = vld [vmem:[#allocation13 + $0x2f8] sm:$0xf]
    %v7164 = vld [vmem:[#allocation13 + $0x2fc] sm:$0xf]
    %v7165 = vld [vmem:[#allocation13 + $0x300] sm:$0xf]
    %v7166 = vld [vmem:[#allocation13 + $0x304] sm:$0xf]
    %v7167 = vld [vmem:[#allocation13 + $0x308] sm:$0xf]
    %v7168 = vld [vmem:[#allocation13 + $0x30c] sm:$0xf]
    %v7169 = vld [vmem:[#allocation13 + $0x310] sm:$0xf]
    %v7170 = vld [vmem:[#allocation13 + $0x314] sm:$0xf]
    %v7171 = vld [vmem:[#allocation13 + $0x318] sm:$0xf]
    %v7172 = vld [vmem:[#allocation13 + $0x31c] sm:$0xf]
    %v7173 = vld [vmem:[#allocation13 + $0x320] sm:$0xf]
    %v7174 = vld [vmem:[#allocation13 + $0x324] sm:$0xf]
    %v7175 = vld [vmem:[#allocation13 + $0x328] sm:$0xf]
    %v7176 = vld [vmem:[#allocation13 + $0x32c] sm:$0xf]
    %v7177 = vld [vmem:[#allocation13 + $0x330] sm:$0xf]
    %v7178 = vld [vmem:[#allocation13 + $0x334] sm:$0xf]
    %v7179 = vld [vmem:[#allocation13 + $0x338] sm:$0xf]
    %v7180 = vld [vmem:[#allocation13 + $0x33c] sm:$0xf]
    %v7181 = vld [vmem:[#allocation13 + $0x340] sm:$0xf]
    %v7182 = vld [vmem:[#allocation13 + $0x344] sm:$0xf]
    %v7183 = vld [vmem:[#allocation13 + $0x348] sm:$0xf]
    %v7184 = vld [vmem:[#allocation13 + $0x34c] sm:$0xf]
    %v7185 = vld [vmem:[#allocation13 + $0x350] sm:$0xf]
    %v7186 = vld [vmem:[#allocation13 + $0x354] sm:$0xf]
    %v7187 = vld [vmem:[#allocation13 + $0x358] sm:$0xf]
    %v7188 = vld [vmem:[#allocation13 + $0x35c] sm:$0xf]
    %v7189 = vld [vmem:[#allocation13 + $0x360] sm:$0xf]
    %v7190 = vld [vmem:[#allocation13 + $0x364] sm:$0xf]
    %v7191 = vld [vmem:[#allocation13 + $0x368] sm:$0xf]
    %v7192 = vld [vmem:[#allocation13 + $0x36c] sm:$0xf]
    %v7193 = vld [vmem:[#allocation13 + $0x370] sm:$0xf]
    %v7194 = vld [vmem:[#allocation13 + $0x374] sm:$0xf]
    %v7195 = vld [vmem:[#allocation13 + $0x378] sm:$0xf]
    %v7196 = vld [vmem:[#allocation13 + $0x37c] sm:$0xf]
    %v7197 = vld [vmem:[#allocation13 + $0x380] sm:$0xf]
    %v7198 = vld [vmem:[#allocation13 + $0x384] sm:$0xf]
    %v7199 = vld [vmem:[#allocation13 + $0x388] sm:$0xf]
    %v7200 = vld [vmem:[#allocation13 + $0x38c] sm:$0xf]
    %v7201 = vld [vmem:[#allocation13 + $0x390] sm:$0xf]
    %v7202 = vld [vmem:[#allocation13 + $0x394] sm:$0xf]
    %v7203 = vld [vmem:[#allocation13 + $0x398] sm:$0xf]
    %v7204 = vld [vmem:[#allocation13 + $0x39c] sm:$0xf]
    %v7205 = vld [vmem:[#allocation13 + $0x3a0] sm:$0xf]
    %v7206 = vld [vmem:[#allocation13 + $0x3a4] sm:$0xf]
    %v7207 = vld [vmem:[#allocation13 + $0x3a8] sm:$0xf]
    %v7208 = vld [vmem:[#allocation13 + $0x3ac] sm:$0xf]
    %v7209 = vld [vmem:[#allocation13 + $0x3b0] sm:$0xf]
    %v7210 = vld [vmem:[#allocation13 + $0x3b4] sm:$0xf]
    %v7211 = vld [vmem:[#allocation13 + $0x3b8] sm:$0xf]
    %v7212 = vld [vmem:[#allocation13 + $0x3bc] sm:$0xf]
    %v7213 = vld [vmem:[#allocation13 + $0x3c0] sm:$0xf]
    %v7214 = vld [vmem:[#allocation13 + $0x3c4] sm:$0xf]
    %v7215 = vld [vmem:[#allocation13 + $0x3c8] sm:$0xf]
    %v7216 = vld [vmem:[#allocation13 + $0x3cc] sm:$0xf]
    %v7217 = vld [vmem:[#allocation13 + $0x3d0] sm:$0xf]
    %v7218 = vld [vmem:[#allocation13 + $0x3d4] sm:$0xf]
    %v7219 = vld [vmem:[#allocation13 + $0x3d8] sm:$0xf]
    %v7220 = vld [vmem:[#allocation13 + $0x3dc] sm:$0xf]
    %v7221 = vld [vmem:[#allocation13 + $0x3e0] sm:$0xf]
    %v7222 = vld [vmem:[#allocation13 + $0x3e4] sm:$0xf]
    %v7223 = vld [vmem:[#allocation13 + $0x3e8] sm:$0xf]
    %v7224 = vld [vmem:[#allocation13 + $0x3ec] sm:$0xf]
    %v7225 = vld [vmem:[#allocation13 + $0x3f0] sm:$0xf]
    %v7226 = vld [vmem:[#allocation13 + $0x3f4] sm:$0xf]
    %v7227 = vld [vmem:[#allocation13 + $0x3f8] sm:$0xf]
    %v7228 = vld [vmem:[#allocation13 + $0x3fc] sm:$0xf]
    %v7229 = vld [vmem:[#allocation15] sm:$0x1]
    %v7231 = vperm.slane %v7229, 0
    %v7489 = vunpack.c.l.b16 %v6973
    %v7490 = vunpack.c.l.b16 %v6974
    %v7491 = vunpack.c.l.b16 %v6975
    %v7492 = vunpack.c.l.b16 %v6976
    %v7493 = vunpack.c.l.b16 %v6977
    %v7494 = vunpack.c.l.b16 %v6978
    %v7495 = vunpack.c.l.b16 %v6979
    %v7496 = vunpack.c.l.b16 %v6980
    %v7497 = vunpack.c.l.b16 %v6981
    %v7498 = vunpack.c.l.b16 %v6982
    %v7499 = vunpack.c.l.b16 %v6983
    %v7500 = vunpack.c.l.b16 %v6984
    %v7501 = vunpack.c.l.b16 %v6985
    %v7502 = vunpack.c.l.b16 %v6986
    %v7503 = vunpack.c.l.b16 %v6987
    %v7504 = vunpack.c.l.b16 %v6988
    %v7505 = vunpack.c.l.b16 %v6989
    %v7506 = vunpack.c.l.b16 %v6990
    %v7507 = vunpack.c.l.b16 %v6991
    %v7508 = vunpack.c.l.b16 %v6992
    %v7509 = vunpack.c.l.b16 %v6993
    %v7510 = vunpack.c.l.b16 %v6994
    %v7511 = vunpack.c.l.b16 %v6995
    %v7512 = vunpack.c.l.b16 %v6996
    %v7513 = vunpack.c.l.b16 %v6997
    %v7514 = vunpack.c.l.b16 %v6998
    %v7515 = vunpack.c.l.b16 %v6999
    %v7516 = vunpack.c.l.b16 %v7000
    %v7517 = vunpack.c.l.b16 %v7001
    %v7518 = vunpack.c.l.b16 %v7002
    %v7519 = vunpack.c.l.b16 %v7003
    %v7520 = vunpack.c.l.b16 %v7004
    %v7521 = vunpack.c.l.b16 %v7005
    %v7522 = vunpack.c.l.b16 %v7006
    %v7523 = vunpack.c.l.b16 %v7007
    %v7524 = vunpack.c.l.b16 %v7008
    %v7525 = vunpack.c.l.b16 %v7009
    %v7526 = vunpack.c.l.b16 %v7010
    %v7527 = vunpack.c.l.b16 %v7011
    %v7528 = vunpack.c.l.b16 %v7012
    %v7529 = vunpack.c.l.b16 %v7013
    %v7530 = vunpack.c.l.b16 %v7014
    %v7531 = vunpack.c.l.b16 %v7015
    %v7532 = vunpack.c.l.b16 %v7016
    %v7533 = vunpack.c.l.b16 %v7017
    %v7534 = vunpack.c.l.b16 %v7018
    %v7535 = vunpack.c.l.b16 %v7019
    %v7536 = vunpack.c.l.b16 %v7020
    %v7537 = vunpack.c.l.b16 %v7021
    %v7538 = vunpack.c.l.b16 %v7022
    %v7539 = vunpack.c.l.b16 %v7023
    %v7540 = vunpack.c.l.b16 %v7024
    %v7541 = vunpack.c.l.b16 %v7025
    %v7542 = vunpack.c.l.b16 %v7026
    %v7543 = vunpack.c.l.b16 %v7027
    %v7544 = vunpack.c.l.b16 %v7028
    %v7545 = vunpack.c.l.b16 %v7029
    %v7546 = vunpack.c.l.b16 %v7030
    %v7547 = vunpack.c.l.b16 %v7031
    %v7548 = vunpack.c.l.b16 %v7032
    %v7549 = vunpack.c.l.b16 %v7033
    %v7550 = vunpack.c.l.b16 %v7034
    %v7551 = vunpack.c.l.b16 %v7035
    %v7552 = vunpack.c.l.b16 %v7036
    %v7553 = vunpack.c.l.b16 %v7037
    %v7554 = vunpack.c.l.b16 %v7038
    %v7555 = vunpack.c.l.b16 %v7039
    %v7556 = vunpack.c.l.b16 %v7040
    %v7557 = vunpack.c.l.b16 %v7041
    %v7558 = vunpack.c.l.b16 %v7042
    %v7559 = vunpack.c.l.b16 %v7043
    %v7560 = vunpack.c.l.b16 %v7044
    %v7561 = vunpack.c.l.b16 %v7045
    %v7562 = vunpack.c.l.b16 %v7046
    %v7563 = vunpack.c.l.b16 %v7047
    %v7564 = vunpack.c.l.b16 %v7048
    %v7565 = vunpack.c.l.b16 %v7049
    %v7566 = vunpack.c.l.b16 %v7050
    %v7567 = vunpack.c.l.b16 %v7051
    %v7568 = vunpack.c.l.b16 %v7052
    %v7569 = vunpack.c.l.b16 %v7053
    %v7570 = vunpack.c.l.b16 %v7054
    %v7571 = vunpack.c.l.b16 %v7055
    %v7572 = vunpack.c.l.b16 %v7056
    %v7573 = vunpack.c.l.b16 %v7057
    %v7574 = vunpack.c.l.b16 %v7058
    %v7575 = vunpack.c.l.b16 %v7059
    %v7576 = vunpack.c.l.b16 %v7060
    %v7577 = vunpack.c.l.b16 %v7061
    %v7578 = vunpack.c.l.b16 %v7062
    %v7579 = vunpack.c.l.b16 %v7063
    %v7580 = vunpack.c.l.b16 %v7064
    %v7581 = vunpack.c.l.b16 %v7065
    %v7582 = vunpack.c.l.b16 %v7066
    %v7583 = vunpack.c.l.b16 %v7067
    %v7584 = vunpack.c.l.b16 %v7068
    %v7585 = vunpack.c.l.b16 %v7069
    %v7586 = vunpack.c.l.b16 %v7070
    %v7587 = vunpack.c.l.b16 %v7071
    %v7588 = vunpack.c.l.b16 %v7072
    %v7589 = vunpack.c.l.b16 %v7073
    %v7590 = vunpack.c.l.b16 %v7074
    %v7591 = vunpack.c.l.b16 %v7075
    %v7592 = vunpack.c.l.b16 %v7076
    %v7593 = vunpack.c.l.b16 %v7077
    %v7594 = vunpack.c.l.b16 %v7078
    %v7595 = vunpack.c.l.b16 %v7079
    %v7596 = vunpack.c.l.b16 %v7080
    %v7597 = vunpack.c.l.b16 %v7081
    %v7598 = vunpack.c.l.b16 %v7082
    %v7599 = vunpack.c.l.b16 %v7083
    %v7600 = vunpack.c.l.b16 %v7084
    %v7601 = vunpack.c.l.b16 %v7085
    %v7602 = vunpack.c.l.b16 %v7086
    %v7603 = vunpack.c.l.b16 %v7087
    %v7604 = vunpack.c.l.b16 %v7088
    %v7605 = vunpack.c.l.b16 %v7089
    %v7606 = vunpack.c.l.b16 %v7090
    %v7607 = vunpack.c.l.b16 %v7091
    %v7608 = vunpack.c.l.b16 %v7092
    %v7609 = vunpack.c.l.b16 %v7093
    %v7610 = vunpack.c.l.b16 %v7094
    %v7611 = vunpack.c.l.b16 %v7095
    %v7612 = vunpack.c.l.b16 %v7096
    %v7613 = vunpack.c.l.b16 %v7097
    %v7614 = vunpack.c.l.b16 %v7098
    %v7615 = vunpack.c.l.b16 %v7099
    %v7616 = vunpack.c.l.b16 %v7100
    %v7617 = vunpack.c.l.b16 %v7101
    %v7618 = vunpack.c.l.b16 %v7102
    %v7619 = vunpack.c.l.b16 %v7103
    %v7620 = vunpack.c.l.b16 %v7104
    %v7621 = vunpack.c.l.b16 %v7105
    %v7622 = vunpack.c.l.b16 %v7106
    %v7623 = vunpack.c.l.b16 %v7107
    %v7624 = vunpack.c.l.b16 %v7108
    %v7625 = vunpack.c.l.b16 %v7109
    %v7626 = vunpack.c.l.b16 %v7110
    %v7627 = vunpack.c.l.b16 %v7111
    %v7628 = vunpack.c.l.b16 %v7112
    %v7629 = vunpack.c.l.b16 %v7113
    %v7630 = vunpack.c.l.b16 %v7114
    %v7631 = vunpack.c.l.b16 %v7115
    %v7632 = vunpack.c.l.b16 %v7116
    %v7633 = vunpack.c.l.b16 %v7117
    %v7634 = vunpack.c.l.b16 %v7118
    %v7635 = vunpack.c.l.b16 %v7119
    %v7636 = vunpack.c.l.b16 %v7120
    %v7637 = vunpack.c.l.b16 %v7121
    %v7638 = vunpack.c.l.b16 %v7122
    %v7639 = vunpack.c.l.b16 %v7123
    %v7640 = vunpack.c.l.b16 %v7124
    %v7641 = vunpack.c.l.b16 %v7125
    %v7642 = vunpack.c.l.b16 %v7126
    %v7643 = vunpack.c.l.b16 %v7127
    %v7644 = vunpack.c.l.b16 %v7128
    %v7645 = vunpack.c.l.b16 %v7129
    %v7646 = vunpack.c.l.b16 %v7130
    %v7647 = vunpack.c.l.b16 %v7131
    %v7648 = vunpack.c.l.b16 %v7132
    %v7649 = vunpack.c.l.b16 %v7133
    %v7650 = vunpack.c.l.b16 %v7134
    %v7651 = vunpack.c.l.b16 %v7135
    %v7652 = vunpack.c.l.b16 %v7136
    %v7653 = vunpack.c.l.b16 %v7137
    %v7654 = vunpack.c.l.b16 %v7138
    %v7655 = vunpack.c.l.b16 %v7139
    %v7656 = vunpack.c.l.b16 %v7140
    %v7657 = vunpack.c.l.b16 %v7141
    %v7658 = vunpack.c.l.b16 %v7142
    %v7659 = vunpack.c.l.b16 %v7143
    %v7660 = vunpack.c.l.b16 %v7144
    %v7661 = vunpack.c.l.b16 %v7145
    %v7662 = vunpack.c.l.b16 %v7146
    %v7663 = vunpack.c.l.b16 %v7147
    %v7664 = vunpack.c.l.b16 %v7148
    %v7665 = vunpack.c.l.b16 %v7149
    %v7666 = vunpack.c.l.b16 %v7150
    %v7667 = vunpack.c.l.b16 %v7151
    %v7668 = vunpack.c.l.b16 %v7152
    %v7669 = vunpack.c.l.b16 %v7153
    %v7670 = vunpack.c.l.b16 %v7154
    %v7671 = vunpack.c.l.b16 %v7155
    %v7672 = vunpack.c.l.b16 %v7156
    %v7673 = vunpack.c.l.b16 %v7157
    %v7674 = vunpack.c.l.b16 %v7158
    %v7675 = vunpack.c.l.b16 %v7159
    %v7676 = vunpack.c.l.b16 %v7160
    %v7677 = vunpack.c.l.b16 %v7161
    %v7678 = vunpack.c.l.b16 %v7162
    %v7679 = vunpack.c.l.b16 %v7163
    %v7680 = vunpack.c.l.b16 %v7164
    %v7681 = vunpack.c.l.b16 %v7165
    %v7682 = vunpack.c.l.b16 %v7166
    %v7683 = vunpack.c.l.b16 %v7167
    %v7684 = vunpack.c.l.b16 %v7168
    %v7685 = vunpack.c.l.b16 %v7169
    %v7686 = vunpack.c.l.b16 %v7170
    %v7687 = vunpack.c.l.b16 %v7171
    %v7688 = vunpack.c.l.b16 %v7172
    %v7689 = vunpack.c.l.b16 %v7173
    %v7690 = vunpack.c.l.b16 %v7174
    %v7691 = vunpack.c.l.b16 %v7175
    %v7692 = vunpack.c.l.b16 %v7176
    %v7693 = vunpack.c.l.b16 %v7177
    %v7694 = vunpack.c.l.b16 %v7178
    %v7695 = vunpack.c.l.b16 %v7179
    %v7696 = vunpack.c.l.b16 %v7180
    %v7697 = vunpack.c.l.b16 %v7181
    %v7698 = vunpack.c.l.b16 %v7182
    %v7699 = vunpack.c.l.b16 %v7183
    %v7700 = vunpack.c.l.b16 %v7184
    %v7701 = vunpack.c.l.b16 %v7185
    %v7702 = vunpack.c.l.b16 %v7186
    %v7703 = vunpack.c.l.b16 %v7187
    %v7704 = vunpack.c.l.b16 %v7188
    %v7705 = vunpack.c.l.b16 %v7189
    %v7706 = vunpack.c.l.b16 %v7190
    %v7707 = vunpack.c.l.b16 %v7191
    %v7708 = vunpack.c.l.b16 %v7192
    %v7709 = vunpack.c.l.b16 %v7193
    %v7710 = vunpack.c.l.b16 %v7194
    %v7711 = vunpack.c.l.b16 %v7195
    %v7712 = vunpack.c.l.b16 %v7196
    %v7713 = vunpack.c.l.b16 %v7197
    %v7714 = vunpack.c.l.b16 %v7198
    %v7715 = vunpack.c.l.b16 %v7199
    %v7716 = vunpack.c.l.b16 %v7200
    %v7717 = vunpack.c.l.b16 %v7201
    %v7718 = vunpack.c.l.b16 %v7202
    %v7719 = vunpack.c.l.b16 %v7203
    %v7720 = vunpack.c.l.b16 %v7204
    %v7721 = vunpack.c.l.b16 %v7205
    %v7722 = vunpack.c.l.b16 %v7206
    %v7723 = vunpack.c.l.b16 %v7207
    %v7724 = vunpack.c.l.b16 %v7208
    %v7725 = vunpack.c.l.b16 %v7209
    %v7726 = vunpack.c.l.b16 %v7210
    %v7727 = vunpack.c.l.b16 %v7211
    %v7728 = vunpack.c.l.b16 %v7212
    %v7729 = vunpack.c.l.b16 %v7213
    %v7730 = vunpack.c.l.b16 %v7214
    %v7731 = vunpack.c.l.b16 %v7215
    %v7732 = vunpack.c.l.b16 %v7216
    %v7733 = vunpack.c.l.b16 %v7217
    %v7734 = vunpack.c.l.b16 %v7218
    %v7735 = vunpack.c.l.b16 %v7219
    %v7736 = vunpack.c.l.b16 %v7220
    %v7737 = vunpack.c.l.b16 %v7221
    %v7738 = vunpack.c.l.b16 %v7222
    %v7739 = vunpack.c.l.b16 %v7223
    %v7740 = vunpack.c.l.b16 %v7224
    %v7741 = vunpack.c.l.b16 %v7225
    %v7742 = vunpack.c.l.b16 %v7226
    %v7743 = vunpack.c.l.b16 %v7227
    %v7744 = vunpack.c.l.b16 %v7228
    %v7745 = vpack.c.b16 %v7490, %v7489
    %v7746 = vpack.c.b16 %v7492, %v7491
    %v7747 = vpack.c.b16 %v7494, %v7493
    %v7748 = vpack.c.b16 %v7496, %v7495
    %v7749 = vpack.c.b16 %v7498, %v7497
    %v7750 = vpack.c.b16 %v7500, %v7499
    %v7751 = vpack.c.b16 %v7502, %v7501
    %v7752 = vpack.c.b16 %v7504, %v7503
    %v7753 = vpack.c.b16 %v7506, %v7505
    %v7754 = vpack.c.b16 %v7508, %v7507
    %v7755 = vpack.c.b16 %v7510, %v7509
    %v7756 = vpack.c.b16 %v7512, %v7511
    %v7757 = vpack.c.b16 %v7514, %v7513
    %v7758 = vpack.c.b16 %v7516, %v7515
    %v7759 = vpack.c.b16 %v7518, %v7517
    %v7760 = vpack.c.b16 %v7520, %v7519
    %v7761 = vpack.c.b16 %v7522, %v7521
    %v7762 = vpack.c.b16 %v7524, %v7523
    %v7763 = vpack.c.b16 %v7526, %v7525
    %v7764 = vpack.c.b16 %v7528, %v7527
    %v7765 = vpack.c.b16 %v7530, %v7529
    %v7766 = vpack.c.b16 %v7532, %v7531
    %v7767 = vpack.c.b16 %v7534, %v7533
    %v7768 = vpack.c.b16 %v7536, %v7535
    %v7769 = vpack.c.b16 %v7538, %v7537
    %v7770 = vpack.c.b16 %v7540, %v7539
    %v7771 = vpack.c.b16 %v7542, %v7541
    %v7772 = vpack.c.b16 %v7544, %v7543
    %v7773 = vpack.c.b16 %v7546, %v7545
    %v7774 = vpack.c.b16 %v7548, %v7547
    %v7775 = vpack.c.b16 %v7550, %v7549
    %v7776 = vpack.c.b16 %v7552, %v7551
    %v7777 = vpack.c.b16 %v7554, %v7553
    %v7778 = vpack.c.b16 %v7556, %v7555
    %v7779 = vpack.c.b16 %v7558, %v7557
    %v7780 = vpack.c.b16 %v7560, %v7559
    %v7781 = vpack.c.b16 %v7562, %v7561
    %v7782 = vpack.c.b16 %v7564, %v7563
    %v7783 = vpack.c.b16 %v7566, %v7565
    %v7784 = vpack.c.b16 %v7568, %v7567
    %v7785 = vpack.c.b16 %v7570, %v7569
    %v7786 = vpack.c.b16 %v7572, %v7571
    %v7787 = vpack.c.b16 %v7574, %v7573
    %v7788 = vpack.c.b16 %v7576, %v7575
    %v7789 = vpack.c.b16 %v7578, %v7577
    %v7790 = vpack.c.b16 %v7580, %v7579
    %v7791 = vpack.c.b16 %v7582, %v7581
    %v7792 = vpack.c.b16 %v7584, %v7583
    %v7793 = vpack.c.b16 %v7586, %v7585
    %v7794 = vpack.c.b16 %v7588, %v7587
    %v7795 = vpack.c.b16 %v7590, %v7589
    %v7796 = vpack.c.b16 %v7592, %v7591
    %v7797 = vpack.c.b16 %v7594, %v7593
    %v7798 = vpack.c.b16 %v7596, %v7595
    %v7799 = vpack.c.b16 %v7598, %v7597
    %v7800 = vpack.c.b16 %v7600, %v7599
    %v7801 = vpack.c.b16 %v7602, %v7601
    %v7802 = vpack.c.b16 %v7604, %v7603
    %v7803 = vpack.c.b16 %v7606, %v7605
    %v7804 = vpack.c.b16 %v7608, %v7607
    %v7805 = vpack.c.b16 %v7610, %v7609
    %v7806 = vpack.c.b16 %v7612, %v7611
    %v7807 = vpack.c.b16 %v7614, %v7613
    %v7808 = vpack.c.b16 %v7616, %v7615
    %v7809 = vpack.c.b16 %v7618, %v7617
    %v7810 = vpack.c.b16 %v7620, %v7619
    %v7811 = vpack.c.b16 %v7622, %v7621
    %v7812 = vpack.c.b16 %v7624, %v7623
    %v7813 = vpack.c.b16 %v7626, %v7625
    %v7814 = vpack.c.b16 %v7628, %v7627
    %v7815 = vpack.c.b16 %v7630, %v7629
    %v7816 = vpack.c.b16 %v7632, %v7631
    %v7817 = vpack.c.b16 %v7634, %v7633
    %v7818 = vpack.c.b16 %v7636, %v7635
    %v7819 = vpack.c.b16 %v7638, %v7637
    %v7820 = vpack.c.b16 %v7640, %v7639
    %v7821 = vpack.c.b16 %v7642, %v7641
    %v7822 = vpack.c.b16 %v7644, %v7643
    %v7823 = vpack.c.b16 %v7646, %v7645
    %v7824 = vpack.c.b16 %v7648, %v7647
    %v7825 = vpack.c.b16 %v7650, %v7649
    %v7826 = vpack.c.b16 %v7652, %v7651
    %v7827 = vpack.c.b16 %v7654, %v7653
    %v7828 = vpack.c.b16 %v7656, %v7655
    %v7829 = vpack.c.b16 %v7658, %v7657
    %v7830 = vpack.c.b16 %v7660, %v7659
    %v7831 = vpack.c.b16 %v7662, %v7661
    %v7832 = vpack.c.b16 %v7664, %v7663
    %v7833 = vpack.c.b16 %v7666, %v7665
    %v7834 = vpack.c.b16 %v7668, %v7667
    %v7835 = vpack.c.b16 %v7670, %v7669
    %v7836 = vpack.c.b16 %v7672, %v7671
    %v7837 = vpack.c.b16 %v7674, %v7673
    %v7838 = vpack.c.b16 %v7676, %v7675
    %v7839 = vpack.c.b16 %v7678, %v7677
    %v7840 = vpack.c.b16 %v7680, %v7679
    %v7841 = vpack.c.b16 %v7682, %v7681
    %v7842 = vpack.c.b16 %v7684, %v7683
    %v7843 = vpack.c.b16 %v7686, %v7685
    %v7844 = vpack.c.b16 %v7688, %v7687
    %v7845 = vpack.c.b16 %v7690, %v7689
    %v7846 = vpack.c.b16 %v7692, %v7691
    %v7847 = vpack.c.b16 %v7694, %v7693
    %v7848 = vpack.c.b16 %v7696, %v7695
    %v7849 = vpack.c.b16 %v7698, %v7697
    %v7850 = vpack.c.b16 %v7700, %v7699
    %v7851 = vpack.c.b16 %v7702, %v7701
    %v7852 = vpack.c.b16 %v7704, %v7703
    %v7853 = vpack.c.b16 %v7706, %v7705
    %v7854 = vpack.c.b16 %v7708, %v7707
    %v7855 = vpack.c.b16 %v7710, %v7709
    %v7856 = vpack.c.b16 %v7712, %v7711
    %v7857 = vpack.c.b16 %v7714, %v7713
    %v7858 = vpack.c.b16 %v7716, %v7715
    %v7859 = vpack.c.b16 %v7718, %v7717
    %v7860 = vpack.c.b16 %v7720, %v7719
    %v7861 = vpack.c.b16 %v7722, %v7721
    %v7862 = vpack.c.b16 %v7724, %v7723
    %v7863 = vpack.c.b16 %v7726, %v7725
    %v7864 = vpack.c.b16 %v7728, %v7727
    %v7865 = vpack.c.b16 %v7730, %v7729
    %v7866 = vpack.c.b16 %v7732, %v7731
    %v7867 = vpack.c.b16 %v7734, %v7733
    %v7868 = vpack.c.b16 %v7736, %v7735
    %v7869 = vpack.c.b16 %v7738, %v7737
    %v7870 = vpack.c.b16 %v7740, %v7739
    %v7871 = vpack.c.b16 %v7742, %v7741
    %v7872 = vpack.c.b16 %v7744, %v7743
    %8001 = vmatpush.bf16.msra.mxu0 %v7752
    %8002 = vmatpush.bf16.msra.mxu0 %v7751
    %8003 = vmatpush.bf16.msra.mxu0 %v7750
    %8004 = vmatpush.bf16.msra.mxu0 %v7749
    %8005 = vmatpush.bf16.msra.mxu0 %v7748
    %8006 = vmatpush.bf16.msra.mxu0 %v7747
    %8007 = vmatpush.bf16.msra.mxu0 %v7746
    %8008 = vmatpush.bf16.msra.mxu0 %v7745
    %8009 = vmatmul.bf16.gmra.mxu0 %v6957
    %v8010 = vpop.f32.mrf.mxu0
    %v8011 = vadd.f32 %v7231, %v8010
    %v8012 = vpop.f32.mrf.mxu0
    %8013 = vdwg.mxu0
    %8014 = vmatpush.bf16.msra.mxu0 %v7760
    %8015 = vmatpush.bf16.msra.mxu0 %v7759
    %8016 = vmatpush.bf16.msra.mxu0 %v7758
    %8017 = vmatpush.bf16.msra.mxu0 %v7757
    %8018 = vmatpush.bf16.msra.mxu0 %v7756
    %8019 = vmatpush.bf16.msra.mxu0 %v7755
    %8020 = vmatpush.bf16.msra.mxu0 %v7754
    %8021 = vmatpush.bf16.msra.mxu0 %v7753
    %8022 = vmatmul.bf16.gmra.mxu0 %v6958
    %v8023 = vpop.f32.mrf.mxu0
    %v8024 = vadd.f32 %v8011, %v8023
    %v8025 = vpop.f32.mrf.mxu0
    %8026 = vdwg.mxu0
    %8027 = vmatpush.bf16.msra.mxu0 %v7768
    %8028 = vmatpush.bf16.msra.mxu0 %v7767
    %8029 = vmatpush.bf16.msra.mxu0 %v7766
    %8030 = vmatpush.bf16.msra.mxu0 %v7765
    %8031 = vmatpush.bf16.msra.mxu0 %v7764
    %8032 = vmatpush.bf16.msra.mxu0 %v7763
    %8033 = vmatpush.bf16.msra.mxu0 %v7762
    %8034 = vmatpush.bf16.msra.mxu0 %v7761
    %8035 = vmatmul.bf16.gmra.mxu0 %v6959
    %v8036 = vpop.f32.mrf.mxu0
    %v8037 = vadd.f32 %v8024, %v8036
    %v8038 = vpop.f32.mrf.mxu0
    %8039 = vdwg.mxu0
    %8040 = vmatpush.bf16.msra.mxu0 %v7776
    %8041 = vmatpush.bf16.msra.mxu0 %v7775
    %8042 = vmatpush.bf16.msra.mxu0 %v7774
    %8043 = vmatpush.bf16.msra.mxu0 %v7773
    %8044 = vmatpush.bf16.msra.mxu0 %v7772
    %8045 = vmatpush.bf16.msra.mxu0 %v7771
    %8046 = vmatpush.bf16.msra.mxu0 %v7770
    %8047 = vmatpush.bf16.msra.mxu0 %v7769
    %8048 = vmatmul.bf16.gmra.mxu0 %v6960
    %v8049 = vpop.f32.mrf.mxu0
    %v8050 = vadd.f32 %v8037, %v8049
    %v8051 = vpop.f32.mrf.mxu0
    %8052 = vdwg.mxu0
    %8053 = vmatpush.bf16.msra.mxu0 %v7784
    %8054 = vmatpush.bf16.msra.mxu0 %v7783
    %8055 = vmatpush.bf16.msra.mxu0 %v7782
    %8056 = vmatpush.bf16.msra.mxu0 %v7781
    %8057 = vmatpush.bf16.msra.mxu0 %v7780
    %8058 = vmatpush.bf16.msra.mxu0 %v7779
    %8059 = vmatpush.bf16.msra.mxu0 %v7778
    %8060 = vmatpush.bf16.msra.mxu0 %v7777
    %8061 = vmatmul.bf16.gmra.mxu0 %v6961
    %v8062 = vpop.f32.mrf.mxu0
    %v8063 = vadd.f32 %v8050, %v8062
    %v8064 = vpop.f32.mrf.mxu0
    %8065 = vdwg.mxu0
    %8066 = vmatpush.bf16.msra.mxu0 %v7792
    %8067 = vmatpush.bf16.msra.mxu0 %v7791
    %8068 = vmatpush.bf16.msra.mxu0 %v7790
    %8069 = vmatpush.bf16.msra.mxu0 %v7789
    %8070 = vmatpush.bf16.msra.mxu0 %v7788
    %8071 = vmatpush.bf16.msra.mxu0 %v7787
    %8072 = vmatpush.bf16.msra.mxu0 %v7786
    %8073 = vmatpush.bf16.msra.mxu0 %v7785
    %8074 = vmatmul.bf16.gmra.mxu0 %v6962
    %v8075 = vpop.f32.mrf.mxu0
    %v8076 = vadd.f32 %v8063, %v8075
    %v8077 = vpop.f32.mrf.mxu0
    %8078 = vdwg.mxu0
    %8079 = vmatpush.bf16.msra.mxu0 %v7800
    %8080 = vmatpush.bf16.msra.mxu0 %v7799
    %8081 = vmatpush.bf16.msra.mxu0 %v7798
    %8082 = vmatpush.bf16.msra.mxu0 %v7797
    %8083 = vmatpush.bf16.msra.mxu0 %v7796
    %8084 = vmatpush.bf16.msra.mxu0 %v7795
    %8085 = vmatpush.bf16.msra.mxu0 %v7794
    %8086 = vmatpush.bf16.msra.mxu0 %v7793
    %8087 = vmatmul.bf16.gmra.mxu0 %v6963
    %v8088 = vpop.f32.mrf.mxu0
    %v8089 = vadd.f32 %v8076, %v8088
    %v8090 = vpop.f32.mrf.mxu0
    %8091 = vdwg.mxu0
    %8092 = vmatpush.bf16.msra.mxu0 %v7808
    %8093 = vmatpush.bf16.msra.mxu0 %v7807
    %8094 = vmatpush.bf16.msra.mxu0 %v7806
    %8095 = vmatpush.bf16.msra.mxu0 %v7805
    %8096 = vmatpush.bf16.msra.mxu0 %v7804
    %8097 = vmatpush.bf16.msra.mxu0 %v7803
    %8098 = vmatpush.bf16.msra.mxu0 %v7802
    %8099 = vmatpush.bf16.msra.mxu0 %v7801
    %8100 = vmatmul.bf16.gmra.mxu0 %v6964
    %v8101 = vpop.f32.mrf.mxu0
    %v8102 = vadd.f32 %v8089, %v8101
    %v8103 = vpop.f32.mrf.mxu0
    %8104 = vdwg.mxu0
    %8105 = vmatpush.bf16.msra.mxu0 %v7816
    %8106 = vmatpush.bf16.msra.mxu0 %v7815
    %8107 = vmatpush.bf16.msra.mxu0 %v7814
    %8108 = vmatpush.bf16.msra.mxu0 %v7813
    %8109 = vmatpush.bf16.msra.mxu0 %v7812
    %8110 = vmatpush.bf16.msra.mxu0 %v7811
    %8111 = vmatpush.bf16.msra.mxu0 %v7810
    %8112 = vmatpush.bf16.msra.mxu0 %v7809
    %8113 = vmatmul.bf16.gmra.mxu0 %v6965
    %v8114 = vpop.f32.mrf.mxu0
    %v8115 = vadd.f32 %v8102, %v8114
    %v8116 = vpop.f32.mrf.mxu0
    %8117 = vdwg.mxu0
    %8118 = vmatpush.bf16.msra.mxu0 %v7824
    %8119 = vmatpush.bf16.msra.mxu0 %v7823
    %8120 = vmatpush.bf16.msra.mxu0 %v7822
    %8121 = vmatpush.bf16.msra.mxu0 %v7821
    %8122 = vmatpush.bf16.msra.mxu0 %v7820
    %8123 = vmatpush.bf16.msra.mxu0 %v7819
    %8124 = vmatpush.bf16.msra.mxu0 %v7818
    %8125 = vmatpush.bf16.msra.mxu0 %v7817
    %8126 = vmatmul.bf16.gmra.mxu0 %v6966
    %v8127 = vpop.f32.mrf.mxu0
    %v8128 = vadd.f32 %v8115, %v8127
    %v8129 = vpop.f32.mrf.mxu0
    %8130 = vdwg.mxu0
    %8131 = vmatpush.bf16.msra.mxu0 %v7832
    %8132 = vmatpush.bf16.msra.mxu0 %v7831
    %8133 = vmatpush.bf16.msra.mxu0 %v7830
    %8134 = vmatpush.bf16.msra.mxu0 %v7829
    %8135 = vmatpush.bf16.msra.mxu0 %v7828
    %8136 = vmatpush.bf16.msra.mxu0 %v7827
    %8137 = vmatpush.bf16.msra.mxu0 %v7826
    %8138 = vmatpush.bf16.msra.mxu0 %v7825
    %8139 = vmatmul.bf16.gmra.mxu0 %v6967
    %v8140 = vpop.f32.mrf.mxu0
    %v8141 = vadd.f32 %v8128, %v8140
    %v8142 = vpop.f32.mrf.mxu0
    %8143 = vdwg.mxu0
    %8144 = vmatpush.bf16.msra.mxu0 %v7840
    %8145 = vmatpush.bf16.msra.mxu0 %v7839
    %8146 = vmatpush.bf16.msra.mxu0 %v7838
    %8147 = vmatpush.bf16.msra.mxu0 %v7837
    %8148 = vmatpush.bf16.msra.mxu0 %v7836
    %8149 = vmatpush.bf16.msra.mxu0 %v7835
    %8150 = vmatpush.bf16.msra.mxu0 %v7834
    %8151 = vmatpush.bf16.msra.mxu0 %v7833
    %8152 = vmatmul.bf16.gmra.mxu0 %v6968
    %v8153 = vpop.f32.mrf.mxu0
    %v8154 = vadd.f32 %v8141, %v8153
    %v8155 = vpop.f32.mrf.mxu0
    %8156 = vdwg.mxu0
    %8157 = vmatpush.bf16.msra.mxu0 %v7848
    %8158 = vmatpush.bf16.msra.mxu0 %v7847
    %8159 = vmatpush.bf16.msra.mxu0 %v7846
    %8160 = vmatpush.bf16.msra.mxu0 %v7845
    %8161 = vmatpush.bf16.msra.mxu0 %v7844
    %8162 = vmatpush.bf16.msra.mxu0 %v7843
    %8163 = vmatpush.bf16.msra.mxu0 %v7842
    %8164 = vmatpush.bf16.msra.mxu0 %v7841
    %8165 = vmatmul.bf16.gmra.mxu0 %v6969
    %v8166 = vpop.f32.mrf.mxu0
    %v8167 = vadd.f32 %v8154, %v8166
    %v8168 = vpop.f32.mrf.mxu0
    %8169 = vdwg.mxu0
    %8170 = vmatpush.bf16.msra.mxu0 %v7856
    %8171 = vmatpush.bf16.msra.mxu0 %v7855
    %8172 = vmatpush.bf16.msra.mxu0 %v7854
    %8173 = vmatpush.bf16.msra.mxu0 %v7853
    %8174 = vmatpush.bf16.msra.mxu0 %v7852
    %8175 = vmatpush.bf16.msra.mxu0 %v7851
    %8176 = vmatpush.bf16.msra.mxu0 %v7850
    %8177 = vmatpush.bf16.msra.mxu0 %v7849
    %8178 = vmatmul.bf16.gmra.mxu0 %v6970
    %v8179 = vpop.f32.mrf.mxu0
    %v8180 = vadd.f32 %v8167, %v8179
    %v8181 = vpop.f32.mrf.mxu0
    %8182 = vdwg.mxu0
    %8183 = vmatpush.bf16.msra.mxu0 %v7864
    %8184 = vmatpush.bf16.msra.mxu0 %v7863
    %8185 = vmatpush.bf16.msra.mxu0 %v7862
    %8186 = vmatpush.bf16.msra.mxu0 %v7861
    %8187 = vmatpush.bf16.msra.mxu0 %v7860
    %8188 = vmatpush.bf16.msra.mxu0 %v7859
    %8189 = vmatpush.bf16.msra.mxu0 %v7858
    %8190 = vmatpush.bf16.msra.mxu0 %v7857
    %8191 = vmatmul.bf16.gmra.mxu0 %v6971
    %v8192 = vpop.f32.mrf.mxu0
    %v8193 = vadd.f32 %v8180, %v8192
    %v8194 = vpop.f32.mrf.mxu0
    %8195 = vdwg.mxu0
    %8196 = vmatpush.bf16.msra.mxu0 %v7872
    %8197 = vmatpush.bf16.msra.mxu0 %v7871
    %8198 = vmatpush.bf16.msra.mxu0 %v7870
    %8199 = vmatpush.bf16.msra.mxu0 %v7869
    %8200 = vmatpush.bf16.msra.mxu0 %v7868
    %8201 = vmatpush.bf16.msra.mxu0 %v7867
    %8202 = vmatpush.bf16.msra.mxu0 %v7866
    %8203 = vmatpush.bf16.msra.mxu0 %v7865
    %8204 = vmatmul.bf16.gmra.mxu0 %v6972
    %v8205 = vpop.f32.mrf.mxu0
    %v8206 = vadd.f32 %v8193, %v8205
    %v8207 = vpop.f32.mrf.mxu0
    %8208 = vdwg.mxu0
    %v8209 = vxor.u32 %v8206, 2147483648
    %v8210 = vmul.f32 %v8209, 1.442695
    %v8211 = vpow.pop %v8210
    %v8212 = vadd.f32 %v8211, 1.0
    %v8213 = vrcp.pop %v8212
    %v8214 = vmul.f32 %v8212, %v8213
    %v8215 = vsub.f32 1.0, %v8214
    %v8216 = vmul.f32 %v8213, %v8215
    %v8217 = vadd.f32 %v8213, %v8216
    %vm8218 = vweird.f32 %v8212
    %vm8219 = vweird.f32 %v8213
    %vm8220 = vmor %vm8218, %vm8219
    %v8221 = vsel %vm8220, %v8213, %v8217
    %v8222 = vand.u32 2147483647, %v8212
    %vm8223 = vcmp.eq.f32.partialorder %v8222, 8.507059e+37
    %v8224 = vand.u32 %v8212, 2147483648
    %v8225 = vor.u32 1.1754944e-38, %v8224
    %v8226 = vsel %vm8223, %v8225, %v8221
    %v8227 = vmul.f32 1.0, %v8226
    %8228 = vst [vmem:[%s13] sm:$0xff] %v8227
    // Predicated region
    $region90: #{adapt_rm_forward.1} parent=1 // pred_check
      _
    $region91: #{adapt_rm_forward.1} parent=1 // pred_check_branch
      %8230 = sbr.rel (0) target = $region93
    $region92: #{adapt_rm_forward.1} parent=1 // pred_region
      _
    $region93: #{adapt_rm_forward.1} parent=1 // pred_fallthru
      _
    // Predicated region
    $region94: #{adapt_rm_forward.1} parent=1 // pred_check
      _
    $region95: #{adapt_rm_forward.1} parent=1 // pred_check_branch
      %8232 = sbr.rel (0) target = $region97
    $region96: #{adapt_rm_forward.1} parent=1 // pred_region
      _
    $region97: #{adapt_rm_forward.1} parent=1 // pred_fallthru
      _
    %8233 = vsyncpa [#allocation3], 1
    %8234 = vsyncpa [#allocation5], 1
    %8235 = vsyncpa [#allocation8], 1
    %8236 = vsyncpa [#allocation11], 1
    %8237 = vsyncpa [#allocation14], 1

</llo_original>
